<compile_context>
chip_gen: v6e
topology: v6e:2x2x1
jax: 0.10.0
libtpu: 0.0.40
codegen_flags: <defaults>
</compile_context>

<pallas_src>
import math

import jax
import jax.numpy as jnp
from jax.experimental import pallas as pl
from jax.experimental.pallas import tpu as pltpu

# ----------------------------------------------------------------------------
# Hyper-parameters (small, consistent with Transformer(d_model, nhead, ...)).
# ----------------------------------------------------------------------------
D_MODEL = 32
NHEAD = 4
HD = D_MODEL // NHEAD
DFF = 64
NUM_ENC_LAYERS = 2
NUM_DEC_LAYERS = 2
NUM_QUERIES = 8
LN_EPS = 1e-5
W_QKV = 3 * D_MODEL                  # true QKV width (96)
SLAB_W = 128                         # lane-padded slab width (full (8,128) tiles)

# ----------------------------------------------------------------------------
# Packed parameter slab row layout (per layer, width SLAB_W, f32). Weights are
# pre-transposed so the kernel computes plain x @ W; the q columns / bias are
# pre-scaled by 1/sqrt(HD). Unused lanes are zero.
# ----------------------------------------------------------------------------
# encoder layer
R_E_QKV = 0                          # (D, 3D)  [Wq|Wk|Wv]^T
R_E_WOUT = R_E_QKV + D_MODEL         # (D, D)   out_proj.weight^T
R_E_FF1 = R_E_WOUT + D_MODEL         # (D, DFF) linear1.weight^T
R_E_FF2 = R_E_FF1 + D_MODEL          # (DFF, D) linear2.weight^T
R_E_VEC = R_E_FF2 + DFF
(RV_E_BQKV, RV_E_BOUT, RV_E_BFF1, RV_E_BFF2,
 RV_E_LN1G, RV_E_LN1B, RV_E_LN2G, RV_E_LN2B) = range(R_E_VEC, R_E_VEC + 8)
ENC_ROWS = ((R_E_VEC + 8 + 7) // 8) * 8

# decoder layer
R_D_SA_QKV = 0
R_D_SA_WOUT = R_D_SA_QKV + D_MODEL
R_D_CA_QKV = R_D_SA_WOUT + D_MODEL
R_D_CA_WOUT = R_D_CA_QKV + D_MODEL
R_D_FF1 = R_D_CA_WOUT + D_MODEL
R_D_FF2 = R_D_FF1 + D_MODEL
R_D_VEC = R_D_FF2 + DFF
(RV_D_SA_BQKV, RV_D_SA_BOUT, RV_D_CA_BQKV, RV_D_CA_BOUT,
 RV_D_BFF1, RV_D_BFF2,
 RV_D_LN1G, RV_D_LN1B, RV_D_LN2G, RV_D_LN2B, RV_D_LN3G, RV_D_LN3B,
 RV_D_FING, RV_D_FINB) = range(R_D_VEC, R_D_VEC + 14)
DEC_ROWS = ((R_D_VEC + 14 + 7) // 8) * 8


# ----------------------------------------------------------------------------
# In-kernel building blocks (traced inline; w_ref is the packed slab Ref).
# ----------------------------------------------------------------------------
def _rows(w_ref, row, n):
    """Full-width (n, 128) row-block load (unmasked vld on exact lane tiles)."""
    return w_ref[row:row + n, :]


def _layernorm(x, w_ref, g_row, b_row):
    g = w_ref[g_row:g_row + 1, 0:D_MODEL]
    b = w_ref[b_row:b_row + 1, 0:D_MODEL]
    mu = jnp.mean(x, axis=-1, keepdims=True)
    c = x - mu
    var = jnp.mean(c * c, axis=-1, keepdims=True)
    return c * jax.lax.rsqrt(var + LN_EPS) * g + b


def _mha(q2, k2, v2, mask, w_ref, wout_row, bout_row):
    """q2:(Lq,D) pre-scaled by 1/sqrt(HD); k2/v2:(Lk,D); mask:(1,Lk) additive or None.
    One shared K^T for all heads; per-head 2-D score/PV matmuls; head outputs are
    lane-concatenated and fed through a single out-projection matmul (bias included)."""
    kT = jnp.transpose(k2)                                  # (D, Lk), shared across heads
    outs = []
    for h in range(NHEAD):
        lo = h * HD
        s = jnp.dot(q2[:, lo:lo + HD], kT[lo:lo + HD, :],
                    preferred_element_type=jnp.float32)     # (Lq, Lk)
        if mask is not None:
            s = s + mask                                    # (1, Lk) broadcast
        m = jnp.max(s, axis=-1, keepdims=True)
        e = jnp.exp(s - m)
        p = e * pl.reciprocal(jnp.sum(e, axis=-1, keepdims=True), approx=False)
        outs.append(jnp.dot(p, v2[:, lo:lo + HD], preferred_element_type=jnp.float32))
    o2 = jnp.concatenate(outs, axis=-1)                     # (Lq, D) lane concat
    w_o = _rows(w_ref, wout_row, D_MODEL)[:, 0:D_MODEL]
    b_o = w_ref[bout_row:bout_row + 1, 0:D_MODEL]
    return jnp.dot(o2, w_o, preferred_element_type=jnp.float32) + b_o


def _encoder_layer(x2, pos2, mask, w_ref, base):
    d, dff = D_MODEL, DFF
    # fused QKV projection; positional contribution via linearity (v-part unused)
    w_qkv = _rows(w_ref, base + R_E_QKV, d)                 # (D, 128)
    b_qkv = w_ref[base + RV_E_BQKV:base + RV_E_BQKV + 1, :]
    qkv = jnp.dot(x2, w_qkv, preferred_element_type=jnp.float32) + b_qkv
    qkv_p = jnp.dot(pos2, w_qkv, preferred_element_type=jnp.float32)
    q = qkv[:, 0:d] + qkv_p[:, 0:d]
    k = qkv[:, d:2 * d] + qkv_p[:, d:2 * d]
    v = qkv[:, 2 * d:3 * d]
    attn = _mha(q, k, v, mask, w_ref, base + R_E_WOUT, base + RV_E_BOUT)
    y = _layernorm(x2 + attn, w_ref, base + RV_E_LN1G, base + RV_E_LN1B)

    w1 = _rows(w_ref, base + R_E_FF1, d)[:, 0:dff]
    b1 = w_ref[base + RV_E_BFF1:base + RV_E_BFF1 + 1, 0:dff]
    w2 = _rows(w_ref, base + R_E_FF2, dff)[:, 0:d]
    b2 = w_ref[base + RV_E_BFF2:base + RV_E_BFF2 + 1, 0:d]
    hmid = jnp.maximum(jnp.dot(y, w1, preferred_element_type=jnp.float32) + b1, 0.0)
    ffn = jnp.dot(hmid, w2, preferred_element_type=jnp.float32) + b2
    return _layernorm(y + ffn, w_ref, base + RV_E_LN2G, base + RV_E_LN2B)


def _decoder_layer(t2, qpos2, mem2, pos2, mem_mask, w_ref, base):
    d, dff = D_MODEL, DFF
    # --- self attention: q = k = tgt + query_pos, v = tgt, no mask ---
    w_sa = _rows(w_ref, base + R_D_SA_QKV, d)
    b_sa = w_ref[base + RV_D_SA_BQKV:base + RV_D_SA_BQKV + 1, :]
    qkv = jnp.dot(t2, w_sa, preferred_element_type=jnp.float32) + b_sa
    qkv_p = jnp.dot(qpos2, w_sa, preferred_element_type=jnp.float32)
    q = qkv[:, 0:d] + qkv_p[:, 0:d]
    k = qkv[:, d:2 * d] + qkv_p[:, d:2 * d]
    v = qkv[:, 2 * d:3 * d]
    attn = _mha(q, k, v, None, w_ref, base + R_D_SA_WOUT, base + RV_D_SA_BOUT)
    t2 = _layernorm(t2 + attn, w_ref, base + RV_D_LN1G, base + RV_D_LN1B)

    # --- cross attention: q = tgt + query_pos, k = memory + pos, v = memory ---
    # Only the q columns are applied to the target side and only the k/v columns to
    # the memory side (no discarded projection outputs).
    w_ca = _rows(w_ref, base + R_D_CA_QKV, d)               # (D, 128) single full load
    b_ca = w_ref[base + RV_D_CA_BQKV:base + RV_D_CA_BQKV + 1, :]
    qc = jnp.dot(t2 + qpos2, w_ca[:, 0:d],
                 preferred_element_type=jnp.float32) + b_ca[:, 0:d]
    kv = jnp.dot(mem2, w_ca[:, d:3 * d],
                 preferred_element_type=jnp.float32) + b_ca[:, d:3 * d]
    kv_p = jnp.dot(pos2, w_ca[:, d:3 * d], preferred_element_type=jnp.float32)
    kc = kv[:, 0:d] + kv_p[:, 0:d]
    vc = kv[:, d:2 * d]
    attn = _mha(qc, kc, vc, mem_mask, w_ref, base + R_D_CA_WOUT, base + RV_D_CA_BOUT)
    t2 = _layernorm(t2 + attn, w_ref, base + RV_D_LN2G, base + RV_D_LN2B)

    # --- FFN ---
    w1 = _rows(w_ref, base + R_D_FF1, d)[:, 0:dff]
    b1 = w_ref[base + RV_D_BFF1:base + RV_D_BFF1 + 1, 0:dff]
    w2 = _rows(w_ref, base + R_D_FF2, dff)[:, 0:d]
    b2 = w_ref[base + RV_D_BFF2:base + RV_D_BFF2 + 1, 0:d]
    hmid = jnp.maximum(jnp.dot(t2, w1, preferred_element_type=jnp.float32) + b1, 0.0)
    ffn = jnp.dot(hmid, w2, preferred_element_type=jnp.float32) + b2
    return _layernorm(t2 + ffn, w_ref, base + RV_D_LN3G, base + RV_D_LN3B)


# ----------------------------------------------------------------------------
# Single fused kernel: full encoder stack + full decoder stack + final LayerNorm.
# Grid iterates over batch (parallel -> both v7x TensorCores get work); `memory`
# stays in VMEM/vregs between the stacks and is also written out as an output.
# ----------------------------------------------------------------------------
def transformer_kernel(src_ref, pos_ref, qemb_ref, mask_ref, enc_w_ref, dec_w_ref,
                       mem_ref, hs_ref):
    _, l, d = src_ref.shape
    q_len = qemb_ref.shape[0]

    x2 = src_ref[...].reshape(l, d)
    pos2 = pos_ref[...].reshape(l, d)
    mask = mask_ref[...].reshape(1, l)                       # additive key-padding mask

    for layer in range(NUM_ENC_LAYERS):
        x2 = _encoder_layer(x2, pos2, mask, enc_w_ref, layer * ENC_ROWS)
    mem_ref[...] = x2.reshape(1, l, d)

    qpos2 = qemb_ref[...]                                    # (Q, D); batch is in the grid
    t2 = jnp.zeros((q_len, d), jnp.float32)                  # tgt = zeros_like(query_embed)
    for layer in range(NUM_DEC_LAYERS):
        t2 = _decoder_layer(t2, qpos2, x2, pos2, mask, dec_w_ref, layer * DEC_ROWS)
    fin = (NUM_DEC_LAYERS - 1) * DEC_ROWS                    # final decoder LayerNorm
    t2 = _layernorm(t2, dec_w_ref, fin + RV_D_FING, fin + RV_D_FINB)
    hs_ref[...] = t2.reshape(1, q_len, d)


# ----------------------------------------------------------------------------
# Wrapper
# ----------------------------------------------------------------------------
def transformer_forward(src, mask_bool, query_embed, pos_embed, enc_slab, dec_slab):
    """src/pos_embed: (B, L, D), mask_bool: (B, L) True=pad, query_embed: (Q, D)."""
    b, l, d = src.shape
    q = query_embed.shape[0]
    mask_add = jnp.where(mask_bool, -1e9, 0.0).astype(jnp.float32)[:, None, :]  # (B,1,L)

    memory, hs = pl.pallas_call(
        transformer_kernel,
        out_shape=(jax.ShapeDtypeStruct((b, l, d), jnp.float32),
                   jax.ShapeDtypeStruct((b, q, d), jnp.float32)),
        grid=(b,),
        in_specs=[
            pl.BlockSpec((1, l, d), lambda i: (i, 0, 0)),          # src
            pl.BlockSpec((1, l, d), lambda i: (i, 0, 0)),          # pos_embed
            pl.BlockSpec((q, d), lambda i: (0, 0)),                # query_embed (shared)
            pl.BlockSpec((1, 1, l), lambda i: (i, 0, 0)),          # additive mask
            pl.BlockSpec(enc_slab.shape, lambda i: (0, 0)),        # encoder weights
            pl.BlockSpec(dec_slab.shape, lambda i: (0, 0)),        # decoder weights
        ],
        out_specs=(pl.BlockSpec((1, l, d), lambda i: (i, 0, 0)),
                   pl.BlockSpec((1, q, d), lambda i: (i, 0, 0))),
        compiler_params=pltpu.CompilerParams(dimension_semantics=("parallel",)),
    )(src, pos_embed, query_embed, mask_add, enc_slab, dec_slab)

    return hs[None], memory        # ((1, B, Q, D), (B, L, D)) — PyTorch return layout


# ----------------------------------------------------------------------------
# Host-side parameter packing (pre-transpose weights, fold softmax scale,
# pad lanes to 128).
# ----------------------------------------------------------------------------
def _fold_scale(in_w, in_b):
    scale = 1.0 / math.sqrt(HD)
    return in_w.at[:D_MODEL].multiply(scale), in_b.at[:D_MODEL].multiply(scale)


def pack_encoder_slab(p):
    slab = jnp.zeros((ENC_ROWS, SLAB_W), jnp.float32)
    w, bias = _fold_scale(p['in_w'], p['in_b'])
    slab = slab.at[R_E_QKV:R_E_QKV + D_MODEL, :W_QKV].set(w.T)
    slab = slab.at[R_E_WOUT:R_E_WOUT + D_MODEL, :D_MODEL].set(p['out_w'].T)
    slab = slab.at[R_E_FF1:R_E_FF1 + D_MODEL, :DFF].set(p['ff1_w'].T)
    slab = slab.at[R_E_FF2:R_E_FF2 + DFF, :D_MODEL].set(p['ff2_w'].T)
    slab = slab.at[RV_E_BQKV, :W_QKV].set(bias)
    slab = slab.at[RV_E_BOUT, :D_MODEL].set(p['out_b'])
    slab = slab.at[RV_E_BFF1, :DFF].set(p['ff1_b'])
    slab = slab.at[RV_E_BFF2, :D_MODEL].set(p['ff2_b'])
    slab = slab.at[RV_E_LN1G, :D_MODEL].set(p['ln1_g'])
    slab = slab.at[RV_E_LN1B, :D_MODEL].set(p['ln1_b'])
    slab = slab.at[RV_E_LN2G, :D_MODEL].set(p['ln2_g'])
    slab = slab.at[RV_E_LN2B, :D_MODEL].set(p['ln2_b'])
    return slab


def pack_decoder_slab(p, final_g=None, final_b=None):
    slab = jnp.zeros((DEC_ROWS, SLAB_W), jnp.float32)
    w, bias = _fold_scale(p['sa_in_w'], p['sa_in_b'])
    slab = slab.at[R_D_SA_QKV:R_D_SA_QKV + D_MODEL, :W_QKV].set(w.T)
    slab = slab.at[RV_D_SA_BQKV, :W_QKV].set(bias)
    slab = slab.at[R_D_SA_WOUT:R_D_SA_WOUT + D_MODEL, :D_MODEL].set(p['sa_out_w'].T)
    slab = slab.at[RV_D_SA_BOUT, :D_MODEL].set(p['sa_out_b'])
    w, bias = _fold_scale(p['ca_in_w'], p['ca_in_b'])
    slab = slab.at[R_D_CA_QKV:R_D_CA_QKV + D_MODEL, :W_QKV].set(w.T)
    slab = slab.at[RV_D_CA_BQKV, :W_QKV].set(bias)
    slab = slab.at[R_D_CA_WOUT:R_D_CA_WOUT + D_MODEL, :D_MODEL].set(p['ca_out_w'].T)
    slab = slab.at[RV_D_CA_BOUT, :D_MODEL].set(p['ca_out_b'])
    slab = slab.at[R_D_FF1:R_D_FF1 + D_MODEL, :DFF].set(p['ff1_w'].T)
    slab = slab.at[RV_D_BFF1, :DFF].set(p['ff1_b'])
    slab = slab.at[R_D_FF2:R_D_FF2 + DFF, :D_MODEL].set(p['ff2_w'].T)
    slab = slab.at[RV_D_BFF2, :D_MODEL].set(p['ff2_b'])
    for name, row in (('ln1_g', RV_D_LN1G), ('ln1_b', RV_D_LN1B),
                      ('ln2_g', RV_D_LN2G), ('ln2_b', RV_D_LN2B),
                      ('ln3_g', RV_D_LN3G), ('ln3_b', RV_D_LN3B)):
        slab = slab.at[row, :D_MODEL].set(p[name])
    if final_g is not None:
        slab = slab.at[RV_D_FING, :D_MODEL].set(final_g)
        slab = slab.at[RV_D_FINB, :D_MODEL].set(final_b)
    return slab


# ----------------------------------------------------------------------------
# Pure-JAX reference (mirrors the PyTorch module, batch-first).
# ----------------------------------------------------------------------------
def _ref_ln(x, g, b):
    mu = x.mean(-1, keepdims=True)
    var = ((x - mu) ** 2).mean(-1, keepdims=True)
    return (x - mu) / jnp.sqrt(var + LN_EPS) * g + b


def _ref_mha(q_in, k_in, v_in, in_w, in_b, out_w, out_b, key_mask_add=None):
    bsz, lq, d = q_in.shape
    lk = k_in.shape[1]
    wq, wk, wv = in_w[:d], in_w[d:2 * d], in_w[2 * d:]
    bq, bk, bv = in_b[:d], in_b[d:2 * d], in_b[2 * d:]
    qp = q_in @ wq.T + bq
    kp = k_in @ wk.T + bk
    vp = v_in @ wv.T + bv
    heads = lambda x, L: x.reshape(bsz, L, NHEAD, HD).transpose(0, 2, 1, 3)
    qh, kh, vh = heads(qp, lq), heads(kp, lk), heads(vp, lk)
    s = (qh / math.sqrt(HD)) @ jnp.swapaxes(kh, -1, -2)
    if key_mask_add is not None:
        s = s + key_mask_add[:, None, None, :]
    p = jax.nn.softmax(s, axis=-1)
    o = (p @ vh).transpose(0, 2, 1, 3).reshape(bsz, lq, d)
    return o @ out_w.T + out_b


def _ref_encoder_layer(src, pos, p, mask_add):
    qk = src + pos
    a = _ref_mha(qk, qk, src, p['in_w'], p['in_b'], p['out_w'], p['out_b'], mask_add)
    x = _ref_ln(src + a, p['ln1_g'], p['ln1_b'])
    f = jnp.maximum(x @ p['ff1_w'].T + p['ff1_b'], 0.0) @ p['ff2_w'].T + p['ff2_b']
    return _ref_ln(x + f, p['ln2_g'], p['ln2_b'])


def _ref_decoder_layer(tgt, mem, qpos, pos, p, mem_mask_add):
    q = tgt + qpos
    a = _ref_mha(q, q, tgt, p['sa_in_w'], p['sa_in_b'], p['sa_out_w'], p['sa_out_b'])
    t = _ref_ln(tgt + a, p['ln1_g'], p['ln1_b'])
    a2 = _ref_mha(t + qpos, mem + pos, mem, p['ca_in_w'], p['ca_in_b'],
                  p['ca_out_w'], p['ca_out_b'], mem_mask_add)
    t = _ref_ln(t + a2, p['ln2_g'], p['ln2_b'])
    f = jnp.maximum(t @ p['ff1_w'].T + p['ff1_b'], 0.0) @ p['ff2_w'].T + p['ff2_b']
    return _ref_ln(t + f, p['ln3_g'], p['ln3_b'])


def reference_transformer(src, mask_bool, query_embed, pos_embed,
                          enc_ps, dec_ps, fin_g, fin_b):
    bsz = src.shape[0]
    mask_add = jnp.where(mask_bool, -1e9, 0.0).astype(jnp.float32)
    mem = src
    for p in enc_ps:
        mem = _ref_encoder_layer(mem, pos_embed, p, mask_add)
    q = query_embed.shape[0]
    qpos = jnp.broadcast_to(query_embed[None], (bsz, q, D_MODEL))
    tgt = jnp.zeros((bsz, q, D_MODEL), jnp.float32)
    for p in dec_ps:
        tgt = _ref_decoder_layer(tgt, mem, qpos, pos_embed, p, mask_add)
    tgt = _ref_ln(tgt, fin_g, fin_b)
    return tgt[None], mem


# ----------------------------------------------------------------------------
# Parameter construction
# ----------------------------------------------------------------------------
def init_encoder_layer_params(key):
    ks = jax.random.split(key, 12)
    n = lambda k, shape, s: s * jax.random.normal(k, shape, jnp.float32)
    return dict(
        in_w=n(ks[0], (3 * D_MODEL, D_MODEL), 0.1), in_b=n(ks[1], (3 * D_MODEL,), 0.05),
        out_w=n(ks[2], (D_MODEL, D_MODEL), 0.1), out_b=n(ks[3], (D_MODEL,), 0.05),
        ff1_w=n(ks[4], (DFF, D_MODEL), 0.1), ff1_b=n(ks[5], (DFF,), 0.05),
        ff2_w=n(ks[6], (D_MODEL, DFF), 0.1), ff2_b=n(ks[7], (D_MODEL,), 0.05),
        ln1_g=1.0 + n(ks[8], (D_MODEL,), 0.02), ln1_b=n(ks[9], (D_MODEL,), 0.02),
        ln2_g=1.0 + n(ks[10], (D_MODEL,), 0.02), ln2_b=n(ks[11], (D_MODEL,), 0.02),
    )


def init_decoder_layer_params(key):
    ks = jax.random.split(key, 18)
    n = lambda k, shape, s: s * jax.random.normal(k, shape, jnp.float32)
    return dict(
        sa_in_w=n(ks[0], (3 * D_MODEL, D_MODEL), 0.1), sa_in_b=n(ks[1], (3 * D_MODEL,), 0.05),
        sa_out_w=n(ks[2], (D_MODEL, D_MODEL), 0.1), sa_out_b=n(ks[3], (D_MODEL,), 0.05),
        ca_in_w=n(ks[4], (3 * D_MODEL, D_MODEL), 0.1), ca_in_b=n(ks[5], (3 * D_MODEL,), 0.05),
        ca_out_w=n(ks[6], (D_MODEL, D_MODEL), 0.1), ca_out_b=n(ks[7], (D_MODEL,), 0.05),
        ff1_w=n(ks[8], (DFF, D_MODEL), 0.1), ff1_b=n(ks[9], (DFF,), 0.05),
        ff2_w=n(ks[10], (D_MODEL, DFF), 0.1), ff2_b=n(ks[11], (D_MODEL,), 0.05),
        ln1_g=1.0 + n(ks[12], (D_MODEL,), 0.02), ln1_b=n(ks[13], (D_MODEL,), 0.02),
        ln2_g=1.0 + n(ks[14], (D_MODEL,), 0.02), ln2_b=n(ks[15], (D_MODEL,), 0.02),
        ln3_g=1.0 + n(ks[16], (D_MODEL,), 0.02), ln3_b=n(ks[17], (D_MODEL,), 0.02),
    )


if __name__ == "__main__":
    key = jax.random.PRNGKey(0)
    k_inp, k_enc, k_dec, k_fin = jax.random.split(key, 4)

    B, L, Q = 2, 8, NUM_QUERIES
    ki = jax.random.split(k_inp, 3)
    src = jax.random.normal(ki[0], (B, L, D_MODEL), jnp.float32)
    pos_embed = 0.1 * jax.random.normal(ki[1], (B, L, D_MODEL), jnp.float32)
    query_embed = jax.random.normal(ki[2], (Q, D_MODEL), jnp.float32)
    mask = jnp.zeros((B, L), jnp.bool_).at[1, L - 2:].set(True)   # pad last 2 keys of batch 1

    enc_params = [init_encoder_layer_params(k) for k in jax.random.split(k_enc, NUM_ENC_LAYERS)]
    dec_params = [init_decoder_layer_params(k) for k in jax.random.split(k_dec, NUM_DEC_LAYERS)]
    kf = jax.random.split(k_fin, 2)
    fin_g = 1.0 + 0.02 * jax.random.normal(kf[0], (D_MODEL,), jnp.float32)
    fin_b = 0.02 * jax.random.normal(kf[1], (D_MODEL,), jnp.float32)

    enc_slab = jnp.concatenate([pack_encoder_slab(p) for p in enc_params], axis=0)
    dec_slab = jnp.concatenate(
        [pack_decoder_slab(p,
                           fin_g if i == NUM_DEC_LAYERS - 1 else None,
                           fin_b if i == NUM_DEC_LAYERS - 1 else None)
         for i, p in enumerate(dec_params)], axis=0)

    hs, memory = jax.jit(transformer_forward)(src, mask, query_embed, pos_embed,
                                              enc_slab, dec_slab)
    hs, memory = jax.block_until_ready((hs, memory))

    hs_ref, mem_ref = reference_transformer(src, mask, query_embed, pos_embed,
                                            enc_params, dec_params, fin_g, fin_b)

    assert hs.shape == (1, B, Q, D_MODEL) and memory.shape == (B, L, D_MODEL)
    err = max(float(jnp.max(jnp.abs(hs - hs_ref))),
              float(jnp.max(jnp.abs(memory - mem_ref))))
    # Tolerance covers the fused / re-associated projections and EUP exp/rsqrt paths;
    # structural bugs (wrong packing, heads, masks, scale) would be orders of magnitude larger.
    assert err < 1e-2, f"max abs err vs reference = {err}"
    print("KERNEL_OK")
</pallas_src>

<mosaic_0001>
module attributes {stable_mosaic.version = 11 : i64} {
  func.func @transformer_kernel(%arg0: i32, %arg1: memref<1x8x32xf32, #tpu.memory_space<vmem>>, %arg2: memref<1x8x32xf32, #tpu.memory_space<vmem>>, %arg3: memref<8x32xf32, #tpu.memory_space<vmem>>, %arg4: memref<1x1x8xf32, #tpu.memory_space<vmem>>, %arg5: memref<336x128xf32, #tpu.memory_space<vmem>>, %arg6: memref<480x128xf32, #tpu.memory_space<vmem>>, %arg7: memref<1x8x32xf32, #tpu.memory_space<vmem>>, %arg8: memref<1x8x32xf32, #tpu.memory_space<vmem>>) attributes {dimension_semantics = [#tpu.dimension_semantics<parallel>], iteration_bounds = array<i64: 2>, scalar_prefetch = 0 : i64, scratch_operands = 0 : i64, tpu.core_type = #tpu.core_type<tc>, window_params = [{transform_indices = @transform_0, window_bounds = array<i64: 1, 8, 32>}, {transform_indices = @transform_1, window_bounds = array<i64: 1, 8, 32>}, {pipeline_mode = #tpu.pipeline_mode<synchronous>, transform_indices = @transform_2, window_bounds = array<i64: 8, 32>}, {transform_indices = @transform_3, window_bounds = array<i64: 1, 1, 8>}, {pipeline_mode = #tpu.pipeline_mode<synchronous>, transform_indices = @transform_4, window_bounds = array<i64: 336, 128>}, {pipeline_mode = #tpu.pipeline_mode<synchronous>, transform_indices = @transform_5, window_bounds = array<i64: 480, 128>}, {transform_indices = @transform_6, window_bounds = array<i64: 1, 8, 32>}, {transform_indices = @transform_7, window_bounds = array<i64: 1, 8, 32>}]} {
    %c0 = arith.constant 0 : index
    %c0_0 = arith.constant 0 : index
    %c0_1 = arith.constant 0 : index
    %0 = vector.load %arg1[%c0, %c0_0, %c0_1] : memref<1x8x32xf32, #tpu.memory_space<vmem>>, vector<1x8x32xf32>
    %1 = vector.shape_cast %0 : vector<1x8x32xf32> to vector<8x32xf32>
    %c0_2 = arith.constant 0 : index
    %c0_3 = arith.constant 0 : index
    %c0_4 = arith.constant 0 : index
    %2 = vector.load %arg2[%c0_2, %c0_3, %c0_4] : memref<1x8x32xf32, #tpu.memory_space<vmem>>, vector<1x8x32xf32>
    %3 = vector.shape_cast %2 : vector<1x8x32xf32> to vector<8x32xf32>
    %c0_5 = arith.constant 0 : index
    %c0_6 = arith.constant 0 : index
    %c0_7 = arith.constant 0 : index
    %4 = vector.load %arg4[%c0_5, %c0_6, %c0_7] : memref<1x1x8xf32, #tpu.memory_space<vmem>>, vector<1x1x8xf32>
    %5 = vector.shape_cast %4 : vector<1x1x8xf32> to vector<1x8xf32>
    %c0_8 = arith.constant 0 : index
    %c0_9 = arith.constant 0 : index
    %6 = vector.load %arg5[%c0_8, %c0_9] : memref<336x128xf32, #tpu.memory_space<vmem>>, vector<32x128xf32>
    %c160 = arith.constant 160 : index
    %c0_10 = arith.constant 0 : index
    %7 = vector.load %arg5[%c160, %c0_10] : memref<336x128xf32, #tpu.memory_space<vmem>>, vector<1x128xf32>
    %cst = arith.constant dense<0.000000e+00> : vector<8x128xf32>
    %8 = tpu.matmul %1, %6, %cst {dimension_numbers = #tpu.dot_dimension_numbers<[1], [0], [0], [1], [0, 0, 1, 1], [], []>} : vector<8x32xf32>, vector<32x128xf32>, vector<8x128xf32> -> vector<8x128xf32>
    %9 = vector.broadcast %7 : vector<1x128xf32> to vector<8x128xf32>
    %10 = arith.addf %8, %9 : vector<8x128xf32>
    %cst_11 = arith.constant dense<0.000000e+00> : vector<8x128xf32>
    %11 = tpu.matmul %3, %6, %cst_11 {dimension_numbers = #tpu.dot_dimension_numbers<[1], [0], [0], [1], [0, 0, 1, 1], [], []>} : vector<8x32xf32>, vector<32x128xf32>, vector<8x128xf32> -> vector<8x128xf32>
    %12 = vector.extract_strided_slice %10 {offsets = [0, 0], sizes = [8, 32], strides = [1, 1]} : vector<8x128xf32> to vector<8x32xf32>
    %13 = vector.extract_strided_slice %11 {offsets = [0, 0], sizes = [8, 32], strides = [1, 1]} : vector<8x128xf32> to vector<8x32xf32>
    %14 = arith.addf %12, %13 : vector<8x32xf32>
    %15 = vector.extract_strided_slice %10 {offsets = [0, 32], sizes = [8, 32], strides = [1, 1]} : vector<8x128xf32> to vector<8x32xf32>
    %16 = vector.extract_strided_slice %11 {offsets = [0, 32], sizes = [8, 32], strides = [1, 1]} : vector<8x128xf32> to vector<8x32xf32>
    %17 = arith.addf %15, %16 : vector<8x32xf32>
    %18 = vector.extract_strided_slice %10 {offsets = [0, 64], sizes = [8, 32], strides = [1, 1]} : vector<8x128xf32> to vector<8x32xf32>
    %19 = tpu.transpose %17, [1, 0] : vector<8x32xf32> -> vector<32x8xf32>
    %20 = vector.extract_strided_slice %14 {offsets = [0, 0], sizes = [8, 8], strides = [1, 1]} : vector<8x32xf32> to vector<8x8xf32>
    %21 = vector.extract_strided_slice %19 {offsets = [0, 0], sizes = [8, 8], strides = [1, 1]} : vector<32x8xf32> to vector<8x8xf32>
    %cst_12 = arith.constant dense<0.000000e+00> : vector<8x8xf32>
    %22 = tpu.matmul %20, %21, %cst_12 {dimension_numbers = #tpu.dot_dimension_numbers<[1], [0], [0], [1], [0, 0, 1, 1], [], []>} : vector<8x8xf32>, vector<8x8xf32>, vector<8x8xf32> -> vector<8x8xf32>
    %23 = vector.broadcast %5 : vector<1x8xf32> to vector<8x8xf32>
    %24 = arith.addf %22, %23 : vector<8x8xf32>
    %cst_13 = arith.constant dense<0xFF800000> : vector<8xf32>
    %25 = vector.multi_reduction <maximumf>, %24, %cst_13 [1] : vector<8x8xf32> to vector<8xf32>
    %26 = vector.shape_cast %25 : vector<8xf32> to vector<8x1xf32>
    %27 = vector.broadcast %26 : vector<8x1xf32> to vector<8x8xf32>
    %28 = arith.subf %24, %27 : vector<8x8xf32>
    %29 = math.exp %28 : vector<8x8xf32>
    %cst_14 = arith.constant dense<0.000000e+00> : vector<8xf32>
    %30 = vector.multi_reduction <add>, %29, %cst_14 [1] : vector<8x8xf32> to vector<8xf32>
    %31 = vector.shape_cast %30 : vector<8xf32> to vector<8x1xf32>
    %32 = tpu.reciprocal %31 : vector<8x1xf32> -> vector<8x1xf32>
    %33 = vector.broadcast %32 : vector<8x1xf32> to vector<8x8xf32>
    %34 = arith.mulf %29, %33 : vector<8x8xf32>
    %35 = vector.extract_strided_slice %18 {offsets = [0, 0], sizes = [8, 8], strides = [1, 1]} : vector<8x32xf32> to vector<8x8xf32>
    %cst_15 = arith.constant dense<0.000000e+00> : vector<8x8xf32>
    %36 = tpu.matmul %34, %35, %cst_15 {dimension_numbers = #tpu.dot_dimension_numbers<[1], [0], [0], [1], [0, 0, 1, 1], [], []>} : vector<8x8xf32>, vector<8x8xf32>, vector<8x8xf32> -> vector<8x8xf32>
    %37 = vector.extract_strided_slice %14 {offsets = [0, 8], sizes = [8, 8], strides = [1, 1]} : vector<8x32xf32> to vector<8x8xf32>
    %38 = vector.extract_strided_slice %19 {offsets = [8, 0], sizes = [8, 8], strides = [1, 1]} : vector<32x8xf32> to vector<8x8xf32>
    %cst_16 = arith.constant dense<0.000000e+00> : vector<8x8xf32>
    %39 = tpu.matmul %37, %38, %cst_16 {dimension_numbers = #tpu.dot_dimension_numbers<[1], [0], [0], [1], [0, 0, 1, 1], [], []>} : vector<8x8xf32>, vector<8x8xf32>, vector<8x8xf32> -> vector<8x8xf32>
    %40 = vector.broadcast %5 : vector<1x8xf32> to vector<8x8xf32>
    %41 = arith.addf %39, %40 : vector<8x8xf32>
    %cst_17 = arith.constant dense<0xFF800000> : vector<8xf32>
    %42 = vector.multi_reduction <maximumf>, %41, %cst_17 [1] : vector<8x8xf32> to vector<8xf32>
    %43 = vector.shape_cast %42 : vector<8xf32> to vector<8x1xf32>
    %44 = vector.broadcast %43 : vector<8x1xf32> to vector<8x8xf32>
    %45 = arith.subf %41, %44 : vector<8x8xf32>
    %46 = math.exp %45 : vector<8x8xf32>
    %cst_18 = arith.constant dense<0.000000e+00> : vector<8xf32>
    %47 = vector.multi_reduction <add>, %46, %cst_18 [1] : vector<8x8xf32> to vector<8xf32>
    %48 = vector.shape_cast %47 : vector<8xf32> to vector<8x1xf32>
    %49 = tpu.reciprocal %48 : vector<8x1xf32> -> vector<8x1xf32>
    %50 = vector.broadcast %49 : vector<8x1xf32> to vector<8x8xf32>
    %51 = arith.mulf %46, %50 : vector<8x8xf32>
    %52 = vector.extract_strided_slice %18 {offsets = [0, 8], sizes = [8, 8], strides = [1, 1]} : vector<8x32xf32> to vector<8x8xf32>
    %cst_19 = arith.constant dense<0.000000e+00> : vector<8x8xf32>
    %53 = tpu.matmul %51, %52, %cst_19 {dimension_numbers = #tpu.dot_dimension_numbers<[1], [0], [0], [1], [0, 0, 1, 1], [], []>} : vector<8x8xf32>, vector<8x8xf32>, vector<8x8xf32> -> vector<8x8xf32>
    %54 = vector.extract_strided_slice %14 {offsets = [0, 16], sizes = [8, 8], strides = [1, 1]} : vector<8x32xf32> to vector<8x8xf32>
    %55 = vector.extract_strided_slice %19 {offsets = [16, 0], sizes = [8, 8], strides = [1, 1]} : vector<32x8xf32> to vector<8x8xf32>
    %cst_20 = arith.constant dense<0.000000e+00> : vector<8x8xf32>
    %56 = tpu.matmul %54, %55, %cst_20 {dimension_numbers = #tpu.dot_dimension_numbers<[1], [0], [0], [1], [0, 0, 1, 1], [], []>} : vector<8x8xf32>, vector<8x8xf32>, vector<8x8xf32> -> vector<8x8xf32>
    %57 = vector.broadcast %5 : vector<1x8xf32> to vector<8x8xf32>
    %58 = arith.addf %56, %57 : vector<8x8xf32>
    %cst_21 = arith.constant dense<0xFF800000> : vector<8xf32>
    %59 = vector.multi_reduction <maximumf>, %58, %cst_21 [1] : vector<8x8xf32> to vector<8xf32>
    %60 = vector.shape_cast %59 : vector<8xf32> to vector<8x1xf32>
    %61 = vector.broadcast %60 : vector<8x1xf32> to vector<8x8xf32>
    %62 = arith.subf %58, %61 : vector<8x8xf32>
    %63 = math.exp %62 : vector<8x8xf32>
    %cst_22 = arith.constant dense<0.000000e+00> : vector<8xf32>
    %64 = vector.multi_reduction <add>, %63, %cst_22 [1] : vector<8x8xf32> to vector<8xf32>
    %65 = vector.shape_cast %64 : vector<8xf32> to vector<8x1xf32>
    %66 = tpu.reciprocal %65 : vector<8x1xf32> -> vector<8x1xf32>
    %67 = vector.broadcast %66 : vector<8x1xf32> to vector<8x8xf32>
    %68 = arith.mulf %63, %67 : vector<8x8xf32>
    %69 = vector.extract_strided_slice %18 {offsets = [0, 16], sizes = [8, 8], strides = [1, 1]} : vector<8x32xf32> to vector<8x8xf32>
    %cst_23 = arith.constant dense<0.000000e+00> : vector<8x8xf32>
    %70 = tpu.matmul %68, %69, %cst_23 {dimension_numbers = #tpu.dot_dimension_numbers<[1], [0], [0], [1], [0, 0, 1, 1], [], []>} : vector<8x8xf32>, vector<8x8xf32>, vector<8x8xf32> -> vector<8x8xf32>
    %71 = vector.extract_strided_slice %14 {offsets = [0, 24], sizes = [8, 8], strides = [1, 1]} : vector<8x32xf32> to vector<8x8xf32>
    %72 = vector.extract_strided_slice %19 {offsets = [24, 0], sizes = [8, 8], strides = [1, 1]} : vector<32x8xf32> to vector<8x8xf32>
    %cst_24 = arith.constant dense<0.000000e+00> : vector<8x8xf32>
    %73 = tpu.matmul %71, %72, %cst_24 {dimension_numbers = #tpu.dot_dimension_numbers<[1], [0], [0], [1], [0, 0, 1, 1], [], []>} : vector<8x8xf32>, vector<8x8xf32>, vector<8x8xf32> -> vector<8x8xf32>
    %74 = vector.broadcast %5 : vector<1x8xf32> to vector<8x8xf32>
    %75 = arith.addf %73, %74 : vector<8x8xf32>
    %cst_25 = arith.constant dense<0xFF800000> : vector<8xf32>
    %76 = vector.multi_reduction <maximumf>, %75, %cst_25 [1] : vector<8x8xf32> to vector<8xf32>
    %77 = vector.shape_cast %76 : vector<8xf32> to vector<8x1xf32>
    %78 = vector.broadcast %77 : vector<8x1xf32> to vector<8x8xf32>
    %79 = arith.subf %75, %78 : vector<8x8xf32>
    %80 = math.exp %79 : vector<8x8xf32>
    %cst_26 = arith.constant dense<0.000000e+00> : vector<8xf32>
    %81 = vector.multi_reduction <add>, %80, %cst_26 [1] : vector<8x8xf32> to vector<8xf32>
    %82 = vector.shape_cast %81 : vector<8xf32> to vector<8x1xf32>
    %83 = tpu.reciprocal %82 : vector<8x1xf32> -> vector<8x1xf32>
    %84 = vector.broadcast %83 : vector<8x1xf32> to vector<8x8xf32>
    %85 = arith.mulf %80, %84 : vector<8x8xf32>
    %86 = vector.extract_strided_slice %18 {offsets = [0, 24], sizes = [8, 8], strides = [1, 1]} : vector<8x32xf32> to vector<8x8xf32>
    %cst_27 = arith.constant dense<0.000000e+00> : vector<8x8xf32>
    %87 = tpu.matmul %85, %86, %cst_27 {dimension_numbers = #tpu.dot_dimension_numbers<[1], [0], [0], [1], [0, 0, 1, 1], [], []>} : vector<8x8xf32>, vector<8x8xf32>, vector<8x8xf32> -> vector<8x8xf32>
    %88 = tpu.concatenate %36, %53, %70, %87 in 1 : vector<8x8xf32>, vector<8x8xf32>, vector<8x8xf32>, vector<8x8xf32> -> vector<8x32xf32>
    %c32 = arith.constant 32 : index
    %c0_28 = arith.constant 0 : index
    %89 = vector.load %arg5[%c32, %c0_28] : memref<336x128xf32, #tpu.memory_space<vmem>>, vector<32x128xf32>
    %90 = vector.extract_strided_slice %89 {offsets = [0, 0], sizes = [32, 32], strides = [1, 1]} : vector<32x128xf32> to vector<32x32xf32>
    %c161 = arith.constant 161 : index
    %c0_29 = arith.constant 0 : index
    %91 = vector.load %arg5[%c161, %c0_29] : memref<336x128xf32, #tpu.memory_space<vmem>>, vector<1x32xf32>
    %cst_30 = arith.constant dense<0.000000e+00> : vector<8x32xf32>
    %92 = tpu.matmul %88, %90, %cst_30 {dimension_numbers = #tpu.dot_dimension_numbers<[1], [0], [0], [1], [0, 0, 1, 1], [], []>} : vector<8x32xf32>, vector<32x32xf32>, vector<8x32xf32> -> vector<8x32xf32>
    %93 = vector.broadcast %91 : vector<1x32xf32> to vector<8x32xf32>
    %94 = arith.addf %92, %93 : vector<8x32xf32>
    %95 = arith.addf %1, %94 : vector<8x32xf32>
    %c164 = arith.constant 164 : index
    %c0_31 = arith.constant 0 : index
    %96 = vector.load %arg5[%c164, %c0_31] : memref<336x128xf32, #tpu.memory_space<vmem>>, vector<1x32xf32>
    %c165 = arith.constant 165 : index
    %c0_32 = arith.constant 0 : index
    %97 = vector.load %arg5[%c165, %c0_32] : memref<336x128xf32, #tpu.memory_space<vmem>>, vector<1x32xf32>
    %cst_33 = arith.constant dense<0.000000e+00> : vector<8xf32>
    %98 = vector.multi_reduction <add>, %95, %cst_33 [1] : vector<8x32xf32> to vector<8xf32>
    %99 = vector.shape_cast %98 : vector<8xf32> to vector<8x1xf32>
    %cst_34 = arith.constant 3.200000e+01 : f32
    %100 = vector.broadcast %cst_34 : f32 to vector<8x1xf32>
    %101 = arith.divf %99, %100 : vector<8x1xf32>
    %102 = vector.broadcast %101 : vector<8x1xf32> to vector<8x32xf32>
    %103 = arith.subf %95, %102 : vector<8x32xf32>
    %104 = arith.mulf %103, %103 : vector<8x32xf32>
    %cst_35 = arith.constant dense<0.000000e+00> : vector<8xf32>
    %105 = vector.multi_reduction <add>, %104, %cst_35 [1] : vector<8x32xf32> to vector<8xf32>
    %106 = vector.shape_cast %105 : vector<8xf32> to vector<8x1xf32>
    %cst_36 = arith.constant 3.200000e+01 : f32
    %107 = vector.broadcast %cst_36 : f32 to vector<8x1xf32>
    %108 = arith.divf %106, %107 : vector<8x1xf32>
    %cst_37 = arith.constant 9.99999974E-6 : f32
    %109 = vector.broadcast %cst_37 : f32 to vector<8x1xf32>
    %110 = arith.addf %108, %109 : vector<8x1xf32>
    %111 = math.rsqrt %110 : vector<8x1xf32>
    %112 = vector.broadcast %111 : vector<8x1xf32> to vector<8x32xf32>
    %113 = arith.mulf %103, %112 : vector<8x32xf32>
    %114 = vector.broadcast %96 : vector<1x32xf32> to vector<8x32xf32>
    %115 = arith.mulf %113, %114 : vector<8x32xf32>
    %116 = vector.broadcast %97 : vector<1x32xf32> to vector<8x32xf32>
    %117 = arith.addf %115, %116 : vector<8x32xf32>
    %c64 = arith.constant 64 : index
    %c0_38 = arith.constant 0 : index
    %118 = vector.load %arg5[%c64, %c0_38] : memref<336x128xf32, #tpu.memory_space<vmem>>, vector<32x128xf32>
    %119 = vector.extract_strided_slice %118 {offsets = [0, 0], sizes = [32, 64], strides = [1, 1]} : vector<32x128xf32> to vector<32x64xf32>
    %c162 = arith.constant 162 : index
    %c0_39 = arith.constant 0 : index
    %120 = vector.load %arg5[%c162, %c0_39] : memref<336x128xf32, #tpu.memory_space<vmem>>, vector<1x64xf32>
    %c96 = arith.constant 96 : index
    %c0_40 = arith.constant 0 : index
    %121 = vector.load %arg5[%c96, %c0_40] : memref<336x128xf32, #tpu.memory_space<vmem>>, vector<64x128xf32>
    %122 = vector.extract_strided_slice %121 {offsets = [0, 0], sizes = [64, 32], strides = [1, 1]} : vector<64x128xf32> to vector<64x32xf32>
    %c163 = arith.constant 163 : index
    %c0_41 = arith.constant 0 : index
    %123 = vector.load %arg5[%c163, %c0_41] : memref<336x128xf32, #tpu.memory_space<vmem>>, vector<1x32xf32>
    %cst_42 = arith.constant dense<0.000000e+00> : vector<8x64xf32>
    %124 = tpu.matmul %117, %119, %cst_42 {dimension_numbers = #tpu.dot_dimension_numbers<[1], [0], [0], [1], [0, 0, 1, 1], [], []>} : vector<8x32xf32>, vector<32x64xf32>, vector<8x64xf32> -> vector<8x64xf32>
    %125 = vector.broadcast %120 : vector<1x64xf32> to vector<8x64xf32>
    %126 = arith.addf %124, %125 : vector<8x64xf32>
    %cst_43 = arith.constant 0.000000e+00 : f32
    %127 = vector.broadcast %cst_43 : f32 to vector<8x64xf32>
    %128 = arith.maximumf %126, %127 : vector<8x64xf32>
    %cst_44 = arith.constant dense<0.000000e+00> : vector<8x32xf32>
    %129 = tpu.matmul %128, %122, %cst_44 {dimension_numbers = #tpu.dot_dimension_numbers<[1], [0], [0], [1], [0, 0, 1, 1], [], []>} : vector<8x64xf32>, vector<64x32xf32>, vector<8x32xf32> -> vector<8x32xf32>
    %130 = vector.broadcast %123 : vector<1x32xf32> to vector<8x32xf32>
    %131 = arith.addf %129, %130 : vector<8x32xf32>
    %132 = arith.addf %117, %131 : vector<8x32xf32>
    %c166 = arith.constant 166 : index
    %c0_45 = arith.constant 0 : index
    %133 = vector.load %arg5[%c166, %c0_45] : memref<336x128xf32, #tpu.memory_space<vmem>>, vector<1x32xf32>
    %c167 = arith.constant 167 : index
    %c0_46 = arith.constant 0 : index
    %134 = vector.load %arg5[%c167, %c0_46] : memref<336x128xf32, #tpu.memory_space<vmem>>, vector<1x32xf32>
    %cst_47 = arith.constant dense<0.000000e+00> : vector<8xf32>
    %135 = vector.multi_reduction <add>, %132, %cst_47 [1] : vector<8x32xf32> to vector<8xf32>
    %136 = vector.shape_cast %135 : vector<8xf32> to vector<8x1xf32>
    %cst_48 = arith.constant 3.200000e+01 : f32
    %137 = vector.broadcast %cst_48 : f32 to vector<8x1xf32>
    %138 = arith.divf %136, %137 : vector<8x1xf32>
    %139 = vector.broadcast %138 : vector<8x1xf32> to vector<8x32xf32>
    %140 = arith.subf %132, %139 : vector<8x32xf32>
    %141 = arith.mulf %140, %140 : vector<8x32xf32>
    %cst_49 = arith.constant dense<0.000000e+00> : vector<8xf32>
    %142 = vector.multi_reduction <add>, %141, %cst_49 [1] : vector<8x32xf32> to vector<8xf32>
    %143 = vector.shape_cast %142 : vector<8xf32> to vector<8x1xf32>
    %cst_50 = arith.constant 3.200000e+01 : f32
    %144 = vector.broadcast %cst_50 : f32 to vector<8x1xf32>
    %145 = arith.divf %143, %144 : vector<8x1xf32>
    %cst_51 = arith.constant 9.99999974E-6 : f32
    %146 = vector.broadcast %cst_51 : f32 to vector<8x1xf32>
    %147 = arith.addf %145, %146 : vector<8x1xf32>
    %148 = math.rsqrt %147 : vector<8x1xf32>
    %149 = vector.broadcast %148 : vector<8x1xf32> to vector<8x32xf32>
    %150 = arith.mulf %140, %149 : vector<8x32xf32>
    %151 = vector.broadcast %133 : vector<1x32xf32> to vector<8x32xf32>
    %152 = arith.mulf %150, %151 : vector<8x32xf32>
    %153 = vector.broadcast %134 : vector<1x32xf32> to vector<8x32xf32>
    %154 = arith.addf %152, %153 : vector<8x32xf32>
    %c168 = arith.constant 168 : index
    %c0_52 = arith.constant 0 : index
    %155 = vector.load %arg5[%c168, %c0_52] : memref<336x128xf32, #tpu.memory_space<vmem>>, vector<32x128xf32>
    %c328 = arith.constant 328 : index
    %c0_53 = arith.constant 0 : index
    %156 = vector.load %arg5[%c328, %c0_53] : memref<336x128xf32, #tpu.memory_space<vmem>>, vector<1x128xf32>
    %cst_54 = arith.constant dense<0.000000e+00> : vector<8x128xf32>
    %157 = tpu.matmul %154, %155, %cst_54 {dimension_numbers = #tpu.dot_dimension_numbers<[1], [0], [0], [1], [0, 0, 1, 1], [], []>} : vector<8x32xf32>, vector<32x128xf32>, vector<8x128xf32> -> vector<8x128xf32>
    %158 = vector.broadcast %156 : vector<1x128xf32> to vector<8x128xf32>
    %159 = arith.addf %157, %158 : vector<8x128xf32>
    %cst_55 = arith.constant dense<0.000000e+00> : vector<8x128xf32>
    %160 = tpu.matmul %3, %155, %cst_55 {dimension_numbers = #tpu.dot_dimension_numbers<[1], [0], [0], [1], [0, 0, 1, 1], [], []>} : vector<8x32xf32>, vector<32x128xf32>, vector<8x128xf32> -> vector<8x128xf32>
    %161 = vector.extract_strided_slice %159 {offsets = [0, 0], sizes = [8, 32], strides = [1, 1]} : vector<8x128xf32> to vector<8x32xf32>
    %162 = vector.extract_strided_slice %160 {offsets = [0, 0], sizes = [8, 32], strides = [1, 1]} : vector<8x128xf32> to vector<8x32xf32>
    %163 = arith.addf %161, %162 : vector<8x32xf32>
    %164 = vector.extract_strided_slice %159 {offsets = [0, 32], sizes = [8, 32], strides = [1, 1]} : vector<8x128xf32> to vector<8x32xf32>
    %165 = vector.extract_strided_slice %160 {offsets = [0, 32], sizes = [8, 32], strides = [1, 1]} : vector<8x128xf32> to vector<8x32xf32>
    %166 = arith.addf %164, %165 : vector<8x32xf32>
    %167 = vector.extract_strided_slice %159 {offsets = [0, 64], sizes = [8, 32], strides = [1, 1]} : vector<8x128xf32> to vector<8x32xf32>
    %168 = tpu.transpose %166, [1, 0] : vector<8x32xf32> -> vector<32x8xf32>
    %169 = vector.extract_strided_slice %163 {offsets = [0, 0], sizes = [8, 8], strides = [1, 1]} : vector<8x32xf32> to vector<8x8xf32>
    %170 = vector.extract_strided_slice %168 {offsets = [0, 0], sizes = [8, 8], strides = [1, 1]} : vector<32x8xf32> to vector<8x8xf32>
    %cst_56 = arith.constant dense<0.000000e+00> : vector<8x8xf32>
    %171 = tpu.matmul %169, %170, %cst_56 {dimension_numbers = #tpu.dot_dimension_numbers<[1], [0], [0], [1], [0, 0, 1, 1], [], []>} : vector<8x8xf32>, vector<8x8xf32>, vector<8x8xf32> -> vector<8x8xf32>
    %172 = vector.broadcast %5 : vector<1x8xf32> to vector<8x8xf32>
    %173 = arith.addf %171, %172 : vector<8x8xf32>
    %cst_57 = arith.constant dense<0xFF800000> : vector<8xf32>
    %174 = vector.multi_reduction <maximumf>, %173, %cst_57 [1] : vector<8x8xf32> to vector<8xf32>
    %175 = vector.shape_cast %174 : vector<8xf32> to vector<8x1xf32>
    %176 = vector.broadcast %175 : vector<8x1xf32> to vector<8x8xf32>
    %177 = arith.subf %173, %176 : vector<8x8xf32>
    %178 = math.exp %177 : vector<8x8xf32>
    %cst_58 = arith.constant dense<0.000000e+00> : vector<8xf32>
    %179 = vector.multi_reduction <add>, %178, %cst_58 [1] : vector<8x8xf32> to vector<8xf32>
    %180 = vector.shape_cast %179 : vector<8xf32> to vector<8x1xf32>
    %181 = tpu.reciprocal %180 : vector<8x1xf32> -> vector<8x1xf32>
    %182 = vector.broadcast %181 : vector<8x1xf32> to vector<8x8xf32>
    %183 = arith.mulf %178, %182 : vector<8x8xf32>
    %184 = vector.extract_strided_slice %167 {offsets = [0, 0], sizes = [8, 8], strides = [1, 1]} : vector<8x32xf32> to vector<8x8xf32>
    %cst_59 = arith.constant dense<0.000000e+00> : vector<8x8xf32>
    %185 = tpu.matmul %183, %184, %cst_59 {dimension_numbers = #tpu.dot_dimension_numbers<[1], [0], [0], [1], [0, 0, 1, 1], [], []>} : vector<8x8xf32>, vector<8x8xf32>, vector<8x8xf32> -> vector<8x8xf32>
    %186 = vector.extract_strided_slice %163 {offsets = [0, 8], sizes = [8, 8], strides = [1, 1]} : vector<8x32xf32> to vector<8x8xf32>
    %187 = vector.extract_strided_slice %168 {offsets = [8, 0], sizes = [8, 8], strides = [1, 1]} : vector<32x8xf32> to vector<8x8xf32>
    %cst_60 = arith.constant dense<0.000000e+00> : vector<8x8xf32>
    %188 = tpu.matmul %186, %187, %cst_60 {dimension_numbers = #tpu.dot_dimension_numbers<[1], [0], [0], [1], [0, 0, 1, 1], [], []>} : vector<8x8xf32>, vector<8x8xf32>, vector<8x8xf32> -> vector<8x8xf32>
    %189 = vector.broadcast %5 : vector<1x8xf32> to vector<8x8xf32>
    %190 = arith.addf %188, %189 : vector<8x8xf32>
    %cst_61 = arith.constant dense<0xFF800000> : vector<8xf32>
    %191 = vector.multi_reduction <maximumf>, %190, %cst_61 [1] : vector<8x8xf32> to vector<8xf32>
    %192 = vector.shape_cast %191 : vector<8xf32> to vector<8x1xf32>
    %193 = vector.broadcast %192 : vector<8x1xf32> to vector<8x8xf32>
    %194 = arith.subf %190, %193 : vector<8x8xf32>
    %195 = math.exp %194 : vector<8x8xf32>
    %cst_62 = arith.constant dense<0.000000e+00> : vector<8xf32>
    %196 = vector.multi_reduction <add>, %195, %cst_62 [1] : vector<8x8xf32> to vector<8xf32>
    %197 = vector.shape_cast %196 : vector<8xf32> to vector<8x1xf32>
    %198 = tpu.reciprocal %197 : vector<8x1xf32> -> vector<8x1xf32>
    %199 = vector.broadcast %198 : vector<8x1xf32> to vector<8x8xf32>
    %200 = arith.mulf %195, %199 : vector<8x8xf32>
    %201 = vector.extract_strided_slice %167 {offsets = [0, 8], sizes = [8, 8], strides = [1, 1]} : vector<8x32xf32> to vector<8x8xf32>
    %cst_63 = arith.constant dense<0.000000e+00> : vector<8x8xf32>
    %202 = tpu.matmul %200, %201, %cst_63 {dimension_numbers = #tpu.dot_dimension_numbers<[1], [0], [0], [1], [0, 0, 1, 1], [], []>} : vector<8x8xf32>, vector<8x8xf32>, vector<8x8xf32> -> vector<8x8xf32>
    %203 = vector.extract_strided_slice %163 {offsets = [0, 16], sizes = [8, 8], strides = [1, 1]} : vector<8x32xf32> to vector<8x8xf32>
    %204 = vector.extract_strided_slice %168 {offsets = [16, 0], sizes = [8, 8], strides = [1, 1]} : vector<32x8xf32> to vector<8x8xf32>
    %cst_64 = arith.constant dense<0.000000e+00> : vector<8x8xf32>
    %205 = tpu.matmul %203, %204, %cst_64 {dimension_numbers = #tpu.dot_dimension_numbers<[1], [0], [0], [1], [0, 0, 1, 1], [], []>} : vector<8x8xf32>, vector<8x8xf32>, vector<8x8xf32> -> vector<8x8xf32>
    %206 = vector.broadcast %5 : vector<1x8xf32> to vector<8x8xf32>
    %207 = arith.addf %205, %206 : vector<8x8xf32>
    %cst_65 = arith.constant dense<0xFF800000> : vector<8xf32>
    %208 = vector.multi_reduction <maximumf>, %207, %cst_65 [1] : vector<8x8xf32> to vector<8xf32>
    %209 = vector.shape_cast %208 : vector<8xf32> to vector<8x1xf32>
    %210 = vector.broadcast %209 : vector<8x1xf32> to vector<8x8xf32>
    %211 = arith.subf %207, %210 : vector<8x8xf32>
    %212 = math.exp %211 : vector<8x8xf32>
    %cst_66 = arith.constant dense<0.000000e+00> : vector<8xf32>
    %213 = vector.multi_reduction <add>, %212, %cst_66 [1] : vector<8x8xf32> to vector<8xf32>
    %214 = vector.shape_cast %213 : vector<8xf32> to vector<8x1xf32>
    %215 = tpu.reciprocal %214 : vector<8x1xf32> -> vector<8x1xf32>
    %216 = vector.broadcast %215 : vector<8x1xf32> to vector<8x8xf32>
    %217 = arith.mulf %212, %216 : vector<8x8xf32>
    %218 = vector.extract_strided_slice %167 {offsets = [0, 16], sizes = [8, 8], strides = [1, 1]} : vector<8x32xf32> to vector<8x8xf32>
    %cst_67 = arith.constant dense<0.000000e+00> : vector<8x8xf32>
    %219 = tpu.matmul %217, %218, %cst_67 {dimension_numbers = #tpu.dot_dimension_numbers<[1], [0], [0], [1], [0, 0, 1, 1], [], []>} : vector<8x8xf32>, vector<8x8xf32>, vector<8x8xf32> -> vector<8x8xf32>
    %220 = vector.extract_strided_slice %163 {offsets = [0, 24], sizes = [8, 8], strides = [1, 1]} : vector<8x32xf32> to vector<8x8xf32>
    %221 = vector.extract_strided_slice %168 {offsets = [24, 0], sizes = [8, 8], strides = [1, 1]} : vector<32x8xf32> to vector<8x8xf32>
    %cst_68 = arith.constant dense<0.000000e+00> : vector<8x8xf32>
    %222 = tpu.matmul %220, %221, %cst_68 {dimension_numbers = #tpu.dot_dimension_numbers<[1], [0], [0], [1], [0, 0, 1, 1], [], []>} : vector<8x8xf32>, vector<8x8xf32>, vector<8x8xf32> -> vector<8x8xf32>
    %223 = vector.broadcast %5 : vector<1x8xf32> to vector<8x8xf32>
    %224 = arith.addf %222, %223 : vector<8x8xf32>
    %cst_69 = arith.constant dense<0xFF800000> : vector<8xf32>
    %225 = vector.multi_reduction <maximumf>, %224, %cst_69 [1] : vector<8x8xf32> to vector<8xf32>
    %226 = vector.shape_cast %225 : vector<8xf32> to vector<8x1xf32>
    %227 = vector.broadcast %226 : vector<8x1xf32> to vector<8x8xf32>
    %228 = arith.subf %224, %227 : vector<8x8xf32>
    %229 = math.exp %228 : vector<8x8xf32>
    %cst_70 = arith.constant dense<0.000000e+00> : vector<8xf32>
    %230 = vector.multi_reduction <add>, %229, %cst_70 [1] : vector<8x8xf32> to vector<8xf32>
    %231 = vector.shape_cast %230 : vector<8xf32> to vector<8x1xf32>
    %232 = tpu.reciprocal %231 : vector<8x1xf32> -> vector<8x1xf32>
    %233 = vector.broadcast %232 : vector<8x1xf32> to vector<8x8xf32>
    %234 = arith.mulf %229, %233 : vector<8x8xf32>
    %235 = vector.extract_strided_slice %167 {offsets = [0, 24], sizes = [8, 8], strides = [1, 1]} : vector<8x32xf32> to vector<8x8xf32>
    %cst_71 = arith.constant dense<0.000000e+00> : vector<8x8xf32>
    %236 = tpu.matmul %234, %235, %cst_71 {dimension_numbers = #tpu.dot_dimension_numbers<[1], [0], [0], [1], [0, 0, 1, 1], [], []>} : vector<8x8xf32>, vector<8x8xf32>, vector<8x8xf32> -> vector<8x8xf32>
    %237 = tpu.concatenate %185, %202, %219, %236 in 1 : vector<8x8xf32>, vector<8x8xf32>, vector<8x8xf32>, vector<8x8xf32> -> vector<8x32xf32>
    %c200 = arith.constant 200 : index
    %c0_72 = arith.constant 0 : index
    %238 = vector.load %arg5[%c200, %c0_72] : memref<336x128xf32, #tpu.memory_space<vmem>>, vector<32x128xf32>
    %239 = vector.extract_strided_slice %238 {offsets = [0, 0], sizes = [32, 32], strides = [1, 1]} : vector<32x128xf32> to vector<32x32xf32>
    %c329 = arith.constant 329 : index
    %c0_73 = arith.constant 0 : index
    %240 = vector.load %arg5[%c329, %c0_73] : memref<336x128xf32, #tpu.memory_space<vmem>>, vector<1x32xf32>
    %cst_74 = arith.constant dense<0.000000e+00> : vector<8x32xf32>
    %241 = tpu.matmul %237, %239, %cst_74 {dimension_numbers = #tpu.dot_dimension_numbers<[1], [0], [0], [1], [0, 0, 1, 1], [], []>} : vector<8x32xf32>, vector<32x32xf32>, vector<8x32xf32> -> vector<8x32xf32>
    %242 = vector.broadcast %240 : vector<1x32xf32> to vector<8x32xf32>
    %243 = arith.addf %241, %242 : vector<8x32xf32>
    %244 = arith.addf %154, %243 : vector<8x32xf32>
    %c332 = arith.constant 332 : index
    %c0_75 = arith.constant 0 : index
    %245 = vector.load %arg5[%c332, %c0_75] : memref<336x128xf32, #tpu.memory_space<vmem>>, vector<1x32xf32>
    %c333 = arith.constant 333 : index
    %c0_76 = arith.constant 0 : index
    %246 = vector.load %arg5[%c333, %c0_76] : memref<336x128xf32, #tpu.memory_space<vmem>>, vector<1x32xf32>
    %cst_77 = arith.constant dense<0.000000e+00> : vector<8xf32>
    %247 = vector.multi_reduction <add>, %244, %cst_77 [1] : vector<8x32xf32> to vector<8xf32>
    %248 = vector.shape_cast %247 : vector<8xf32> to vector<8x1xf32>
    %cst_78 = arith.constant 3.200000e+01 : f32
    %249 = vector.broadcast %cst_78 : f32 to vector<8x1xf32>
    %250 = arith.divf %248, %249 : vector<8x1xf32>
    %251 = vector.broadcast %250 : vector<8x1xf32> to vector<8x32xf32>
    %252 = arith.subf %244, %251 : vector<8x32xf32>
    %253 = arith.mulf %252, %252 : vector<8x32xf32>
    %cst_79 = arith.constant dense<0.000000e+00> : vector<8xf32>
    %254 = vector.multi_reduction <add>, %253, %cst_79 [1] : vector<8x32xf32> to vector<8xf32>
    %255 = vector.shape_cast %254 : vector<8xf32> to vector<8x1xf32>
    %cst_80 = arith.constant 3.200000e+01 : f32
    %256 = vector.broadcast %cst_80 : f32 to vector<8x1xf32>
    %257 = arith.divf %255, %256 : vector<8x1xf32>
    %cst_81 = arith.constant 9.99999974E-6 : f32
    %258 = vector.broadcast %cst_81 : f32 to vector<8x1xf32>
    %259 = arith.addf %257, %258 : vector<8x1xf32>
    %260 = math.rsqrt %259 : vector<8x1xf32>
    %261 = vector.broadcast %260 : vector<8x1xf32> to vector<8x32xf32>
    %262 = arith.mulf %252, %261 : vector<8x32xf32>
    %263 = vector.broadcast %245 : vector<1x32xf32> to vector<8x32xf32>
    %264 = arith.mulf %262, %263 : vector<8x32xf32>
    %265 = vector.broadcast %246 : vector<1x32xf32> to vector<8x32xf32>
    %266 = arith.addf %264, %265 : vector<8x32xf32>
    %c232 = arith.constant 232 : index
    %c0_82 = arith.constant 0 : index
    %267 = vector.load %arg5[%c232, %c0_82] : memref<336x128xf32, #tpu.memory_space<vmem>>, vector<32x128xf32>
    %268 = vector.extract_strided_slice %267 {offsets = [0, 0], sizes = [32, 64], strides = [1, 1]} : vector<32x128xf32> to vector<32x64xf32>
    %c330 = arith.constant 330 : index
    %c0_83 = arith.constant 0 : index
    %269 = vector.load %arg5[%c330, %c0_83] : memref<336x128xf32, #tpu.memory_space<vmem>>, vector<1x64xf32>
    %c264 = arith.constant 264 : index
    %c0_84 = arith.constant 0 : index
    %270 = vector.load %arg5[%c264, %c0_84] : memref<336x128xf32, #tpu.memory_space<vmem>>, vector<64x128xf32>
    %271 = vector.extract_strided_slice %270 {offsets = [0, 0], sizes = [64, 32], strides = [1, 1]} : vector<64x128xf32> to vector<64x32xf32>
    %c331 = arith.constant 331 : index
    %c0_85 = arith.constant 0 : index
    %272 = vector.load %arg5[%c331, %c0_85] : memref<336x128xf32, #tpu.memory_space<vmem>>, vector<1x32xf32>
    %cst_86 = arith.constant dense<0.000000e+00> : vector<8x64xf32>
    %273 = tpu.matmul %266, %268, %cst_86 {dimension_numbers = #tpu.dot_dimension_numbers<[1], [0], [0], [1], [0, 0, 1, 1], [], []>} : vector<8x32xf32>, vector<32x64xf32>, vector<8x64xf32> -> vector<8x64xf32>
    %274 = vector.broadcast %269 : vector<1x64xf32> to vector<8x64xf32>
    %275 = arith.addf %273, %274 : vector<8x64xf32>
    %cst_87 = arith.constant 0.000000e+00 : f32
    %276 = vector.broadcast %cst_87 : f32 to vector<8x64xf32>
    %277 = arith.maximumf %275, %276 : vector<8x64xf32>
    %cst_88 = arith.constant dense<0.000000e+00> : vector<8x32xf32>
    %278 = tpu.matmul %277, %271, %cst_88 {dimension_numbers = #tpu.dot_dimension_numbers<[1], [0], [0], [1], [0, 0, 1, 1], [], []>} : vector<8x64xf32>, vector<64x32xf32>, vector<8x32xf32> -> vector<8x32xf32>
    %279 = vector.broadcast %272 : vector<1x32xf32> to vector<8x32xf32>
    %280 = arith.addf %278, %279 : vector<8x32xf32>
    %281 = arith.addf %266, %280 : vector<8x32xf32>
    %c334 = arith.constant 334 : index
    %c0_89 = arith.constant 0 : index
    %282 = vector.load %arg5[%c334, %c0_89] : memref<336x128xf32, #tpu.memory_space<vmem>>, vector<1x32xf32>
    %c335 = arith.constant 335 : index
    %c0_90 = arith.constant 0 : index
    %283 = vector.load %arg5[%c335, %c0_90] : memref<336x128xf32, #tpu.memory_space<vmem>>, vector<1x32xf32>
    %cst_91 = arith.constant dense<0.000000e+00> : vector<8xf32>
    %284 = vector.multi_reduction <add>, %281, %cst_91 [1] : vector<8x32xf32> to vector<8xf32>
    %285 = vector.shape_cast %284 : vector<8xf32> to vector<8x1xf32>
    %cst_92 = arith.constant 3.200000e+01 : f32
    %286 = vector.broadcast %cst_92 : f32 to vector<8x1xf32>
    %287 = arith.divf %285, %286 : vector<8x1xf32>
    %288 = vector.broadcast %287 : vector<8x1xf32> to vector<8x32xf32>
    %289 = arith.subf %281, %288 : vector<8x32xf32>
    %290 = arith.mulf %289, %289 : vector<8x32xf32>
    %cst_93 = arith.constant dense<0.000000e+00> : vector<8xf32>
    %291 = vector.multi_reduction <add>, %290, %cst_93 [1] : vector<8x32xf32> to vector<8xf32>
    %292 = vector.shape_cast %291 : vector<8xf32> to vector<8x1xf32>
    %cst_94 = arith.constant 3.200000e+01 : f32
    %293 = vector.broadcast %cst_94 : f32 to vector<8x1xf32>
    %294 = arith.divf %292, %293 : vector<8x1xf32>
    %cst_95 = arith.constant 9.99999974E-6 : f32
    %295 = vector.broadcast %cst_95 : f32 to vector<8x1xf32>
    %296 = arith.addf %294, %295 : vector<8x1xf32>
    %297 = math.rsqrt %296 : vector<8x1xf32>
    %298 = vector.broadcast %297 : vector<8x1xf32> to vector<8x32xf32>
    %299 = arith.mulf %289, %298 : vector<8x32xf32>
    %300 = vector.broadcast %282 : vector<1x32xf32> to vector<8x32xf32>
    %301 = arith.mulf %299, %300 : vector<8x32xf32>
    %302 = vector.broadcast %283 : vector<1x32xf32> to vector<8x32xf32>
    %303 = arith.addf %301, %302 : vector<8x32xf32>
    %304 = vector.shape_cast %303 : vector<8x32xf32> to vector<1x8x32xf32>
    %c0_96 = arith.constant 0 : index
    %c0_97 = arith.constant 0 : index
    %c0_98 = arith.constant 0 : index
    %305 = vector.load %arg7[%c0_96, %c0_97, %c0_98] : memref<1x8x32xf32, #tpu.memory_space<vmem>>, vector<1x8x32xf32>
    tpu.vector_store %arg7[%c0_96, %c0_97, %c0_98], %304 {strides = array<i32>} : memref<1x8x32xf32, #tpu.memory_space<vmem>>, vector<1x8x32xf32>,
    %c0_99 = arith.constant 0 : index
    %c0_100 = arith.constant 0 : index
    %306 = vector.load %arg3[%c0_99, %c0_100] : memref<8x32xf32, #tpu.memory_space<vmem>>, vector<8x32xf32>
    %cst_101 = arith.constant 0.000000e+00 : f32
    %307 = vector.broadcast %cst_101 : f32 to vector<8x32xf32>
    %c0_102 = arith.constant 0 : index
    %c0_103 = arith.constant 0 : index
    %308 = vector.load %arg6[%c0_102, %c0_103] : memref<480x128xf32, #tpu.memory_space<vmem>>, vector<32x128xf32>
    %c224 = arith.constant 224 : index
    %c0_104 = arith.constant 0 : index
    %309 = vector.load %arg6[%c224, %c0_104] : memref<480x128xf32, #tpu.memory_space<vmem>>, vector<1x128xf32>
    %cst_105 = arith.constant dense<0.000000e+00> : vector<8x128xf32>
    %310 = tpu.matmul %307, %308, %cst_105 {dimension_numbers = #tpu.dot_dimension_numbers<[1], [0], [0], [1], [0, 0, 1, 1], [], []>} : vector<8x32xf32>, vector<32x128xf32>, vector<8x128xf32> -> vector<8x128xf32>
    %311 = vector.broadcast %309 : vector<1x128xf32> to vector<8x128xf32>
    %312 = arith.addf %310, %311 : vector<8x128xf32>
    %cst_106 = arith.constant dense<0.000000e+00> : vector<8x128xf32>
    %313 = tpu.matmul %306, %308, %cst_106 {dimension_numbers = #tpu.dot_dimension_numbers<[1], [0], [0], [1], [0, 0, 1, 1], [], []>} : vector<8x32xf32>, vector<32x128xf32>, vector<8x128xf32> -> vector<8x128xf32>
    %314 = vector.extract_strided_slice %312 {offsets = [0, 0], sizes = [8, 32], strides = [1, 1]} : vector<8x128xf32> to vector<8x32xf32>
    %315 = vector.extract_strided_slice %313 {offsets = [0, 0], sizes = [8, 32], strides = [1, 1]} : vector<8x128xf32> to vector<8x32xf32>
    %316 = arith.addf %314, %315 : vector<8x32xf32>
    %317 = vector.extract_strided_slice %312 {offsets = [0, 32], sizes = [8, 32], strides = [1, 1]} : vector<8x128xf32> to vector<8x32xf32>
    %318 = vector.extract_strided_slice %313 {offsets = [0, 32], sizes = [8, 32], strides = [1, 1]} : vector<8x128xf32> to vector<8x32xf32>
    %319 = arith.addf %317, %318 : vector<8x32xf32>
    %320 = vector.extract_strided_slice %312 {offsets = [0, 64], sizes = [8, 32], strides = [1, 1]} : vector<8x128xf32> to vector<8x32xf32>
    %321 = tpu.transpose %319, [1, 0] : vector<8x32xf32> -> vector<32x8xf32>
    %322 = vector.extract_strided_slice %316 {offsets = [0, 0], sizes = [8, 8], strides = [1, 1]} : vector<8x32xf32> to vector<8x8xf32>
    %323 = vector.extract_strided_slice %321 {offsets = [0, 0], sizes = [8, 8], strides = [1, 1]} : vector<32x8xf32> to vector<8x8xf32>
    %cst_107 = arith.constant dense<0.000000e+00> : vector<8x8xf32>
    %324 = tpu.matmul %322, %323, %cst_107 {dimension_numbers = #tpu.dot_dimension_numbers<[1], [0], [0], [1], [0, 0, 1, 1], [], []>} : vector<8x8xf32>, vector<8x8xf32>, vector<8x8xf32> -> vector<8x8xf32>
    %cst_108 = arith.constant dense<0xFF800000> : vector<8xf32>
    %325 = vector.multi_reduction <maximumf>, %324, %cst_108 [1] : vector<8x8xf32> to vector<8xf32>
    %326 = vector.shape_cast %325 : vector<8xf32> to vector<8x1xf32>
    %327 = vector.broadcast %326 : vector<8x1xf32> to vector<8x8xf32>
    %328 = arith.subf %324, %327 : vector<8x8xf32>
    %329 = math.exp %328 : vector<8x8xf32>
    %cst_109 = arith.constant dense<0.000000e+00> : vector<8xf32>
    %330 = vector.multi_reduction <add>, %329, %cst_109 [1] : vector<8x8xf32> to vector<8xf32>
    %331 = vector.shape_cast %330 : vector<8xf32> to vector<8x1xf32>
    %332 = tpu.reciprocal %331 : vector<8x1xf32> -> vector<8x1xf32>
    %333 = vector.broadcast %332 : vector<8x1xf32> to vector<8x8xf32>
    %334 = arith.mulf %329, %333 : vector<8x8xf32>
    %335 = vector.extract_strided_slice %320 {offsets = [0, 0], sizes = [8, 8], strides = [1, 1]} : vector<8x32xf32> to vector<8x8xf32>
    %cst_110 = arith.constant dense<0.000000e+00> : vector<8x8xf32>
    %336 = tpu.matmul %334, %335, %cst_110 {dimension_numbers = #tpu.dot_dimension_numbers<[1], [0], [0], [1], [0, 0, 1, 1], [], []>} : vector<8x8xf32>, vector<8x8xf32>, vector<8x8xf32> -> vector<8x8xf32>
    %337 = vector.extract_strided_slice %316 {offsets = [0, 8], sizes = [8, 8], strides = [1, 1]} : vector<8x32xf32> to vector<8x8xf32>
    %338 = vector.extract_strided_slice %321 {offsets = [8, 0], sizes = [8, 8], strides = [1, 1]} : vector<32x8xf32> to vector<8x8xf32>
    %cst_111 = arith.constant dense<0.000000e+00> : vector<8x8xf32>
    %339 = tpu.matmul %337, %338, %cst_111 {dimension_numbers = #tpu.dot_dimension_numbers<[1], [0], [0], [1], [0, 0, 1, 1], [], []>} : vector<8x8xf32>, vector<8x8xf32>, vector<8x8xf32> -> vector<8x8xf32>
    %cst_112 = arith.constant dense<0xFF800000> : vector<8xf32>
    %340 = vector.multi_reduction <maximumf>, %339, %cst_112 [1] : vector<8x8xf32> to vector<8xf32>
    %341 = vector.shape_cast %340 : vector<8xf32> to vector<8x1xf32>
    %342 = vector.broadcast %341 : vector<8x1xf32> to vector<8x8xf32>
    %343 = arith.subf %339, %342 : vector<8x8xf32>
    %344 = math.exp %343 : vector<8x8xf32>
    %cst_113 = arith.constant dense<0.000000e+00> : vector<8xf32>
    %345 = vector.multi_reduction <add>, %344, %cst_113 [1] : vector<8x8xf32> to vector<8xf32>
    %346 = vector.shape_cast %345 : vector<8xf32> to vector<8x1xf32>
    %347 = tpu.reciprocal %346 : vector<8x1xf32> -> vector<8x1xf32>
    %348 = vector.broadcast %347 : vector<8x1xf32> to vector<8x8xf32>
    %349 = arith.mulf %344, %348 : vector<8x8xf32>
    %350 = vector.extract_strided_slice %320 {offsets = [0, 8], sizes = [8, 8], strides = [1, 1]} : vector<8x32xf32> to vector<8x8xf32>
    %cst_114 = arith.constant dense<0.000000e+00> : vector<8x8xf32>
    %351 = tpu.matmul %349, %350, %cst_114 {dimension_numbers = #tpu.dot_dimension_numbers<[1], [0], [0], [1], [0, 0, 1, 1], [], []>} : vector<8x8xf32>, vector<8x8xf32>, vector<8x8xf32> -> vector<8x8xf32>
    %352 = vector.extract_strided_slice %316 {offsets = [0, 16], sizes = [8, 8], strides = [1, 1]} : vector<8x32xf32> to vector<8x8xf32>
    %353 = vector.extract_strided_slice %321 {offsets = [16, 0], sizes = [8, 8], strides = [1, 1]} : vector<32x8xf32> to vector<8x8xf32>
    %cst_115 = arith.constant dense<0.000000e+00> : vector<8x8xf32>
    %354 = tpu.matmul %352, %353, %cst_115 {dimension_numbers = #tpu.dot_dimension_numbers<[1], [0], [0], [1], [0, 0, 1, 1], [], []>} : vector<8x8xf32>, vector<8x8xf32>, vector<8x8xf32> -> vector<8x8xf32>
    %cst_116 = arith.constant dense<0xFF800000> : vector<8xf32>
    %355 = vector.multi_reduction <maximumf>, %354, %cst_116 [1] : vector<8x8xf32> to vector<8xf32>
    %356 = vector.shape_cast %355 : vector<8xf32> to vector<8x1xf32>
    %357 = vector.broadcast %356 : vector<8x1xf32> to vector<8x8xf32>
    %358 = arith.subf %354, %357 : vector<8x8xf32>
    %359 = math.exp %358 : vector<8x8xf32>
    %cst_117 = arith.constant dense<0.000000e+00> : vector<8xf32>
    %360 = vector.multi_reduction <add>, %359, %cst_117 [1] : vector<8x8xf32> to vector<8xf32>
    %361 = vector.shape_cast %360 : vector<8xf32> to vector<8x1xf32>
    %362 = tpu.reciprocal %361 : vector<8x1xf32> -> vector<8x1xf32>
    %363 = vector.broadcast %362 : vector<8x1xf32> to vector<8x8xf32>
    %364 = arith.mulf %359, %363 : vector<8x8xf32>
    %365 = vector.extract_strided_slice %320 {offsets = [0, 16], sizes = [8, 8], strides = [1, 1]} : vector<8x32xf32> to vector<8x8xf32>
    %cst_118 = arith.constant dense<0.000000e+00> : vector<8x8xf32>
    %366 = tpu.matmul %364, %365, %cst_118 {dimension_numbers = #tpu.dot_dimension_numbers<[1], [0], [0], [1], [0, 0, 1, 1], [], []>} : vector<8x8xf32>, vector<8x8xf32>, vector<8x8xf32> -> vector<8x8xf32>
    %367 = vector.extract_strided_slice %316 {offsets = [0, 24], sizes = [8, 8], strides = [1, 1]} : vector<8x32xf32> to vector<8x8xf32>
    %368 = vector.extract_strided_slice %321 {offsets = [24, 0], sizes = [8, 8], strides = [1, 1]} : vector<32x8xf32> to vector<8x8xf32>
    %cst_119 = arith.constant dense<0.000000e+00> : vector<8x8xf32>
    %369 = tpu.matmul %367, %368, %cst_119 {dimension_numbers = #tpu.dot_dimension_numbers<[1], [0], [0], [1], [0, 0, 1, 1], [], []>} : vector<8x8xf32>, vector<8x8xf32>, vector<8x8xf32> -> vector<8x8xf32>
    %cst_120 = arith.constant dense<0xFF800000> : vector<8xf32>
    %370 = vector.multi_reduction <maximumf>, %369, %cst_120 [1] : vector<8x8xf32> to vector<8xf32>
    %371 = vector.shape_cast %370 : vector<8xf32> to vector<8x1xf32>
    %372 = vector.broadcast %371 : vector<8x1xf32> to vector<8x8xf32>
    %373 = arith.subf %369, %372 : vector<8x8xf32>
    %374 = math.exp %373 : vector<8x8xf32>
    %cst_121 = arith.constant dense<0.000000e+00> : vector<8xf32>
    %375 = vector.multi_reduction <add>, %374, %cst_121 [1] : vector<8x8xf32> to vector<8xf32>
    %376 = vector.shape_cast %375 : vector<8xf32> to vector<8x1xf32>
    %377 = tpu.reciprocal %376 : vector<8x1xf32> -> vector<8x1xf32>
    %378 = vector.broadcast %377 : vector<8x1xf32> to vector<8x8xf32>
    %379 = arith.mulf %374, %378 : vector<8x8xf32>
    %380 = vector.extract_strided_slice %320 {offsets = [0, 24], sizes = [8, 8], strides = [1, 1]} : vector<8x32xf32> to vector<8x8xf32>
    %cst_122 = arith.constant dense<0.000000e+00> : vector<8x8xf32>
    %381 = tpu.matmul %379, %380, %cst_122 {dimension_numbers = #tpu.dot_dimension_numbers<[1], [0], [0], [1], [0, 0, 1, 1], [], []>} : vector<8x8xf32>, vector<8x8xf32>, vector<8x8xf32> -> vector<8x8xf32>
    %382 = tpu.concatenate %336, %351, %366, %381 in 1 : vector<8x8xf32>, vector<8x8xf32>, vector<8x8xf32>, vector<8x8xf32> -> vector<8x32xf32>
    %c32_123 = arith.constant 32 : index
    %c0_124 = arith.constant 0 : index
    %383 = vector.load %arg6[%c32_123, %c0_124] : memref<480x128xf32, #tpu.memory_space<vmem>>, vector<32x128xf32>
    %384 = vector.extract_strided_slice %383 {offsets = [0, 0], sizes = [32, 32], strides = [1, 1]} : vector<32x128xf32> to vector<32x32xf32>
    %c225 = arith.constant 225 : index
    %c0_125 = arith.constant 0 : index
    %385 = vector.load %arg6[%c225, %c0_125] : memref<480x128xf32, #tpu.memory_space<vmem>>, vector<1x32xf32>
    %cst_126 = arith.constant dense<0.000000e+00> : vector<8x32xf32>
    %386 = tpu.matmul %382, %384, %cst_126 {dimension_numbers = #tpu.dot_dimension_numbers<[1], [0], [0], [1], [0, 0, 1, 1], [], []>} : vector<8x32xf32>, vector<32x32xf32>, vector<8x32xf32> -> vector<8x32xf32>
    %387 = vector.broadcast %385 : vector<1x32xf32> to vector<8x32xf32>
    %388 = arith.addf %386, %387 : vector<8x32xf32>
    %389 = arith.addf %307, %388 : vector<8x32xf32>
    %c230 = arith.constant 230 : index
    %c0_127 = arith.constant 0 : index
    %390 = vector.load %arg6[%c230, %c0_127] : memref<480x128xf32, #tpu.memory_space<vmem>>, vector<1x32xf32>
    %c231 = arith.constant 231 : index
    %c0_128 = arith.constant 0 : index
    %391 = vector.load %arg6[%c231, %c0_128] : memref<480x128xf32, #tpu.memory_space<vmem>>, vector<1x32xf32>
    %cst_129 = arith.constant dense<0.000000e+00> : vector<8xf32>
    %392 = vector.multi_reduction <add>, %389, %cst_129 [1] : vector<8x32xf32> to vector<8xf32>
    %393 = vector.shape_cast %392 : vector<8xf32> to vector<8x1xf32>
    %cst_130 = arith.constant 3.200000e+01 : f32
    %394 = vector.broadcast %cst_130 : f32 to vector<8x1xf32>
    %395 = arith.divf %393, %394 : vector<8x1xf32>
    %396 = vector.broadcast %395 : vector<8x1xf32> to vector<8x32xf32>
    %397 = arith.subf %389, %396 : vector<8x32xf32>
    %398 = arith.mulf %397, %397 : vector<8x32xf32>
    %cst_131 = arith.constant dense<0.000000e+00> : vector<8xf32>
    %399 = vector.multi_reduction <add>, %398, %cst_131 [1] : vector<8x32xf32> to vector<8xf32>
    %400 = vector.shape_cast %399 : vector<8xf32> to vector<8x1xf32>
    %cst_132 = arith.constant 3.200000e+01 : f32
    %401 = vector.broadcast %cst_132 : f32 to vector<8x1xf32>
    %402 = arith.divf %400, %401 : vector<8x1xf32>
    %cst_133 = arith.constant 9.99999974E-6 : f32
    %403 = vector.broadcast %cst_133 : f32 to vector<8x1xf32>
    %404 = arith.addf %402, %403 : vector<8x1xf32>
    %405 = math.rsqrt %404 : vector<8x1xf32>
    %406 = vector.broadcast %405 : vector<8x1xf32> to vector<8x32xf32>
    %407 = arith.mulf %397, %406 : vector<8x32xf32>
    %408 = vector.broadcast %390 : vector<1x32xf32> to vector<8x32xf32>
    %409 = arith.mulf %407, %408 : vector<8x32xf32>
    %410 = vector.broadcast %391 : vector<1x32xf32> to vector<8x32xf32>
    %411 = arith.addf %409, %410 : vector<8x32xf32>
    %c64_134 = arith.constant 64 : index
    %c0_135 = arith.constant 0 : index
    %412 = vector.load %arg6[%c64_134, %c0_135] : memref<480x128xf32, #tpu.memory_space<vmem>>, vector<32x128xf32>
    %c226 = arith.constant 226 : index
    %c0_136 = arith.constant 0 : index
    %413 = vector.load %arg6[%c226, %c0_136] : memref<480x128xf32, #tpu.memory_space<vmem>>, vector<1x128xf32>
    %414 = arith.addf %411, %306 : vector<8x32xf32>
    %415 = vector.extract_strided_slice %412 {offsets = [0, 0], sizes = [32, 32], strides = [1, 1]} : vector<32x128xf32> to vector<32x32xf32>
    %cst_137 = arith.constant dense<0.000000e+00> : vector<8x32xf32>
    %416 = tpu.matmul %414, %415, %cst_137 {dimension_numbers = #tpu.dot_dimension_numbers<[1], [0], [0], [1], [0, 0, 1, 1], [], []>} : vector<8x32xf32>, vector<32x32xf32>, vector<8x32xf32> -> vector<8x32xf32>
    %417 = vector.extract_strided_slice %413 {offsets = [0, 0], sizes = [1, 32], strides = [1, 1]} : vector<1x128xf32> to vector<1x32xf32>
    %418 = vector.broadcast %417 : vector<1x32xf32> to vector<8x32xf32>
    %419 = arith.addf %416, %418 : vector<8x32xf32>
    %420 = vector.extract_strided_slice %412 {offsets = [0, 32], sizes = [32, 64], strides = [1, 1]} : vector<32x128xf32> to vector<32x64xf32>
    %cst_138 = arith.constant dense<0.000000e+00> : vector<8x64xf32>
    %421 = tpu.matmul %303, %420, %cst_138 {dimension_numbers = #tpu.dot_dimension_numbers<[1], [0], [0], [1], [0, 0, 1, 1], [], []>} : vector<8x32xf32>, vector<32x64xf32>, vector<8x64xf32> -> vector<8x64xf32>
    %422 = vector.extract_strided_slice %413 {offsets = [0, 32], sizes = [1, 64], strides = [1, 1]} : vector<1x128xf32> to vector<1x64xf32>
    %423 = vector.broadcast %422 : vector<1x64xf32> to vector<8x64xf32>
    %424 = arith.addf %421, %423 : vector<8x64xf32>
    %425 = vector.extract_strided_slice %412 {offsets = [0, 32], sizes = [32, 64], strides = [1, 1]} : vector<32x128xf32> to vector<32x64xf32>
    %cst_139 = arith.constant dense<0.000000e+00> : vector<8x64xf32>
    %426 = tpu.matmul %3, %425, %cst_139 {dimension_numbers = #tpu.dot_dimension_numbers<[1], [0], [0], [1], [0, 0, 1, 1], [], []>} : vector<8x32xf32>, vector<32x64xf32>, vector<8x64xf32> -> vector<8x64xf32>
    %427 = vector.extract_strided_slice %424 {offsets = [0, 0], sizes = [8, 32], strides = [1, 1]} : vector<8x64xf32> to vector<8x32xf32>
    %428 = vector.extract_strided_slice %426 {offsets = [0, 0], sizes = [8, 32], strides = [1, 1]} : vector<8x64xf32> to vector<8x32xf32>
    %429 = arith.addf %427, %428 : vector<8x32xf32>
    %430 = vector.extract_strided_slice %424 {offsets = [0, 32], sizes = [8, 32], strides = [1, 1]} : vector<8x64xf32> to vector<8x32xf32>
    %431 = tpu.transpose %429, [1, 0] : vector<8x32xf32> -> vector<32x8xf32>
    %432 = vector.extract_strided_slice %419 {offsets = [0, 0], sizes = [8, 8], strides = [1, 1]} : vector<8x32xf32> to vector<8x8xf32>
    %433 = vector.extract_strided_slice %431 {offsets = [0, 0], sizes = [8, 8], strides = [1, 1]} : vector<32x8xf32> to vector<8x8xf32>
    %cst_140 = arith.constant dense<0.000000e+00> : vector<8x8xf32>
    %434 = tpu.matmul %432, %433, %cst_140 {dimension_numbers = #tpu.dot_dimension_numbers<[1], [0], [0], [1], [0, 0, 1, 1], [], []>} : vector<8x8xf32>, vector<8x8xf32>, vector<8x8xf32> -> vector<8x8xf32>
    %435 = vector.broadcast %5 : vector<1x8xf32> to vector<8x8xf32>
    %436 = arith.addf %434, %435 : vector<8x8xf32>
    %cst_141 = arith.constant dense<0xFF800000> : vector<8xf32>
    %437 = vector.multi_reduction <maximumf>, %436, %cst_141 [1] : vector<8x8xf32> to vector<8xf32>
    %438 = vector.shape_cast %437 : vector<8xf32> to vector<8x1xf32>
    %439 = vector.broadcast %438 : vector<8x1xf32> to vector<8x8xf32>
    %440 = arith.subf %436, %439 : vector<8x8xf32>
    %441 = math.exp %440 : vector<8x8xf32>
    %cst_142 = arith.constant dense<0.000000e+00> : vector<8xf32>
    %442 = vector.multi_reduction <add>, %441, %cst_142 [1] : vector<8x8xf32> to vector<8xf32>
    %443 = vector.shape_cast %442 : vector<8xf32> to vector<8x1xf32>
    %444 = tpu.reciprocal %443 : vector<8x1xf32> -> vector<8x1xf32>
    %445 = vector.broadcast %444 : vector<8x1xf32> to vector<8x8xf32>
    %446 = arith.mulf %441, %445 : vector<8x8xf32>
    %447 = vector.extract_strided_slice %430 {offsets = [0, 0], sizes = [8, 8], strides = [1, 1]} : vector<8x32xf32> to vector<8x8xf32>
    %cst_143 = arith.constant dense<0.000000e+00> : vector<8x8xf32>
    %448 = tpu.matmul %446, %447, %cst_143 {dimension_numbers = #tpu.dot_dimension_numbers<[1], [0], [0], [1], [0, 0, 1, 1], [], []>} : vector<8x8xf32>, vector<8x8xf32>, vector<8x8xf32> -> vector<8x8xf32>
    %449 = vector.extract_strided_slice %419 {offsets = [0, 8], sizes = [8, 8], strides = [1, 1]} : vector<8x32xf32> to vector<8x8xf32>
    %450 = vector.extract_strided_slice %431 {offsets = [8, 0], sizes = [8, 8], strides = [1, 1]} : vector<32x8xf32> to vector<8x8xf32>
    %cst_144 = arith.constant dense<0.000000e+00> : vector<8x8xf32>
    %451 = tpu.matmul %449, %450, %cst_144 {dimension_numbers = #tpu.dot_dimension_numbers<[1], [0], [0], [1], [0, 0, 1, 1], [], []>} : vector<8x8xf32>, vector<8x8xf32>, vector<8x8xf32> -> vector<8x8xf32>
    %452 = vector.broadcast %5 : vector<1x8xf32> to vector<8x8xf32>
    %453 = arith.addf %451, %452 : vector<8x8xf32>
    %cst_145 = arith.constant dense<0xFF800000> : vector<8xf32>
    %454 = vector.multi_reduction <maximumf>, %453, %cst_145 [1] : vector<8x8xf32> to vector<8xf32>
    %455 = vector.shape_cast %454 : vector<8xf32> to vector<8x1xf32>
    %456 = vector.broadcast %455 : vector<8x1xf32> to vector<8x8xf32>
    %457 = arith.subf %453, %456 : vector<8x8xf32>
    %458 = math.exp %457 : vector<8x8xf32>
    %cst_146 = arith.constant dense<0.000000e+00> : vector<8xf32>
    %459 = vector.multi_reduction <add>, %458, %cst_146 [1] : vector<8x8xf32> to vector<8xf32>
    %460 = vector.shape_cast %459 : vector<8xf32> to vector<8x1xf32>
    %461 = tpu.reciprocal %460 : vector<8x1xf32> -> vector<8x1xf32>
    %462 = vector.broadcast %461 : vector<8x1xf32> to vector<8x8xf32>
    %463 = arith.mulf %458, %462 : vector<8x8xf32>
    %464 = vector.extract_strided_slice %430 {offsets = [0, 8], sizes = [8, 8], strides = [1, 1]} : vector<8x32xf32> to vector<8x8xf32>
    %cst_147 = arith.constant dense<0.000000e+00> : vector<8x8xf32>
    %465 = tpu.matmul %463, %464, %cst_147 {dimension_numbers = #tpu.dot_dimension_numbers<[1], [0], [0], [1], [0, 0, 1, 1], [], []>} : vector<8x8xf32>, vector<8x8xf32>, vector<8x8xf32> -> vector<8x8xf32>
    %466 = vector.extract_strided_slice %419 {offsets = [0, 16], sizes = [8, 8], strides = [1, 1]} : vector<8x32xf32> to vector<8x8xf32>
    %467 = vector.extract_strided_slice %431 {offsets = [16, 0], sizes = [8, 8], strides = [1, 1]} : vector<32x8xf32> to vector<8x8xf32>
    %cst_148 = arith.constant dense<0.000000e+00> : vector<8x8xf32>
    %468 = tpu.matmul %466, %467, %cst_148 {dimension_numbers = #tpu.dot_dimension_numbers<[1], [0], [0], [1], [0, 0, 1, 1], [], []>} : vector<8x8xf32>, vector<8x8xf32>, vector<8x8xf32> -> vector<8x8xf32>
    %469 = vector.broadcast %5 : vector<1x8xf32> to vector<8x8xf32>
    %470 = arith.addf %468, %469 : vector<8x8xf32>
    %cst_149 = arith.constant dense<0xFF800000> : vector<8xf32>
    %471 = vector.multi_reduction <maximumf>, %470, %cst_149 [1] : vector<8x8xf32> to vector<8xf32>
    %472 = vector.shape_cast %471 : vector<8xf32> to vector<8x1xf32>
    %473 = vector.broadcast %472 : vector<8x1xf32> to vector<8x8xf32>
    %474 = arith.subf %470, %473 : vector<8x8xf32>
    %475 = math.exp %474 : vector<8x8xf32>
    %cst_150 = arith.constant dense<0.000000e+00> : vector<8xf32>
    %476 = vector.multi_reduction <add>, %475, %cst_150 [1] : vector<8x8xf32> to vector<8xf32>
    %477 = vector.shape_cast %476 : vector<8xf32> to vector<8x1xf32>
    %478 = tpu.reciprocal %477 : vector<8x1xf32> -> vector<8x1xf32>
    %479 = vector.broadcast %478 : vector<8x1xf32> to vector<8x8xf32>
    %480 = arith.mulf %475, %479 : vector<8x8xf32>
    %481 = vector.extract_strided_slice %430 {offsets = [0, 16], sizes = [8, 8], strides = [1, 1]} : vector<8x32xf32> to vector<8x8xf32>
    %cst_151 = arith.constant dense<0.000000e+00> : vector<8x8xf32>
    %482 = tpu.matmul %480, %481, %cst_151 {dimension_numbers = #tpu.dot_dimension_numbers<[1], [0], [0], [1], [0, 0, 1, 1], [], []>} : vector<8x8xf32>, vector<8x8xf32>, vector<8x8xf32> -> vector<8x8xf32>
    %483 = vector.extract_strided_slice %419 {offsets = [0, 24], sizes = [8, 8], strides = [1, 1]} : vector<8x32xf32> to vector<8x8xf32>
    %484 = vector.extract_strided_slice %431 {offsets = [24, 0], sizes = [8, 8], strides = [1, 1]} : vector<32x8xf32> to vector<8x8xf32>
    %cst_152 = arith.constant dense<0.000000e+00> : vector<8x8xf32>
    %485 = tpu.matmul %483, %484, %cst_152 {dimension_numbers = #tpu.dot_dimension_numbers<[1], [0], [0], [1], [0, 0, 1, 1], [], []>} : vector<8x8xf32>, vector<8x8xf32>, vector<8x8xf32> -> vector<8x8xf32>
    %486 = vector.broadcast %5 : vector<1x8xf32> to vector<8x8xf32>
    %487 = arith.addf %485, %486 : vector<8x8xf32>
    %cst_153 = arith.constant dense<0xFF800000> : vector<8xf32>
    %488 = vector.multi_reduction <maximumf>, %487, %cst_153 [1] : vector<8x8xf32> to vector<8xf32>
    %489 = vector.shape_cast %488 : vector<8xf32> to vector<8x1xf32>
    %490 = vector.broadcast %489 : vector<8x1xf32> to vector<8x8xf32>
    %491 = arith.subf %487, %490 : vector<8x8xf32>
    %492 = math.exp %491 : vector<8x8xf32>
    %cst_154 = arith.constant dense<0.000000e+00> : vector<8xf32>
    %493 = vector.multi_reduction <add>, %492, %cst_154 [1] : vector<8x8xf32> to vector<8xf32>
    %494 = vector.shape_cast %493 : vector<8xf32> to vector<8x1xf32>
    %495 = tpu.reciprocal %494 : vector<8x1xf32> -> vector<8x1xf32>
    %496 = vector.broadcast %495 : vector<8x1xf32> to vector<8x8xf32>
    %497 = arith.mulf %492, %496 : vector<8x8xf32>
    %498 = vector.extract_strided_slice %430 {offsets = [0, 24], sizes = [8, 8], strides = [1, 1]} : vector<8x32xf32> to vector<8x8xf32>
    %cst_155 = arith.constant dense<0.000000e+00> : vector<8x8xf32>
    %499 = tpu.matmul %497, %498, %cst_155 {dimension_numbers = #tpu.dot_dimension_numbers<[1], [0], [0], [1], [0, 0, 1, 1], [], []>} : vector<8x8xf32>, vector<8x8xf32>, vector<8x8xf32> -> vector<8x8xf32>
    %500 = tpu.concatenate %448, %465, %482, %499 in 1 : vector<8x8xf32>, vector<8x8xf32>, vector<8x8xf32>, vector<8x8xf32> -> vector<8x32xf32>
    %c96_156 = arith.constant 96 : index
    %c0_157 = arith.constant 0 : index
    %501 = vector.load %arg6[%c96_156, %c0_157] : memref<480x128xf32, #tpu.memory_space<vmem>>, vector<32x128xf32>
    %502 = vector.extract_strided_slice %501 {offsets = [0, 0], sizes = [32, 32], strides = [1, 1]} : vector<32x128xf32> to vector<32x32xf32>
    %c227 = arith.constant 227 : index
    %c0_158 = arith.constant 0 : index
    %503 = vector.load %arg6[%c227, %c0_158] : memref<480x128xf32, #tpu.memory_space<vmem>>, vector<1x32xf32>
    %cst_159 = arith.constant dense<0.000000e+00> : vector<8x32xf32>
    %504 = tpu.matmul %500, %502, %cst_159 {dimension_numbers = #tpu.dot_dimension_numbers<[1], [0], [0], [1], [0, 0, 1, 1], [], []>} : vector<8x32xf32>, vector<32x32xf32>, vector<8x32xf32> -> vector<8x32xf32>
    %505 = vector.broadcast %503 : vector<1x32xf32> to vector<8x32xf32>
    %506 = arith.addf %504, %505 : vector<8x32xf32>
    %507 = arith.addf %411, %506 : vector<8x32xf32>
    %c232_160 = arith.constant 232 : index
    %c0_161 = arith.constant 0 : index
    %508 = vector.load %arg6[%c232_160, %c0_161] : memref<480x128xf32, #tpu.memory_space<vmem>>, vector<1x32xf32>
    %c233 = arith.constant 233 : index
    %c0_162 = arith.constant 0 : index
    %509 = vector.load %arg6[%c233, %c0_162] : memref<480x128xf32, #tpu.memory_space<vmem>>, vector<1x32xf32>
    %cst_163 = arith.constant dense<0.000000e+00> : vector<8xf32>
    %510 = vector.multi_reduction <add>, %507, %cst_163 [1] : vector<8x32xf32> to vector<8xf32>
    %511 = vector.shape_cast %510 : vector<8xf32> to vector<8x1xf32>
    %cst_164 = arith.constant 3.200000e+01 : f32
    %512 = vector.broadcast %cst_164 : f32 to vector<8x1xf32>
    %513 = arith.divf %511, %512 : vector<8x1xf32>
    %514 = vector.broadcast %513 : vector<8x1xf32> to vector<8x32xf32>
    %515 = arith.subf %507, %514 : vector<8x32xf32>
    %516 = arith.mulf %515, %515 : vector<8x32xf32>
    %cst_165 = arith.constant dense<0.000000e+00> : vector<8xf32>
    %517 = vector.multi_reduction <add>, %516, %cst_165 [1] : vector<8x32xf32> to vector<8xf32>
    %518 = vector.shape_cast %517 : vector<8xf32> to vector<8x1xf32>
    %cst_166 = arith.constant 3.200000e+01 : f32
    %519 = vector.broadcast %cst_166 : f32 to vector<8x1xf32>
    %520 = arith.divf %518, %519 : vector<8x1xf32>
    %cst_167 = arith.constant 9.99999974E-6 : f32
    %521 = vector.broadcast %cst_167 : f32 to vector<8x1xf32>
    %522 = arith.addf %520, %521 : vector<8x1xf32>
    %523 = math.rsqrt %522 : vector<8x1xf32>
    %524 = vector.broadcast %523 : vector<8x1xf32> to vector<8x32xf32>
    %525 = arith.mulf %515, %524 : vector<8x32xf32>
    %526 = vector.broadcast %508 : vector<1x32xf32> to vector<8x32xf32>
    %527 = arith.mulf %525, %526 : vector<8x32xf32>
    %528 = vector.broadcast %509 : vector<1x32xf32> to vector<8x32xf32>
    %529 = arith.addf %527, %528 : vector<8x32xf32>
    %c128 = arith.constant 128 : index
    %c0_168 = arith.constant 0 : index
    %530 = vector.load %arg6[%c128, %c0_168] : memref<480x128xf32, #tpu.memory_space<vmem>>, vector<32x128xf32>
    %531 = vector.extract_strided_slice %530 {offsets = [0, 0], sizes = [32, 64], strides = [1, 1]} : vector<32x128xf32> to vector<32x64xf32>
    %c228 = arith.constant 228 : index
    %c0_169 = arith.constant 0 : index
    %532 = vector.load %arg6[%c228, %c0_169] : memref<480x128xf32, #tpu.memory_space<vmem>>, vector<1x64xf32>
    %c160_170 = arith.constant 160 : index
    %c0_171 = arith.constant 0 : index
    %533 = vector.load %arg6[%c160_170, %c0_171] : memref<480x128xf32, #tpu.memory_space<vmem>>, vector<64x128xf32>
    %534 = vector.extract_strided_slice %533 {offsets = [0, 0], sizes = [64, 32], strides = [1, 1]} : vector<64x128xf32> to vector<64x32xf32>
    %c229 = arith.constant 229 : index
    %c0_172 = arith.constant 0 : index
    %535 = vector.load %arg6[%c229, %c0_172] : memref<480x128xf32, #tpu.memory_space<vmem>>, vector<1x32xf32>
    %cst_173 = arith.constant dense<0.000000e+00> : vector<8x64xf32>
    %536 = tpu.matmul %529, %531, %cst_173 {dimension_numbers = #tpu.dot_dimension_numbers<[1], [0], [0], [1], [0, 0, 1, 1], [], []>} : vector<8x32xf32>, vector<32x64xf32>, vector<8x64xf32> -> vector<8x64xf32>
    %537 = vector.broadcast %532 : vector<1x64xf32> to vector<8x64xf32>
    %538 = arith.addf %536, %537 : vector<8x64xf32>
    %cst_174 = arith.constant 0.000000e+00 : f32
    %539 = vector.broadcast %cst_174 : f32 to vector<8x64xf32>
    %540 = arith.maximumf %538, %539 : vector<8x64xf32>
    %cst_175 = arith.constant dense<0.000000e+00> : vector<8x32xf32>
    %541 = tpu.matmul %540, %534, %cst_175 {dimension_numbers = #tpu.dot_dimension_numbers<[1], [0], [0], [1], [0, 0, 1, 1], [], []>} : vector<8x64xf32>, vector<64x32xf32>, vector<8x32xf32> -> vector<8x32xf32>
    %542 = vector.broadcast %535 : vector<1x32xf32> to vector<8x32xf32>
    %543 = arith.addf %541, %542 : vector<8x32xf32>
    %544 = arith.addf %529, %543 : vector<8x32xf32>
    %c234 = arith.constant 234 : index
    %c0_176 = arith.constant 0 : index
    %545 = vector.load %arg6[%c234, %c0_176] : memref<480x128xf32, #tpu.memory_space<vmem>>, vector<1x32xf32>
    %c235 = arith.constant 235 : index
    %c0_177 = arith.constant 0 : index
    %546 = vector.load %arg6[%c235, %c0_177] : memref<480x128xf32, #tpu.memory_space<vmem>>, vector<1x32xf32>
    %cst_178 = arith.constant dense<0.000000e+00> : vector<8xf32>
    %547 = vector.multi_reduction <add>, %544, %cst_178 [1] : vector<8x32xf32> to vector<8xf32>
    %548 = vector.shape_cast %547 : vector<8xf32> to vector<8x1xf32>
    %cst_179 = arith.constant 3.200000e+01 : f32
    %549 = vector.broadcast %cst_179 : f32 to vector<8x1xf32>
    %550 = arith.divf %548, %549 : vector<8x1xf32>
    %551 = vector.broadcast %550 : vector<8x1xf32> to vector<8x32xf32>
    %552 = arith.subf %544, %551 : vector<8x32xf32>
    %553 = arith.mulf %552, %552 : vector<8x32xf32>
    %cst_180 = arith.constant dense<0.000000e+00> : vector<8xf32>
    %554 = vector.multi_reduction <add>, %553, %cst_180 [1] : vector<8x32xf32> to vector<8xf32>
    %555 = vector.shape_cast %554 : vector<8xf32> to vector<8x1xf32>
    %cst_181 = arith.constant 3.200000e+01 : f32
    %556 = vector.broadcast %cst_181 : f32 to vector<8x1xf32>
    %557 = arith.divf %555, %556 : vector<8x1xf32>
    %cst_182 = arith.constant 9.99999974E-6 : f32
    %558 = vector.broadcast %cst_182 : f32 to vector<8x1xf32>
    %559 = arith.addf %557, %558 : vector<8x1xf32>
    %560 = math.rsqrt %559 : vector<8x1xf32>
    %561 = vector.broadcast %560 : vector<8x1xf32> to vector<8x32xf32>
    %562 = arith.mulf %552, %561 : vector<8x32xf32>
    %563 = vector.broadcast %545 : vector<1x32xf32> to vector<8x32xf32>
    %564 = arith.mulf %562, %563 : vector<8x32xf32>
    %565 = vector.broadcast %546 : vector<1x32xf32> to vector<8x32xf32>
    %566 = arith.addf %564, %565 : vector<8x32xf32>
    %c240 = arith.constant 240 : index
    %c0_183 = arith.constant 0 : index
    %567 = vector.load %arg6[%c240, %c0_183] : memref<480x128xf32, #tpu.memory_space<vmem>>, vector<32x128xf32>
    %c464 = arith.constant 464 : index
    %c0_184 = arith.constant 0 : index
    %568 = vector.load %arg6[%c464, %c0_184] : memref<480x128xf32, #tpu.memory_space<vmem>>, vector<1x128xf32>
    %cst_185 = arith.constant dense<0.000000e+00> : vector<8x128xf32>
    %569 = tpu.matmul %566, %567, %cst_185 {dimension_numbers = #tpu.dot_dimension_numbers<[1], [0], [0], [1], [0, 0, 1, 1], [], []>} : vector<8x32xf32>, vector<32x128xf32>, vector<8x128xf32> -> vector<8x128xf32>
    %570 = vector.broadcast %568 : vector<1x128xf32> to vector<8x128xf32>
    %571 = arith.addf %569, %570 : vector<8x128xf32>
    %cst_186 = arith.constant dense<0.000000e+00> : vector<8x128xf32>
    %572 = tpu.matmul %306, %567, %cst_186 {dimension_numbers = #tpu.dot_dimension_numbers<[1], [0], [0], [1], [0, 0, 1, 1], [], []>} : vector<8x32xf32>, vector<32x128xf32>, vector<8x128xf32> -> vector<8x128xf32>
    %573 = vector.extract_strided_slice %571 {offsets = [0, 0], sizes = [8, 32], strides = [1, 1]} : vector<8x128xf32> to vector<8x32xf32>
    %574 = vector.extract_strided_slice %572 {offsets = [0, 0], sizes = [8, 32], strides = [1, 1]} : vector<8x128xf32> to vector<8x32xf32>
    %575 = arith.addf %573, %574 : vector<8x32xf32>
    %576 = vector.extract_strided_slice %571 {offsets = [0, 32], sizes = [8, 32], strides = [1, 1]} : vector<8x128xf32> to vector<8x32xf32>
    %577 = vector.extract_strided_slice %572 {offsets = [0, 32], sizes = [8, 32], strides = [1, 1]} : vector<8x128xf32> to vector<8x32xf32>
    %578 = arith.addf %576, %577 : vector<8x32xf32>
    %579 = vector.extract_strided_slice %571 {offsets = [0, 64], sizes = [8, 32], strides = [1, 1]} : vector<8x128xf32> to vector<8x32xf32>
    %580 = tpu.transpose %578, [1, 0] : vector<8x32xf32> -> vector<32x8xf32>
    %581 = vector.extract_strided_slice %575 {offsets = [0, 0], sizes = [8, 8], strides = [1, 1]} : vector<8x32xf32> to vector<8x8xf32>
    %582 = vector.extract_strided_slice %580 {offsets = [0, 0], sizes = [8, 8], strides = [1, 1]} : vector<32x8xf32> to vector<8x8xf32>
    %cst_187 = arith.constant dense<0.000000e+00> : vector<8x8xf32>
    %583 = tpu.matmul %581, %582, %cst_187 {dimension_numbers = #tpu.dot_dimension_numbers<[1], [0], [0], [1], [0, 0, 1, 1], [], []>} : vector<8x8xf32>, vector<8x8xf32>, vector<8x8xf32> -> vector<8x8xf32>
    %cst_188 = arith.constant dense<0xFF800000> : vector<8xf32>
    %584 = vector.multi_reduction <maximumf>, %583, %cst_188 [1] : vector<8x8xf32> to vector<8xf32>
    %585 = vector.shape_cast %584 : vector<8xf32> to vector<8x1xf32>
    %586 = vector.broadcast %585 : vector<8x1xf32> to vector<8x8xf32>
    %587 = arith.subf %583, %586 : vector<8x8xf32>
    %588 = math.exp %587 : vector<8x8xf32>
    %cst_189 = arith.constant dense<0.000000e+00> : vector<8xf32>
    %589 = vector.multi_reduction <add>, %588, %cst_189 [1] : vector<8x8xf32> to vector<8xf32>
    %590 = vector.shape_cast %589 : vector<8xf32> to vector<8x1xf32>
    %591 = tpu.reciprocal %590 : vector<8x1xf32> -> vector<8x1xf32>
    %592 = vector.broadcast %591 : vector<8x1xf32> to vector<8x8xf32>
    %593 = arith.mulf %588, %592 : vector<8x8xf32>
    %594 = vector.extract_strided_slice %579 {offsets = [0, 0], sizes = [8, 8], strides = [1, 1]} : vector<8x32xf32> to vector<8x8xf32>
    %cst_190 = arith.constant dense<0.000000e+00> : vector<8x8xf32>
    %595 = tpu.matmul %593, %594, %cst_190 {dimension_numbers = #tpu.dot_dimension_numbers<[1], [0], [0], [1], [0, 0, 1, 1], [], []>} : vector<8x8xf32>, vector<8x8xf32>, vector<8x8xf32> -> vector<8x8xf32>
    %596 = vector.extract_strided_slice %575 {offsets = [0, 8], sizes = [8, 8], strides = [1, 1]} : vector<8x32xf32> to vector<8x8xf32>
    %597 = vector.extract_strided_slice %580 {offsets = [8, 0], sizes = [8, 8], strides = [1, 1]} : vector<32x8xf32> to vector<8x8xf32>
    %cst_191 = arith.constant dense<0.000000e+00> : vector<8x8xf32>
    %598 = tpu.matmul %596, %597, %cst_191 {dimension_numbers = #tpu.dot_dimension_numbers<[1], [0], [0], [1], [0, 0, 1, 1], [], []>} : vector<8x8xf32>, vector<8x8xf32>, vector<8x8xf32> -> vector<8x8xf32>
    %cst_192 = arith.constant dense<0xFF800000> : vector<8xf32>
    %599 = vector.multi_reduction <maximumf>, %598, %cst_192 [1] : vector<8x8xf32> to vector<8xf32>
    %600 = vector.shape_cast %599 : vector<8xf32> to vector<8x1xf32>
    %601 = vector.broadcast %600 : vector<8x1xf32> to vector<8x8xf32>
    %602 = arith.subf %598, %601 : vector<8x8xf32>
    %603 = math.exp %602 : vector<8x8xf32>
    %cst_193 = arith.constant dense<0.000000e+00> : vector<8xf32>
    %604 = vector.multi_reduction <add>, %603, %cst_193 [1] : vector<8x8xf32> to vector<8xf32>
    %605 = vector.shape_cast %604 : vector<8xf32> to vector<8x1xf32>
    %606 = tpu.reciprocal %605 : vector<8x1xf32> -> vector<8x1xf32>
    %607 = vector.broadcast %606 : vector<8x1xf32> to vector<8x8xf32>
    %608 = arith.mulf %603, %607 : vector<8x8xf32>
    %609 = vector.extract_strided_slice %579 {offsets = [0, 8], sizes = [8, 8], strides = [1, 1]} : vector<8x32xf32> to vector<8x8xf32>
    %cst_194 = arith.constant dense<0.000000e+00> : vector<8x8xf32>
    %610 = tpu.matmul %608, %609, %cst_194 {dimension_numbers = #tpu.dot_dimension_numbers<[1], [0], [0], [1], [0, 0, 1, 1], [], []>} : vector<8x8xf32>, vector<8x8xf32>, vector<8x8xf32> -> vector<8x8xf32>
    %611 = vector.extract_strided_slice %575 {offsets = [0, 16], sizes = [8, 8], strides = [1, 1]} : vector<8x32xf32> to vector<8x8xf32>
    %612 = vector.extract_strided_slice %580 {offsets = [16, 0], sizes = [8, 8], strides = [1, 1]} : vector<32x8xf32> to vector<8x8xf32>
    %cst_195 = arith.constant dense<0.000000e+00> : vector<8x8xf32>
    %613 = tpu.matmul %611, %612, %cst_195 {dimension_numbers = #tpu.dot_dimension_numbers<[1], [0], [0], [1], [0, 0, 1, 1], [], []>} : vector<8x8xf32>, vector<8x8xf32>, vector<8x8xf32> -> vector<8x8xf32>
    %cst_196 = arith.constant dense<0xFF800000> : vector<8xf32>
    %614 = vector.multi_reduction <maximumf>, %613, %cst_196 [1] : vector<8x8xf32> to vector<8xf32>
    %615 = vector.shape_cast %614 : vector<8xf32> to vector<8x1xf32>
    %616 = vector.broadcast %615 : vector<8x1xf32> to vector<8x8xf32>
    %617 = arith.subf %613, %616 : vector<8x8xf32>
    %618 = math.exp %617 : vector<8x8xf32>
    %cst_197 = arith.constant dense<0.000000e+00> : vector<8xf32>
    %619 = vector.multi_reduction <add>, %618, %cst_197 [1] : vector<8x8xf32> to vector<8xf32>
    %620 = vector.shape_cast %619 : vector<8xf32> to vector<8x1xf32>
    %621 = tpu.reciprocal %620 : vector<8x1xf32> -> vector<8x1xf32>
    %622 = vector.broadcast %621 : vector<8x1xf32> to vector<8x8xf32>
    %623 = arith.mulf %618, %622 : vector<8x8xf32>
    %624 = vector.extract_strided_slice %579 {offsets = [0, 16], sizes = [8, 8], strides = [1, 1]} : vector<8x32xf32> to vector<8x8xf32>
    %cst_198 = arith.constant dense<0.000000e+00> : vector<8x8xf32>
    %625 = tpu.matmul %623, %624, %cst_198 {dimension_numbers = #tpu.dot_dimension_numbers<[1], [0], [0], [1], [0, 0, 1, 1], [], []>} : vector<8x8xf32>, vector<8x8xf32>, vector<8x8xf32> -> vector<8x8xf32>
    %626 = vector.extract_strided_slice %575 {offsets = [0, 24], sizes = [8, 8], strides = [1, 1]} : vector<8x32xf32> to vector<8x8xf32>
    %627 = vector.extract_strided_slice %580 {offsets = [24, 0], sizes = [8, 8], strides = [1, 1]} : vector<32x8xf32> to vector<8x8xf32>
    %cst_199 = arith.constant dense<0.000000e+00> : vector<8x8xf32>
    %628 = tpu.matmul %626, %627, %cst_199 {dimension_numbers = #tpu.dot_dimension_numbers<[1], [0], [0], [1], [0, 0, 1, 1], [], []>} : vector<8x8xf32>, vector<8x8xf32>, vector<8x8xf32> -> vector<8x8xf32>
    %cst_200 = arith.constant dense<0xFF800000> : vector<8xf32>
    %629 = vector.multi_reduction <maximumf>, %628, %cst_200 [1] : vector<8x8xf32> to vector<8xf32>
    %630 = vector.shape_cast %629 : vector<8xf32> to vector<8x1xf32>
    %631 = vector.broadcast %630 : vector<8x1xf32> to vector<8x8xf32>
    %632 = arith.subf %628, %631 : vector<8x8xf32>
    %633 = math.exp %632 : vector<8x8xf32>
    %cst_201 = arith.constant dense<0.000000e+00> : vector<8xf32>
    %634 = vector.multi_reduction <add>, %633, %cst_201 [1] : vector<8x8xf32> to vector<8xf32>
    %635 = vector.shape_cast %634 : vector<8xf32> to vector<8x1xf32>
    %636 = tpu.reciprocal %635 : vector<8x1xf32> -> vector<8x1xf32>
    %637 = vector.broadcast %636 : vector<8x1xf32> to vector<8x8xf32>
    %638 = arith.mulf %633, %637 : vector<8x8xf32>
    %639 = vector.extract_strided_slice %579 {offsets = [0, 24], sizes = [8, 8], strides = [1, 1]} : vector<8x32xf32> to vector<8x8xf32>
    %cst_202 = arith.constant dense<0.000000e+00> : vector<8x8xf32>
    %640 = tpu.matmul %638, %639, %cst_202 {dimension_numbers = #tpu.dot_dimension_numbers<[1], [0], [0], [1], [0, 0, 1, 1], [], []>} : vector<8x8xf32>, vector<8x8xf32>, vector<8x8xf32> -> vector<8x8xf32>
    %641 = tpu.concatenate %595, %610, %625, %640 in 1 : vector<8x8xf32>, vector<8x8xf32>, vector<8x8xf32>, vector<8x8xf32> -> vector<8x32xf32>
    %c272 = arith.constant 272 : index
    %c0_203 = arith.constant 0 : index
    %642 = vector.load %arg6[%c272, %c0_203] : memref<480x128xf32, #tpu.memory_space<vmem>>, vector<32x128xf32>
    %643 = vector.extract_strided_slice %642 {offsets = [0, 0], sizes = [32, 32], strides = [1, 1]} : vector<32x128xf32> to vector<32x32xf32>
    %c465 = arith.constant 465 : index
    %c0_204 = arith.constant 0 : index
    %644 = vector.load %arg6[%c465, %c0_204] : memref<480x128xf32, #tpu.memory_space<vmem>>, vector<1x32xf32>
    %cst_205 = arith.constant dense<0.000000e+00> : vector<8x32xf32>
    %645 = tpu.matmul %641, %643, %cst_205 {dimension_numbers = #tpu.dot_dimension_numbers<[1], [0], [0], [1], [0, 0, 1, 1], [], []>} : vector<8x32xf32>, vector<32x32xf32>, vector<8x32xf32> -> vector<8x32xf32>
    %646 = vector.broadcast %644 : vector<1x32xf32> to vector<8x32xf32>
    %647 = arith.addf %645, %646 : vector<8x32xf32>
    %648 = arith.addf %566, %647 : vector<8x32xf32>
    %c470 = arith.constant 470 : index
    %c0_206 = arith.constant 0 : index
    %649 = vector.load %arg6[%c470, %c0_206] : memref<480x128xf32, #tpu.memory_space<vmem>>, vector<1x32xf32>
    %c471 = arith.constant 471 : index
    %c0_207 = arith.constant 0 : index
    %650 = vector.load %arg6[%c471, %c0_207] : memref<480x128xf32, #tpu.memory_space<vmem>>, vector<1x32xf32>
    %cst_208 = arith.constant dense<0.000000e+00> : vector<8xf32>
    %651 = vector.multi_reduction <add>, %648, %cst_208 [1] : vector<8x32xf32> to vector<8xf32>
    %652 = vector.shape_cast %651 : vector<8xf32> to vector<8x1xf32>
    %cst_209 = arith.constant 3.200000e+01 : f32
    %653 = vector.broadcast %cst_209 : f32 to vector<8x1xf32>
    %654 = arith.divf %652, %653 : vector<8x1xf32>
    %655 = vector.broadcast %654 : vector<8x1xf32> to vector<8x32xf32>
    %656 = arith.subf %648, %655 : vector<8x32xf32>
    %657 = arith.mulf %656, %656 : vector<8x32xf32>
    %cst_210 = arith.constant dense<0.000000e+00> : vector<8xf32>
    %658 = vector.multi_reduction <add>, %657, %cst_210 [1] : vector<8x32xf32> to vector<8xf32>
    %659 = vector.shape_cast %658 : vector<8xf32> to vector<8x1xf32>
    %cst_211 = arith.constant 3.200000e+01 : f32
    %660 = vector.broadcast %cst_211 : f32 to vector<8x1xf32>
    %661 = arith.divf %659, %660 : vector<8x1xf32>
    %cst_212 = arith.constant 9.99999974E-6 : f32
    %662 = vector.broadcast %cst_212 : f32 to vector<8x1xf32>
    %663 = arith.addf %661, %662 : vector<8x1xf32>
    %664 = math.rsqrt %663 : vector<8x1xf32>
    %665 = vector.broadcast %664 : vector<8x1xf32> to vector<8x32xf32>
    %666 = arith.mulf %656, %665 : vector<8x32xf32>
    %667 = vector.broadcast %649 : vector<1x32xf32> to vector<8x32xf32>
    %668 = arith.mulf %666, %667 : vector<8x32xf32>
    %669 = vector.broadcast %650 : vector<1x32xf32> to vector<8x32xf32>
    %670 = arith.addf %668, %669 : vector<8x32xf32>
    %c304 = arith.constant 304 : index
    %c0_213 = arith.constant 0 : index
    %671 = vector.load %arg6[%c304, %c0_213] : memref<480x128xf32, #tpu.memory_space<vmem>>, vector<32x128xf32>
    %c466 = arith.constant 466 : index
    %c0_214 = arith.constant 0 : index
    %672 = vector.load %arg6[%c466, %c0_214] : memref<480x128xf32, #tpu.memory_space<vmem>>, vector<1x128xf32>
    %673 = arith.addf %670, %306 : vector<8x32xf32>
    %674 = vector.extract_strided_slice %671 {offsets = [0, 0], sizes = [32, 32], strides = [1, 1]} : vector<32x128xf32> to vector<32x32xf32>
    %cst_215 = arith.constant dense<0.000000e+00> : vector<8x32xf32>
    %675 = tpu.matmul %673, %674, %cst_215 {dimension_numbers = #tpu.dot_dimension_numbers<[1], [0], [0], [1], [0, 0, 1, 1], [], []>} : vector<8x32xf32>, vector<32x32xf32>, vector<8x32xf32> -> vector<8x32xf32>
    %676 = vector.extract_strided_slice %672 {offsets = [0, 0], sizes = [1, 32], strides = [1, 1]} : vector<1x128xf32> to vector<1x32xf32>
    %677 = vector.broadcast %676 : vector<1x32xf32> to vector<8x32xf32>
    %678 = arith.addf %675, %677 : vector<8x32xf32>
    %679 = vector.extract_strided_slice %671 {offsets = [0, 32], sizes = [32, 64], strides = [1, 1]} : vector<32x128xf32> to vector<32x64xf32>
    %cst_216 = arith.constant dense<0.000000e+00> : vector<8x64xf32>
    %680 = tpu.matmul %303, %679, %cst_216 {dimension_numbers = #tpu.dot_dimension_numbers<[1], [0], [0], [1], [0, 0, 1, 1], [], []>} : vector<8x32xf32>, vector<32x64xf32>, vector<8x64xf32> -> vector<8x64xf32>
    %681 = vector.extract_strided_slice %672 {offsets = [0, 32], sizes = [1, 64], strides = [1, 1]} : vector<1x128xf32> to vector<1x64xf32>
    %682 = vector.broadcast %681 : vector<1x64xf32> to vector<8x64xf32>
    %683 = arith.addf %680, %682 : vector<8x64xf32>
    %684 = vector.extract_strided_slice %671 {offsets = [0, 32], sizes = [32, 64], strides = [1, 1]} : vector<32x128xf32> to vector<32x64xf32>
    %cst_217 = arith.constant dense<0.000000e+00> : vector<8x64xf32>
    %685 = tpu.matmul %3, %684, %cst_217 {dimension_numbers = #tpu.dot_dimension_numbers<[1], [0], [0], [1], [0, 0, 1, 1], [], []>} : vector<8x32xf32>, vector<32x64xf32>, vector<8x64xf32> -> vector<8x64xf32>
    %686 = vector.extract_strided_slice %683 {offsets = [0, 0], sizes = [8, 32], strides = [1, 1]} : vector<8x64xf32> to vector<8x32xf32>
    %687 = vector.extract_strided_slice %685 {offsets = [0, 0], sizes = [8, 32], strides = [1, 1]} : vector<8x64xf32> to vector<8x32xf32>
    %688 = arith.addf %686, %687 : vector<8x32xf32>
    %689 = vector.extract_strided_slice %683 {offsets = [0, 32], sizes = [8, 32], strides = [1, 1]} : vector<8x64xf32> to vector<8x32xf32>
    %690 = tpu.transpose %688, [1, 0] : vector<8x32xf32> -> vector<32x8xf32>
    %691 = vector.extract_strided_slice %678 {offsets = [0, 0], sizes = [8, 8], strides = [1, 1]} : vector<8x32xf32> to vector<8x8xf32>
    %692 = vector.extract_strided_slice %690 {offsets = [0, 0], sizes = [8, 8], strides = [1, 1]} : vector<32x8xf32> to vector<8x8xf32>
    %cst_218 = arith.constant dense<0.000000e+00> : vector<8x8xf32>
    %693 = tpu.matmul %691, %692, %cst_218 {dimension_numbers = #tpu.dot_dimension_numbers<[1], [0], [0], [1], [0, 0, 1, 1], [], []>} : vector<8x8xf32>, vector<8x8xf32>, vector<8x8xf32> -> vector<8x8xf32>
    %694 = vector.broadcast %5 : vector<1x8xf32> to vector<8x8xf32>
    %695 = arith.addf %693, %694 : vector<8x8xf32>
    %cst_219 = arith.constant dense<0xFF800000> : vector<8xf32>
    %696 = vector.multi_reduction <maximumf>, %695, %cst_219 [1] : vector<8x8xf32> to vector<8xf32>
    %697 = vector.shape_cast %696 : vector<8xf32> to vector<8x1xf32>
    %698 = vector.broadcast %697 : vector<8x1xf32> to vector<8x8xf32>
    %699 = arith.subf %695, %698 : vector<8x8xf32>
    %700 = math.exp %699 : vector<8x8xf32>
    %cst_220 = arith.constant dense<0.000000e+00> : vector<8xf32>
    %701 = vector.multi_reduction <add>, %700, %cst_220 [1] : vector<8x8xf32> to vector<8xf32>
    %702 = vector.shape_cast %701 : vector<8xf32> to vector<8x1xf32>
    %703 = tpu.reciprocal %702 : vector<8x1xf32> -> vector<8x1xf32>
    %704 = vector.broadcast %703 : vector<8x1xf32> to vector<8x8xf32>
    %705 = arith.mulf %700, %704 : vector<8x8xf32>
    %706 = vector.extract_strided_slice %689 {offsets = [0, 0], sizes = [8, 8], strides = [1, 1]} : vector<8x32xf32> to vector<8x8xf32>
    %cst_221 = arith.constant dense<0.000000e+00> : vector<8x8xf32>
    %707 = tpu.matmul %705, %706, %cst_221 {dimension_numbers = #tpu.dot_dimension_numbers<[1], [0], [0], [1], [0, 0, 1, 1], [], []>} : vector<8x8xf32>, vector<8x8xf32>, vector<8x8xf32> -> vector<8x8xf32>
    %708 = vector.extract_strided_slice %678 {offsets = [0, 8], sizes = [8, 8], strides = [1, 1]} : vector<8x32xf32> to vector<8x8xf32>
    %709 = vector.extract_strided_slice %690 {offsets = [8, 0], sizes = [8, 8], strides = [1, 1]} : vector<32x8xf32> to vector<8x8xf32>
    %cst_222 = arith.constant dense<0.000000e+00> : vector<8x8xf32>
    %710 = tpu.matmul %708, %709, %cst_222 {dimension_numbers = #tpu.dot_dimension_numbers<[1], [0], [0], [1], [0, 0, 1, 1], [], []>} : vector<8x8xf32>, vector<8x8xf32>, vector<8x8xf32> -> vector<8x8xf32>
    %711 = vector.broadcast %5 : vector<1x8xf32> to vector<8x8xf32>
    %712 = arith.addf %710, %711 : vector<8x8xf32>
    %cst_223 = arith.constant dense<0xFF800000> : vector<8xf32>
    %713 = vector.multi_reduction <maximumf>, %712, %cst_223 [1] : vector<8x8xf32> to vector<8xf32>
    %714 = vector.shape_cast %713 : vector<8xf32> to vector<8x1xf32>
    %715 = vector.broadcast %714 : vector<8x1xf32> to vector<8x8xf32>
    %716 = arith.subf %712, %715 : vector<8x8xf32>
    %717 = math.exp %716 : vector<8x8xf32>
    %cst_224 = arith.constant dense<0.000000e+00> : vector<8xf32>
    %718 = vector.multi_reduction <add>, %717, %cst_224 [1] : vector<8x8xf32> to vector<8xf32>
    %719 = vector.shape_cast %718 : vector<8xf32> to vector<8x1xf32>
    %720 = tpu.reciprocal %719 : vector<8x1xf32> -> vector<8x1xf32>
    %721 = vector.broadcast %720 : vector<8x1xf32> to vector<8x8xf32>
    %722 = arith.mulf %717, %721 : vector<8x8xf32>
    %723 = vector.extract_strided_slice %689 {offsets = [0, 8], sizes = [8, 8], strides = [1, 1]} : vector<8x32xf32> to vector<8x8xf32>
    %cst_225 = arith.constant dense<0.000000e+00> : vector<8x8xf32>
    %724 = tpu.matmul %722, %723, %cst_225 {dimension_numbers = #tpu.dot_dimension_numbers<[1], [0], [0], [1], [0, 0, 1, 1], [], []>} : vector<8x8xf32>, vector<8x8xf32>, vector<8x8xf32> -> vector<8x8xf32>
    %725 = vector.extract_strided_slice %678 {offsets = [0, 16], sizes = [8, 8], strides = [1, 1]} : vector<8x32xf32> to vector<8x8xf32>
    %726 = vector.extract_strided_slice %690 {offsets = [16, 0], sizes = [8, 8], strides = [1, 1]} : vector<32x8xf32> to vector<8x8xf32>
    %cst_226 = arith.constant dense<0.000000e+00> : vector<8x8xf32>
    %727 = tpu.matmul %725, %726, %cst_226 {dimension_numbers = #tpu.dot_dimension_numbers<[1], [0], [0], [1], [0, 0, 1, 1], [], []>} : vector<8x8xf32>, vector<8x8xf32>, vector<8x8xf32> -> vector<8x8xf32>
    %728 = vector.broadcast %5 : vector<1x8xf32> to vector<8x8xf32>
    %729 = arith.addf %727, %728 : vector<8x8xf32>
    %cst_227 = arith.constant dense<0xFF800000> : vector<8xf32>
    %730 = vector.multi_reduction <maximumf>, %729, %cst_227 [1] : vector<8x8xf32> to vector<8xf32>
    %731 = vector.shape_cast %730 : vector<8xf32> to vector<8x1xf32>
    %732 = vector.broadcast %731 : vector<8x1xf32> to vector<8x8xf32>
    %733 = arith.subf %729, %732 : vector<8x8xf32>
    %734 = math.exp %733 : vector<8x8xf32>
    %cst_228 = arith.constant dense<0.000000e+00> : vector<8xf32>
    %735 = vector.multi_reduction <add>, %734, %cst_228 [1] : vector<8x8xf32> to vector<8xf32>
    %736 = vector.shape_cast %735 : vector<8xf32> to vector<8x1xf32>
    %737 = tpu.reciprocal %736 : vector<8x1xf32> -> vector<8x1xf32>
    %738 = vector.broadcast %737 : vector<8x1xf32> to vector<8x8xf32>
    %739 = arith.mulf %734, %738 : vector<8x8xf32>
    %740 = vector.extract_strided_slice %689 {offsets = [0, 16], sizes = [8, 8], strides = [1, 1]} : vector<8x32xf32> to vector<8x8xf32>
    %cst_229 = arith.constant dense<0.000000e+00> : vector<8x8xf32>
    %741 = tpu.matmul %739, %740, %cst_229 {dimension_numbers = #tpu.dot_dimension_numbers<[1], [0], [0], [1], [0, 0, 1, 1], [], []>} : vector<8x8xf32>, vector<8x8xf32>, vector<8x8xf32> -> vector<8x8xf32>
    %742 = vector.extract_strided_slice %678 {offsets = [0, 24], sizes = [8, 8], strides = [1, 1]} : vector<8x32xf32> to vector<8x8xf32>
    %743 = vector.extract_strided_slice %690 {offsets = [24, 0], sizes = [8, 8], strides = [1, 1]} : vector<32x8xf32> to vector<8x8xf32>
    %cst_230 = arith.constant dense<0.000000e+00> : vector<8x8xf32>
    %744 = tpu.matmul %742, %743, %cst_230 {dimension_numbers = #tpu.dot_dimension_numbers<[1], [0], [0], [1], [0, 0, 1, 1], [], []>} : vector<8x8xf32>, vector<8x8xf32>, vector<8x8xf32> -> vector<8x8xf32>
    %745 = vector.broadcast %5 : vector<1x8xf32> to vector<8x8xf32>
    %746 = arith.addf %744, %745 : vector<8x8xf32>
    %cst_231 = arith.constant dense<0xFF800000> : vector<8xf32>
    %747 = vector.multi_reduction <maximumf>, %746, %cst_231 [1] : vector<8x8xf32> to vector<8xf32>
    %748 = vector.shape_cast %747 : vector<8xf32> to vector<8x1xf32>
    %749 = vector.broadcast %748 : vector<8x1xf32> to vector<8x8xf32>
    %750 = arith.subf %746, %749 : vector<8x8xf32>
    %751 = math.exp %750 : vector<8x8xf32>
    %cst_232 = arith.constant dense<0.000000e+00> : vector<8xf32>
    %752 = vector.multi_reduction <add>, %751, %cst_232 [1] : vector<8x8xf32> to vector<8xf32>
    %753 = vector.shape_cast %752 : vector<8xf32> to vector<8x1xf32>
    %754 = tpu.reciprocal %753 : vector<8x1xf32> -> vector<8x1xf32>
    %755 = vector.broadcast %754 : vector<8x1xf32> to vector<8x8xf32>
    %756 = arith.mulf %751, %755 : vector<8x8xf32>
    %757 = vector.extract_strided_slice %689 {offsets = [0, 24], sizes = [8, 8], strides = [1, 1]} : vector<8x32xf32> to vector<8x8xf32>
    %cst_233 = arith.constant dense<0.000000e+00> : vector<8x8xf32>
    %758 = tpu.matmul %756, %757, %cst_233 {dimension_numbers = #tpu.dot_dimension_numbers<[1], [0], [0], [1], [0, 0, 1, 1], [], []>} : vector<8x8xf32>, vector<8x8xf32>, vector<8x8xf32> -> vector<8x8xf32>
    %759 = tpu.concatenate %707, %724, %741, %758 in 1 : vector<8x8xf32>, vector<8x8xf32>, vector<8x8xf32>, vector<8x8xf32> -> vector<8x32xf32>
    %c336 = arith.constant 336 : index
    %c0_234 = arith.constant 0 : index
    %760 = vector.load %arg6[%c336, %c0_234] : memref<480x128xf32, #tpu.memory_space<vmem>>, vector<32x128xf32>
    %761 = vector.extract_strided_slice %760 {offsets = [0, 0], sizes = [32, 32], strides = [1, 1]} : vector<32x128xf32> to vector<32x32xf32>
    %c467 = arith.constant 467 : index
    %c0_235 = arith.constant 0 : index
    %762 = vector.load %arg6[%c467, %c0_235] : memref<480x128xf32, #tpu.memory_space<vmem>>, vector<1x32xf32>
    %cst_236 = arith.constant dense<0.000000e+00> : vector<8x32xf32>
    %763 = tpu.matmul %759, %761, %cst_236 {dimension_numbers = #tpu.dot_dimension_numbers<[1], [0], [0], [1], [0, 0, 1, 1], [], []>} : vector<8x32xf32>, vector<32x32xf32>, vector<8x32xf32> -> vector<8x32xf32>
    %764 = vector.broadcast %762 : vector<1x32xf32> to vector<8x32xf32>
    %765 = arith.addf %763, %764 : vector<8x32xf32>
    %766 = arith.addf %670, %765 : vector<8x32xf32>
    %c472 = arith.constant 472 : index
    %c0_237 = arith.constant 0 : index
    %767 = vector.load %arg6[%c472, %c0_237] : memref<480x128xf32, #tpu.memory_space<vmem>>, vector<1x32xf32>
    %c473 = arith.constant 473 : index
    %c0_238 = arith.constant 0 : index
    %768 = vector.load %arg6[%c473, %c0_238] : memref<480x128xf32, #tpu.memory_space<vmem>>, vector<1x32xf32>
    %cst_239 = arith.constant dense<0.000000e+00> : vector<8xf32>
    %769 = vector.multi_reduction <add>, %766, %cst_239 [1] : vector<8x32xf32> to vector<8xf32>
    %770 = vector.shape_cast %769 : vector<8xf32> to vector<8x1xf32>
    %cst_240 = arith.constant 3.200000e+01 : f32
    %771 = vector.broadcast %cst_240 : f32 to vector<8x1xf32>
    %772 = arith.divf %770, %771 : vector<8x1xf32>
    %773 = vector.broadcast %772 : vector<8x1xf32> to vector<8x32xf32>
    %774 = arith.subf %766, %773 : vector<8x32xf32>
    %775 = arith.mulf %774, %774 : vector<8x32xf32>
    %cst_241 = arith.constant dense<0.000000e+00> : vector<8xf32>
    %776 = vector.multi_reduction <add>, %775, %cst_241 [1] : vector<8x32xf32> to vector<8xf32>
    %777 = vector.shape_cast %776 : vector<8xf32> to vector<8x1xf32>
    %cst_242 = arith.constant 3.200000e+01 : f32
    %778 = vector.broadcast %cst_242 : f32 to vector<8x1xf32>
    %779 = arith.divf %777, %778 : vector<8x1xf32>
    %cst_243 = arith.constant 9.99999974E-6 : f32
    %780 = vector.broadcast %cst_243 : f32 to vector<8x1xf32>
    %781 = arith.addf %779, %780 : vector<8x1xf32>
    %782 = math.rsqrt %781 : vector<8x1xf32>
    %783 = vector.broadcast %782 : vector<8x1xf32> to vector<8x32xf32>
    %784 = arith.mulf %774, %783 : vector<8x32xf32>
    %785 = vector.broadcast %767 : vector<1x32xf32> to vector<8x32xf32>
    %786 = arith.mulf %784, %785 : vector<8x32xf32>
    %787 = vector.broadcast %768 : vector<1x32xf32> to vector<8x32xf32>
    %788 = arith.addf %786, %787 : vector<8x32xf32>
    %c368 = arith.constant 368 : index
    %c0_244 = arith.constant 0 : index
    %789 = vector.load %arg6[%c368, %c0_244] : memref<480x128xf32, #tpu.memory_space<vmem>>, vector<32x128xf32>
    %790 = vector.extract_strided_slice %789 {offsets = [0, 0], sizes = [32, 64], strides = [1, 1]} : vector<32x128xf32> to vector<32x64xf32>
    %c468 = arith.constant 468 : index
    %c0_245 = arith.constant 0 : index
    %791 = vector.load %arg6[%c468, %c0_245] : memref<480x128xf32, #tpu.memory_space<vmem>>, vector<1x64xf32>
    %c400 = arith.constant 400 : index
    %c0_246 = arith.constant 0 : index
    %792 = vector.load %arg6[%c400, %c0_246] : memref<480x128xf32, #tpu.memory_space<vmem>>, vector<64x128xf32>
    %793 = vector.extract_strided_slice %792 {offsets = [0, 0], sizes = [64, 32], strides = [1, 1]} : vector<64x128xf32> to vector<64x32xf32>
    %c469 = arith.constant 469 : index
    %c0_247 = arith.constant 0 : index
    %794 = vector.load %arg6[%c469, %c0_247] : memref<480x128xf32, #tpu.memory_space<vmem>>, vector<1x32xf32>
    %cst_248 = arith.constant dense<0.000000e+00> : vector<8x64xf32>
    %795 = tpu.matmul %788, %790, %cst_248 {dimension_numbers = #tpu.dot_dimension_numbers<[1], [0], [0], [1], [0, 0, 1, 1], [], []>} : vector<8x32xf32>, vector<32x64xf32>, vector<8x64xf32> -> vector<8x64xf32>
    %796 = vector.broadcast %791 : vector<1x64xf32> to vector<8x64xf32>
    %797 = arith.addf %795, %796 : vector<8x64xf32>
    %cst_249 = arith.constant 0.000000e+00 : f32
    %798 = vector.broadcast %cst_249 : f32 to vector<8x64xf32>
    %799 = arith.maximumf %797, %798 : vector<8x64xf32>
    %cst_250 = arith.constant dense<0.000000e+00> : vector<8x32xf32>
    %800 = tpu.matmul %799, %793, %cst_250 {dimension_numbers = #tpu.dot_dimension_numbers<[1], [0], [0], [1], [0, 0, 1, 1], [], []>} : vector<8x64xf32>, vector<64x32xf32>, vector<8x32xf32> -> vector<8x32xf32>
    %801 = vector.broadcast %794 : vector<1x32xf32> to vector<8x32xf32>
    %802 = arith.addf %800, %801 : vector<8x32xf32>
    %803 = arith.addf %788, %802 : vector<8x32xf32>
    %c474 = arith.constant 474 : index
    %c0_251 = arith.constant 0 : index
    %804 = vector.load %arg6[%c474, %c0_251] : memref<480x128xf32, #tpu.memory_space<vmem>>, vector<1x32xf32>
    %c475 = arith.constant 475 : index
    %c0_252 = arith.constant 0 : index
    %805 = vector.load %arg6[%c475, %c0_252] : memref<480x128xf32, #tpu.memory_space<vmem>>, vector<1x32xf32>
    %cst_253 = arith.constant dense<0.000000e+00> : vector<8xf32>
    %806 = vector.multi_reduction <add>, %803, %cst_253 [1] : vector<8x32xf32> to vector<8xf32>
    %807 = vector.shape_cast %806 : vector<8xf32> to vector<8x1xf32>
    %cst_254 = arith.constant 3.200000e+01 : f32
    %808 = vector.broadcast %cst_254 : f32 to vector<8x1xf32>
    %809 = arith.divf %807, %808 : vector<8x1xf32>
    %810 = vector.broadcast %809 : vector<8x1xf32> to vector<8x32xf32>
    %811 = arith.subf %803, %810 : vector<8x32xf32>
    %812 = arith.mulf %811, %811 : vector<8x32xf32>
    %cst_255 = arith.constant dense<0.000000e+00> : vector<8xf32>
    %813 = vector.multi_reduction <add>, %812, %cst_255 [1] : vector<8x32xf32> to vector<8xf32>
    %814 = vector.shape_cast %813 : vector<8xf32> to vector<8x1xf32>
    %cst_256 = arith.constant 3.200000e+01 : f32
    %815 = vector.broadcast %cst_256 : f32 to vector<8x1xf32>
    %816 = arith.divf %814, %815 : vector<8x1xf32>
    %cst_257 = arith.constant 9.99999974E-6 : f32
    %817 = vector.broadcast %cst_257 : f32 to vector<8x1xf32>
    %818 = arith.addf %816, %817 : vector<8x1xf32>
    %819 = math.rsqrt %818 : vector<8x1xf32>
    %820 = vector.broadcast %819 : vector<8x1xf32> to vector<8x32xf32>
    %821 = arith.mulf %811, %820 : vector<8x32xf32>
    %822 = vector.broadcast %804 : vector<1x32xf32> to vector<8x32xf32>
    %823 = arith.mulf %821, %822 : vector<8x32xf32>
    %824 = vector.broadcast %805 : vector<1x32xf32> to vector<8x32xf32>
    %825 = arith.addf %823, %824 : vector<8x32xf32>
    %c476 = arith.constant 476 : index
    %c0_258 = arith.constant 0 : index
    %826 = vector.load %arg6[%c476, %c0_258] : memref<480x128xf32, #tpu.memory_space<vmem>>, vector<1x32xf32>
    %c477 = arith.constant 477 : index
    %c0_259 = arith.constant 0 : index
    %827 = vector.load %arg6[%c477, %c0_259] : memref<480x128xf32, #tpu.memory_space<vmem>>, vector<1x32xf32>
    %cst_260 = arith.constant dense<0.000000e+00> : vector<8xf32>
    %828 = vector.multi_reduction <add>, %825, %cst_260 [1] : vector<8x32xf32> to vector<8xf32>
    %829 = vector.shape_cast %828 : vector<8xf32> to vector<8x1xf32>
    %cst_261 = arith.constant 3.200000e+01 : f32
    %830 = vector.broadcast %cst_261 : f32 to vector<8x1xf32>
    %831 = arith.divf %829, %830 : vector<8x1xf32>
    %832 = vector.broadcast %831 : vector<8x1xf32> to vector<8x32xf32>
    %833 = arith.subf %825, %832 : vector<8x32xf32>
    %834 = arith.mulf %833, %833 : vector<8x32xf32>
    %cst_262 = arith.constant dense<0.000000e+00> : vector<8xf32>
    %835 = vector.multi_reduction <add>, %834, %cst_262 [1] : vector<8x32xf32> to vector<8xf32>
    %836 = vector.shape_cast %835 : vector<8xf32> to vector<8x1xf32>
    %cst_263 = arith.constant 3.200000e+01 : f32
    %837 = vector.broadcast %cst_263 : f32 to vector<8x1xf32>
    %838 = arith.divf %836, %837 : vector<8x1xf32>
    %cst_264 = arith.constant 9.99999974E-6 : f32
    %839 = vector.broadcast %cst_264 : f32 to vector<8x1xf32>
    %840 = arith.addf %838, %839 : vector<8x1xf32>
    %841 = math.rsqrt %840 : vector<8x1xf32>
    %842 = vector.broadcast %841 : vector<8x1xf32> to vector<8x32xf32>
    %843 = arith.mulf %833, %842 : vector<8x32xf32>
    %844 = vector.broadcast %826 : vector<1x32xf32> to vector<8x32xf32>
    %845 = arith.mulf %843, %844 : vector<8x32xf32>
    %846 = vector.broadcast %827 : vector<1x32xf32> to vector<8x32xf32>
    %847 = arith.addf %845, %846 : vector<8x32xf32>
    %848 = vector.shape_cast %847 : vector<8x32xf32> to vector<1x8x32xf32>
    %c0_265 = arith.constant 0 : index
    %c0_266 = arith.constant 0 : index
    %c0_267 = arith.constant 0 : index
    %849 = vector.load %arg8[%c0_265, %c0_266, %c0_267] : memref<1x8x32xf32, #tpu.memory_space<vmem>>, vector<1x8x32xf32>
    tpu.vector_store %arg8[%c0_265, %c0_266, %c0_267], %848 {strides = array<i32>} : memref<1x8x32xf32, #tpu.memory_space<vmem>>, vector<1x8x32xf32>,
    return
  }
  func.func @transform_0(%arg0: i32) -> (i32, i32, i32) {
    %c0_i32 = arith.constant 0 : i32
    %c0_i32_0 = arith.constant 0 : i32
    %c0_i32_1 = arith.constant 0 : i32
    return %arg0, %c0_i32, %c0_i32_0 : i32, i32, i32
  }
  func.func @transform_1(%arg0: i32) -> (i32, i32, i32) {
    %c0_i32 = arith.constant 0 : i32
    %c0_i32_0 = arith.constant 0 : i32
    %c0_i32_1 = arith.constant 0 : i32
    return %arg0, %c0_i32, %c0_i32_0 : i32, i32, i32
  }
  func.func @transform_2(%arg0: i32) -> (i32, i32) {
    %c0_i32 = arith.constant 0 : i32
    %c0_i32_0 = arith.constant 0 : i32
    %c0_i32_1 = arith.constant 0 : i32
    return %c0_i32, %c0_i32_0 : i32, i32
  }
  func.func @transform_3(%arg0: i32) -> (i32, i32, i32) {
    %c0_i32 = arith.constant 0 : i32
    %c0_i32_0 = arith.constant 0 : i32
    %c0_i32_1 = arith.constant 0 : i32
    return %arg0, %c0_i32, %c0_i32_0 : i32, i32, i32
  }
  func.func @transform_4(%arg0: i32) -> (i32, i32) {
    %c0_i32 = arith.constant 0 : i32
    %c0_i32_0 = arith.constant 0 : i32
    %c0_i32_1 = arith.constant 0 : i32
    return %c0_i32, %c0_i32_0 : i32, i32
  }
  func.func @transform_5(%arg0: i32) -> (i32, i32) {
    %c0_i32 = arith.constant 0 : i32
    %c0_i32_0 = arith.constant 0 : i32
    %c0_i32_1 = arith.constant 0 : i32
    return %c0_i32, %c0_i32_0 : i32, i32
  }
  func.func @transform_6(%arg0: i32) -> (i32, i32, i32) {
    %c0_i32 = arith.constant 0 : i32
    %c0_i32_0 = arith.constant 0 : i32
    %c0_i32_1 = arith.constant 0 : i32
    return %arg0, %c0_i32, %c0_i32_0 : i32, i32, i32
  }
  func.func @transform_7(%arg0: i32) -> (i32, i32, i32) {
    %c0_i32 = arith.constant 0 : i32
    %c0_i32_0 = arith.constant 0 : i32
    %c0_i32_1 = arith.constant 0 : i32
    return %arg0, %c0_i32, %c0_i32_0 : i32, i32, i32
  }
}

</mosaic_0001>

<llo_original>
// kernel: transformer_forward.1
$region0: #{transformer_forward.1}
  #allocation0 [shape = 'u32[]', space=smem, size = 0x4, offset = 0x4, fixed_abs, tag = 'smem constant byte address 0x4 - core index']
  #allocation1 [shape = 'u32[144,128]{1,0:T(1,128)}', space=vmem, size = 0x12000, scoped, tag = 'internal scratch']
  %s0 = inlined_call_operand.hbm [shape: f32[2,8,32], index: 0, kind: input, shape index: {}]
  %s1 = inlined_call_operand.hbm [shape: f32[2,8,32], index: 1, kind: input, shape index: {}]
  %s2 = inlined_call_operand.vmem [shape: f32[8,32], index: 2, kind: input, shape index: {}]
  %s3 = inlined_call_operand.vmem [shape: f32[2,1,8], index: 3, kind: input, shape index: {}]
  %s4 = inlined_call_operand.hbm [shape: f32[336,128], index: 4, kind: input, shape index: {}]
  %s5 = inlined_call_operand.hbm [shape: f32[480,128], index: 5, kind: input, shape index: {}]
  %s6 = inlined_call_operand.hbm [shape: f32[2,8,32], index: 6, kind: output, shape index: {0}]
  %s7 = inlined_call_operand.hbm [shape: f32[2,8,32], index: 7, kind: output, shape index: {1}]
  %8 = xla_tuple %s6, %s7
  %s9 = sld [smem:[#allocation0]]
  $region81: #{transformer_forward.1} parent=0
    _
  %s11 = ssub.s32 1, %s9
  %s12 = scalar_select 0, %s11, %s9
  $region1: #{transformer_forward.1} parent=0
    #allocation2 [shape = 'u8[8192]{0}', space=vmem, size = 0x2000, scoped, tag = 'input window, operand 0']
    #allocation3 [shape = 's32[2]{0}', space=sflag, size = 0x8, scoped, tag = 'scoped memory for transformer_forward.1']
    #allocation4 [shape = 's32[2]{0}', space=sflag, size = 0x8, scoped, tag = 'scoped memory for transformer_forward.1']
    #allocation5 [shape = 'u8[8192]{0}', space=vmem, size = 0x2000, scoped, tag = 'input window, operand 1']
    #allocation6 [shape = 's32[2]{0}', space=sflag, size = 0x8, scoped, tag = 'scoped memory for transformer_forward.1']
    #allocation7 [shape = 'u8[172032]{0}', space=vmem, size = 0x2a000, scoped, tag = 'input window, operand 4, single buffered']
    #allocation8 [shape = 'u8[245760]{0}', space=vmem, size = 0x3c000, scoped, tag = 'input window, operand 5, single buffered']
    #allocation9 [shape = 's32[1]{0}', space=sflag, size = 0x4, scoped, tag = 'scoped memory for transformer_forward.1']
    #allocation10 [shape = 'u8[8192]{0}', space=vmem, size = 0x2000, scoped, tag = 'output window, operand 0']
    #allocation11 [shape = 'u8[8192]{0}', space=vmem, size = 0x2000, scoped, tag = 'output window, operand 1']
    #allocation12 [shape = 's32[2]{0}', space=sflag, size = 0x8, scoped, tag = 'scoped memory for transformer_forward.1']
    %13 = vsyncpa [#allocation3], 0
    %s14 = scalar_lea.sflag [#allocation3], 1
    %15 = vsyncpa %s14, 0
    %16 = vsyncpa [#allocation6], 0
    %s17 = scalar_lea.sflag [#allocation6], 1
    %18 = vsyncpa %s17, 0
    %19 = vsyncpa [#allocation9], 0
    %20 = vsyncpa [#allocation4], 0
    %s21 = scalar_lea.sflag [#allocation4], 1
    %22 = vsyncpa %s21, 0
    %23 = vsyncpa [#allocation12], 0
    %s24 = scalar_lea.sflag [#allocation12], 1
    %25 = vsyncpa %s24, 0
    loop: start=0, step=1, limit=4
    $region2: #{transformer_forward.1} parent=1 // loop_pre_header
      _
    $region3: #{transformer_forward.1} parent=1 // loop_header
      %s27 = sphi 0, %s31
      %p28 = scmp.ge.s32.totalorder %s27, 4
      %s37 = sphi 0, %s39
      %s40 = sphi 0, %s37
      %s41 = sphi 0, %s40
      %s57 = sphi 0, %s41
      %s63 = sphi 0, %s65
      %s66 = sphi 0, %s63
      %s67 = sphi 0, %s66
      %s83 = sphi 0, %s67
      %s87 = sphi 0, %s87
      %s89 = sphi 0, %s87
      %s90 = sphi 0, %s89
      %s104 = sphi 0, %s90
      %s110 = sphi 0, %s112
      %s113 = sphi 0, %s110
      %s114 = sphi 0, %s113
      %s130 = sphi 0, %s114
      %s134 = sphi 0, %s134
      %s136 = sphi 0, %s134
      %s137 = sphi 0, %s136
      %s151 = sphi 0, %s137
      %s155 = sphi 0, %s155
      %s157 = sphi 0, %s155
      %s158 = sphi 0, %s157
      %s172 = sphi 0, %s158
      %s178 = sphi 0, %s180
      %s181 = sphi 0, %s178
      %s182 = sphi 0, %s181
      %s198 = sphi 0, %s182
      %s204 = sphi 0, %s206
      %s207 = sphi 0, %s204
      %s208 = sphi 0, %s207
      %s224 = sphi 0, %s208
    $region4: #{transformer_forward.1} parent=1 // loop_header_branch
      %30 = sbr.rel (%p28) target = $region8
    $region5: #{transformer_forward.1} parent=1 // loop_body
      %s32 = ssub.s32 %s27, 1
      %s33 = ssub.s32 %s27, 2
      %s34 = sadd.s32 %s27, 1
      %s35 = ssub.s32 %s27, %s34
      %p36 = scmp.eq.s32.totalorder %s35, 0
      %s38 = sadd.s32 %s37, 1
      %s39 = scalar_select %p36, %s37, %s38
      %p42 = pneg %p36
      %p43 = scmp.eq.s32.totalorder %s27, 1
      %p44 = por %p42, %p43
      %p45 = scmp.ne.s32.totalorder %s37, %s40
      %p46 = scmp.eq.s32.totalorder %s27, 0
      %p47 = por %p45, %p46
      %p48 = scmp.ne.s32.totalorder %s37, %s40
      %p49 = scmp.eq.s32.totalorder %s32, 1
      %p50 = por %p48, %p49
      %p51 = scmp.ne.s32.totalorder %s40, %s41
      %p52 = scmp.eq.s32.totalorder %s32, 0
      %p53 = por %p51, %p52
      %p54 = scmp.ne.s32.totalorder %s40, %s41
      %p55 = scmp.eq.s32.totalorder %s33, 1
      %p56 = por %p54, %p55
      %p58 = scmp.ne.s32.totalorder %s41, %s57
      %p59 = scmp.eq.s32.totalorder %s33, 0
      %p60 = por %p58, %p59
      %s61 = ssub.s32 %s27, %s34
      %p62 = scmp.eq.s32.totalorder %s61, 0
      %s64 = sadd.s32 %s63, 1
      %s65 = scalar_select %p62, %s63, %s64
      %p68 = pneg %p62
      %p69 = scmp.eq.s32.totalorder %s27, 1
      %p70 = por %p68, %p69
      %p71 = scmp.ne.s32.totalorder %s63, %s66
      %p72 = scmp.eq.s32.totalorder %s27, 0
      %p73 = por %p71, %p72
      %p74 = scmp.ne.s32.totalorder %s63, %s66
      %p75 = scmp.eq.s32.totalorder %s32, 1
      %p76 = por %p74, %p75
      %p77 = scmp.ne.s32.totalorder %s66, %s67
      %p78 = scmp.eq.s32.totalorder %s32, 0
      %p79 = por %p77, %p78
      %p80 = scmp.ne.s32.totalorder %s66, %s67
      %p81 = scmp.eq.s32.totalorder %s33, 1
      %p82 = por %p80, %p81
      %p84 = scmp.ne.s32.totalorder %s67, %s83
      %p85 = scmp.eq.s32.totalorder %s33, 0
      %p86 = por %p84, %p85
      %s88 = sadd.s32 %s87, 1
      %p91 = scmp.eq.s32.totalorder %s27, 1
      %p92 = scmp.ne.s32.totalorder %s87, %s89
      %p93 = scmp.eq.s32.totalorder %s27, 0
      %p94 = por %p92, %p93
      %p95 = scmp.ne.s32.totalorder %s87, %s89
      %p96 = scmp.eq.s32.totalorder %s32, 1
      %p97 = por %p95, %p96
      %p98 = scmp.ne.s32.totalorder %s89, %s90
      %p99 = scmp.eq.s32.totalorder %s32, 0
      %p100 = por %p98, %p99
      %p101 = scmp.ne.s32.totalorder %s89, %s90
      %p102 = scmp.eq.s32.totalorder %s33, 1
      %p103 = por %p101, %p102
      %p105 = scmp.ne.s32.totalorder %s90, %s104
      %p106 = scmp.eq.s32.totalorder %s33, 0
      %p107 = por %p105, %p106
      %s108 = ssub.s32 %s27, %s34
      %p109 = scmp.eq.s32.totalorder %s108, 0
      %s111 = sadd.s32 %s110, 1
      %s112 = scalar_select %p109, %s110, %s111
      %p115 = pneg %p109
      %p116 = scmp.eq.s32.totalorder %s27, 1
      %p117 = por %p115, %p116
      %p118 = scmp.ne.s32.totalorder %s110, %s113
      %p119 = scmp.eq.s32.totalorder %s27, 0
      %p120 = por %p118, %p119
      %p121 = scmp.ne.s32.totalorder %s110, %s113
      %p122 = scmp.eq.s32.totalorder %s32, 1
      %p123 = por %p121, %p122
      %p124 = scmp.ne.s32.totalorder %s113, %s114
      %p125 = scmp.eq.s32.totalorder %s32, 0
      %p126 = por %p124, %p125
      %p127 = scmp.ne.s32.totalorder %s113, %s114
      %p128 = scmp.eq.s32.totalorder %s33, 1
      %p129 = por %p127, %p128
      %p131 = scmp.ne.s32.totalorder %s114, %s130
      %p132 = scmp.eq.s32.totalorder %s33, 0
      %p133 = por %p131, %p132
      %s135 = sadd.s32 %s134, 1
      %p138 = scmp.eq.s32.totalorder %s27, 1
      %p139 = scmp.ne.s32.totalorder %s134, %s136
      %p140 = scmp.eq.s32.totalorder %s27, 0
      %p141 = por %p139, %p140
      %p142 = scmp.ne.s32.totalorder %s134, %s136
      %p143 = scmp.eq.s32.totalorder %s32, 1
      %p144 = por %p142, %p143
      %p145 = scmp.ne.s32.totalorder %s136, %s137
      %p146 = scmp.eq.s32.totalorder %s32, 0
      %p147 = por %p145, %p146
      %p148 = scmp.ne.s32.totalorder %s136, %s137
      %p149 = scmp.eq.s32.totalorder %s33, 1
      %p150 = por %p148, %p149
      %p152 = scmp.ne.s32.totalorder %s137, %s151
      %p153 = scmp.eq.s32.totalorder %s33, 0
      %p154 = por %p152, %p153
      %s156 = sadd.s32 %s155, 1
      %p159 = scmp.eq.s32.totalorder %s27, 1
      %p160 = scmp.ne.s32.totalorder %s155, %s157
      %p161 = scmp.eq.s32.totalorder %s27, 0
      %p162 = por %p160, %p161
      %p163 = scmp.ne.s32.totalorder %s155, %s157
      %p164 = scmp.eq.s32.totalorder %s32, 1
      %p165 = por %p163, %p164
      %p166 = scmp.ne.s32.totalorder %s157, %s158
      %p167 = scmp.eq.s32.totalorder %s32, 0
      %p168 = por %p166, %p167
      %p169 = scmp.ne.s32.totalorder %s157, %s158
      %p170 = scmp.eq.s32.totalorder %s33, 1
      %p171 = por %p169, %p170
      %p173 = scmp.ne.s32.totalorder %s158, %s172
      %p174 = scmp.eq.s32.totalorder %s33, 0
      %p175 = por %p173, %p174
      %s176 = ssub.s32 %s27, %s34
      %p177 = scmp.eq.s32.totalorder %s176, 0
      %s179 = sadd.s32 %s178, 1
      %s180 = scalar_select %p177, %s178, %s179
      %p183 = pneg %p177
      %p184 = scmp.eq.s32.totalorder %s27, 1
      %p185 = por %p183, %p184
      %p186 = scmp.ne.s32.totalorder %s178, %s181
      %p187 = scmp.eq.s32.totalorder %s27, 0
      %p188 = por %p186, %p187
      %p189 = scmp.ne.s32.totalorder %s178, %s181
      %p190 = scmp.eq.s32.totalorder %s32, 1
      %p191 = por %p189, %p190
      %p192 = scmp.ne.s32.totalorder %s181, %s182
      %p193 = scmp.eq.s32.totalorder %s32, 0
      %p194 = por %p192, %p193
      %p195 = scmp.ne.s32.totalorder %s181, %s182
      %p196 = scmp.eq.s32.totalorder %s33, 1
      %p197 = por %p195, %p196
      %p199 = scmp.ne.s32.totalorder %s182, %s198
      %p200 = scmp.eq.s32.totalorder %s33, 0
      %p201 = por %p199, %p200
      %s202 = ssub.s32 %s27, %s34
      %p203 = scmp.eq.s32.totalorder %s202, 0
      %s205 = sadd.s32 %s204, 1
      %s206 = scalar_select %p203, %s204, %s205
      %p209 = pneg %p203
      %p210 = scmp.eq.s32.totalorder %s27, 1
      %p211 = por %p209, %p210
      %p212 = scmp.ne.s32.totalorder %s204, %s207
      %p213 = scmp.eq.s32.totalorder %s27, 0
      %p214 = por %p212, %p213
      %p215 = scmp.ne.s32.totalorder %s204, %s207
      %p216 = scmp.eq.s32.totalorder %s32, 1
      %p217 = por %p215, %p216
      %p218 = scmp.ne.s32.totalorder %s207, %s208
      %p219 = scmp.eq.s32.totalorder %s32, 0
      %p220 = por %p218, %p219
      %p221 = scmp.ne.s32.totalorder %s207, %s208
      %p222 = scmp.eq.s32.totalorder %s33, 1
      %p223 = por %p221, %p222
      %p225 = scmp.ne.s32.totalorder %s208, %s224
      %p226 = scmp.eq.s32.totalorder %s33, 0
      %p227 = por %p225, %p226
      %p228 = scmp.le.s32.totalorder 1, %s27
      %p229 = scmp.lt.s32.totalorder %s27, 3
      %p230 = pnand %p228, %p229
      %p231 = pneg %p230
      // Predicated region
      $region9: #{transformer_forward.1} parent=5 // pred_check
        _
      $region10: #{transformer_forward.1} parent=5 // pred_check_branch
        %233 = sbr.rel (%p230) target = $region12
      $region11: #{transformer_forward.1} parent=5 // pred_region
        %s234 = ssub.s32 %s27, 1
        // Predicated region
        $region13: #{transformer_forward.1} parent=11 // pred_check
          %p235 = pneg %p100
        $region14: #{transformer_forward.1} parent=11 // pred_check_branch
          %237 = sbr.rel (%p235) target = $region16
        $region15: #{transformer_forward.1} parent=11 // pred_region
          _
        $region16: #{transformer_forward.1} parent=11 // pred_fallthru
          _
        // Predicated region
        $region17: #{transformer_forward.1} parent=11 // pred_check
          %p238 = pneg %p147
        $region18: #{transformer_forward.1} parent=11 // pred_check_branch
          %240 = sbr.rel (%p238) target = $region20
        $region19: #{transformer_forward.1} parent=11 // pred_region
          %s242 = ssub.s32 5376, 5376
          %243 = vsyncadd [#allocation6], %s242
          %s244 = sshll.u32 [#allocation7], 4
          %s245 = int_to_ptr.vmem [resolvable:$true] %s244
          %250 = dma.hbm_to_vmem [thread:$0]  %s4, 5376, %s245, [#allocation6], 128, 128, 8
        $region20: #{transformer_forward.1} parent=11 // pred_fallthru
          _
        // Predicated region
        $region21: #{transformer_forward.1} parent=11 // pred_check
          %p251 = pneg %p168
        $region22: #{transformer_forward.1} parent=11 // pred_check_branch
          %253 = sbr.rel (%p251) target = $region24
        $region23: #{transformer_forward.1} parent=11 // pred_region
          %s255 = ssub.s32 7680, 7680
          %256 = vsyncadd [#allocation9], %s255
          %s257 = sshll.u32 [#allocation8], 4
          %s258 = int_to_ptr.vmem [resolvable:$true] %s257
          %263 = dma.hbm_to_vmem [thread:$0]  %s5, 7680, %s258, [#allocation9], 128, 128, 8
        $region24: #{transformer_forward.1} parent=11 // pred_fallthru
          _
      $region12: #{transformer_forward.1} parent=5 // pred_fallthru
        _
      %p264 = scmp.lt.s32.totalorder %s27, 2
      // Predicated region
      $region25: #{transformer_forward.1} parent=5 // pred_check
        %p265 = pneg %p264
      $region26: #{transformer_forward.1} parent=5 // pred_check_branch
        %267 = sbr.rel (%p265) target = $region28
      $region27: #{transformer_forward.1} parent=5 // pred_region
        // Predicated region
        $region29: #{transformer_forward.1} parent=27 // pred_check
          %p268 = pneg %p47
        $region30: #{transformer_forward.1} parent=27 // pred_check_branch
          %270 = sbr.rel (%p268) target = $region32
        $region31: #{transformer_forward.1} parent=27 // pred_region
          %s271 = sand.u32 %s37, 1
          %s272 = scalar_lea.sflag [#allocation3], %s271
          %s273 = sand.u32 %s37, 1
          %s274 = smul.addr %s273, 8
          %s275 = scalar_lea.vmem [#allocation2], %s274
          %s277 = ssub.s32 128, 128
          %278 = vsyncadd %s272, %s277
          %s279 = smul.addr %s27, 128
          %s280 = scalar_lea.hbm %s0, %s279
          %s282 = sshll.u32 %s275, 4
          %s283 = int_to_ptr.vmem [resolvable:$true] %s282
          %285 = dma.hbm_to_vmem [thread:$0]  %s280, 128, %s283, %s272
        $region32: #{transformer_forward.1} parent=27 // pred_fallthru
          _
        // Predicated region
        $region33: #{transformer_forward.1} parent=27 // pred_check
          %p286 = pneg %p73
        $region34: #{transformer_forward.1} parent=27 // pred_check_branch
          %288 = sbr.rel (%p286) target = $region36
        $region35: #{transformer_forward.1} parent=27 // pred_region
          %s289 = sand.u32 %s27, 1
          %s290 = scalar_lea.sflag [#allocation6], %s289
          %s291 = sand.u32 %s63, 1
          %s292 = smul.addr %s291, 8
          %s293 = scalar_lea.vmem [#allocation5], %s292
          %s295 = ssub.s32 128, 128
          %296 = vsyncadd %s290, %s295
          %s297 = smul.addr %s27, 128
          %s298 = scalar_lea.hbm %s1, %s297
          %s300 = sshll.u32 %s293, 4
          %s301 = int_to_ptr.vmem [resolvable:$true] %s300
          %303 = dma.hbm_to_vmem [thread:$0]  %s298, 128, %s301, %s290
        $region36: #{transformer_forward.1} parent=27 // pred_fallthru
          _
        // Predicated region
        $region37: #{transformer_forward.1} parent=27 // pred_check
          %p304 = pneg %p120
        $region38: #{transformer_forward.1} parent=27 // pred_check_branch
          %306 = sbr.rel (%p304) target = $region40
        $region39: #{transformer_forward.1} parent=27 // pred_region
          %p307 = scmp.lt.s32.totalorder %s27, 1
          %s308 = scalar_select %p307, %s27, 1
          %s309 = scalar_lea.vmem %s3, %s308
        $region40: #{transformer_forward.1} parent=27 // pred_fallthru
          _
      $region28: #{transformer_forward.1} parent=5 // pred_fallthru
        _
      %p310 = scmp.le.s32.totalorder 1, %s27
      %p311 = scmp.lt.s32.totalorder %s27, 3
      %p312 = pnand %p310, %p311
      %p313 = pneg %p312
      // Predicated region
      $region41: #{transformer_forward.1} parent=5 // pred_check
        _
      $region42: #{transformer_forward.1} parent=5 // pred_check_branch
        %315 = sbr.rel (%p312) target = $region44
      $region43: #{transformer_forward.1} parent=5 // pred_region
        %s316 = ssub.s32 %s27, 1
        %s317 = sand.u32 %s40, 1
        %s318 = scalar_lea.sflag [#allocation3], %s317
        %s319 = sand.u32 %s40, 1
        %s320 = smul.addr %s319, 8
        %s321 = scalar_lea.vmem [#allocation2], %s320
        // Predicated region
        $region45: #{transformer_forward.1} parent=43 // pred_check
          %p322 = pneg %p53
        $region46: #{transformer_forward.1} parent=43 // pred_check_branch
          %324 = sbr.rel (%p322) target = $region48
        $region47: #{transformer_forward.1} parent=43 // pred_region
          %325 = dma.done %s318, 128
        $region48: #{transformer_forward.1} parent=43 // pred_fallthru
          _
        %s326 = sand.u32 %s32, 1
        %s327 = scalar_lea.sflag [#allocation6], %s326
        %s328 = sand.u32 %s66, 1
        %s329 = smul.addr %s328, 8
        %s330 = scalar_lea.vmem [#allocation5], %s329
        // Predicated region
        $region49: #{transformer_forward.1} parent=43 // pred_check
          %p331 = pneg %p79
        $region50: #{transformer_forward.1} parent=43 // pred_check_branch
          %333 = sbr.rel (%p331) target = $region52
        $region51: #{transformer_forward.1} parent=43 // pred_region
          %334 = dma.done %s327, 128
        $region52: #{transformer_forward.1} parent=43 // pred_fallthru
          _
        // Predicated region
        $region53: #{transformer_forward.1} parent=43 // pred_check
          %p335 = pneg %p147
        $region54: #{transformer_forward.1} parent=43 // pred_check_branch
          %337 = sbr.rel (%p335) target = $region56
        $region55: #{transformer_forward.1} parent=43 // pred_region
          %338 = dma.done [#allocation6], 5376
        $region56: #{transformer_forward.1} parent=43 // pred_fallthru
          _
        // Predicated region
        $region57: #{transformer_forward.1} parent=43 // pred_check
          %p339 = pneg %p168
        $region58: #{transformer_forward.1} parent=43 // pred_check_branch
          %341 = sbr.rel (%p339) target = $region60
        $region59: #{transformer_forward.1} parent=43 // pred_region
          %342 = dma.done [#allocation9], 7680
        $region60: #{transformer_forward.1} parent=43 // pred_fallthru
          _
        %s343 = sand.u32 %s40, 1
        %s344 = scalar_lea.sflag [#allocation3], %s343
        %s345 = sand.u32 %s40, 1
        %s346 = smul.addr %s345, 8
        %s347 = scalar_lea.vmem [#allocation2], %s346
        %p348 = pneg %p53
        %p349 = pneg %p50
        %s350 = sand.u32 %s32, 1
        %s351 = scalar_lea.sflag [#allocation6], %s350
        %s352 = sand.u32 %s66, 1
        %s353 = smul.addr %s352, 8
        %s354 = scalar_lea.vmem [#allocation5], %s353
        %p355 = pneg %p79
        %p356 = pneg %p76
        %p357 = pneg %p100
        %p358 = pneg %p97
        %p359 = scmp.lt.s32.totalorder %s32, 1
        %s360 = scalar_select %p359, %s32, 1
        %s361 = scalar_lea.vmem %s3, %s360
        %p362 = pneg %p126
        %p363 = pneg %p123
        %p364 = pneg %p147
        %p365 = pneg %p144
        %p366 = pneg %p168
        %p367 = pneg %p165
        %p368 = pneg %p194
        %p369 = pneg %p191
        %s370 = sand.u32 %s181, 1
        %s371 = scalar_lea.sflag [#allocation4], %s370
        %s372 = sand.u32 %s181, 1
        %s373 = smul.addr %s372, 8
        %s374 = scalar_lea.vmem [#allocation10], %s373
        %p375 = pneg %p220
        %p376 = pneg %p217
        %s377 = sand.u32 %s207, 1
        %s378 = scalar_lea.sflag [#allocation12], %s377
        %s379 = sand.u32 %s207, 1
        %s380 = smul.addr %s379, 8
        %s381 = scalar_lea.vmem [#allocation11], %s380
        %p382 = scmp.lt.s32.totalorder %s32, 1
        %s383 = scalar_select %p382, %s32, 1
        %s384 = scalar_lea.vmem %s3, %s383
        %v385 = vld [vmem:[%s321] sm:$0xff]
        %v386 = vld [vmem:[%s330] sm:$0xff]
        %v387 = vld [vmem:[%s384] sm:$0x1]
        %v388 = vld [vmem:[#allocation7] sm:$0xff]
        %v389 = vld [vmem:[#allocation7 + $0x8] sm:$0xff]
        %v390 = vld [vmem:[#allocation7 + $0x10] sm:$0xff]
        %v391 = vld [vmem:[#allocation7 + $0x18] sm:$0xff]
        %v392 = vld [vmem:[#allocation7 + $0xa0] sm:$0x1]
        %v393 = vlaneseq
        %v394 = vshrl.u32 %v393, 7
        %v395 = vsub.s32 0, %v394
        %v396 = vrot.slane %v392, %v395
        %vm397 = vcmask 261120
        %v399 = vsel %vm397, %v385, 0
        %401 = vmatprep.subr.mxu0 0.0
        %402 = vmatpush1.msra.mxu0 0.0
        %403 = vmatprep.subr.mxu0 0.0
        %404 = vmatpush1.msra.mxu0 0.0
        %405 = vmatprep.subr.mxu0 0.0
        %406 = vmatpush1.msra.mxu0 0.0
        %407 = vmatprep.subr.mxu0 0.0
        %408 = vmatpush1.msra.mxu0 0.0
        %409 = vmatprep.subr.mxu0 0.0
        %410 = vmatpush1.msra.mxu0 0.0
        %411 = vmatprep.subr.mxu0 0.0
        %412 = vmatpush1.msra.mxu0 0.0
        %413 = vmatprep.subr.mxu0 0.0
        %414 = vmatpush1.msra.mxu0 0.0
        %415 = vmatprep.subr.mxu0 0.0
        %416 = vmatpush1.msra.mxu0 0.0
        %417 = vmatprep.subr.mxu0 0.0
        %418 = vmatpush1.msra.mxu0 0.0
        %419 = vmatprep.subr.mxu0 0.0
        %420 = vmatpush1.msra.mxu0 0.0
        %421 = vmatprep.subr.mxu0 0.0
        %422 = vmatpush1.msra.mxu0 0.0
        %423 = vmatprep.subr.mxu0 0.0
        %424 = vmatpush1.msra.mxu0 0.0
        %425 = vmatprep.subr.mxu0 0.0
        %426 = vmatpush1.msra.mxu0 %v391
        %427 = vmatprep.subr.mxu0 0.0
        %428 = vmatpush1.msra.mxu0 %v390
        %429 = vmatprep.subr.mxu0 0.0
        %430 = vmatpush1.msra.mxu0 %v389
        %431 = vmatprep.subr.mxu0 0.0
        %432 = vmatpush1.msra.mxu0 %v388
        %433 = vmatprep.subr.mxu0 0.0
        %434 = vmatpush2.msra.mxu0 0.0
        %435 = vmatprep.subr.mxu0 0.0
        %436 = vmatpush2.msra.mxu0 0.0
        %437 = vmatprep.subr.mxu0 0.0
        %438 = vmatpush2.msra.mxu0 0.0
        %439 = vmatprep.subr.mxu0 0.0
        %440 = vmatpush2.msra.mxu0 0.0
        %441 = vmatprep.subr.mxu0 0.0
        %442 = vmatpush2.msra.mxu0 0.0
        %443 = vmatprep.subr.mxu0 0.0
        %444 = vmatpush2.msra.mxu0 0.0
        %445 = vmatprep.subr.mxu0 0.0
        %446 = vmatpush2.msra.mxu0 0.0
        %447 = vmatprep.subr.mxu0 0.0
        %448 = vmatpush2.msra.mxu0 0.0
        %449 = vmatprep.subr.mxu0 0.0
        %450 = vmatpush2.msra.mxu0 0.0
        %451 = vmatprep.subr.mxu0 0.0
        %452 = vmatpush2.msra.mxu0 0.0
        %453 = vmatprep.subr.mxu0 0.0
        %454 = vmatpush2.msra.mxu0 0.0
        %455 = vmatprep.subr.mxu0 0.0
        %456 = vmatpush2.msra.mxu0 0.0
        %457 = vmatprep.subr.mxu0 0.0
        %458 = vmatpush2.msra.mxu0 0.0
        %459 = vmatprep.subr.mxu0 0.0
        %460 = vmatpush2.msra.mxu0 0.0
        %461 = vmatprep.subr.mxu0 0.0
        %462 = vmatpush2.msra.mxu0 0.0
        %463 = vmatprep.subr.mxu0 0.0
        %464 = vmatpush2.msra.mxu0 0.0
        %465 = vmatprep.mubr.f32.mxu0 0.0
        %466 = vmatmul.mubr.f32.gmra.mxu0 %v399
        %v467 = vpop.f32.mrf.mxu0
        %v468 = vadd.f32 %v396, %v467
        %v469 = vpop.f32.mrf.mxu0
        %470 = vdwg.mxu0
        %v472 = vsel %vm397, %v386, 0
        %474 = vmatprep.subr.mxu0 0.0
        %475 = vmatpush1.msra.mxu0 0.0
        %476 = vmatprep.subr.mxu0 0.0
        %477 = vmatpush1.msra.mxu0 0.0
        %478 = vmatprep.subr.mxu0 0.0
        %479 = vmatpush1.msra.mxu0 0.0
        %480 = vmatprep.subr.mxu0 0.0
        %481 = vmatpush1.msra.mxu0 0.0
        %482 = vmatprep.subr.mxu0 0.0
        %483 = vmatpush1.msra.mxu0 0.0
        %484 = vmatprep.subr.mxu0 0.0
        %485 = vmatpush1.msra.mxu0 0.0
        %486 = vmatprep.subr.mxu0 0.0
        %487 = vmatpush1.msra.mxu0 0.0
        %488 = vmatprep.subr.mxu0 0.0
        %489 = vmatpush1.msra.mxu0 0.0
        %490 = vmatprep.subr.mxu0 0.0
        %491 = vmatpush1.msra.mxu0 0.0
        %492 = vmatprep.subr.mxu0 0.0
        %493 = vmatpush1.msra.mxu0 0.0
        %494 = vmatprep.subr.mxu0 0.0
        %495 = vmatpush1.msra.mxu0 0.0
        %496 = vmatprep.subr.mxu0 0.0
        %497 = vmatpush1.msra.mxu0 0.0
        %498 = vmatprep.subr.mxu0 0.0
        %499 = vmatpush1.msra.mxu0 %v391
        %500 = vmatprep.subr.mxu0 0.0
        %501 = vmatpush1.msra.mxu0 %v390
        %502 = vmatprep.subr.mxu0 0.0
        %503 = vmatpush1.msra.mxu0 %v389
        %504 = vmatprep.subr.mxu0 0.0
        %505 = vmatpush1.msra.mxu0 %v388
        %506 = vmatprep.subr.mxu0 0.0
        %507 = vmatpush2.msra.mxu0 0.0
        %508 = vmatprep.subr.mxu0 0.0
        %509 = vmatpush2.msra.mxu0 0.0
        %510 = vmatprep.subr.mxu0 0.0
        %511 = vmatpush2.msra.mxu0 0.0
        %512 = vmatprep.subr.mxu0 0.0
        %513 = vmatpush2.msra.mxu0 0.0
        %514 = vmatprep.subr.mxu0 0.0
        %515 = vmatpush2.msra.mxu0 0.0
        %516 = vmatprep.subr.mxu0 0.0
        %517 = vmatpush2.msra.mxu0 0.0
        %518 = vmatprep.subr.mxu0 0.0
        %519 = vmatpush2.msra.mxu0 0.0
        %520 = vmatprep.subr.mxu0 0.0
        %521 = vmatpush2.msra.mxu0 0.0
        %522 = vmatprep.subr.mxu0 0.0
        %523 = vmatpush2.msra.mxu0 0.0
        %524 = vmatprep.subr.mxu0 0.0
        %525 = vmatpush2.msra.mxu0 0.0
        %526 = vmatprep.subr.mxu0 0.0
        %527 = vmatpush2.msra.mxu0 0.0
        %528 = vmatprep.subr.mxu0 0.0
        %529 = vmatpush2.msra.mxu0 0.0
        %530 = vmatprep.subr.mxu0 0.0
        %531 = vmatpush2.msra.mxu0 0.0
        %532 = vmatprep.subr.mxu0 0.0
        %533 = vmatpush2.msra.mxu0 0.0
        %534 = vmatprep.subr.mxu0 0.0
        %535 = vmatpush2.msra.mxu0 0.0
        %536 = vmatprep.subr.mxu0 0.0
        %537 = vmatpush2.msra.mxu0 0.0
        %538 = vmatprep.mubr.f32.mxu0 0.0
        %539 = vmatmul.mubr.f32.gmra.mxu0 %v472
        %v540 = vpop.f32.mrf.mxu0
        %v541 = vadd.f32 0.0, %v540
        %v542 = vpop.f32.mrf.mxu0
        %543 = vdwg.mxu0
        %v544 = vadd.f32 %v468, %v541
        %v546 = vlaneseq
        %v547 = vshrl.u32 %v546, 7
        %v548 = vsub.s32 0, %v547
        %v549 = vrot.slane %v387, %v548
        %552 = vrot.lane.b32.xlu0 %v544, 96
        %v553 = vpop.permute.xlu0 %552
        %vm554 = vcmask 64512
        %v555 = vsel %vm554, %v544, 0
        %v557 = vsel %vm554, %v553, 0
        %559 = vmatprep.subr.mxu0 0.0
        %560 = vmatpush1.xpose.msra.mxu0 0.0
        %561 = vmatprep.subr.mxu0 0.0
        %562 = vmatpush1.xpose.msra.mxu0 0.0
        %563 = vmatprep.subr.mxu0 0.0
        %564 = vmatpush1.xpose.msra.mxu0 0.0
        %565 = vmatprep.subr.mxu0 0.0
        %566 = vmatpush1.xpose.msra.mxu0 0.0
        %567 = vmatprep.subr.mxu0 0.0
        %568 = vmatpush1.xpose.msra.mxu0 0.0
        %569 = vmatprep.subr.mxu0 0.0
        %570 = vmatpush1.xpose.msra.mxu0 0.0
        %571 = vmatprep.subr.mxu0 0.0
        %572 = vmatpush1.xpose.msra.mxu0 0.0
        %573 = vmatprep.subr.mxu0 0.0
        %574 = vmatpush1.xpose.msra.mxu0 0.0
        %575 = vmatprep.subr.mxu0 0.0
        %576 = vmatpush1.xpose.msra.mxu0 0.0
        %577 = vmatprep.subr.mxu0 0.0
        %578 = vmatpush1.xpose.msra.mxu0 0.0
        %579 = vmatprep.subr.mxu0 0.0
        %580 = vmatpush1.xpose.msra.mxu0 0.0
        %581 = vmatprep.subr.mxu0 0.0
        %582 = vmatpush1.xpose.msra.mxu0 0.0
        %583 = vmatprep.subr.mxu0 0.0
        %584 = vmatpush1.xpose.msra.mxu0 0.0
        %585 = vmatprep.subr.mxu0 0.0
        %586 = vmatpush1.xpose.msra.mxu0 0.0
        %587 = vmatprep.subr.mxu0 0.0
        %588 = vmatpush1.xpose.msra.mxu0 0.0
        %589 = vmatprep.subr.mxu0 0.0
        %590 = vmatpush1.xpose.msra.mxu0 %v557
        %591 = vmatprep.subr.mxu0 0.0
        %592 = vmatpush2.xpose.msra.mxu0 0.0
        %593 = vmatprep.subr.mxu0 0.0
        %594 = vmatpush2.xpose.msra.mxu0 0.0
        %595 = vmatprep.subr.mxu0 0.0
        %596 = vmatpush2.xpose.msra.mxu0 0.0
        %597 = vmatprep.subr.mxu0 0.0
        %598 = vmatpush2.xpose.msra.mxu0 0.0
        %599 = vmatprep.subr.mxu0 0.0
        %600 = vmatpush2.xpose.msra.mxu0 0.0
        %601 = vmatprep.subr.mxu0 0.0
        %602 = vmatpush2.xpose.msra.mxu0 0.0
        %603 = vmatprep.subr.mxu0 0.0
        %604 = vmatpush2.xpose.msra.mxu0 0.0
        %605 = vmatprep.subr.mxu0 0.0
        %606 = vmatpush2.xpose.msra.mxu0 0.0
        %607 = vmatprep.subr.mxu0 0.0
        %608 = vmatpush2.xpose.msra.mxu0 0.0
        %609 = vmatprep.subr.mxu0 0.0
        %610 = vmatpush2.xpose.msra.mxu0 0.0
        %611 = vmatprep.subr.mxu0 0.0
        %612 = vmatpush2.xpose.msra.mxu0 0.0
        %613 = vmatprep.subr.mxu0 0.0
        %614 = vmatpush2.xpose.msra.mxu0 0.0
        %615 = vmatprep.subr.mxu0 0.0
        %616 = vmatpush2.xpose.msra.mxu0 0.0
        %617 = vmatprep.subr.mxu0 0.0
        %618 = vmatpush2.xpose.msra.mxu0 0.0
        %619 = vmatprep.subr.mxu0 0.0
        %620 = vmatpush2.xpose.msra.mxu0 0.0
        %621 = vmatprep.subr.mxu0 0.0
        %622 = vmatpush2.xpose.msra.mxu0 0.0
        %623 = vmatprep.mubr.f32.mxu0 0.0
        %624 = vmatmul.mubr.f32.gmra.mxu0 %v555
        %v625 = vpop.f32.mrf.mxu0
        %v626 = vadd.f32 %v549, %v625
        %v627 = vpop.f32.mrf.mxu0
        %628 = vdwg.mxu0
        %v629 = vsel %vm554, %v626, -inf
        %630 = vmax.xlane.f32.xlu0 %v629
        %v631 = vpop.xlane.xlu0 %630
        %v632 = vsub.f32 %v626, %v631
        %v633 = vmul.f32 %v632, 1.442695
        %v634 = vpow.pop %v633
        %v635 = vsel %vm554, %v634, 0.0
        %636 = vadd.xlane.f32.xlu0 %v635
        %v637 = vpop.xlane.xlu0 %636
        %v638 = vrcp.pop %v637
        %v639 = vmul.f32 %v634, %v638
        %641 = vrot.lane.b32.xlu0 %v468, 64
        %v642 = vpop.permute.xlu0 %641
        %v645 = vsel %vm554, %v639, 0
        %647 = vmatprep.subr.mxu0 0.0
        %648 = vmatpush1.msra.mxu0 0.0
        %649 = vmatprep.subr.mxu0 0.0
        %650 = vmatpush1.msra.mxu0 0.0
        %651 = vmatprep.subr.mxu0 0.0
        %652 = vmatpush1.msra.mxu0 0.0
        %653 = vmatprep.subr.mxu0 0.0
        %654 = vmatpush1.msra.mxu0 0.0
        %655 = vmatprep.subr.mxu0 0.0
        %656 = vmatpush1.msra.mxu0 0.0
        %657 = vmatprep.subr.mxu0 0.0
        %658 = vmatpush1.msra.mxu0 0.0
        %659 = vmatprep.subr.mxu0 0.0
        %660 = vmatpush1.msra.mxu0 0.0
        %661 = vmatprep.subr.mxu0 0.0
        %662 = vmatpush1.msra.mxu0 0.0
        %663 = vmatprep.subr.mxu0 0.0
        %664 = vmatpush1.msra.mxu0 0.0
        %665 = vmatprep.subr.mxu0 0.0
        %666 = vmatpush1.msra.mxu0 0.0
        %667 = vmatprep.subr.mxu0 0.0
        %668 = vmatpush1.msra.mxu0 0.0
        %669 = vmatprep.subr.mxu0 0.0
        %670 = vmatpush1.msra.mxu0 0.0
        %671 = vmatprep.subr.mxu0 0.0
        %672 = vmatpush1.msra.mxu0 0.0
        %673 = vmatprep.subr.mxu0 0.0
        %674 = vmatpush1.msra.mxu0 0.0
        %675 = vmatprep.subr.mxu0 0.0
        %676 = vmatpush1.msra.mxu0 0.0
        %677 = vmatprep.subr.mxu0 0.0
        %678 = vmatpush1.msra.mxu0 %v642
        %679 = vmatprep.subr.mxu0 0.0
        %680 = vmatpush2.msra.mxu0 0.0
        %681 = vmatprep.subr.mxu0 0.0
        %682 = vmatpush2.msra.mxu0 0.0
        %683 = vmatprep.subr.mxu0 0.0
        %684 = vmatpush2.msra.mxu0 0.0
        %685 = vmatprep.subr.mxu0 0.0
        %686 = vmatpush2.msra.mxu0 0.0
        %687 = vmatprep.subr.mxu0 0.0
        %688 = vmatpush2.msra.mxu0 0.0
        %689 = vmatprep.subr.mxu0 0.0
        %690 = vmatpush2.msra.mxu0 0.0
        %691 = vmatprep.subr.mxu0 0.0
        %692 = vmatpush2.msra.mxu0 0.0
        %693 = vmatprep.subr.mxu0 0.0
        %694 = vmatpush2.msra.mxu0 0.0
        %695 = vmatprep.subr.mxu0 0.0
        %696 = vmatpush2.msra.mxu0 0.0
        %697 = vmatprep.subr.mxu0 0.0
        %698 = vmatpush2.msra.mxu0 0.0
        %699 = vmatprep.subr.mxu0 0.0
        %700 = vmatpush2.msra.mxu0 0.0
        %701 = vmatprep.subr.mxu0 0.0
        %702 = vmatpush2.msra.mxu0 0.0
        %703 = vmatprep.subr.mxu0 0.0
        %704 = vmatpush2.msra.mxu0 0.0
        %705 = vmatprep.subr.mxu0 0.0
        %706 = vmatpush2.msra.mxu0 0.0
        %707 = vmatprep.subr.mxu0 0.0
        %708 = vmatpush2.msra.mxu0 0.0
        %709 = vmatprep.subr.mxu0 0.0
        %710 = vmatpush2.msra.mxu0 0.0
        %711 = vmatprep.mubr.f32.mxu0 0.0
        %712 = vmatmul.mubr.f32.gmra.mxu0 %v645
        %v713 = vpop.f32.mrf.mxu0
        %v714 = vadd.f32 0.0, %v713
        %v715 = vpop.f32.mrf.mxu0
        %716 = vdwg.mxu0
        %717 = vrot.lane.b32.xlu0 %v544, 120
        %v718 = vpop.permute.xlu0 %717
        %719 = vrot.lane.b32.xlu0 %v544, 88
        %v720 = vpop.permute.xlu0 %719
        %v721 = vsel %vm554, %v718, 0
        %v723 = vsel %vm554, %v720, 0
        %725 = vmatprep.subr.mxu0 0.0
        %726 = vmatpush1.xpose.msra.mxu0 0.0
        %727 = vmatprep.subr.mxu0 0.0
        %728 = vmatpush1.xpose.msra.mxu0 0.0
        %729 = vmatprep.subr.mxu0 0.0
        %730 = vmatpush1.xpose.msra.mxu0 0.0
        %731 = vmatprep.subr.mxu0 0.0
        %732 = vmatpush1.xpose.msra.mxu0 0.0
        %733 = vmatprep.subr.mxu0 0.0
        %734 = vmatpush1.xpose.msra.mxu0 0.0
        %735 = vmatprep.subr.mxu0 0.0
        %736 = vmatpush1.xpose.msra.mxu0 0.0
        %737 = vmatprep.subr.mxu0 0.0
        %738 = vmatpush1.xpose.msra.mxu0 0.0
        %739 = vmatprep.subr.mxu0 0.0
        %740 = vmatpush1.xpose.msra.mxu0 0.0
        %741 = vmatprep.subr.mxu0 0.0
        %742 = vmatpush1.xpose.msra.mxu0 0.0
        %743 = vmatprep.subr.mxu0 0.0
        %744 = vmatpush1.xpose.msra.mxu0 0.0
        %745 = vmatprep.subr.mxu0 0.0
        %746 = vmatpush1.xpose.msra.mxu0 0.0
        %747 = vmatprep.subr.mxu0 0.0
        %748 = vmatpush1.xpose.msra.mxu0 0.0
        %749 = vmatprep.subr.mxu0 0.0
        %750 = vmatpush1.xpose.msra.mxu0 0.0
        %751 = vmatprep.subr.mxu0 0.0
        %752 = vmatpush1.xpose.msra.mxu0 0.0
        %753 = vmatprep.subr.mxu0 0.0
        %754 = vmatpush1.xpose.msra.mxu0 0.0
        %755 = vmatprep.subr.mxu0 0.0
        %756 = vmatpush1.xpose.msra.mxu0 %v723
        %757 = vmatprep.subr.mxu0 0.0
        %758 = vmatpush2.xpose.msra.mxu0 0.0
        %759 = vmatprep.subr.mxu0 0.0
        %760 = vmatpush2.xpose.msra.mxu0 0.0
        %761 = vmatprep.subr.mxu0 0.0
        %762 = vmatpush2.xpose.msra.mxu0 0.0
        %763 = vmatprep.subr.mxu0 0.0
        %764 = vmatpush2.xpose.msra.mxu0 0.0
        %765 = vmatprep.subr.mxu0 0.0
        %766 = vmatpush2.xpose.msra.mxu0 0.0
        %767 = vmatprep.subr.mxu0 0.0
        %768 = vmatpush2.xpose.msra.mxu0 0.0
        %769 = vmatprep.subr.mxu0 0.0
        %770 = vmatpush2.xpose.msra.mxu0 0.0
        %771 = vmatprep.subr.mxu0 0.0
        %772 = vmatpush2.xpose.msra.mxu0 0.0
        %773 = vmatprep.subr.mxu0 0.0
        %774 = vmatpush2.xpose.msra.mxu0 0.0
        %775 = vmatprep.subr.mxu0 0.0
        %776 = vmatpush2.xpose.msra.mxu0 0.0
        %777 = vmatprep.subr.mxu0 0.0
        %778 = vmatpush2.xpose.msra.mxu0 0.0
        %779 = vmatprep.subr.mxu0 0.0
        %780 = vmatpush2.xpose.msra.mxu0 0.0
        %781 = vmatprep.subr.mxu0 0.0
        %782 = vmatpush2.xpose.msra.mxu0 0.0
        %783 = vmatprep.subr.mxu0 0.0
        %784 = vmatpush2.xpose.msra.mxu0 0.0
        %785 = vmatprep.subr.mxu0 0.0
        %786 = vmatpush2.xpose.msra.mxu0 0.0
        %787 = vmatprep.subr.mxu0 0.0
        %788 = vmatpush2.xpose.msra.mxu0 0.0
        %789 = vmatprep.mubr.f32.mxu0 0.0
        %790 = vmatmul.mubr.f32.gmra.mxu0 %v721
        %v791 = vpop.f32.mrf.mxu0
        %v792 = vadd.f32 %v549, %v791
        %v793 = vpop.f32.mrf.mxu0
        %794 = vdwg.mxu0
        %v795 = vsel %vm554, %v792, -inf
        %796 = vmax.xlane.f32.xlu0 %v795
        %v797 = vpop.xlane.xlu0 %796
        %v798 = vsub.f32 %v792, %v797
        %v799 = vmul.f32 %v798, 1.442695
        %v800 = vpow.pop %v799
        %v801 = vsel %vm554, %v800, 0.0
        %802 = vadd.xlane.f32.xlu0 %v801
        %v803 = vpop.xlane.xlu0 %802
        %v804 = vrcp.pop %v803
        %v805 = vmul.f32 %v800, %v804
        %806 = vrot.lane.b32.xlu0 %v468, 56
        %v807 = vpop.permute.xlu0 %806
        %v810 = vsel %vm554, %v805, 0
        %812 = vmatprep.subr.mxu0 0.0
        %813 = vmatpush1.msra.mxu0 0.0
        %814 = vmatprep.subr.mxu0 0.0
        %815 = vmatpush1.msra.mxu0 0.0
        %816 = vmatprep.subr.mxu0 0.0
        %817 = vmatpush1.msra.mxu0 0.0
        %818 = vmatprep.subr.mxu0 0.0
        %819 = vmatpush1.msra.mxu0 0.0
        %820 = vmatprep.subr.mxu0 0.0
        %821 = vmatpush1.msra.mxu0 0.0
        %822 = vmatprep.subr.mxu0 0.0
        %823 = vmatpush1.msra.mxu0 0.0
        %824 = vmatprep.subr.mxu0 0.0
        %825 = vmatpush1.msra.mxu0 0.0
        %826 = vmatprep.subr.mxu0 0.0
        %827 = vmatpush1.msra.mxu0 0.0
        %828 = vmatprep.subr.mxu0 0.0
        %829 = vmatpush1.msra.mxu0 0.0
        %830 = vmatprep.subr.mxu0 0.0
        %831 = vmatpush1.msra.mxu0 0.0
        %832 = vmatprep.subr.mxu0 0.0
        %833 = vmatpush1.msra.mxu0 0.0
        %834 = vmatprep.subr.mxu0 0.0
        %835 = vmatpush1.msra.mxu0 0.0
        %836 = vmatprep.subr.mxu0 0.0
        %837 = vmatpush1.msra.mxu0 0.0
        %838 = vmatprep.subr.mxu0 0.0
        %839 = vmatpush1.msra.mxu0 0.0
        %840 = vmatprep.subr.mxu0 0.0
        %841 = vmatpush1.msra.mxu0 0.0
        %842 = vmatprep.subr.mxu0 0.0
        %843 = vmatpush1.msra.mxu0 %v807
        %844 = vmatprep.subr.mxu0 0.0
        %845 = vmatpush2.msra.mxu0 0.0
        %846 = vmatprep.subr.mxu0 0.0
        %847 = vmatpush2.msra.mxu0 0.0
        %848 = vmatprep.subr.mxu0 0.0
        %849 = vmatpush2.msra.mxu0 0.0
        %850 = vmatprep.subr.mxu0 0.0
        %851 = vmatpush2.msra.mxu0 0.0
        %852 = vmatprep.subr.mxu0 0.0
        %853 = vmatpush2.msra.mxu0 0.0
        %854 = vmatprep.subr.mxu0 0.0
        %855 = vmatpush2.msra.mxu0 0.0
        %856 = vmatprep.subr.mxu0 0.0
        %857 = vmatpush2.msra.mxu0 0.0
        %858 = vmatprep.subr.mxu0 0.0
        %859 = vmatpush2.msra.mxu0 0.0
        %860 = vmatprep.subr.mxu0 0.0
        %861 = vmatpush2.msra.mxu0 0.0
        %862 = vmatprep.subr.mxu0 0.0
        %863 = vmatpush2.msra.mxu0 0.0
        %864 = vmatprep.subr.mxu0 0.0
        %865 = vmatpush2.msra.mxu0 0.0
        %866 = vmatprep.subr.mxu0 0.0
        %867 = vmatpush2.msra.mxu0 0.0
        %868 = vmatprep.subr.mxu0 0.0
        %869 = vmatpush2.msra.mxu0 0.0
        %870 = vmatprep.subr.mxu0 0.0
        %871 = vmatpush2.msra.mxu0 0.0
        %872 = vmatprep.subr.mxu0 0.0
        %873 = vmatpush2.msra.mxu0 0.0
        %874 = vmatprep.subr.mxu0 0.0
        %875 = vmatpush2.msra.mxu0 0.0
        %876 = vmatprep.mubr.f32.mxu0 0.0
        %877 = vmatmul.mubr.f32.gmra.mxu0 %v810
        %v878 = vpop.f32.mrf.mxu0
        %v879 = vadd.f32 0.0, %v878
        %v880 = vpop.f32.mrf.mxu0
        %881 = vdwg.mxu0
        %882 = vrot.lane.b32.xlu0 %v544, 112
        %v883 = vpop.permute.xlu0 %882
        %884 = vrot.lane.b32.xlu0 %v544, 80
        %v885 = vpop.permute.xlu0 %884
        %v886 = vsel %vm554, %v883, 0
        %v888 = vsel %vm554, %v885, 0
        %890 = vmatprep.subr.mxu0 0.0
        %891 = vmatpush1.xpose.msra.mxu0 0.0
        %892 = vmatprep.subr.mxu0 0.0
        %893 = vmatpush1.xpose.msra.mxu0 0.0
        %894 = vmatprep.subr.mxu0 0.0
        %895 = vmatpush1.xpose.msra.mxu0 0.0
        %896 = vmatprep.subr.mxu0 0.0
        %897 = vmatpush1.xpose.msra.mxu0 0.0
        %898 = vmatprep.subr.mxu0 0.0
        %899 = vmatpush1.xpose.msra.mxu0 0.0
        %900 = vmatprep.subr.mxu0 0.0
        %901 = vmatpush1.xpose.msra.mxu0 0.0
        %902 = vmatprep.subr.mxu0 0.0
        %903 = vmatpush1.xpose.msra.mxu0 0.0
        %904 = vmatprep.subr.mxu0 0.0
        %905 = vmatpush1.xpose.msra.mxu0 0.0
        %906 = vmatprep.subr.mxu0 0.0
        %907 = vmatpush1.xpose.msra.mxu0 0.0
        %908 = vmatprep.subr.mxu0 0.0
        %909 = vmatpush1.xpose.msra.mxu0 0.0
        %910 = vmatprep.subr.mxu0 0.0
        %911 = vmatpush1.xpose.msra.mxu0 0.0
        %912 = vmatprep.subr.mxu0 0.0
        %913 = vmatpush1.xpose.msra.mxu0 0.0
        %914 = vmatprep.subr.mxu0 0.0
        %915 = vmatpush1.xpose.msra.mxu0 0.0
        %916 = vmatprep.subr.mxu0 0.0
        %917 = vmatpush1.xpose.msra.mxu0 0.0
        %918 = vmatprep.subr.mxu0 0.0
        %919 = vmatpush1.xpose.msra.mxu0 0.0
        %920 = vmatprep.subr.mxu0 0.0
        %921 = vmatpush1.xpose.msra.mxu0 %v888
        %922 = vmatprep.subr.mxu0 0.0
        %923 = vmatpush2.xpose.msra.mxu0 0.0
        %924 = vmatprep.subr.mxu0 0.0
        %925 = vmatpush2.xpose.msra.mxu0 0.0
        %926 = vmatprep.subr.mxu0 0.0
        %927 = vmatpush2.xpose.msra.mxu0 0.0
        %928 = vmatprep.subr.mxu0 0.0
        %929 = vmatpush2.xpose.msra.mxu0 0.0
        %930 = vmatprep.subr.mxu0 0.0
        %931 = vmatpush2.xpose.msra.mxu0 0.0
        %932 = vmatprep.subr.mxu0 0.0
        %933 = vmatpush2.xpose.msra.mxu0 0.0
        %934 = vmatprep.subr.mxu0 0.0
        %935 = vmatpush2.xpose.msra.mxu0 0.0
        %936 = vmatprep.subr.mxu0 0.0
        %937 = vmatpush2.xpose.msra.mxu0 0.0
        %938 = vmatprep.subr.mxu0 0.0
        %939 = vmatpush2.xpose.msra.mxu0 0.0
        %940 = vmatprep.subr.mxu0 0.0
        %941 = vmatpush2.xpose.msra.mxu0 0.0
        %942 = vmatprep.subr.mxu0 0.0
        %943 = vmatpush2.xpose.msra.mxu0 0.0
        %944 = vmatprep.subr.mxu0 0.0
        %945 = vmatpush2.xpose.msra.mxu0 0.0
        %946 = vmatprep.subr.mxu0 0.0
        %947 = vmatpush2.xpose.msra.mxu0 0.0
        %948 = vmatprep.subr.mxu0 0.0
        %949 = vmatpush2.xpose.msra.mxu0 0.0
        %950 = vmatprep.subr.mxu0 0.0
        %951 = vmatpush2.xpose.msra.mxu0 0.0
        %952 = vmatprep.subr.mxu0 0.0
        %953 = vmatpush2.xpose.msra.mxu0 0.0
        %954 = vmatprep.mubr.f32.mxu0 0.0
        %955 = vmatmul.mubr.f32.gmra.mxu0 %v886
        %v956 = vpop.f32.mrf.mxu0
        %v957 = vadd.f32 %v549, %v956
        %v958 = vpop.f32.mrf.mxu0
        %959 = vdwg.mxu0
        %v960 = vsel %vm554, %v957, -inf
        %961 = vmax.xlane.f32.xlu0 %v960
        %v962 = vpop.xlane.xlu0 %961
        %v963 = vsub.f32 %v957, %v962
        %v964 = vmul.f32 %v963, 1.442695
        %v965 = vpow.pop %v964
        %v966 = vsel %vm554, %v965, 0.0
        %967 = vadd.xlane.f32.xlu0 %v966
        %v968 = vpop.xlane.xlu0 %967
        %v969 = vrcp.pop %v968
        %v970 = vmul.f32 %v965, %v969
        %971 = vrot.lane.b32.xlu0 %v468, 48
        %v972 = vpop.permute.xlu0 %971
        %v975 = vsel %vm554, %v970, 0
        %977 = vmatprep.subr.mxu0 0.0
        %978 = vmatpush1.msra.mxu0 0.0
        %979 = vmatprep.subr.mxu0 0.0
        %980 = vmatpush1.msra.mxu0 0.0
        %981 = vmatprep.subr.mxu0 0.0
        %982 = vmatpush1.msra.mxu0 0.0
        %983 = vmatprep.subr.mxu0 0.0
        %984 = vmatpush1.msra.mxu0 0.0
        %985 = vmatprep.subr.mxu0 0.0
        %986 = vmatpush1.msra.mxu0 0.0
        %987 = vmatprep.subr.mxu0 0.0
        %988 = vmatpush1.msra.mxu0 0.0
        %989 = vmatprep.subr.mxu0 0.0
        %990 = vmatpush1.msra.mxu0 0.0
        %991 = vmatprep.subr.mxu0 0.0
        %992 = vmatpush1.msra.mxu0 0.0
        %993 = vmatprep.subr.mxu0 0.0
        %994 = vmatpush1.msra.mxu0 0.0
        %995 = vmatprep.subr.mxu0 0.0
        %996 = vmatpush1.msra.mxu0 0.0
        %997 = vmatprep.subr.mxu0 0.0
        %998 = vmatpush1.msra.mxu0 0.0
        %999 = vmatprep.subr.mxu0 0.0
        %1000 = vmatpush1.msra.mxu0 0.0
        %1001 = vmatprep.subr.mxu0 0.0
        %1002 = vmatpush1.msra.mxu0 0.0
        %1003 = vmatprep.subr.mxu0 0.0
        %1004 = vmatpush1.msra.mxu0 0.0
        %1005 = vmatprep.subr.mxu0 0.0
        %1006 = vmatpush1.msra.mxu0 0.0
        %1007 = vmatprep.subr.mxu0 0.0
        %1008 = vmatpush1.msra.mxu0 %v972
        %1009 = vmatprep.subr.mxu0 0.0
        %1010 = vmatpush2.msra.mxu0 0.0
        %1011 = vmatprep.subr.mxu0 0.0
        %1012 = vmatpush2.msra.mxu0 0.0
        %1013 = vmatprep.subr.mxu0 0.0
        %1014 = vmatpush2.msra.mxu0 0.0
        %1015 = vmatprep.subr.mxu0 0.0
        %1016 = vmatpush2.msra.mxu0 0.0
        %1017 = vmatprep.subr.mxu0 0.0
        %1018 = vmatpush2.msra.mxu0 0.0
        %1019 = vmatprep.subr.mxu0 0.0
        %1020 = vmatpush2.msra.mxu0 0.0
        %1021 = vmatprep.subr.mxu0 0.0
        %1022 = vmatpush2.msra.mxu0 0.0
        %1023 = vmatprep.subr.mxu0 0.0
        %1024 = vmatpush2.msra.mxu0 0.0
        %1025 = vmatprep.subr.mxu0 0.0
        %1026 = vmatpush2.msra.mxu0 0.0
        %1027 = vmatprep.subr.mxu0 0.0
        %1028 = vmatpush2.msra.mxu0 0.0
        %1029 = vmatprep.subr.mxu0 0.0
        %1030 = vmatpush2.msra.mxu0 0.0
        %1031 = vmatprep.subr.mxu0 0.0
        %1032 = vmatpush2.msra.mxu0 0.0
        %1033 = vmatprep.subr.mxu0 0.0
        %1034 = vmatpush2.msra.mxu0 0.0
        %1035 = vmatprep.subr.mxu0 0.0
        %1036 = vmatpush2.msra.mxu0 0.0
        %1037 = vmatprep.subr.mxu0 0.0
        %1038 = vmatpush2.msra.mxu0 0.0
        %1039 = vmatprep.subr.mxu0 0.0
        %1040 = vmatpush2.msra.mxu0 0.0
        %1041 = vmatprep.mubr.f32.mxu0 0.0
        %1042 = vmatmul.mubr.f32.gmra.mxu0 %v975
        %v1043 = vpop.f32.mrf.mxu0
        %v1044 = vadd.f32 0.0, %v1043
        %v1045 = vpop.f32.mrf.mxu0
        %1046 = vdwg.mxu0
        %1047 = vrot.lane.b32.xlu0 %v544, 104
        %v1048 = vpop.permute.xlu0 %1047
        %1049 = vrot.lane.b32.xlu0 %v544, 72
        %v1050 = vpop.permute.xlu0 %1049
        %v1051 = vsel %vm554, %v1048, 0
        %v1053 = vsel %vm554, %v1050, 0
        %1055 = vmatprep.subr.mxu0 0.0
        %1056 = vmatpush1.xpose.msra.mxu0 0.0
        %1057 = vmatprep.subr.mxu0 0.0
        %1058 = vmatpush1.xpose.msra.mxu0 0.0
        %1059 = vmatprep.subr.mxu0 0.0
        %1060 = vmatpush1.xpose.msra.mxu0 0.0
        %1061 = vmatprep.subr.mxu0 0.0
        %1062 = vmatpush1.xpose.msra.mxu0 0.0
        %1063 = vmatprep.subr.mxu0 0.0
        %1064 = vmatpush1.xpose.msra.mxu0 0.0
        %1065 = vmatprep.subr.mxu0 0.0
        %1066 = vmatpush1.xpose.msra.mxu0 0.0
        %1067 = vmatprep.subr.mxu0 0.0
        %1068 = vmatpush1.xpose.msra.mxu0 0.0
        %1069 = vmatprep.subr.mxu0 0.0
        %1070 = vmatpush1.xpose.msra.mxu0 0.0
        %1071 = vmatprep.subr.mxu0 0.0
        %1072 = vmatpush1.xpose.msra.mxu0 0.0
        %1073 = vmatprep.subr.mxu0 0.0
        %1074 = vmatpush1.xpose.msra.mxu0 0.0
        %1075 = vmatprep.subr.mxu0 0.0
        %1076 = vmatpush1.xpose.msra.mxu0 0.0
        %1077 = vmatprep.subr.mxu0 0.0
        %1078 = vmatpush1.xpose.msra.mxu0 0.0
        %1079 = vmatprep.subr.mxu0 0.0
        %1080 = vmatpush1.xpose.msra.mxu0 0.0
        %1081 = vmatprep.subr.mxu0 0.0
        %1082 = vmatpush1.xpose.msra.mxu0 0.0
        %1083 = vmatprep.subr.mxu0 0.0
        %1084 = vmatpush1.xpose.msra.mxu0 0.0
        %1085 = vmatprep.subr.mxu0 0.0
        %1086 = vmatpush1.xpose.msra.mxu0 %v1053
        %1087 = vmatprep.subr.mxu0 0.0
        %1088 = vmatpush2.xpose.msra.mxu0 0.0
        %1089 = vmatprep.subr.mxu0 0.0
        %1090 = vmatpush2.xpose.msra.mxu0 0.0
        %1091 = vmatprep.subr.mxu0 0.0
        %1092 = vmatpush2.xpose.msra.mxu0 0.0
        %1093 = vmatprep.subr.mxu0 0.0
        %1094 = vmatpush2.xpose.msra.mxu0 0.0
        %1095 = vmatprep.subr.mxu0 0.0
        %1096 = vmatpush2.xpose.msra.mxu0 0.0
        %1097 = vmatprep.subr.mxu0 0.0
        %1098 = vmatpush2.xpose.msra.mxu0 0.0
        %1099 = vmatprep.subr.mxu0 0.0
        %1100 = vmatpush2.xpose.msra.mxu0 0.0
        %1101 = vmatprep.subr.mxu0 0.0
        %1102 = vmatpush2.xpose.msra.mxu0 0.0
        %1103 = vmatprep.subr.mxu0 0.0
        %1104 = vmatpush2.xpose.msra.mxu0 0.0
        %1105 = vmatprep.subr.mxu0 0.0
        %1106 = vmatpush2.xpose.msra.mxu0 0.0
        %1107 = vmatprep.subr.mxu0 0.0
        %1108 = vmatpush2.xpose.msra.mxu0 0.0
        %1109 = vmatprep.subr.mxu0 0.0
        %1110 = vmatpush2.xpose.msra.mxu0 0.0
        %1111 = vmatprep.subr.mxu0 0.0
        %1112 = vmatpush2.xpose.msra.mxu0 0.0
        %1113 = vmatprep.subr.mxu0 0.0
        %1114 = vmatpush2.xpose.msra.mxu0 0.0
        %1115 = vmatprep.subr.mxu0 0.0
        %1116 = vmatpush2.xpose.msra.mxu0 0.0
        %1117 = vmatprep.subr.mxu0 0.0
        %1118 = vmatpush2.xpose.msra.mxu0 0.0
        %1119 = vmatprep.mubr.f32.mxu0 0.0
        %1120 = vmatmul.mubr.f32.gmra.mxu0 %v1051
        %v1121 = vpop.f32.mrf.mxu0
        %v1122 = vadd.f32 %v549, %v1121
        %v1123 = vpop.f32.mrf.mxu0
        %1124 = vdwg.mxu0
        %v1125 = vsel %vm554, %v1122, -inf
        %1126 = vmax.xlane.f32.xlu0 %v1125
        %v1127 = vpop.xlane.xlu0 %1126
        %v1128 = vsub.f32 %v1122, %v1127
        %v1129 = vmul.f32 %v1128, 1.442695
        %v1130 = vpow.pop %v1129
        %v1131 = vsel %vm554, %v1130, 0.0
        %1132 = vadd.xlane.f32.xlu0 %v1131
        %v1133 = vpop.xlane.xlu0 %1132
        %v1134 = vrcp.pop %v1133
        %v1135 = vmul.f32 %v1130, %v1134
        %1136 = vrot.lane.b32.xlu0 %v468, 40
        %v1137 = vpop.permute.xlu0 %1136
        %v1140 = vsel %vm554, %v1135, 0
        %1142 = vmatprep.subr.mxu0 0.0
        %1143 = vmatpush1.msra.mxu0 0.0
        %1144 = vmatprep.subr.mxu0 0.0
        %1145 = vmatpush1.msra.mxu0 0.0
        %1146 = vmatprep.subr.mxu0 0.0
        %1147 = vmatpush1.msra.mxu0 0.0
        %1148 = vmatprep.subr.mxu0 0.0
        %1149 = vmatpush1.msra.mxu0 0.0
        %1150 = vmatprep.subr.mxu0 0.0
        %1151 = vmatpush1.msra.mxu0 0.0
        %1152 = vmatprep.subr.mxu0 0.0
        %1153 = vmatpush1.msra.mxu0 0.0
        %1154 = vmatprep.subr.mxu0 0.0
        %1155 = vmatpush1.msra.mxu0 0.0
        %1156 = vmatprep.subr.mxu0 0.0
        %1157 = vmatpush1.msra.mxu0 0.0
        %1158 = vmatprep.subr.mxu0 0.0
        %1159 = vmatpush1.msra.mxu0 0.0
        %1160 = vmatprep.subr.mxu0 0.0
        %1161 = vmatpush1.msra.mxu0 0.0
        %1162 = vmatprep.subr.mxu0 0.0
        %1163 = vmatpush1.msra.mxu0 0.0
        %1164 = vmatprep.subr.mxu0 0.0
        %1165 = vmatpush1.msra.mxu0 0.0
        %1166 = vmatprep.subr.mxu0 0.0
        %1167 = vmatpush1.msra.mxu0 0.0
        %1168 = vmatprep.subr.mxu0 0.0
        %1169 = vmatpush1.msra.mxu0 0.0
        %1170 = vmatprep.subr.mxu0 0.0
        %1171 = vmatpush1.msra.mxu0 0.0
        %1172 = vmatprep.subr.mxu0 0.0
        %1173 = vmatpush1.msra.mxu0 %v1137
        %1174 = vmatprep.subr.mxu0 0.0
        %1175 = vmatpush2.msra.mxu0 0.0
        %1176 = vmatprep.subr.mxu0 0.0
        %1177 = vmatpush2.msra.mxu0 0.0
        %1178 = vmatprep.subr.mxu0 0.0
        %1179 = vmatpush2.msra.mxu0 0.0
        %1180 = vmatprep.subr.mxu0 0.0
        %1181 = vmatpush2.msra.mxu0 0.0
        %1182 = vmatprep.subr.mxu0 0.0
        %1183 = vmatpush2.msra.mxu0 0.0
        %1184 = vmatprep.subr.mxu0 0.0
        %1185 = vmatpush2.msra.mxu0 0.0
        %1186 = vmatprep.subr.mxu0 0.0
        %1187 = vmatpush2.msra.mxu0 0.0
        %1188 = vmatprep.subr.mxu0 0.0
        %1189 = vmatpush2.msra.mxu0 0.0
        %1190 = vmatprep.subr.mxu0 0.0
        %1191 = vmatpush2.msra.mxu0 0.0
        %1192 = vmatprep.subr.mxu0 0.0
        %1193 = vmatpush2.msra.mxu0 0.0
        %1194 = vmatprep.subr.mxu0 0.0
        %1195 = vmatpush2.msra.mxu0 0.0
        %1196 = vmatprep.subr.mxu0 0.0
        %1197 = vmatpush2.msra.mxu0 0.0
        %1198 = vmatprep.subr.mxu0 0.0
        %1199 = vmatpush2.msra.mxu0 0.0
        %1200 = vmatprep.subr.mxu0 0.0
        %1201 = vmatpush2.msra.mxu0 0.0
        %1202 = vmatprep.subr.mxu0 0.0
        %1203 = vmatpush2.msra.mxu0 0.0
        %1204 = vmatprep.subr.mxu0 0.0
        %1205 = vmatpush2.msra.mxu0 0.0
        %1206 = vmatprep.mubr.f32.mxu0 0.0
        %1207 = vmatmul.mubr.f32.gmra.mxu0 %v1140
        %v1208 = vpop.f32.mrf.mxu0
        %v1209 = vadd.f32 0.0, %v1208
        %v1210 = vpop.f32.mrf.mxu0
        %1211 = vdwg.mxu0
        %1213 = vrot.lane.b32.xlu0 %v879, 8
        %v1214 = vpop.permute.xlu0 %1213
        %1217 = vrot.lane.b32.xlu0 %v1044, 16
        %v1218 = vpop.permute.xlu0 %1217
        %1221 = vrot.lane.b32.xlu0 %v1209, 24
        %v1222 = vpop.permute.xlu0 %1221
        %v1224 = vsel %vm554, %v714, %v1214
        %vm1225 = vcmask 130048
        %v1226 = vsel %vm1225, %v1224, %v1218
        %vm1227 = vcmask 195584
        %v1228 = vsel %vm1227, %v1226, %v1222
        %v1229 = vld [vmem:[#allocation7 + $0x20] sm:$0xff]
        %v1230 = vld [vmem:[#allocation7 + $0x28] sm:$0xff]
        %v1231 = vld [vmem:[#allocation7 + $0x30] sm:$0xff]
        %v1232 = vld [vmem:[#allocation7 + $0x38] sm:$0xff]
        %v1233 = vld [vmem:[#allocation7 + $0xa1] sm:$0x1]
        %v1234 = vlaneseq
        %v1235 = vshrl.u32 %v1234, 7
        %v1236 = vsub.s32 0, %v1235
        %v1237 = vrot.slane %v1233, %v1236
        %v1239 = vsel %vm397, %v1228, 0
        %1241 = vmatprep.subr.mxu0 0.0
        %1242 = vmatpush1.msra.mxu0 0.0
        %1243 = vmatprep.subr.mxu0 0.0
        %1244 = vmatpush1.msra.mxu0 0.0
        %1245 = vmatprep.subr.mxu0 0.0
        %1246 = vmatpush1.msra.mxu0 0.0
        %1247 = vmatprep.subr.mxu0 0.0
        %1248 = vmatpush1.msra.mxu0 0.0
        %1249 = vmatprep.subr.mxu0 0.0
        %1250 = vmatpush1.msra.mxu0 0.0
        %1251 = vmatprep.subr.mxu0 0.0
        %1252 = vmatpush1.msra.mxu0 0.0
        %1253 = vmatprep.subr.mxu0 0.0
        %1254 = vmatpush1.msra.mxu0 0.0
        %1255 = vmatprep.subr.mxu0 0.0
        %1256 = vmatpush1.msra.mxu0 0.0
        %1257 = vmatprep.subr.mxu0 0.0
        %1258 = vmatpush1.msra.mxu0 0.0
        %1259 = vmatprep.subr.mxu0 0.0
        %1260 = vmatpush1.msra.mxu0 0.0
        %1261 = vmatprep.subr.mxu0 0.0
        %1262 = vmatpush1.msra.mxu0 0.0
        %1263 = vmatprep.subr.mxu0 0.0
        %1264 = vmatpush1.msra.mxu0 0.0
        %1265 = vmatprep.subr.mxu0 0.0
        %1266 = vmatpush1.msra.mxu0 %v1232
        %1267 = vmatprep.subr.mxu0 0.0
        %1268 = vmatpush1.msra.mxu0 %v1231
        %1269 = vmatprep.subr.mxu0 0.0
        %1270 = vmatpush1.msra.mxu0 %v1230
        %1271 = vmatprep.subr.mxu0 0.0
        %1272 = vmatpush1.msra.mxu0 %v1229
        %1273 = vmatprep.subr.mxu0 0.0
        %1274 = vmatpush2.msra.mxu0 0.0
        %1275 = vmatprep.subr.mxu0 0.0
        %1276 = vmatpush2.msra.mxu0 0.0
        %1277 = vmatprep.subr.mxu0 0.0
        %1278 = vmatpush2.msra.mxu0 0.0
        %1279 = vmatprep.subr.mxu0 0.0
        %1280 = vmatpush2.msra.mxu0 0.0
        %1281 = vmatprep.subr.mxu0 0.0
        %1282 = vmatpush2.msra.mxu0 0.0
        %1283 = vmatprep.subr.mxu0 0.0
        %1284 = vmatpush2.msra.mxu0 0.0
        %1285 = vmatprep.subr.mxu0 0.0
        %1286 = vmatpush2.msra.mxu0 0.0
        %1287 = vmatprep.subr.mxu0 0.0
        %1288 = vmatpush2.msra.mxu0 0.0
        %1289 = vmatprep.subr.mxu0 0.0
        %1290 = vmatpush2.msra.mxu0 0.0
        %1291 = vmatprep.subr.mxu0 0.0
        %1292 = vmatpush2.msra.mxu0 0.0
        %1293 = vmatprep.subr.mxu0 0.0
        %1294 = vmatpush2.msra.mxu0 0.0
        %1295 = vmatprep.subr.mxu0 0.0
        %1296 = vmatpush2.msra.mxu0 0.0
        %1297 = vmatprep.subr.mxu0 0.0
        %1298 = vmatpush2.msra.mxu0 0.0
        %1299 = vmatprep.subr.mxu0 0.0
        %1300 = vmatpush2.msra.mxu0 0.0
        %1301 = vmatprep.subr.mxu0 0.0
        %1302 = vmatpush2.msra.mxu0 0.0
        %1303 = vmatprep.subr.mxu0 0.0
        %1304 = vmatpush2.msra.mxu0 0.0
        %1305 = vmatprep.mubr.f32.mxu0 0.0
        %1306 = vmatmul.mubr.f32.gmra.mxu0 %v1239
        %v1307 = vpop.f32.mrf.mxu0
        %v1308 = vadd.f32 %v1237, %v1307
        %v1309 = vpop.f32.mrf.mxu0
        %1310 = vdwg.mxu0
        %v1311 = vadd.f32 %v385, %v1308
        %v1312 = vld [vmem:[#allocation7 + $0xa4] sm:$0x1]
        %v1313 = vld [vmem:[#allocation7 + $0xa5] sm:$0x1]
        %v1314 = vsel %vm397, %v1311, 0.0
        %1315 = vadd.xlane.f32.xlu0 %v1314
        %v1316 = vpop.xlane.xlu0 %1315
        %v1317 = vrcp.pop 32.0
        %v1318 = vmul.f32 %v1316, %v1317
        %v1319 = vsub.f32 %v1311, %v1318
        %v1320 = vmul.f32 %v1319, %v1319
        %v1321 = vsel %vm397, %v1320, 0.0
        %1322 = vadd.xlane.f32.xlu0 %v1321
        %v1323 = vpop.xlane.xlu0 %1322
        %v1324 = vmul.f32 %v1323, %v1317
        %v1325 = vadd.f32 %v1324, 1e-05
        %v1326 = vrsqrt.pop %v1325
        %v1327 = vmul.f32 %v1319, %v1326
        %v1328 = vlaneseq
        %v1329 = vshrl.u32 %v1328, 7
        %v1330 = vsub.s32 0, %v1329
        %v1331 = vrot.slane %v1312, %v1330
        %v1332 = vmul.f32 %v1327, %v1331
        %v1333 = vlaneseq
        %v1334 = vshrl.u32 %v1333, 7
        %v1335 = vsub.s32 0, %v1334
        %v1336 = vrot.slane %v1313, %v1335
        %v1337 = vadd.f32 %v1332, %v1336
        %v1338 = vld [vmem:[#allocation7 + $0x40] sm:$0xff]
        %v1339 = vld [vmem:[#allocation7 + $0x48] sm:$0xff]
        %v1340 = vld [vmem:[#allocation7 + $0x50] sm:$0xff]
        %v1341 = vld [vmem:[#allocation7 + $0x58] sm:$0xff]
        %v1342 = vld [vmem:[#allocation7 + $0xa2] sm:$0x1]
        %v1343 = vld [vmem:[#allocation7 + $0x60] sm:$0xff]
        %v1344 = vld [vmem:[#allocation7 + $0x68] sm:$0xff]
        %v1345 = vld [vmem:[#allocation7 + $0x70] sm:$0xff]
        %v1346 = vld [vmem:[#allocation7 + $0x78] sm:$0xff]
        %v1347 = vld [vmem:[#allocation7 + $0x80] sm:$0xff]
        %v1348 = vld [vmem:[#allocation7 + $0x88] sm:$0xff]
        %v1349 = vld [vmem:[#allocation7 + $0x90] sm:$0xff]
        %v1350 = vld [vmem:[#allocation7 + $0x98] sm:$0xff]
        %v1351 = vld [vmem:[#allocation7 + $0xa3] sm:$0x1]
        %v1352 = vlaneseq
        %v1353 = vshrl.u32 %v1352, 7
        %v1354 = vsub.s32 0, %v1353
        %v1355 = vrot.slane %v1342, %v1354
        %v1357 = vsel %vm397, %v1337, 0
        %1359 = vmatprep.subr.mxu0 0.0
        %1360 = vmatpush1.msra.mxu0 0.0
        %1361 = vmatprep.subr.mxu0 0.0
        %1362 = vmatpush1.msra.mxu0 0.0
        %1363 = vmatprep.subr.mxu0 0.0
        %1364 = vmatpush1.msra.mxu0 0.0
        %1365 = vmatprep.subr.mxu0 0.0
        %1366 = vmatpush1.msra.mxu0 0.0
        %1367 = vmatprep.subr.mxu0 0.0
        %1368 = vmatpush1.msra.mxu0 0.0
        %1369 = vmatprep.subr.mxu0 0.0
        %1370 = vmatpush1.msra.mxu0 0.0
        %1371 = vmatprep.subr.mxu0 0.0
        %1372 = vmatpush1.msra.mxu0 0.0
        %1373 = vmatprep.subr.mxu0 0.0
        %1374 = vmatpush1.msra.mxu0 0.0
        %1375 = vmatprep.subr.mxu0 0.0
        %1376 = vmatpush1.msra.mxu0 0.0
        %1377 = vmatprep.subr.mxu0 0.0
        %1378 = vmatpush1.msra.mxu0 0.0
        %1379 = vmatprep.subr.mxu0 0.0
        %1380 = vmatpush1.msra.mxu0 0.0
        %1381 = vmatprep.subr.mxu0 0.0
        %1382 = vmatpush1.msra.mxu0 0.0
        %1383 = vmatprep.subr.mxu0 0.0
        %1384 = vmatpush1.msra.mxu0 %v1341
        %1385 = vmatprep.subr.mxu0 0.0
        %1386 = vmatpush1.msra.mxu0 %v1340
        %1387 = vmatprep.subr.mxu0 0.0
        %1388 = vmatpush1.msra.mxu0 %v1339
        %1389 = vmatprep.subr.mxu0 0.0
        %1390 = vmatpush1.msra.mxu0 %v1338
        %1391 = vmatprep.subr.mxu0 0.0
        %1392 = vmatpush2.msra.mxu0 0.0
        %1393 = vmatprep.subr.mxu0 0.0
        %1394 = vmatpush2.msra.mxu0 0.0
        %1395 = vmatprep.subr.mxu0 0.0
        %1396 = vmatpush2.msra.mxu0 0.0
        %1397 = vmatprep.subr.mxu0 0.0
        %1398 = vmatpush2.msra.mxu0 0.0
        %1399 = vmatprep.subr.mxu0 0.0
        %1400 = vmatpush2.msra.mxu0 0.0
        %1401 = vmatprep.subr.mxu0 0.0
        %1402 = vmatpush2.msra.mxu0 0.0
        %1403 = vmatprep.subr.mxu0 0.0
        %1404 = vmatpush2.msra.mxu0 0.0
        %1405 = vmatprep.subr.mxu0 0.0
        %1406 = vmatpush2.msra.mxu0 0.0
        %1407 = vmatprep.subr.mxu0 0.0
        %1408 = vmatpush2.msra.mxu0 0.0
        %1409 = vmatprep.subr.mxu0 0.0
        %1410 = vmatpush2.msra.mxu0 0.0
        %1411 = vmatprep.subr.mxu0 0.0
        %1412 = vmatpush2.msra.mxu0 0.0
        %1413 = vmatprep.subr.mxu0 0.0
        %1414 = vmatpush2.msra.mxu0 0.0
        %1415 = vmatprep.subr.mxu0 0.0
        %1416 = vmatpush2.msra.mxu0 0.0
        %1417 = vmatprep.subr.mxu0 0.0
        %1418 = vmatpush2.msra.mxu0 0.0
        %1419 = vmatprep.subr.mxu0 0.0
        %1420 = vmatpush2.msra.mxu0 0.0
        %1421 = vmatprep.subr.mxu0 0.0
        %1422 = vmatpush2.msra.mxu0 0.0
        %1423 = vmatprep.mubr.f32.mxu0 0.0
        %1424 = vmatmul.mubr.f32.gmra.mxu0 %v1357
        %v1425 = vpop.f32.mrf.mxu0
        %v1426 = vadd.f32 %v1355, %v1425
        %v1427 = vpop.f32.mrf.mxu0
        %1428 = vdwg.mxu0
        %v1429 = vmax.f32 %v1426, 0.0
        %v1430 = vlaneseq
        %v1431 = vshrl.u32 %v1430, 7
        %v1432 = vsub.s32 0, %v1431
        %v1433 = vrot.slane %v1351, %v1432
        %vm1434 = vcmask 523264
        %v1436 = vsel %vm1434, %v1429, 0
        %1438 = vmatprep.subr.mxu0 0.0
        %1439 = vmatpush1.msra.mxu0 0.0
        %1440 = vmatprep.subr.mxu0 0.0
        %1441 = vmatpush1.msra.mxu0 0.0
        %1442 = vmatprep.subr.mxu0 0.0
        %1443 = vmatpush1.msra.mxu0 0.0
        %1444 = vmatprep.subr.mxu0 0.0
        %1445 = vmatpush1.msra.mxu0 0.0
        %1446 = vmatprep.subr.mxu0 0.0
        %1447 = vmatpush1.msra.mxu0 0.0
        %1448 = vmatprep.subr.mxu0 0.0
        %1449 = vmatpush1.msra.mxu0 0.0
        %1450 = vmatprep.subr.mxu0 0.0
        %1451 = vmatpush1.msra.mxu0 0.0
        %1452 = vmatprep.subr.mxu0 0.0
        %1453 = vmatpush1.msra.mxu0 0.0
        %1454 = vmatprep.subr.mxu0 0.0
        %1455 = vmatpush1.msra.mxu0 %v1350
        %1456 = vmatprep.subr.mxu0 0.0
        %1457 = vmatpush1.msra.mxu0 %v1349
        %1458 = vmatprep.subr.mxu0 0.0
        %1459 = vmatpush1.msra.mxu0 %v1348
        %1460 = vmatprep.subr.mxu0 0.0
        %1461 = vmatpush1.msra.mxu0 %v1347
        %1462 = vmatprep.subr.mxu0 0.0
        %1463 = vmatpush1.msra.mxu0 %v1346
        %1464 = vmatprep.subr.mxu0 0.0
        %1465 = vmatpush1.msra.mxu0 %v1345
        %1466 = vmatprep.subr.mxu0 0.0
        %1467 = vmatpush1.msra.mxu0 %v1344
        %1468 = vmatprep.subr.mxu0 0.0
        %1469 = vmatpush1.msra.mxu0 %v1343
        %1470 = vmatprep.subr.mxu0 0.0
        %1471 = vmatpush2.msra.mxu0 0.0
        %1472 = vmatprep.subr.mxu0 0.0
        %1473 = vmatpush2.msra.mxu0 0.0
        %1474 = vmatprep.subr.mxu0 0.0
        %1475 = vmatpush2.msra.mxu0 0.0
        %1476 = vmatprep.subr.mxu0 0.0
        %1477 = vmatpush2.msra.mxu0 0.0
        %1478 = vmatprep.subr.mxu0 0.0
        %1479 = vmatpush2.msra.mxu0 0.0
        %1480 = vmatprep.subr.mxu0 0.0
        %1481 = vmatpush2.msra.mxu0 0.0
        %1482 = vmatprep.subr.mxu0 0.0
        %1483 = vmatpush2.msra.mxu0 0.0
        %1484 = vmatprep.subr.mxu0 0.0
        %1485 = vmatpush2.msra.mxu0 0.0
        %1486 = vmatprep.subr.mxu0 0.0
        %1487 = vmatpush2.msra.mxu0 0.0
        %1488 = vmatprep.subr.mxu0 0.0
        %1489 = vmatpush2.msra.mxu0 0.0
        %1490 = vmatprep.subr.mxu0 0.0
        %1491 = vmatpush2.msra.mxu0 0.0
        %1492 = vmatprep.subr.mxu0 0.0
        %1493 = vmatpush2.msra.mxu0 0.0
        %1494 = vmatprep.subr.mxu0 0.0
        %1495 = vmatpush2.msra.mxu0 0.0
        %1496 = vmatprep.subr.mxu0 0.0
        %1497 = vmatpush2.msra.mxu0 0.0
        %1498 = vmatprep.subr.mxu0 0.0
        %1499 = vmatpush2.msra.mxu0 0.0
        %1500 = vmatprep.subr.mxu0 0.0
        %1501 = vmatpush2.msra.mxu0 0.0
        %1502 = vmatprep.mubr.f32.mxu0 0.0
        %1503 = vmatmul.mubr.f32.gmra.mxu0 %v1436
        %v1504 = vpop.f32.mrf.mxu0
        %v1505 = vadd.f32 %v1433, %v1504
        %v1506 = vpop.f32.mrf.mxu0
        %1507 = vdwg.mxu0
        %v1508 = vadd.f32 %v1337, %v1505
        %v1509 = vld [vmem:[#allocation7 + $0xa6] sm:$0x1]
        %v1510 = vld [vmem:[#allocation7 + $0xa7] sm:$0x1]
        %v1511 = vsel %vm397, %v1508, 0.0
        %1512 = vadd.xlane.f32.xlu0 %v1511
        %v1513 = vpop.xlane.xlu0 %1512
        %v1514 = vmul.f32 %v1513, %v1317
        %v1515 = vsub.f32 %v1508, %v1514
        %v1516 = vmul.f32 %v1515, %v1515
        %v1517 = vsel %vm397, %v1516, 0.0
        %1518 = vadd.xlane.f32.xlu0 %v1517
        %v1519 = vpop.xlane.xlu0 %1518
        %v1520 = vmul.f32 %v1519, %v1317
        %v1521 = vadd.f32 %v1520, 1e-05
        %v1522 = vrsqrt.pop %v1521
        %v1523 = vmul.f32 %v1515, %v1522
        %v1524 = vlaneseq
        %v1525 = vshrl.u32 %v1524, 7
        %v1526 = vsub.s32 0, %v1525
        %v1527 = vrot.slane %v1509, %v1526
        %v1528 = vmul.f32 %v1523, %v1527
        %v1529 = vlaneseq
        %v1530 = vshrl.u32 %v1529, 7
        %v1531 = vsub.s32 0, %v1530
        %v1532 = vrot.slane %v1510, %v1531
        %v1533 = vadd.f32 %v1528, %v1532
        %v1534 = vld [vmem:[#allocation7 + $0xa8] sm:$0xff]
        %v1535 = vld [vmem:[#allocation7 + $0xb0] sm:$0xff]
        %v1536 = vld [vmem:[#allocation7 + $0xb8] sm:$0xff]
        %v1537 = vld [vmem:[#allocation7 + $0xc0] sm:$0xff]
        %v1538 = vld [vmem:[#allocation7 + $0x148] sm:$0x1]
        %v1539 = vlaneseq
        %v1540 = vshrl.u32 %v1539, 7
        %v1541 = vsub.s32 0, %v1540
        %v1542 = vrot.slane %v1538, %v1541
        %v1544 = vsel %vm397, %v1533, 0
        %1546 = vmatprep.subr.mxu0 0.0
        %1547 = vmatpush1.msra.mxu0 0.0
        %1548 = vmatprep.subr.mxu0 0.0
        %1549 = vmatpush1.msra.mxu0 0.0
        %1550 = vmatprep.subr.mxu0 0.0
        %1551 = vmatpush1.msra.mxu0 0.0
        %1552 = vmatprep.subr.mxu0 0.0
        %1553 = vmatpush1.msra.mxu0 0.0
        %1554 = vmatprep.subr.mxu0 0.0
        %1555 = vmatpush1.msra.mxu0 0.0
        %1556 = vmatprep.subr.mxu0 0.0
        %1557 = vmatpush1.msra.mxu0 0.0
        %1558 = vmatprep.subr.mxu0 0.0
        %1559 = vmatpush1.msra.mxu0 0.0
        %1560 = vmatprep.subr.mxu0 0.0
        %1561 = vmatpush1.msra.mxu0 0.0
        %1562 = vmatprep.subr.mxu0 0.0
        %1563 = vmatpush1.msra.mxu0 0.0
        %1564 = vmatprep.subr.mxu0 0.0
        %1565 = vmatpush1.msra.mxu0 0.0
        %1566 = vmatprep.subr.mxu0 0.0
        %1567 = vmatpush1.msra.mxu0 0.0
        %1568 = vmatprep.subr.mxu0 0.0
        %1569 = vmatpush1.msra.mxu0 0.0
        %1570 = vmatprep.subr.mxu0 0.0
        %1571 = vmatpush1.msra.mxu0 %v1537
        %1572 = vmatprep.subr.mxu0 0.0
        %1573 = vmatpush1.msra.mxu0 %v1536
        %1574 = vmatprep.subr.mxu0 0.0
        %1575 = vmatpush1.msra.mxu0 %v1535
        %1576 = vmatprep.subr.mxu0 0.0
        %1577 = vmatpush1.msra.mxu0 %v1534
        %1578 = vmatprep.subr.mxu0 0.0
        %1579 = vmatpush2.msra.mxu0 0.0
        %1580 = vmatprep.subr.mxu0 0.0
        %1581 = vmatpush2.msra.mxu0 0.0
        %1582 = vmatprep.subr.mxu0 0.0
        %1583 = vmatpush2.msra.mxu0 0.0
        %1584 = vmatprep.subr.mxu0 0.0
        %1585 = vmatpush2.msra.mxu0 0.0
        %1586 = vmatprep.subr.mxu0 0.0
        %1587 = vmatpush2.msra.mxu0 0.0
        %1588 = vmatprep.subr.mxu0 0.0
        %1589 = vmatpush2.msra.mxu0 0.0
        %1590 = vmatprep.subr.mxu0 0.0
        %1591 = vmatpush2.msra.mxu0 0.0
        %1592 = vmatprep.subr.mxu0 0.0
        %1593 = vmatpush2.msra.mxu0 0.0
        %1594 = vmatprep.subr.mxu0 0.0
        %1595 = vmatpush2.msra.mxu0 0.0
        %1596 = vmatprep.subr.mxu0 0.0
        %1597 = vmatpush2.msra.mxu0 0.0
        %1598 = vmatprep.subr.mxu0 0.0
        %1599 = vmatpush2.msra.mxu0 0.0
        %1600 = vmatprep.subr.mxu0 0.0
        %1601 = vmatpush2.msra.mxu0 0.0
        %1602 = vmatprep.subr.mxu0 0.0
        %1603 = vmatpush2.msra.mxu0 0.0
        %1604 = vmatprep.subr.mxu0 0.0
        %1605 = vmatpush2.msra.mxu0 0.0
        %1606 = vmatprep.subr.mxu0 0.0
        %1607 = vmatpush2.msra.mxu0 0.0
        %1608 = vmatprep.subr.mxu0 0.0
        %1609 = vmatpush2.msra.mxu0 0.0
        %1610 = vmatprep.mubr.f32.mxu0 0.0
        %1611 = vmatmul.mubr.f32.gmra.mxu0 %v1544
        %v1612 = vpop.f32.mrf.mxu0
        %v1613 = vadd.f32 %v1542, %v1612
        %v1614 = vpop.f32.mrf.mxu0
        %1615 = vdwg.mxu0
        %1616 = vmatprep.subr.mxu0 0.0
        %1617 = vmatpush1.msra.mxu0 0.0
        %1618 = vmatprep.subr.mxu0 0.0
        %1619 = vmatpush1.msra.mxu0 0.0
        %1620 = vmatprep.subr.mxu0 0.0
        %1621 = vmatpush1.msra.mxu0 0.0
        %1622 = vmatprep.subr.mxu0 0.0
        %1623 = vmatpush1.msra.mxu0 0.0
        %1624 = vmatprep.subr.mxu0 0.0
        %1625 = vmatpush1.msra.mxu0 0.0
        %1626 = vmatprep.subr.mxu0 0.0
        %1627 = vmatpush1.msra.mxu0 0.0
        %1628 = vmatprep.subr.mxu0 0.0
        %1629 = vmatpush1.msra.mxu0 0.0
        %1630 = vmatprep.subr.mxu0 0.0
        %1631 = vmatpush1.msra.mxu0 0.0
        %1632 = vmatprep.subr.mxu0 0.0
        %1633 = vmatpush1.msra.mxu0 0.0
        %1634 = vmatprep.subr.mxu0 0.0
        %1635 = vmatpush1.msra.mxu0 0.0
        %1636 = vmatprep.subr.mxu0 0.0
        %1637 = vmatpush1.msra.mxu0 0.0
        %1638 = vmatprep.subr.mxu0 0.0
        %1639 = vmatpush1.msra.mxu0 0.0
        %1640 = vmatprep.subr.mxu0 0.0
        %1641 = vmatpush1.msra.mxu0 %v1537
        %1642 = vmatprep.subr.mxu0 0.0
        %1643 = vmatpush1.msra.mxu0 %v1536
        %1644 = vmatprep.subr.mxu0 0.0
        %1645 = vmatpush1.msra.mxu0 %v1535
        %1646 = vmatprep.subr.mxu0 0.0
        %1647 = vmatpush1.msra.mxu0 %v1534
        %1648 = vmatprep.subr.mxu0 0.0
        %1649 = vmatpush2.msra.mxu0 0.0
        %1650 = vmatprep.subr.mxu0 0.0
        %1651 = vmatpush2.msra.mxu0 0.0
        %1652 = vmatprep.subr.mxu0 0.0
        %1653 = vmatpush2.msra.mxu0 0.0
        %1654 = vmatprep.subr.mxu0 0.0
        %1655 = vmatpush2.msra.mxu0 0.0
        %1656 = vmatprep.subr.mxu0 0.0
        %1657 = vmatpush2.msra.mxu0 0.0
        %1658 = vmatprep.subr.mxu0 0.0
        %1659 = vmatpush2.msra.mxu0 0.0
        %1660 = vmatprep.subr.mxu0 0.0
        %1661 = vmatpush2.msra.mxu0 0.0
        %1662 = vmatprep.subr.mxu0 0.0
        %1663 = vmatpush2.msra.mxu0 0.0
        %1664 = vmatprep.subr.mxu0 0.0
        %1665 = vmatpush2.msra.mxu0 0.0
        %1666 = vmatprep.subr.mxu0 0.0
        %1667 = vmatpush2.msra.mxu0 0.0
        %1668 = vmatprep.subr.mxu0 0.0
        %1669 = vmatpush2.msra.mxu0 0.0
        %1670 = vmatprep.subr.mxu0 0.0
        %1671 = vmatpush2.msra.mxu0 0.0
        %1672 = vmatprep.subr.mxu0 0.0
        %1673 = vmatpush2.msra.mxu0 0.0
        %1674 = vmatprep.subr.mxu0 0.0
        %1675 = vmatpush2.msra.mxu0 0.0
        %1676 = vmatprep.subr.mxu0 0.0
        %1677 = vmatpush2.msra.mxu0 0.0
        %1678 = vmatprep.subr.mxu0 0.0
        %1679 = vmatpush2.msra.mxu0 0.0
        %1680 = vmatprep.mubr.f32.mxu0 0.0
        %1681 = vmatmul.mubr.f32.gmra.mxu0 %v472
        %v1682 = vpop.f32.mrf.mxu0
        %v1683 = vadd.f32 0.0, %v1682
        %v1684 = vpop.f32.mrf.mxu0
        %1685 = vdwg.mxu0
        %v1686 = vadd.f32 %v1613, %v1683
        %1688 = vrot.lane.b32.xlu0 %v1686, 96
        %v1689 = vpop.permute.xlu0 %1688
        %v1690 = vsel %vm554, %v1686, 0
        %v1692 = vsel %vm554, %v1689, 0
        %1694 = vmatprep.subr.mxu0 0.0
        %1695 = vmatpush1.xpose.msra.mxu0 0.0
        %1696 = vmatprep.subr.mxu0 0.0
        %1697 = vmatpush1.xpose.msra.mxu0 0.0
        %1698 = vmatprep.subr.mxu0 0.0
        %1699 = vmatpush1.xpose.msra.mxu0 0.0
        %1700 = vmatprep.subr.mxu0 0.0
        %1701 = vmatpush1.xpose.msra.mxu0 0.0
        %1702 = vmatprep.subr.mxu0 0.0
        %1703 = vmatpush1.xpose.msra.mxu0 0.0
        %1704 = vmatprep.subr.mxu0 0.0
        %1705 = vmatpush1.xpose.msra.mxu0 0.0
        %1706 = vmatprep.subr.mxu0 0.0
        %1707 = vmatpush1.xpose.msra.mxu0 0.0
        %1708 = vmatprep.subr.mxu0 0.0
        %1709 = vmatpush1.xpose.msra.mxu0 0.0
        %1710 = vmatprep.subr.mxu0 0.0
        %1711 = vmatpush1.xpose.msra.mxu0 0.0
        %1712 = vmatprep.subr.mxu0 0.0
        %1713 = vmatpush1.xpose.msra.mxu0 0.0
        %1714 = vmatprep.subr.mxu0 0.0
        %1715 = vmatpush1.xpose.msra.mxu0 0.0
        %1716 = vmatprep.subr.mxu0 0.0
        %1717 = vmatpush1.xpose.msra.mxu0 0.0
        %1718 = vmatprep.subr.mxu0 0.0
        %1719 = vmatpush1.xpose.msra.mxu0 0.0
        %1720 = vmatprep.subr.mxu0 0.0
        %1721 = vmatpush1.xpose.msra.mxu0 0.0
        %1722 = vmatprep.subr.mxu0 0.0
        %1723 = vmatpush1.xpose.msra.mxu0 0.0
        %1724 = vmatprep.subr.mxu0 0.0
        %1725 = vmatpush1.xpose.msra.mxu0 %v1692
        %1726 = vmatprep.subr.mxu0 0.0
        %1727 = vmatpush2.xpose.msra.mxu0 0.0
        %1728 = vmatprep.subr.mxu0 0.0
        %1729 = vmatpush2.xpose.msra.mxu0 0.0
        %1730 = vmatprep.subr.mxu0 0.0
        %1731 = vmatpush2.xpose.msra.mxu0 0.0
        %1732 = vmatprep.subr.mxu0 0.0
        %1733 = vmatpush2.xpose.msra.mxu0 0.0
        %1734 = vmatprep.subr.mxu0 0.0
        %1735 = vmatpush2.xpose.msra.mxu0 0.0
        %1736 = vmatprep.subr.mxu0 0.0
        %1737 = vmatpush2.xpose.msra.mxu0 0.0
        %1738 = vmatprep.subr.mxu0 0.0
        %1739 = vmatpush2.xpose.msra.mxu0 0.0
        %1740 = vmatprep.subr.mxu0 0.0
        %1741 = vmatpush2.xpose.msra.mxu0 0.0
        %1742 = vmatprep.subr.mxu0 0.0
        %1743 = vmatpush2.xpose.msra.mxu0 0.0
        %1744 = vmatprep.subr.mxu0 0.0
        %1745 = vmatpush2.xpose.msra.mxu0 0.0
        %1746 = vmatprep.subr.mxu0 0.0
        %1747 = vmatpush2.xpose.msra.mxu0 0.0
        %1748 = vmatprep.subr.mxu0 0.0
        %1749 = vmatpush2.xpose.msra.mxu0 0.0
        %1750 = vmatprep.subr.mxu0 0.0
        %1751 = vmatpush2.xpose.msra.mxu0 0.0
        %1752 = vmatprep.subr.mxu0 0.0
        %1753 = vmatpush2.xpose.msra.mxu0 0.0
        %1754 = vmatprep.subr.mxu0 0.0
        %1755 = vmatpush2.xpose.msra.mxu0 0.0
        %1756 = vmatprep.subr.mxu0 0.0
        %1757 = vmatpush2.xpose.msra.mxu0 0.0
        %1758 = vmatprep.mubr.f32.mxu0 0.0
        %1759 = vmatmul.mubr.f32.gmra.mxu0 %v1690
        %v1760 = vpop.f32.mrf.mxu0
        %v1761 = vadd.f32 %v549, %v1760
        %v1762 = vpop.f32.mrf.mxu0
        %1763 = vdwg.mxu0
        %v1764 = vsel %vm554, %v1761, -inf
        %1765 = vmax.xlane.f32.xlu0 %v1764
        %v1766 = vpop.xlane.xlu0 %1765
        %v1767 = vsub.f32 %v1761, %v1766
        %v1768 = vmul.f32 %v1767, 1.442695
        %v1769 = vpow.pop %v1768
        %v1770 = vsel %vm554, %v1769, 0.0
        %1771 = vadd.xlane.f32.xlu0 %v1770
        %v1772 = vpop.xlane.xlu0 %1771
        %v1773 = vrcp.pop %v1772
        %v1774 = vmul.f32 %v1769, %v1773
        %1776 = vrot.lane.b32.xlu0 %v1613, 64
        %v1777 = vpop.permute.xlu0 %1776
        %v1780 = vsel %vm554, %v1774, 0
        %1782 = vmatprep.subr.mxu0 0.0
        %1783 = vmatpush1.msra.mxu0 0.0
        %1784 = vmatprep.subr.mxu0 0.0
        %1785 = vmatpush1.msra.mxu0 0.0
        %1786 = vmatprep.subr.mxu0 0.0
        %1787 = vmatpush1.msra.mxu0 0.0
        %1788 = vmatprep.subr.mxu0 0.0
        %1789 = vmatpush1.msra.mxu0 0.0
        %1790 = vmatprep.subr.mxu0 0.0
        %1791 = vmatpush1.msra.mxu0 0.0
        %1792 = vmatprep.subr.mxu0 0.0
        %1793 = vmatpush1.msra.mxu0 0.0
        %1794 = vmatprep.subr.mxu0 0.0
        %1795 = vmatpush1.msra.mxu0 0.0
        %1796 = vmatprep.subr.mxu0 0.0
        %1797 = vmatpush1.msra.mxu0 0.0
        %1798 = vmatprep.subr.mxu0 0.0
        %1799 = vmatpush1.msra.mxu0 0.0
        %1800 = vmatprep.subr.mxu0 0.0
        %1801 = vmatpush1.msra.mxu0 0.0
        %1802 = vmatprep.subr.mxu0 0.0
        %1803 = vmatpush1.msra.mxu0 0.0
        %1804 = vmatprep.subr.mxu0 0.0
        %1805 = vmatpush1.msra.mxu0 0.0
        %1806 = vmatprep.subr.mxu0 0.0
        %1807 = vmatpush1.msra.mxu0 0.0
        %1808 = vmatprep.subr.mxu0 0.0
        %1809 = vmatpush1.msra.mxu0 0.0
        %1810 = vmatprep.subr.mxu0 0.0
        %1811 = vmatpush1.msra.mxu0 0.0
        %1812 = vmatprep.subr.mxu0 0.0
        %1813 = vmatpush1.msra.mxu0 %v1777
        %1814 = vmatprep.subr.mxu0 0.0
        %1815 = vmatpush2.msra.mxu0 0.0
        %1816 = vmatprep.subr.mxu0 0.0
        %1817 = vmatpush2.msra.mxu0 0.0
        %1818 = vmatprep.subr.mxu0 0.0
        %1819 = vmatpush2.msra.mxu0 0.0
        %1820 = vmatprep.subr.mxu0 0.0
        %1821 = vmatpush2.msra.mxu0 0.0
        %1822 = vmatprep.subr.mxu0 0.0
        %1823 = vmatpush2.msra.mxu0 0.0
        %1824 = vmatprep.subr.mxu0 0.0
        %1825 = vmatpush2.msra.mxu0 0.0
        %1826 = vmatprep.subr.mxu0 0.0
        %1827 = vmatpush2.msra.mxu0 0.0
        %1828 = vmatprep.subr.mxu0 0.0
        %1829 = vmatpush2.msra.mxu0 0.0
        %1830 = vmatprep.subr.mxu0 0.0
        %1831 = vmatpush2.msra.mxu0 0.0
        %1832 = vmatprep.subr.mxu0 0.0
        %1833 = vmatpush2.msra.mxu0 0.0
        %1834 = vmatprep.subr.mxu0 0.0
        %1835 = vmatpush2.msra.mxu0 0.0
        %1836 = vmatprep.subr.mxu0 0.0
        %1837 = vmatpush2.msra.mxu0 0.0
        %1838 = vmatprep.subr.mxu0 0.0
        %1839 = vmatpush2.msra.mxu0 0.0
        %1840 = vmatprep.subr.mxu0 0.0
        %1841 = vmatpush2.msra.mxu0 0.0
        %1842 = vmatprep.subr.mxu0 0.0
        %1843 = vmatpush2.msra.mxu0 0.0
        %1844 = vmatprep.subr.mxu0 0.0
        %1845 = vmatpush2.msra.mxu0 0.0
        %1846 = vmatprep.mubr.f32.mxu0 0.0
        %1847 = vmatmul.mubr.f32.gmra.mxu0 %v1780
        %v1848 = vpop.f32.mrf.mxu0
        %v1849 = vadd.f32 0.0, %v1848
        %v1850 = vpop.f32.mrf.mxu0
        %1851 = vdwg.mxu0
        %1852 = vrot.lane.b32.xlu0 %v1686, 120
        %v1853 = vpop.permute.xlu0 %1852
        %1854 = vrot.lane.b32.xlu0 %v1686, 88
        %v1855 = vpop.permute.xlu0 %1854
        %v1856 = vsel %vm554, %v1853, 0
        %v1858 = vsel %vm554, %v1855, 0
        %1860 = vmatprep.subr.mxu0 0.0
        %1861 = vmatpush1.xpose.msra.mxu0 0.0
        %1862 = vmatprep.subr.mxu0 0.0
        %1863 = vmatpush1.xpose.msra.mxu0 0.0
        %1864 = vmatprep.subr.mxu0 0.0
        %1865 = vmatpush1.xpose.msra.mxu0 0.0
        %1866 = vmatprep.subr.mxu0 0.0
        %1867 = vmatpush1.xpose.msra.mxu0 0.0
        %1868 = vmatprep.subr.mxu0 0.0
        %1869 = vmatpush1.xpose.msra.mxu0 0.0
        %1870 = vmatprep.subr.mxu0 0.0
        %1871 = vmatpush1.xpose.msra.mxu0 0.0
        %1872 = vmatprep.subr.mxu0 0.0
        %1873 = vmatpush1.xpose.msra.mxu0 0.0
        %1874 = vmatprep.subr.mxu0 0.0
        %1875 = vmatpush1.xpose.msra.mxu0 0.0
        %1876 = vmatprep.subr.mxu0 0.0
        %1877 = vmatpush1.xpose.msra.mxu0 0.0
        %1878 = vmatprep.subr.mxu0 0.0
        %1879 = vmatpush1.xpose.msra.mxu0 0.0
        %1880 = vmatprep.subr.mxu0 0.0
        %1881 = vmatpush1.xpose.msra.mxu0 0.0
        %1882 = vmatprep.subr.mxu0 0.0
        %1883 = vmatpush1.xpose.msra.mxu0 0.0
        %1884 = vmatprep.subr.mxu0 0.0
        %1885 = vmatpush1.xpose.msra.mxu0 0.0
        %1886 = vmatprep.subr.mxu0 0.0
        %1887 = vmatpush1.xpose.msra.mxu0 0.0
        %1888 = vmatprep.subr.mxu0 0.0
        %1889 = vmatpush1.xpose.msra.mxu0 0.0
        %1890 = vmatprep.subr.mxu0 0.0
        %1891 = vmatpush1.xpose.msra.mxu0 %v1858
        %1892 = vmatprep.subr.mxu0 0.0
        %1893 = vmatpush2.xpose.msra.mxu0 0.0
        %1894 = vmatprep.subr.mxu0 0.0
        %1895 = vmatpush2.xpose.msra.mxu0 0.0
        %1896 = vmatprep.subr.mxu0 0.0
        %1897 = vmatpush2.xpose.msra.mxu0 0.0
        %1898 = vmatprep.subr.mxu0 0.0
        %1899 = vmatpush2.xpose.msra.mxu0 0.0
        %1900 = vmatprep.subr.mxu0 0.0
        %1901 = vmatpush2.xpose.msra.mxu0 0.0
        %1902 = vmatprep.subr.mxu0 0.0
        %1903 = vmatpush2.xpose.msra.mxu0 0.0
        %1904 = vmatprep.subr.mxu0 0.0
        %1905 = vmatpush2.xpose.msra.mxu0 0.0
        %1906 = vmatprep.subr.mxu0 0.0
        %1907 = vmatpush2.xpose.msra.mxu0 0.0
        %1908 = vmatprep.subr.mxu0 0.0
        %1909 = vmatpush2.xpose.msra.mxu0 0.0
        %1910 = vmatprep.subr.mxu0 0.0
        %1911 = vmatpush2.xpose.msra.mxu0 0.0
        %1912 = vmatprep.subr.mxu0 0.0
        %1913 = vmatpush2.xpose.msra.mxu0 0.0
        %1914 = vmatprep.subr.mxu0 0.0
        %1915 = vmatpush2.xpose.msra.mxu0 0.0
        %1916 = vmatprep.subr.mxu0 0.0
        %1917 = vmatpush2.xpose.msra.mxu0 0.0
        %1918 = vmatprep.subr.mxu0 0.0
        %1919 = vmatpush2.xpose.msra.mxu0 0.0
        %1920 = vmatprep.subr.mxu0 0.0
        %1921 = vmatpush2.xpose.msra.mxu0 0.0
        %1922 = vmatprep.subr.mxu0 0.0
        %1923 = vmatpush2.xpose.msra.mxu0 0.0
        %1924 = vmatprep.mubr.f32.mxu0 0.0
        %1925 = vmatmul.mubr.f32.gmra.mxu0 %v1856
        %v1926 = vpop.f32.mrf.mxu0
        %v1927 = vadd.f32 %v549, %v1926
        %v1928 = vpop.f32.mrf.mxu0
        %1929 = vdwg.mxu0
        %v1930 = vsel %vm554, %v1927, -inf
        %1931 = vmax.xlane.f32.xlu0 %v1930
        %v1932 = vpop.xlane.xlu0 %1931
        %v1933 = vsub.f32 %v1927, %v1932
        %v1934 = vmul.f32 %v1933, 1.442695
        %v1935 = vpow.pop %v1934
        %v1936 = vsel %vm554, %v1935, 0.0
        %1937 = vadd.xlane.f32.xlu0 %v1936
        %v1938 = vpop.xlane.xlu0 %1937
        %v1939 = vrcp.pop %v1938
        %v1940 = vmul.f32 %v1935, %v1939
        %1941 = vrot.lane.b32.xlu0 %v1613, 56
        %v1942 = vpop.permute.xlu0 %1941
        %v1945 = vsel %vm554, %v1940, 0
        %1947 = vmatprep.subr.mxu0 0.0
        %1948 = vmatpush1.msra.mxu0 0.0
        %1949 = vmatprep.subr.mxu0 0.0
        %1950 = vmatpush1.msra.mxu0 0.0
        %1951 = vmatprep.subr.mxu0 0.0
        %1952 = vmatpush1.msra.mxu0 0.0
        %1953 = vmatprep.subr.mxu0 0.0
        %1954 = vmatpush1.msra.mxu0 0.0
        %1955 = vmatprep.subr.mxu0 0.0
        %1956 = vmatpush1.msra.mxu0 0.0
        %1957 = vmatprep.subr.mxu0 0.0
        %1958 = vmatpush1.msra.mxu0 0.0
        %1959 = vmatprep.subr.mxu0 0.0
        %1960 = vmatpush1.msra.mxu0 0.0
        %1961 = vmatprep.subr.mxu0 0.0
        %1962 = vmatpush1.msra.mxu0 0.0
        %1963 = vmatprep.subr.mxu0 0.0
        %1964 = vmatpush1.msra.mxu0 0.0
        %1965 = vmatprep.subr.mxu0 0.0
        %1966 = vmatpush1.msra.mxu0 0.0
        %1967 = vmatprep.subr.mxu0 0.0
        %1968 = vmatpush1.msra.mxu0 0.0
        %1969 = vmatprep.subr.mxu0 0.0
        %1970 = vmatpush1.msra.mxu0 0.0
        %1971 = vmatprep.subr.mxu0 0.0
        %1972 = vmatpush1.msra.mxu0 0.0
        %1973 = vmatprep.subr.mxu0 0.0
        %1974 = vmatpush1.msra.mxu0 0.0
        %1975 = vmatprep.subr.mxu0 0.0
        %1976 = vmatpush1.msra.mxu0 0.0
        %1977 = vmatprep.subr.mxu0 0.0
        %1978 = vmatpush1.msra.mxu0 %v1942
        %1979 = vmatprep.subr.mxu0 0.0
        %1980 = vmatpush2.msra.mxu0 0.0
        %1981 = vmatprep.subr.mxu0 0.0
        %1982 = vmatpush2.msra.mxu0 0.0
        %1983 = vmatprep.subr.mxu0 0.0
        %1984 = vmatpush2.msra.mxu0 0.0
        %1985 = vmatprep.subr.mxu0 0.0
        %1986 = vmatpush2.msra.mxu0 0.0
        %1987 = vmatprep.subr.mxu0 0.0
        %1988 = vmatpush2.msra.mxu0 0.0
        %1989 = vmatprep.subr.mxu0 0.0
        %1990 = vmatpush2.msra.mxu0 0.0
        %1991 = vmatprep.subr.mxu0 0.0
        %1992 = vmatpush2.msra.mxu0 0.0
        %1993 = vmatprep.subr.mxu0 0.0
        %1994 = vmatpush2.msra.mxu0 0.0
        %1995 = vmatprep.subr.mxu0 0.0
        %1996 = vmatpush2.msra.mxu0 0.0
        %1997 = vmatprep.subr.mxu0 0.0
        %1998 = vmatpush2.msra.mxu0 0.0
        %1999 = vmatprep.subr.mxu0 0.0
        %2000 = vmatpush2.msra.mxu0 0.0
        %2001 = vmatprep.subr.mxu0 0.0
        %2002 = vmatpush2.msra.mxu0 0.0
        %2003 = vmatprep.subr.mxu0 0.0
        %2004 = vmatpush2.msra.mxu0 0.0
        %2005 = vmatprep.subr.mxu0 0.0
        %2006 = vmatpush2.msra.mxu0 0.0
        %2007 = vmatprep.subr.mxu0 0.0
        %2008 = vmatpush2.msra.mxu0 0.0
        %2009 = vmatprep.subr.mxu0 0.0
        %2010 = vmatpush2.msra.mxu0 0.0
        %2011 = vmatprep.mubr.f32.mxu0 0.0
        %2012 = vmatmul.mubr.f32.gmra.mxu0 %v1945
        %v2013 = vpop.f32.mrf.mxu0
        %v2014 = vadd.f32 0.0, %v2013
        %v2015 = vpop.f32.mrf.mxu0
        %2016 = vdwg.mxu0
        %2017 = vrot.lane.b32.xlu0 %v1686, 112
        %v2018 = vpop.permute.xlu0 %2017
        %2019 = vrot.lane.b32.xlu0 %v1686, 80
        %v2020 = vpop.permute.xlu0 %2019
        %v2021 = vsel %vm554, %v2018, 0
        %v2023 = vsel %vm554, %v2020, 0
        %2025 = vmatprep.subr.mxu0 0.0
        %2026 = vmatpush1.xpose.msra.mxu0 0.0
        %2027 = vmatprep.subr.mxu0 0.0
        %2028 = vmatpush1.xpose.msra.mxu0 0.0
        %2029 = vmatprep.subr.mxu0 0.0
        %2030 = vmatpush1.xpose.msra.mxu0 0.0
        %2031 = vmatprep.subr.mxu0 0.0
        %2032 = vmatpush1.xpose.msra.mxu0 0.0
        %2033 = vmatprep.subr.mxu0 0.0
        %2034 = vmatpush1.xpose.msra.mxu0 0.0
        %2035 = vmatprep.subr.mxu0 0.0
        %2036 = vmatpush1.xpose.msra.mxu0 0.0
        %2037 = vmatprep.subr.mxu0 0.0
        %2038 = vmatpush1.xpose.msra.mxu0 0.0
        %2039 = vmatprep.subr.mxu0 0.0
        %2040 = vmatpush1.xpose.msra.mxu0 0.0
        %2041 = vmatprep.subr.mxu0 0.0
        %2042 = vmatpush1.xpose.msra.mxu0 0.0
        %2043 = vmatprep.subr.mxu0 0.0
        %2044 = vmatpush1.xpose.msra.mxu0 0.0
        %2045 = vmatprep.subr.mxu0 0.0
        %2046 = vmatpush1.xpose.msra.mxu0 0.0
        %2047 = vmatprep.subr.mxu0 0.0
        %2048 = vmatpush1.xpose.msra.mxu0 0.0
        %2049 = vmatprep.subr.mxu0 0.0
        %2050 = vmatpush1.xpose.msra.mxu0 0.0
        %2051 = vmatprep.subr.mxu0 0.0
        %2052 = vmatpush1.xpose.msra.mxu0 0.0
        %2053 = vmatprep.subr.mxu0 0.0
        %2054 = vmatpush1.xpose.msra.mxu0 0.0
        %2055 = vmatprep.subr.mxu0 0.0
        %2056 = vmatpush1.xpose.msra.mxu0 %v2023
        %2057 = vmatprep.subr.mxu0 0.0
        %2058 = vmatpush2.xpose.msra.mxu0 0.0
        %2059 = vmatprep.subr.mxu0 0.0
        %2060 = vmatpush2.xpose.msra.mxu0 0.0
        %2061 = vmatprep.subr.mxu0 0.0
        %2062 = vmatpush2.xpose.msra.mxu0 0.0
        %2063 = vmatprep.subr.mxu0 0.0
        %2064 = vmatpush2.xpose.msra.mxu0 0.0
        %2065 = vmatprep.subr.mxu0 0.0
        %2066 = vmatpush2.xpose.msra.mxu0 0.0
        %2067 = vmatprep.subr.mxu0 0.0
        %2068 = vmatpush2.xpose.msra.mxu0 0.0
        %2069 = vmatprep.subr.mxu0 0.0
        %2070 = vmatpush2.xpose.msra.mxu0 0.0
        %2071 = vmatprep.subr.mxu0 0.0
        %2072 = vmatpush2.xpose.msra.mxu0 0.0
        %2073 = vmatprep.subr.mxu0 0.0
        %2074 = vmatpush2.xpose.msra.mxu0 0.0
        %2075 = vmatprep.subr.mxu0 0.0
        %2076 = vmatpush2.xpose.msra.mxu0 0.0
        %2077 = vmatprep.subr.mxu0 0.0
        %2078 = vmatpush2.xpose.msra.mxu0 0.0
        %2079 = vmatprep.subr.mxu0 0.0
        %2080 = vmatpush2.xpose.msra.mxu0 0.0
        %2081 = vmatprep.subr.mxu0 0.0
        %2082 = vmatpush2.xpose.msra.mxu0 0.0
        %2083 = vmatprep.subr.mxu0 0.0
        %2084 = vmatpush2.xpose.msra.mxu0 0.0
        %2085 = vmatprep.subr.mxu0 0.0
        %2086 = vmatpush2.xpose.msra.mxu0 0.0
        %2087 = vmatprep.subr.mxu0 0.0
        %2088 = vmatpush2.xpose.msra.mxu0 0.0
        %2089 = vmatprep.mubr.f32.mxu0 0.0
        %2090 = vmatmul.mubr.f32.gmra.mxu0 %v2021
        %v2091 = vpop.f32.mrf.mxu0
        %v2092 = vadd.f32 %v549, %v2091
        %v2093 = vpop.f32.mrf.mxu0
        %2094 = vdwg.mxu0
        %v2095 = vsel %vm554, %v2092, -inf
        %2096 = vmax.xlane.f32.xlu0 %v2095
        %v2097 = vpop.xlane.xlu0 %2096
        %v2098 = vsub.f32 %v2092, %v2097
        %v2099 = vmul.f32 %v2098, 1.442695
        %v2100 = vpow.pop %v2099
        %v2101 = vsel %vm554, %v2100, 0.0
        %2102 = vadd.xlane.f32.xlu0 %v2101
        %v2103 = vpop.xlane.xlu0 %2102
        %v2104 = vrcp.pop %v2103
        %v2105 = vmul.f32 %v2100, %v2104
        %2106 = vrot.lane.b32.xlu0 %v1613, 48
        %v2107 = vpop.permute.xlu0 %2106
        %v2110 = vsel %vm554, %v2105, 0
        %2112 = vmatprep.subr.mxu0 0.0
        %2113 = vmatpush1.msra.mxu0 0.0
        %2114 = vmatprep.subr.mxu0 0.0
        %2115 = vmatpush1.msra.mxu0 0.0
        %2116 = vmatprep.subr.mxu0 0.0
        %2117 = vmatpush1.msra.mxu0 0.0
        %2118 = vmatprep.subr.mxu0 0.0
        %2119 = vmatpush1.msra.mxu0 0.0
        %2120 = vmatprep.subr.mxu0 0.0
        %2121 = vmatpush1.msra.mxu0 0.0
        %2122 = vmatprep.subr.mxu0 0.0
        %2123 = vmatpush1.msra.mxu0 0.0
        %2124 = vmatprep.subr.mxu0 0.0
        %2125 = vmatpush1.msra.mxu0 0.0
        %2126 = vmatprep.subr.mxu0 0.0
        %2127 = vmatpush1.msra.mxu0 0.0
        %2128 = vmatprep.subr.mxu0 0.0
        %2129 = vmatpush1.msra.mxu0 0.0
        %2130 = vmatprep.subr.mxu0 0.0
        %2131 = vmatpush1.msra.mxu0 0.0
        %2132 = vmatprep.subr.mxu0 0.0
        %2133 = vmatpush1.msra.mxu0 0.0
        %2134 = vmatprep.subr.mxu0 0.0
        %2135 = vmatpush1.msra.mxu0 0.0
        %2136 = vmatprep.subr.mxu0 0.0
        %2137 = vmatpush1.msra.mxu0 0.0
        %2138 = vmatprep.subr.mxu0 0.0
        %2139 = vmatpush1.msra.mxu0 0.0
        %2140 = vmatprep.subr.mxu0 0.0
        %2141 = vmatpush1.msra.mxu0 0.0
        %2142 = vmatprep.subr.mxu0 0.0
        %2143 = vmatpush1.msra.mxu0 %v2107
        %2144 = vmatprep.subr.mxu0 0.0
        %2145 = vmatpush2.msra.mxu0 0.0
        %2146 = vmatprep.subr.mxu0 0.0
        %2147 = vmatpush2.msra.mxu0 0.0
        %2148 = vmatprep.subr.mxu0 0.0
        %2149 = vmatpush2.msra.mxu0 0.0
        %2150 = vmatprep.subr.mxu0 0.0
        %2151 = vmatpush2.msra.mxu0 0.0
        %2152 = vmatprep.subr.mxu0 0.0
        %2153 = vmatpush2.msra.mxu0 0.0
        %2154 = vmatprep.subr.mxu0 0.0
        %2155 = vmatpush2.msra.mxu0 0.0
        %2156 = vmatprep.subr.mxu0 0.0
        %2157 = vmatpush2.msra.mxu0 0.0
        %2158 = vmatprep.subr.mxu0 0.0
        %2159 = vmatpush2.msra.mxu0 0.0
        %2160 = vmatprep.subr.mxu0 0.0
        %2161 = vmatpush2.msra.mxu0 0.0
        %2162 = vmatprep.subr.mxu0 0.0
        %2163 = vmatpush2.msra.mxu0 0.0
        %2164 = vmatprep.subr.mxu0 0.0
        %2165 = vmatpush2.msra.mxu0 0.0
        %2166 = vmatprep.subr.mxu0 0.0
        %2167 = vmatpush2.msra.mxu0 0.0
        %2168 = vmatprep.subr.mxu0 0.0
        %2169 = vmatpush2.msra.mxu0 0.0
        %2170 = vmatprep.subr.mxu0 0.0
        %2171 = vmatpush2.msra.mxu0 0.0
        %2172 = vmatprep.subr.mxu0 0.0
        %2173 = vmatpush2.msra.mxu0 0.0
        %2174 = vmatprep.subr.mxu0 0.0
        %2175 = vmatpush2.msra.mxu0 0.0
        %2176 = vmatprep.mubr.f32.mxu0 0.0
        %2177 = vmatmul.mubr.f32.gmra.mxu0 %v2110
        %v2178 = vpop.f32.mrf.mxu0
        %v2179 = vadd.f32 0.0, %v2178
        %v2180 = vpop.f32.mrf.mxu0
        %2181 = vdwg.mxu0
        %2182 = vrot.lane.b32.xlu0 %v1686, 104
        %v2183 = vpop.permute.xlu0 %2182
        %2184 = vrot.lane.b32.xlu0 %v1686, 72
        %v2185 = vpop.permute.xlu0 %2184
        %v2186 = vsel %vm554, %v2183, 0
        %v2188 = vsel %vm554, %v2185, 0
        %2190 = vmatprep.subr.mxu0 0.0
        %2191 = vmatpush1.xpose.msra.mxu0 0.0
        %2192 = vmatprep.subr.mxu0 0.0
        %2193 = vmatpush1.xpose.msra.mxu0 0.0
        %2194 = vmatprep.subr.mxu0 0.0
        %2195 = vmatpush1.xpose.msra.mxu0 0.0
        %2196 = vmatprep.subr.mxu0 0.0
        %2197 = vmatpush1.xpose.msra.mxu0 0.0
        %2198 = vmatprep.subr.mxu0 0.0
        %2199 = vmatpush1.xpose.msra.mxu0 0.0
        %2200 = vmatprep.subr.mxu0 0.0
        %2201 = vmatpush1.xpose.msra.mxu0 0.0
        %2202 = vmatprep.subr.mxu0 0.0
        %2203 = vmatpush1.xpose.msra.mxu0 0.0
        %2204 = vmatprep.subr.mxu0 0.0
        %2205 = vmatpush1.xpose.msra.mxu0 0.0
        %2206 = vmatprep.subr.mxu0 0.0
        %2207 = vmatpush1.xpose.msra.mxu0 0.0
        %2208 = vmatprep.subr.mxu0 0.0
        %2209 = vmatpush1.xpose.msra.mxu0 0.0
        %2210 = vmatprep.subr.mxu0 0.0
        %2211 = vmatpush1.xpose.msra.mxu0 0.0
        %2212 = vmatprep.subr.mxu0 0.0
        %2213 = vmatpush1.xpose.msra.mxu0 0.0
        %2214 = vmatprep.subr.mxu0 0.0
        %2215 = vmatpush1.xpose.msra.mxu0 0.0
        %2216 = vmatprep.subr.mxu0 0.0
        %2217 = vmatpush1.xpose.msra.mxu0 0.0
        %2218 = vmatprep.subr.mxu0 0.0
        %2219 = vmatpush1.xpose.msra.mxu0 0.0
        %2220 = vmatprep.subr.mxu0 0.0
        %2221 = vmatpush1.xpose.msra.mxu0 %v2188
        %2222 = vmatprep.subr.mxu0 0.0
        %2223 = vmatpush2.xpose.msra.mxu0 0.0
        %2224 = vmatprep.subr.mxu0 0.0
        %2225 = vmatpush2.xpose.msra.mxu0 0.0
        %2226 = vmatprep.subr.mxu0 0.0
        %2227 = vmatpush2.xpose.msra.mxu0 0.0
        %2228 = vmatprep.subr.mxu0 0.0
        %2229 = vmatpush2.xpose.msra.mxu0 0.0
        %2230 = vmatprep.subr.mxu0 0.0
        %2231 = vmatpush2.xpose.msra.mxu0 0.0
        %2232 = vmatprep.subr.mxu0 0.0
        %2233 = vmatpush2.xpose.msra.mxu0 0.0
        %2234 = vmatprep.subr.mxu0 0.0
        %2235 = vmatpush2.xpose.msra.mxu0 0.0
        %2236 = vmatprep.subr.mxu0 0.0
        %2237 = vmatpush2.xpose.msra.mxu0 0.0
        %2238 = vmatprep.subr.mxu0 0.0
        %2239 = vmatpush2.xpose.msra.mxu0 0.0
        %2240 = vmatprep.subr.mxu0 0.0
        %2241 = vmatpush2.xpose.msra.mxu0 0.0
        %2242 = vmatprep.subr.mxu0 0.0
        %2243 = vmatpush2.xpose.msra.mxu0 0.0
        %2244 = vmatprep.subr.mxu0 0.0
        %2245 = vmatpush2.xpose.msra.mxu0 0.0
        %2246 = vmatprep.subr.mxu0 0.0
        %2247 = vmatpush2.xpose.msra.mxu0 0.0
        %2248 = vmatprep.subr.mxu0 0.0
        %2249 = vmatpush2.xpose.msra.mxu0 0.0
        %2250 = vmatprep.subr.mxu0 0.0
        %2251 = vmatpush2.xpose.msra.mxu0 0.0
        %2252 = vmatprep.subr.mxu0 0.0
        %2253 = vmatpush2.xpose.msra.mxu0 0.0
        %2254 = vmatprep.mubr.f32.mxu0 0.0
        %2255 = vmatmul.mubr.f32.gmra.mxu0 %v2186
        %v2256 = vpop.f32.mrf.mxu0
        %v2257 = vadd.f32 %v549, %v2256
        %v2258 = vpop.f32.mrf.mxu0
        %2259 = vdwg.mxu0
        %v2260 = vsel %vm554, %v2257, -inf
        %2261 = vmax.xlane.f32.xlu0 %v2260
        %v2262 = vpop.xlane.xlu0 %2261
        %v2263 = vsub.f32 %v2257, %v2262
        %v2264 = vmul.f32 %v2263, 1.442695
        %v2265 = vpow.pop %v2264
        %v2266 = vsel %vm554, %v2265, 0.0
        %2267 = vadd.xlane.f32.xlu0 %v2266
        %v2268 = vpop.xlane.xlu0 %2267
        %v2269 = vrcp.pop %v2268
        %v2270 = vmul.f32 %v2265, %v2269
        %2271 = vrot.lane.b32.xlu0 %v1613, 40
        %v2272 = vpop.permute.xlu0 %2271
        %v2275 = vsel %vm554, %v2270, 0
        %2277 = vmatprep.subr.mxu0 0.0
        %2278 = vmatpush1.msra.mxu0 0.0
        %2279 = vmatprep.subr.mxu0 0.0
        %2280 = vmatpush1.msra.mxu0 0.0
        %2281 = vmatprep.subr.mxu0 0.0
        %2282 = vmatpush1.msra.mxu0 0.0
        %2283 = vmatprep.subr.mxu0 0.0
        %2284 = vmatpush1.msra.mxu0 0.0
        %2285 = vmatprep.subr.mxu0 0.0
        %2286 = vmatpush1.msra.mxu0 0.0
        %2287 = vmatprep.subr.mxu0 0.0
        %2288 = vmatpush1.msra.mxu0 0.0
        %2289 = vmatprep.subr.mxu0 0.0
        %2290 = vmatpush1.msra.mxu0 0.0
        %2291 = vmatprep.subr.mxu0 0.0
        %2292 = vmatpush1.msra.mxu0 0.0
        %2293 = vmatprep.subr.mxu0 0.0
        %2294 = vmatpush1.msra.mxu0 0.0
        %2295 = vmatprep.subr.mxu0 0.0
        %2296 = vmatpush1.msra.mxu0 0.0
        %2297 = vmatprep.subr.mxu0 0.0
        %2298 = vmatpush1.msra.mxu0 0.0
        %2299 = vmatprep.subr.mxu0 0.0
        %2300 = vmatpush1.msra.mxu0 0.0
        %2301 = vmatprep.subr.mxu0 0.0
        %2302 = vmatpush1.msra.mxu0 0.0
        %2303 = vmatprep.subr.mxu0 0.0
        %2304 = vmatpush1.msra.mxu0 0.0
        %2305 = vmatprep.subr.mxu0 0.0
        %2306 = vmatpush1.msra.mxu0 0.0
        %2307 = vmatprep.subr.mxu0 0.0
        %2308 = vmatpush1.msra.mxu0 %v2272
        %2309 = vmatprep.subr.mxu0 0.0
        %2310 = vmatpush2.msra.mxu0 0.0
        %2311 = vmatprep.subr.mxu0 0.0
        %2312 = vmatpush2.msra.mxu0 0.0
        %2313 = vmatprep.subr.mxu0 0.0
        %2314 = vmatpush2.msra.mxu0 0.0
        %2315 = vmatprep.subr.mxu0 0.0
        %2316 = vmatpush2.msra.mxu0 0.0
        %2317 = vmatprep.subr.mxu0 0.0
        %2318 = vmatpush2.msra.mxu0 0.0
        %2319 = vmatprep.subr.mxu0 0.0
        %2320 = vmatpush2.msra.mxu0 0.0
        %2321 = vmatprep.subr.mxu0 0.0
        %2322 = vmatpush2.msra.mxu0 0.0
        %2323 = vmatprep.subr.mxu0 0.0
        %2324 = vmatpush2.msra.mxu0 0.0
        %2325 = vmatprep.subr.mxu0 0.0
        %2326 = vmatpush2.msra.mxu0 0.0
        %2327 = vmatprep.subr.mxu0 0.0
        %2328 = vmatpush2.msra.mxu0 0.0
        %2329 = vmatprep.subr.mxu0 0.0
        %2330 = vmatpush2.msra.mxu0 0.0
        %2331 = vmatprep.subr.mxu0 0.0
        %2332 = vmatpush2.msra.mxu0 0.0
        %2333 = vmatprep.subr.mxu0 0.0
        %2334 = vmatpush2.msra.mxu0 0.0
        %2335 = vmatprep.subr.mxu0 0.0
        %2336 = vmatpush2.msra.mxu0 0.0
        %2337 = vmatprep.subr.mxu0 0.0
        %2338 = vmatpush2.msra.mxu0 0.0
        %2339 = vmatprep.subr.mxu0 0.0
        %2340 = vmatpush2.msra.mxu0 0.0
        %2341 = vmatprep.mubr.f32.mxu0 0.0
        %2342 = vmatmul.mubr.f32.gmra.mxu0 %v2275
        %v2343 = vpop.f32.mrf.mxu0
        %v2344 = vadd.f32 0.0, %v2343
        %v2345 = vpop.f32.mrf.mxu0
        %2346 = vdwg.mxu0
        %2348 = vrot.lane.b32.xlu0 %v2014, 8
        %v2349 = vpop.permute.xlu0 %2348
        %2352 = vrot.lane.b32.xlu0 %v2179, 16
        %v2353 = vpop.permute.xlu0 %2352
        %2356 = vrot.lane.b32.xlu0 %v2344, 24
        %v2357 = vpop.permute.xlu0 %2356
        %v2359 = vsel %vm554, %v1849, %v2349
        %v2360 = vsel %vm1225, %v2359, %v2353
        %v2361 = vsel %vm1227, %v2360, %v2357
        %v2362 = vld [vmem:[#allocation7 + $0xc8] sm:$0xff]
        %v2363 = vld [vmem:[#allocation7 + $0xd0] sm:$0xff]
        %v2364 = vld [vmem:[#allocation7 + $0xd8] sm:$0xff]
        %v2365 = vld [vmem:[#allocation7 + $0xe0] sm:$0xff]
        %v2366 = vld [vmem:[#allocation7 + $0x149] sm:$0x1]
        %v2367 = vlaneseq
        %v2368 = vshrl.u32 %v2367, 7
        %v2369 = vsub.s32 0, %v2368
        %v2370 = vrot.slane %v2366, %v2369
        %v2372 = vsel %vm397, %v2361, 0
        %2374 = vmatprep.subr.mxu0 0.0
        %2375 = vmatpush1.msra.mxu0 0.0
        %2376 = vmatprep.subr.mxu0 0.0
        %2377 = vmatpush1.msra.mxu0 0.0
        %2378 = vmatprep.subr.mxu0 0.0
        %2379 = vmatpush1.msra.mxu0 0.0
        %2380 = vmatprep.subr.mxu0 0.0
        %2381 = vmatpush1.msra.mxu0 0.0
        %2382 = vmatprep.subr.mxu0 0.0
        %2383 = vmatpush1.msra.mxu0 0.0
        %2384 = vmatprep.subr.mxu0 0.0
        %2385 = vmatpush1.msra.mxu0 0.0
        %2386 = vmatprep.subr.mxu0 0.0
        %2387 = vmatpush1.msra.mxu0 0.0
        %2388 = vmatprep.subr.mxu0 0.0
        %2389 = vmatpush1.msra.mxu0 0.0
        %2390 = vmatprep.subr.mxu0 0.0
        %2391 = vmatpush1.msra.mxu0 0.0
        %2392 = vmatprep.subr.mxu0 0.0
        %2393 = vmatpush1.msra.mxu0 0.0
        %2394 = vmatprep.subr.mxu0 0.0
        %2395 = vmatpush1.msra.mxu0 0.0
        %2396 = vmatprep.subr.mxu0 0.0
        %2397 = vmatpush1.msra.mxu0 0.0
        %2398 = vmatprep.subr.mxu0 0.0
        %2399 = vmatpush1.msra.mxu0 %v2365
        %2400 = vmatprep.subr.mxu0 0.0
        %2401 = vmatpush1.msra.mxu0 %v2364
        %2402 = vmatprep.subr.mxu0 0.0
        %2403 = vmatpush1.msra.mxu0 %v2363
        %2404 = vmatprep.subr.mxu0 0.0
        %2405 = vmatpush1.msra.mxu0 %v2362
        %2406 = vmatprep.subr.mxu0 0.0
        %2407 = vmatpush2.msra.mxu0 0.0
        %2408 = vmatprep.subr.mxu0 0.0
        %2409 = vmatpush2.msra.mxu0 0.0
        %2410 = vmatprep.subr.mxu0 0.0
        %2411 = vmatpush2.msra.mxu0 0.0
        %2412 = vmatprep.subr.mxu0 0.0
        %2413 = vmatpush2.msra.mxu0 0.0
        %2414 = vmatprep.subr.mxu0 0.0
        %2415 = vmatpush2.msra.mxu0 0.0
        %2416 = vmatprep.subr.mxu0 0.0
        %2417 = vmatpush2.msra.mxu0 0.0
        %2418 = vmatprep.subr.mxu0 0.0
        %2419 = vmatpush2.msra.mxu0 0.0
        %2420 = vmatprep.subr.mxu0 0.0
        %2421 = vmatpush2.msra.mxu0 0.0
        %2422 = vmatprep.subr.mxu0 0.0
        %2423 = vmatpush2.msra.mxu0 0.0
        %2424 = vmatprep.subr.mxu0 0.0
        %2425 = vmatpush2.msra.mxu0 0.0
        %2426 = vmatprep.subr.mxu0 0.0
        %2427 = vmatpush2.msra.mxu0 0.0
        %2428 = vmatprep.subr.mxu0 0.0
        %2429 = vmatpush2.msra.mxu0 0.0
        %2430 = vmatprep.subr.mxu0 0.0
        %2431 = vmatpush2.msra.mxu0 0.0
        %2432 = vmatprep.subr.mxu0 0.0
        %2433 = vmatpush2.msra.mxu0 0.0
        %2434 = vmatprep.subr.mxu0 0.0
        %2435 = vmatpush2.msra.mxu0 0.0
        %2436 = vmatprep.subr.mxu0 0.0
        %2437 = vmatpush2.msra.mxu0 0.0
        %2438 = vmatprep.mubr.f32.mxu0 0.0
        %2439 = vmatmul.mubr.f32.gmra.mxu0 %v2372
        %v2440 = vpop.f32.mrf.mxu0
        %v2441 = vadd.f32 %v2370, %v2440
        %v2442 = vpop.f32.mrf.mxu0
        %2443 = vdwg.mxu0
        %v2444 = vadd.f32 %v1533, %v2441
        %v2445 = vld [vmem:[#allocation7 + $0x14c] sm:$0x1]
        %v2446 = vld [vmem:[#allocation7 + $0x14d] sm:$0x1]
        %v2447 = vsel %vm397, %v2444, 0.0
        %2448 = vadd.xlane.f32.xlu0 %v2447
        %v2449 = vpop.xlane.xlu0 %2448
        %v2450 = vmul.f32 %v2449, %v1317
        %v2451 = vsub.f32 %v2444, %v2450
        %v2452 = vmul.f32 %v2451, %v2451
        %v2453 = vsel %vm397, %v2452, 0.0
        %2454 = vadd.xlane.f32.xlu0 %v2453
        %v2455 = vpop.xlane.xlu0 %2454
        %v2456 = vmul.f32 %v2455, %v1317
        %v2457 = vadd.f32 %v2456, 1e-05
        %v2458 = vrsqrt.pop %v2457
        %v2459 = vmul.f32 %v2451, %v2458
        %v2460 = vlaneseq
        %v2461 = vshrl.u32 %v2460, 7
        %v2462 = vsub.s32 0, %v2461
        %v2463 = vrot.slane %v2445, %v2462
        %v2464 = vmul.f32 %v2459, %v2463
        %v2465 = vlaneseq
        %v2466 = vshrl.u32 %v2465, 7
        %v2467 = vsub.s32 0, %v2466
        %v2468 = vrot.slane %v2446, %v2467
        %v2469 = vadd.f32 %v2464, %v2468
        %v2470 = vld [vmem:[#allocation7 + $0xe8] sm:$0xff]
        %v2471 = vld [vmem:[#allocation7 + $0xf0] sm:$0xff]
        %v2472 = vld [vmem:[#allocation7 + $0xf8] sm:$0xff]
        %v2473 = vld [vmem:[#allocation7 + $0x100] sm:$0xff]
        %v2474 = vld [vmem:[#allocation7 + $0x14a] sm:$0x1]
        %v2475 = vld [vmem:[#allocation7 + $0x108] sm:$0xff]
        %v2476 = vld [vmem:[#allocation7 + $0x110] sm:$0xff]
        %v2477 = vld [vmem:[#allocation7 + $0x118] sm:$0xff]
        %v2478 = vld [vmem:[#allocation7 + $0x120] sm:$0xff]
        %v2479 = vld [vmem:[#allocation7 + $0x128] sm:$0xff]
        %v2480 = vld [vmem:[#allocation7 + $0x130] sm:$0xff]
        %v2481 = vld [vmem:[#allocation7 + $0x138] sm:$0xff]
        %v2482 = vld [vmem:[#allocation7 + $0x140] sm:$0xff]
        %v2483 = vld [vmem:[#allocation7 + $0x14b] sm:$0x1]
        %v2484 = vlaneseq
        %v2485 = vshrl.u32 %v2484, 7
        %v2486 = vsub.s32 0, %v2485
        %v2487 = vrot.slane %v2474, %v2486
        %v2489 = vsel %vm397, %v2469, 0
        %2491 = vmatprep.subr.mxu0 0.0
        %2492 = vmatpush1.msra.mxu0 0.0
        %2493 = vmatprep.subr.mxu0 0.0
        %2494 = vmatpush1.msra.mxu0 0.0
        %2495 = vmatprep.subr.mxu0 0.0
        %2496 = vmatpush1.msra.mxu0 0.0
        %2497 = vmatprep.subr.mxu0 0.0
        %2498 = vmatpush1.msra.mxu0 0.0
        %2499 = vmatprep.subr.mxu0 0.0
        %2500 = vmatpush1.msra.mxu0 0.0
        %2501 = vmatprep.subr.mxu0 0.0
        %2502 = vmatpush1.msra.mxu0 0.0
        %2503 = vmatprep.subr.mxu0 0.0
        %2504 = vmatpush1.msra.mxu0 0.0
        %2505 = vmatprep.subr.mxu0 0.0
        %2506 = vmatpush1.msra.mxu0 0.0
        %2507 = vmatprep.subr.mxu0 0.0
        %2508 = vmatpush1.msra.mxu0 0.0
        %2509 = vmatprep.subr.mxu0 0.0
        %2510 = vmatpush1.msra.mxu0 0.0
        %2511 = vmatprep.subr.mxu0 0.0
        %2512 = vmatpush1.msra.mxu0 0.0
        %2513 = vmatprep.subr.mxu0 0.0
        %2514 = vmatpush1.msra.mxu0 0.0
        %2515 = vmatprep.subr.mxu0 0.0
        %2516 = vmatpush1.msra.mxu0 %v2473
        %2517 = vmatprep.subr.mxu0 0.0
        %2518 = vmatpush1.msra.mxu0 %v2472
        %2519 = vmatprep.subr.mxu0 0.0
        %2520 = vmatpush1.msra.mxu0 %v2471
        %2521 = vmatprep.subr.mxu0 0.0
        %2522 = vmatpush1.msra.mxu0 %v2470
        %2523 = vmatprep.subr.mxu0 0.0
        %2524 = vmatpush2.msra.mxu0 0.0
        %2525 = vmatprep.subr.mxu0 0.0
        %2526 = vmatpush2.msra.mxu0 0.0
        %2527 = vmatprep.subr.mxu0 0.0
        %2528 = vmatpush2.msra.mxu0 0.0
        %2529 = vmatprep.subr.mxu0 0.0
        %2530 = vmatpush2.msra.mxu0 0.0
        %2531 = vmatprep.subr.mxu0 0.0
        %2532 = vmatpush2.msra.mxu0 0.0
        %2533 = vmatprep.subr.mxu0 0.0
        %2534 = vmatpush2.msra.mxu0 0.0
        %2535 = vmatprep.subr.mxu0 0.0
        %2536 = vmatpush2.msra.mxu0 0.0
        %2537 = vmatprep.subr.mxu0 0.0
        %2538 = vmatpush2.msra.mxu0 0.0
        %2539 = vmatprep.subr.mxu0 0.0
        %2540 = vmatpush2.msra.mxu0 0.0
        %2541 = vmatprep.subr.mxu0 0.0
        %2542 = vmatpush2.msra.mxu0 0.0
        %2543 = vmatprep.subr.mxu0 0.0
        %2544 = vmatpush2.msra.mxu0 0.0
        %2545 = vmatprep.subr.mxu0 0.0
        %2546 = vmatpush2.msra.mxu0 0.0
        %2547 = vmatprep.subr.mxu0 0.0
        %2548 = vmatpush2.msra.mxu0 0.0
        %2549 = vmatprep.subr.mxu0 0.0
        %2550 = vmatpush2.msra.mxu0 0.0
        %2551 = vmatprep.subr.mxu0 0.0
        %2552 = vmatpush2.msra.mxu0 0.0
        %2553 = vmatprep.subr.mxu0 0.0
        %2554 = vmatpush2.msra.mxu0 0.0
        %2555 = vmatprep.mubr.f32.mxu0 0.0
        %2556 = vmatmul.mubr.f32.gmra.mxu0 %v2489
        %v2557 = vpop.f32.mrf.mxu0
        %v2558 = vadd.f32 %v2487, %v2557
        %v2559 = vpop.f32.mrf.mxu0
        %2560 = vdwg.mxu0
        %v2561 = vmax.f32 %v2558, 0.0
        %v2562 = vlaneseq
        %v2563 = vshrl.u32 %v2562, 7
        %v2564 = vsub.s32 0, %v2563
        %v2565 = vrot.slane %v2483, %v2564
        %v2567 = vsel %vm1434, %v2561, 0
        %2569 = vmatprep.subr.mxu0 0.0
        %2570 = vmatpush1.msra.mxu0 0.0
        %2571 = vmatprep.subr.mxu0 0.0
        %2572 = vmatpush1.msra.mxu0 0.0
        %2573 = vmatprep.subr.mxu0 0.0
        %2574 = vmatpush1.msra.mxu0 0.0
        %2575 = vmatprep.subr.mxu0 0.0
        %2576 = vmatpush1.msra.mxu0 0.0
        %2577 = vmatprep.subr.mxu0 0.0
        %2578 = vmatpush1.msra.mxu0 0.0
        %2579 = vmatprep.subr.mxu0 0.0
        %2580 = vmatpush1.msra.mxu0 0.0
        %2581 = vmatprep.subr.mxu0 0.0
        %2582 = vmatpush1.msra.mxu0 0.0
        %2583 = vmatprep.subr.mxu0 0.0
        %2584 = vmatpush1.msra.mxu0 0.0
        %2585 = vmatprep.subr.mxu0 0.0
        %2586 = vmatpush1.msra.mxu0 %v2482
        %2587 = vmatprep.subr.mxu0 0.0
        %2588 = vmatpush1.msra.mxu0 %v2481
        %2589 = vmatprep.subr.mxu0 0.0
        %2590 = vmatpush1.msra.mxu0 %v2480
        %2591 = vmatprep.subr.mxu0 0.0
        %2592 = vmatpush1.msra.mxu0 %v2479
        %2593 = vmatprep.subr.mxu0 0.0
        %2594 = vmatpush1.msra.mxu0 %v2478
        %2595 = vmatprep.subr.mxu0 0.0
        %2596 = vmatpush1.msra.mxu0 %v2477
        %2597 = vmatprep.subr.mxu0 0.0
        %2598 = vmatpush1.msra.mxu0 %v2476
        %2599 = vmatprep.subr.mxu0 0.0
        %2600 = vmatpush1.msra.mxu0 %v2475
        %2601 = vmatprep.subr.mxu0 0.0
        %2602 = vmatpush2.msra.mxu0 0.0
        %2603 = vmatprep.subr.mxu0 0.0
        %2604 = vmatpush2.msra.mxu0 0.0
        %2605 = vmatprep.subr.mxu0 0.0
        %2606 = vmatpush2.msra.mxu0 0.0
        %2607 = vmatprep.subr.mxu0 0.0
        %2608 = vmatpush2.msra.mxu0 0.0
        %2609 = vmatprep.subr.mxu0 0.0
        %2610 = vmatpush2.msra.mxu0 0.0
        %2611 = vmatprep.subr.mxu0 0.0
        %2612 = vmatpush2.msra.mxu0 0.0
        %2613 = vmatprep.subr.mxu0 0.0
        %2614 = vmatpush2.msra.mxu0 0.0
        %2615 = vmatprep.subr.mxu0 0.0
        %2616 = vmatpush2.msra.mxu0 0.0
        %2617 = vmatprep.subr.mxu0 0.0
        %2618 = vmatpush2.msra.mxu0 0.0
        %2619 = vmatprep.subr.mxu0 0.0
        %2620 = vmatpush2.msra.mxu0 0.0
        %2621 = vmatprep.subr.mxu0 0.0
        %2622 = vmatpush2.msra.mxu0 0.0
        %2623 = vmatprep.subr.mxu0 0.0
        %2624 = vmatpush2.msra.mxu0 0.0
        %2625 = vmatprep.subr.mxu0 0.0
        %2626 = vmatpush2.msra.mxu0 0.0
        %2627 = vmatprep.subr.mxu0 0.0
        %2628 = vmatpush2.msra.mxu0 0.0
        %2629 = vmatprep.subr.mxu0 0.0
        %2630 = vmatpush2.msra.mxu0 0.0
        %2631 = vmatprep.subr.mxu0 0.0
        %2632 = vmatpush2.msra.mxu0 0.0
        %2633 = vmatprep.mubr.f32.mxu0 0.0
        %2634 = vmatmul.mubr.f32.gmra.mxu0 %v2567
        %v2635 = vpop.f32.mrf.mxu0
        %v2636 = vadd.f32 %v2565, %v2635
        %v2637 = vpop.f32.mrf.mxu0
        %2638 = vdwg.mxu0
        %v2639 = vadd.f32 %v2469, %v2636
        %v2640 = vld [vmem:[#allocation7 + $0x14e] sm:$0x1]
        %v2641 = vld [vmem:[#allocation7 + $0x14f] sm:$0x1]
        %v2642 = vsel %vm397, %v2639, 0.0
        %2643 = vadd.xlane.f32.xlu0 %v2642
        %v2644 = vpop.xlane.xlu0 %2643
        %v2645 = vmul.f32 %v2644, %v1317
        %v2646 = vsub.f32 %v2639, %v2645
        %v2647 = vmul.f32 %v2646, %v2646
        %v2648 = vsel %vm397, %v2647, 0.0
        %2649 = vadd.xlane.f32.xlu0 %v2648
        %v2650 = vpop.xlane.xlu0 %2649
        %v2651 = vmul.f32 %v2650, %v1317
        %v2652 = vadd.f32 %v2651, 1e-05
        %v2653 = vrsqrt.pop %v2652
        %v2654 = vmul.f32 %v2646, %v2653
        %v2655 = vlaneseq
        %v2656 = vshrl.u32 %v2655, 7
        %v2657 = vsub.s32 0, %v2656
        %v2658 = vrot.slane %v2640, %v2657
        %v2659 = vmul.f32 %v2654, %v2658
        %v2660 = vlaneseq
        %v2661 = vshrl.u32 %v2660, 7
        %v2662 = vsub.s32 0, %v2661
        %v2663 = vrot.slane %v2641, %v2662
        %v2664 = vadd.f32 %v2659, %v2663
        %2665 = vst.msk [vmem:[%s374] sm:$0xff] %vm397, %v2664
        %v2666 = vld [vmem:[%s2] sm:$0xff]
        %v2667 = vld [vmem:[#allocation8] sm:$0xff]
        %v2668 = vld [vmem:[#allocation8 + $0x8] sm:$0xff]
        %v2669 = vld [vmem:[#allocation8 + $0x10] sm:$0xff]
        %v2670 = vld [vmem:[#allocation8 + $0x18] sm:$0xff]
        %v2671 = vld [vmem:[#allocation8 + $0xe0] sm:$0x1]
        %v2672 = vlaneseq
        %v2673 = vshrl.u32 %v2672, 7
        %v2674 = vsub.s32 0, %v2673
        %v2675 = vrot.slane %v2671, %v2674
        %v2677 = vsel %vm397, 0.0, 0
        %2679 = vmatprep.subr.mxu0 0.0
        %2680 = vmatpush1.msra.mxu0 0.0
        %2681 = vmatprep.subr.mxu0 0.0
        %2682 = vmatpush1.msra.mxu0 0.0
        %2683 = vmatprep.subr.mxu0 0.0
        %2684 = vmatpush1.msra.mxu0 0.0
        %2685 = vmatprep.subr.mxu0 0.0
        %2686 = vmatpush1.msra.mxu0 0.0
        %2687 = vmatprep.subr.mxu0 0.0
        %2688 = vmatpush1.msra.mxu0 0.0
        %2689 = vmatprep.subr.mxu0 0.0
        %2690 = vmatpush1.msra.mxu0 0.0
        %2691 = vmatprep.subr.mxu0 0.0
        %2692 = vmatpush1.msra.mxu0 0.0
        %2693 = vmatprep.subr.mxu0 0.0
        %2694 = vmatpush1.msra.mxu0 0.0
        %2695 = vmatprep.subr.mxu0 0.0
        %2696 = vmatpush1.msra.mxu0 0.0
        %2697 = vmatprep.subr.mxu0 0.0
        %2698 = vmatpush1.msra.mxu0 0.0
        %2699 = vmatprep.subr.mxu0 0.0
        %2700 = vmatpush1.msra.mxu0 0.0
        %2701 = vmatprep.subr.mxu0 0.0
        %2702 = vmatpush1.msra.mxu0 0.0
        %2703 = vmatprep.subr.mxu0 0.0
        %2704 = vmatpush1.msra.mxu0 %v2670
        %2705 = vmatprep.subr.mxu0 0.0
        %2706 = vmatpush1.msra.mxu0 %v2669
        %2707 = vmatprep.subr.mxu0 0.0
        %2708 = vmatpush1.msra.mxu0 %v2668
        %2709 = vmatprep.subr.mxu0 0.0
        %2710 = vmatpush1.msra.mxu0 %v2667
        %2711 = vmatprep.subr.mxu0 0.0
        %2712 = vmatpush2.msra.mxu0 0.0
        %2713 = vmatprep.subr.mxu0 0.0
        %2714 = vmatpush2.msra.mxu0 0.0
        %2715 = vmatprep.subr.mxu0 0.0
        %2716 = vmatpush2.msra.mxu0 0.0
        %2717 = vmatprep.subr.mxu0 0.0
        %2718 = vmatpush2.msra.mxu0 0.0
        %2719 = vmatprep.subr.mxu0 0.0
        %2720 = vmatpush2.msra.mxu0 0.0
        %2721 = vmatprep.subr.mxu0 0.0
        %2722 = vmatpush2.msra.mxu0 0.0
        %2723 = vmatprep.subr.mxu0 0.0
        %2724 = vmatpush2.msra.mxu0 0.0
        %2725 = vmatprep.subr.mxu0 0.0
        %2726 = vmatpush2.msra.mxu0 0.0
        %2727 = vmatprep.subr.mxu0 0.0
        %2728 = vmatpush2.msra.mxu0 0.0
        %2729 = vmatprep.subr.mxu0 0.0
        %2730 = vmatpush2.msra.mxu0 0.0
        %2731 = vmatprep.subr.mxu0 0.0
        %2732 = vmatpush2.msra.mxu0 0.0
        %2733 = vmatprep.subr.mxu0 0.0
        %2734 = vmatpush2.msra.mxu0 0.0
        %2735 = vmatprep.subr.mxu0 0.0
        %2736 = vmatpush2.msra.mxu0 0.0
        %2737 = vmatprep.subr.mxu0 0.0
        %2738 = vmatpush2.msra.mxu0 0.0
        %2739 = vmatprep.subr.mxu0 0.0
        %2740 = vmatpush2.msra.mxu0 0.0
        %2741 = vmatprep.subr.mxu0 0.0
        %2742 = vmatpush2.msra.mxu0 0.0
        %2743 = vmatprep.mubr.f32.mxu0 0.0
        %2744 = vmatmul.mubr.f32.gmra.mxu0 %v2677
        %v2745 = vpop.f32.mrf.mxu0
        %v2746 = vadd.f32 %v2675, %v2745
        %v2747 = vpop.f32.mrf.mxu0
        %2748 = vdwg.mxu0
        %v2750 = vsel %vm397, %v2666, 0
        %2752 = vmatprep.subr.mxu0 0.0
        %2753 = vmatpush1.msra.mxu0 0.0
        %2754 = vmatprep.subr.mxu0 0.0
        %2755 = vmatpush1.msra.mxu0 0.0
        %2756 = vmatprep.subr.mxu0 0.0
        %2757 = vmatpush1.msra.mxu0 0.0
        %2758 = vmatprep.subr.mxu0 0.0
        %2759 = vmatpush1.msra.mxu0 0.0
        %2760 = vmatprep.subr.mxu0 0.0
        %2761 = vmatpush1.msra.mxu0 0.0
        %2762 = vmatprep.subr.mxu0 0.0
        %2763 = vmatpush1.msra.mxu0 0.0
        %2764 = vmatprep.subr.mxu0 0.0
        %2765 = vmatpush1.msra.mxu0 0.0
        %2766 = vmatprep.subr.mxu0 0.0
        %2767 = vmatpush1.msra.mxu0 0.0
        %2768 = vmatprep.subr.mxu0 0.0
        %2769 = vmatpush1.msra.mxu0 0.0
        %2770 = vmatprep.subr.mxu0 0.0
        %2771 = vmatpush1.msra.mxu0 0.0
        %2772 = vmatprep.subr.mxu0 0.0
        %2773 = vmatpush1.msra.mxu0 0.0
        %2774 = vmatprep.subr.mxu0 0.0
        %2775 = vmatpush1.msra.mxu0 0.0
        %2776 = vmatprep.subr.mxu0 0.0
        %2777 = vmatpush1.msra.mxu0 %v2670
        %2778 = vmatprep.subr.mxu0 0.0
        %2779 = vmatpush1.msra.mxu0 %v2669
        %2780 = vmatprep.subr.mxu0 0.0
        %2781 = vmatpush1.msra.mxu0 %v2668
        %2782 = vmatprep.subr.mxu0 0.0
        %2783 = vmatpush1.msra.mxu0 %v2667
        %2784 = vmatprep.subr.mxu0 0.0
        %2785 = vmatpush2.msra.mxu0 0.0
        %2786 = vmatprep.subr.mxu0 0.0
        %2787 = vmatpush2.msra.mxu0 0.0
        %2788 = vmatprep.subr.mxu0 0.0
        %2789 = vmatpush2.msra.mxu0 0.0
        %2790 = vmatprep.subr.mxu0 0.0
        %2791 = vmatpush2.msra.mxu0 0.0
        %2792 = vmatprep.subr.mxu0 0.0
        %2793 = vmatpush2.msra.mxu0 0.0
        %2794 = vmatprep.subr.mxu0 0.0
        %2795 = vmatpush2.msra.mxu0 0.0
        %2796 = vmatprep.subr.mxu0 0.0
        %2797 = vmatpush2.msra.mxu0 0.0
        %2798 = vmatprep.subr.mxu0 0.0
        %2799 = vmatpush2.msra.mxu0 0.0
        %2800 = vmatprep.subr.mxu0 0.0
        %2801 = vmatpush2.msra.mxu0 0.0
        %2802 = vmatprep.subr.mxu0 0.0
        %2803 = vmatpush2.msra.mxu0 0.0
        %2804 = vmatprep.subr.mxu0 0.0
        %2805 = vmatpush2.msra.mxu0 0.0
        %2806 = vmatprep.subr.mxu0 0.0
        %2807 = vmatpush2.msra.mxu0 0.0
        %2808 = vmatprep.subr.mxu0 0.0
        %2809 = vmatpush2.msra.mxu0 0.0
        %2810 = vmatprep.subr.mxu0 0.0
        %2811 = vmatpush2.msra.mxu0 0.0
        %2812 = vmatprep.subr.mxu0 0.0
        %2813 = vmatpush2.msra.mxu0 0.0
        %2814 = vmatprep.subr.mxu0 0.0
        %2815 = vmatpush2.msra.mxu0 0.0
        %2816 = vmatprep.mubr.f32.mxu0 0.0
        %2817 = vmatmul.mubr.f32.gmra.mxu0 %v2750
        %v2818 = vpop.f32.mrf.mxu0
        %v2819 = vadd.f32 0.0, %v2818
        %v2820 = vpop.f32.mrf.mxu0
        %2821 = vdwg.mxu0
        %v2822 = vadd.f32 %v2746, %v2819
        %2824 = vrot.lane.b32.xlu0 %v2822, 96
        %v2825 = vpop.permute.xlu0 %2824
        %v2826 = vsel %vm554, %v2822, 0
        %v2828 = vsel %vm554, %v2825, 0
        %2830 = vmatprep.subr.mxu0 0.0
        %2831 = vmatpush1.xpose.msra.mxu0 0.0
        %2832 = vmatprep.subr.mxu0 0.0
        %2833 = vmatpush1.xpose.msra.mxu0 0.0
        %2834 = vmatprep.subr.mxu0 0.0
        %2835 = vmatpush1.xpose.msra.mxu0 0.0
        %2836 = vmatprep.subr.mxu0 0.0
        %2837 = vmatpush1.xpose.msra.mxu0 0.0
        %2838 = vmatprep.subr.mxu0 0.0
        %2839 = vmatpush1.xpose.msra.mxu0 0.0
        %2840 = vmatprep.subr.mxu0 0.0
        %2841 = vmatpush1.xpose.msra.mxu0 0.0
        %2842 = vmatprep.subr.mxu0 0.0
        %2843 = vmatpush1.xpose.msra.mxu0 0.0
        %2844 = vmatprep.subr.mxu0 0.0
        %2845 = vmatpush1.xpose.msra.mxu0 0.0
        %2846 = vmatprep.subr.mxu0 0.0
        %2847 = vmatpush1.xpose.msra.mxu0 0.0
        %2848 = vmatprep.subr.mxu0 0.0
        %2849 = vmatpush1.xpose.msra.mxu0 0.0
        %2850 = vmatprep.subr.mxu0 0.0
        %2851 = vmatpush1.xpose.msra.mxu0 0.0
        %2852 = vmatprep.subr.mxu0 0.0
        %2853 = vmatpush1.xpose.msra.mxu0 0.0
        %2854 = vmatprep.subr.mxu0 0.0
        %2855 = vmatpush1.xpose.msra.mxu0 0.0
        %2856 = vmatprep.subr.mxu0 0.0
        %2857 = vmatpush1.xpose.msra.mxu0 0.0
        %2858 = vmatprep.subr.mxu0 0.0
        %2859 = vmatpush1.xpose.msra.mxu0 0.0
        %2860 = vmatprep.subr.mxu0 0.0
        %2861 = vmatpush1.xpose.msra.mxu0 %v2828
        %2862 = vmatprep.subr.mxu0 0.0
        %2863 = vmatpush2.xpose.msra.mxu0 0.0
        %2864 = vmatprep.subr.mxu0 0.0
        %2865 = vmatpush2.xpose.msra.mxu0 0.0
        %2866 = vmatprep.subr.mxu0 0.0
        %2867 = vmatpush2.xpose.msra.mxu0 0.0
        %2868 = vmatprep.subr.mxu0 0.0
        %2869 = vmatpush2.xpose.msra.mxu0 0.0
        %2870 = vmatprep.subr.mxu0 0.0
        %2871 = vmatpush2.xpose.msra.mxu0 0.0
        %2872 = vmatprep.subr.mxu0 0.0
        %2873 = vmatpush2.xpose.msra.mxu0 0.0
        %2874 = vmatprep.subr.mxu0 0.0
        %2875 = vmatpush2.xpose.msra.mxu0 0.0
        %2876 = vmatprep.subr.mxu0 0.0
        %2877 = vmatpush2.xpose.msra.mxu0 0.0
        %2878 = vmatprep.subr.mxu0 0.0
        %2879 = vmatpush2.xpose.msra.mxu0 0.0
        %2880 = vmatprep.subr.mxu0 0.0
        %2881 = vmatpush2.xpose.msra.mxu0 0.0
        %2882 = vmatprep.subr.mxu0 0.0
        %2883 = vmatpush2.xpose.msra.mxu0 0.0
        %2884 = vmatprep.subr.mxu0 0.0
        %2885 = vmatpush2.xpose.msra.mxu0 0.0
        %2886 = vmatprep.subr.mxu0 0.0
        %2887 = vmatpush2.xpose.msra.mxu0 0.0
        %2888 = vmatprep.subr.mxu0 0.0
        %2889 = vmatpush2.xpose.msra.mxu0 0.0
        %2890 = vmatprep.subr.mxu0 0.0
        %2891 = vmatpush2.xpose.msra.mxu0 0.0
        %2892 = vmatprep.subr.mxu0 0.0
        %2893 = vmatpush2.xpose.msra.mxu0 0.0
        %2894 = vmatprep.mubr.f32.mxu0 0.0
        %2895 = vmatmul.mubr.f32.gmra.mxu0 %v2826
        %v2896 = vpop.f32.mrf.mxu0
        %v2897 = vadd.f32 0.0, %v2896
        %v2898 = vpop.f32.mrf.mxu0
        %2899 = vdwg.mxu0
        %v2900 = vsel %vm554, %v2897, -inf
        %2901 = vmax.xlane.f32.xlu0 %v2900
        %v2902 = vpop.xlane.xlu0 %2901
        %v2903 = vsub.f32 %v2897, %v2902
        %v2904 = vmul.f32 %v2903, 1.442695
        %v2905 = vpow.pop %v2904
        %v2906 = vsel %vm554, %v2905, 0.0
        %2907 = vadd.xlane.f32.xlu0 %v2906
        %v2908 = vpop.xlane.xlu0 %2907
        %v2909 = vrcp.pop %v2908
        %v2910 = vmul.f32 %v2905, %v2909
        %2912 = vrot.lane.b32.xlu0 %v2746, 64
        %v2913 = vpop.permute.xlu0 %2912
        %v2916 = vsel %vm554, %v2910, 0
        %2918 = vmatprep.subr.mxu0 0.0
        %2919 = vmatpush1.msra.mxu0 0.0
        %2920 = vmatprep.subr.mxu0 0.0
        %2921 = vmatpush1.msra.mxu0 0.0
        %2922 = vmatprep.subr.mxu0 0.0
        %2923 = vmatpush1.msra.mxu0 0.0
        %2924 = vmatprep.subr.mxu0 0.0
        %2925 = vmatpush1.msra.mxu0 0.0
        %2926 = vmatprep.subr.mxu0 0.0
        %2927 = vmatpush1.msra.mxu0 0.0
        %2928 = vmatprep.subr.mxu0 0.0
        %2929 = vmatpush1.msra.mxu0 0.0
        %2930 = vmatprep.subr.mxu0 0.0
        %2931 = vmatpush1.msra.mxu0 0.0
        %2932 = vmatprep.subr.mxu0 0.0
        %2933 = vmatpush1.msra.mxu0 0.0
        %2934 = vmatprep.subr.mxu0 0.0
        %2935 = vmatpush1.msra.mxu0 0.0
        %2936 = vmatprep.subr.mxu0 0.0
        %2937 = vmatpush1.msra.mxu0 0.0
        %2938 = vmatprep.subr.mxu0 0.0
        %2939 = vmatpush1.msra.mxu0 0.0
        %2940 = vmatprep.subr.mxu0 0.0
        %2941 = vmatpush1.msra.mxu0 0.0
        %2942 = vmatprep.subr.mxu0 0.0
        %2943 = vmatpush1.msra.mxu0 0.0
        %2944 = vmatprep.subr.mxu0 0.0
        %2945 = vmatpush1.msra.mxu0 0.0
        %2946 = vmatprep.subr.mxu0 0.0
        %2947 = vmatpush1.msra.mxu0 0.0
        %2948 = vmatprep.subr.mxu0 0.0
        %2949 = vmatpush1.msra.mxu0 %v2913
        %2950 = vmatprep.subr.mxu0 0.0
        %2951 = vmatpush2.msra.mxu0 0.0
        %2952 = vmatprep.subr.mxu0 0.0
        %2953 = vmatpush2.msra.mxu0 0.0
        %2954 = vmatprep.subr.mxu0 0.0
        %2955 = vmatpush2.msra.mxu0 0.0
        %2956 = vmatprep.subr.mxu0 0.0
        %2957 = vmatpush2.msra.mxu0 0.0
        %2958 = vmatprep.subr.mxu0 0.0
        %2959 = vmatpush2.msra.mxu0 0.0
        %2960 = vmatprep.subr.mxu0 0.0
        %2961 = vmatpush2.msra.mxu0 0.0
        %2962 = vmatprep.subr.mxu0 0.0
        %2963 = vmatpush2.msra.mxu0 0.0
        %2964 = vmatprep.subr.mxu0 0.0
        %2965 = vmatpush2.msra.mxu0 0.0
        %2966 = vmatprep.subr.mxu0 0.0
        %2967 = vmatpush2.msra.mxu0 0.0
        %2968 = vmatprep.subr.mxu0 0.0
        %2969 = vmatpush2.msra.mxu0 0.0
        %2970 = vmatprep.subr.mxu0 0.0
        %2971 = vmatpush2.msra.mxu0 0.0
        %2972 = vmatprep.subr.mxu0 0.0
        %2973 = vmatpush2.msra.mxu0 0.0
        %2974 = vmatprep.subr.mxu0 0.0
        %2975 = vmatpush2.msra.mxu0 0.0
        %2976 = vmatprep.subr.mxu0 0.0
        %2977 = vmatpush2.msra.mxu0 0.0
        %2978 = vmatprep.subr.mxu0 0.0
        %2979 = vmatpush2.msra.mxu0 0.0
        %2980 = vmatprep.subr.mxu0 0.0
        %2981 = vmatpush2.msra.mxu0 0.0
        %2982 = vmatprep.mubr.f32.mxu0 0.0
        %2983 = vmatmul.mubr.f32.gmra.mxu0 %v2916
        %v2984 = vpop.f32.mrf.mxu0
        %v2985 = vadd.f32 0.0, %v2984
        %v2986 = vpop.f32.mrf.mxu0
        %2987 = vdwg.mxu0
        %2988 = vrot.lane.b32.xlu0 %v2822, 120
        %v2989 = vpop.permute.xlu0 %2988
        %2990 = vrot.lane.b32.xlu0 %v2822, 88
        %v2991 = vpop.permute.xlu0 %2990
        %v2992 = vsel %vm554, %v2989, 0
        %v2994 = vsel %vm554, %v2991, 0
        %2996 = vmatprep.subr.mxu0 0.0
        %2997 = vmatpush1.xpose.msra.mxu0 0.0
        %2998 = vmatprep.subr.mxu0 0.0
        %2999 = vmatpush1.xpose.msra.mxu0 0.0
        %3000 = vmatprep.subr.mxu0 0.0
        %3001 = vmatpush1.xpose.msra.mxu0 0.0
        %3002 = vmatprep.subr.mxu0 0.0
        %3003 = vmatpush1.xpose.msra.mxu0 0.0
        %3004 = vmatprep.subr.mxu0 0.0
        %3005 = vmatpush1.xpose.msra.mxu0 0.0
        %3006 = vmatprep.subr.mxu0 0.0
        %3007 = vmatpush1.xpose.msra.mxu0 0.0
        %3008 = vmatprep.subr.mxu0 0.0
        %3009 = vmatpush1.xpose.msra.mxu0 0.0
        %3010 = vmatprep.subr.mxu0 0.0
        %3011 = vmatpush1.xpose.msra.mxu0 0.0
        %3012 = vmatprep.subr.mxu0 0.0
        %3013 = vmatpush1.xpose.msra.mxu0 0.0
        %3014 = vmatprep.subr.mxu0 0.0
        %3015 = vmatpush1.xpose.msra.mxu0 0.0
        %3016 = vmatprep.subr.mxu0 0.0
        %3017 = vmatpush1.xpose.msra.mxu0 0.0
        %3018 = vmatprep.subr.mxu0 0.0
        %3019 = vmatpush1.xpose.msra.mxu0 0.0
        %3020 = vmatprep.subr.mxu0 0.0
        %3021 = vmatpush1.xpose.msra.mxu0 0.0
        %3022 = vmatprep.subr.mxu0 0.0
        %3023 = vmatpush1.xpose.msra.mxu0 0.0
        %3024 = vmatprep.subr.mxu0 0.0
        %3025 = vmatpush1.xpose.msra.mxu0 0.0
        %3026 = vmatprep.subr.mxu0 0.0
        %3027 = vmatpush1.xpose.msra.mxu0 %v2994
        %3028 = vmatprep.subr.mxu0 0.0
        %3029 = vmatpush2.xpose.msra.mxu0 0.0
        %3030 = vmatprep.subr.mxu0 0.0
        %3031 = vmatpush2.xpose.msra.mxu0 0.0
        %3032 = vmatprep.subr.mxu0 0.0
        %3033 = vmatpush2.xpose.msra.mxu0 0.0
        %3034 = vmatprep.subr.mxu0 0.0
        %3035 = vmatpush2.xpose.msra.mxu0 0.0
        %3036 = vmatprep.subr.mxu0 0.0
        %3037 = vmatpush2.xpose.msra.mxu0 0.0
        %3038 = vmatprep.subr.mxu0 0.0
        %3039 = vmatpush2.xpose.msra.mxu0 0.0
        %3040 = vmatprep.subr.mxu0 0.0
        %3041 = vmatpush2.xpose.msra.mxu0 0.0
        %3042 = vmatprep.subr.mxu0 0.0
        %3043 = vmatpush2.xpose.msra.mxu0 0.0
        %3044 = vmatprep.subr.mxu0 0.0
        %3045 = vmatpush2.xpose.msra.mxu0 0.0
        %3046 = vmatprep.subr.mxu0 0.0
        %3047 = vmatpush2.xpose.msra.mxu0 0.0
        %3048 = vmatprep.subr.mxu0 0.0
        %3049 = vmatpush2.xpose.msra.mxu0 0.0
        %3050 = vmatprep.subr.mxu0 0.0
        %3051 = vmatpush2.xpose.msra.mxu0 0.0
        %3052 = vmatprep.subr.mxu0 0.0
        %3053 = vmatpush2.xpose.msra.mxu0 0.0
        %3054 = vmatprep.subr.mxu0 0.0
        %3055 = vmatpush2.xpose.msra.mxu0 0.0
        %3056 = vmatprep.subr.mxu0 0.0
        %3057 = vmatpush2.xpose.msra.mxu0 0.0
        %3058 = vmatprep.subr.mxu0 0.0
        %3059 = vmatpush2.xpose.msra.mxu0 0.0
        %3060 = vmatprep.mubr.f32.mxu0 0.0
        %3061 = vmatmul.mubr.f32.gmra.mxu0 %v2992
        %v3062 = vpop.f32.mrf.mxu0
        %v3063 = vadd.f32 0.0, %v3062
        %v3064 = vpop.f32.mrf.mxu0
        %3065 = vdwg.mxu0
        %v3066 = vsel %vm554, %v3063, -inf
        %3067 = vmax.xlane.f32.xlu0 %v3066
        %v3068 = vpop.xlane.xlu0 %3067
        %v3069 = vsub.f32 %v3063, %v3068
        %v3070 = vmul.f32 %v3069, 1.442695
        %v3071 = vpow.pop %v3070
        %v3072 = vsel %vm554, %v3071, 0.0
        %3073 = vadd.xlane.f32.xlu0 %v3072
        %v3074 = vpop.xlane.xlu0 %3073
        %v3075 = vrcp.pop %v3074
        %v3076 = vmul.f32 %v3071, %v3075
        %3077 = vrot.lane.b32.xlu0 %v2746, 56
        %v3078 = vpop.permute.xlu0 %3077
        %v3081 = vsel %vm554, %v3076, 0
        %3083 = vmatprep.subr.mxu0 0.0
        %3084 = vmatpush1.msra.mxu0 0.0
        %3085 = vmatprep.subr.mxu0 0.0
        %3086 = vmatpush1.msra.mxu0 0.0
        %3087 = vmatprep.subr.mxu0 0.0
        %3088 = vmatpush1.msra.mxu0 0.0
        %3089 = vmatprep.subr.mxu0 0.0
        %3090 = vmatpush1.msra.mxu0 0.0
        %3091 = vmatprep.subr.mxu0 0.0
        %3092 = vmatpush1.msra.mxu0 0.0
        %3093 = vmatprep.subr.mxu0 0.0
        %3094 = vmatpush1.msra.mxu0 0.0
        %3095 = vmatprep.subr.mxu0 0.0
        %3096 = vmatpush1.msra.mxu0 0.0
        %3097 = vmatprep.subr.mxu0 0.0
        %3098 = vmatpush1.msra.mxu0 0.0
        %3099 = vmatprep.subr.mxu0 0.0
        %3100 = vmatpush1.msra.mxu0 0.0
        %3101 = vmatprep.subr.mxu0 0.0
        %3102 = vmatpush1.msra.mxu0 0.0
        %3103 = vmatprep.subr.mxu0 0.0
        %3104 = vmatpush1.msra.mxu0 0.0
        %3105 = vmatprep.subr.mxu0 0.0
        %3106 = vmatpush1.msra.mxu0 0.0
        %3107 = vmatprep.subr.mxu0 0.0
        %3108 = vmatpush1.msra.mxu0 0.0
        %3109 = vmatprep.subr.mxu0 0.0
        %3110 = vmatpush1.msra.mxu0 0.0
        %3111 = vmatprep.subr.mxu0 0.0
        %3112 = vmatpush1.msra.mxu0 0.0
        %3113 = vmatprep.subr.mxu0 0.0
        %3114 = vmatpush1.msra.mxu0 %v3078
        %3115 = vmatprep.subr.mxu0 0.0
        %3116 = vmatpush2.msra.mxu0 0.0
        %3117 = vmatprep.subr.mxu0 0.0
        %3118 = vmatpush2.msra.mxu0 0.0
        %3119 = vmatprep.subr.mxu0 0.0
        %3120 = vmatpush2.msra.mxu0 0.0
        %3121 = vmatprep.subr.mxu0 0.0
        %3122 = vmatpush2.msra.mxu0 0.0
        %3123 = vmatprep.subr.mxu0 0.0
        %3124 = vmatpush2.msra.mxu0 0.0
        %3125 = vmatprep.subr.mxu0 0.0
        %3126 = vmatpush2.msra.mxu0 0.0
        %3127 = vmatprep.subr.mxu0 0.0
        %3128 = vmatpush2.msra.mxu0 0.0
        %3129 = vmatprep.subr.mxu0 0.0
        %3130 = vmatpush2.msra.mxu0 0.0
        %3131 = vmatprep.subr.mxu0 0.0
        %3132 = vmatpush2.msra.mxu0 0.0
        %3133 = vmatprep.subr.mxu0 0.0
        %3134 = vmatpush2.msra.mxu0 0.0
        %3135 = vmatprep.subr.mxu0 0.0
        %3136 = vmatpush2.msra.mxu0 0.0
        %3137 = vmatprep.subr.mxu0 0.0
        %3138 = vmatpush2.msra.mxu0 0.0
        %3139 = vmatprep.subr.mxu0 0.0
        %3140 = vmatpush2.msra.mxu0 0.0
        %3141 = vmatprep.subr.mxu0 0.0
        %3142 = vmatpush2.msra.mxu0 0.0
        %3143 = vmatprep.subr.mxu0 0.0
        %3144 = vmatpush2.msra.mxu0 0.0
        %3145 = vmatprep.subr.mxu0 0.0
        %3146 = vmatpush2.msra.mxu0 0.0
        %3147 = vmatprep.mubr.f32.mxu0 0.0
        %3148 = vmatmul.mubr.f32.gmra.mxu0 %v3081
        %v3149 = vpop.f32.mrf.mxu0
        %v3150 = vadd.f32 0.0, %v3149
        %v3151 = vpop.f32.mrf.mxu0
        %3152 = vdwg.mxu0
        %3153 = vrot.lane.b32.xlu0 %v2822, 112
        %v3154 = vpop.permute.xlu0 %3153
        %3155 = vrot.lane.b32.xlu0 %v2822, 80
        %v3156 = vpop.permute.xlu0 %3155
        %v3157 = vsel %vm554, %v3154, 0
        %v3159 = vsel %vm554, %v3156, 0
        %3161 = vmatprep.subr.mxu0 0.0
        %3162 = vmatpush1.xpose.msra.mxu0 0.0
        %3163 = vmatprep.subr.mxu0 0.0
        %3164 = vmatpush1.xpose.msra.mxu0 0.0
        %3165 = vmatprep.subr.mxu0 0.0
        %3166 = vmatpush1.xpose.msra.mxu0 0.0
        %3167 = vmatprep.subr.mxu0 0.0
        %3168 = vmatpush1.xpose.msra.mxu0 0.0
        %3169 = vmatprep.subr.mxu0 0.0
        %3170 = vmatpush1.xpose.msra.mxu0 0.0
        %3171 = vmatprep.subr.mxu0 0.0
        %3172 = vmatpush1.xpose.msra.mxu0 0.0
        %3173 = vmatprep.subr.mxu0 0.0
        %3174 = vmatpush1.xpose.msra.mxu0 0.0
        %3175 = vmatprep.subr.mxu0 0.0
        %3176 = vmatpush1.xpose.msra.mxu0 0.0
        %3177 = vmatprep.subr.mxu0 0.0
        %3178 = vmatpush1.xpose.msra.mxu0 0.0
        %3179 = vmatprep.subr.mxu0 0.0
        %3180 = vmatpush1.xpose.msra.mxu0 0.0
        %3181 = vmatprep.subr.mxu0 0.0
        %3182 = vmatpush1.xpose.msra.mxu0 0.0
        %3183 = vmatprep.subr.mxu0 0.0
        %3184 = vmatpush1.xpose.msra.mxu0 0.0
        %3185 = vmatprep.subr.mxu0 0.0
        %3186 = vmatpush1.xpose.msra.mxu0 0.0
        %3187 = vmatprep.subr.mxu0 0.0
        %3188 = vmatpush1.xpose.msra.mxu0 0.0
        %3189 = vmatprep.subr.mxu0 0.0
        %3190 = vmatpush1.xpose.msra.mxu0 0.0
        %3191 = vmatprep.subr.mxu0 0.0
        %3192 = vmatpush1.xpose.msra.mxu0 %v3159
        %3193 = vmatprep.subr.mxu0 0.0
        %3194 = vmatpush2.xpose.msra.mxu0 0.0
        %3195 = vmatprep.subr.mxu0 0.0
        %3196 = vmatpush2.xpose.msra.mxu0 0.0
        %3197 = vmatprep.subr.mxu0 0.0
        %3198 = vmatpush2.xpose.msra.mxu0 0.0
        %3199 = vmatprep.subr.mxu0 0.0
        %3200 = vmatpush2.xpose.msra.mxu0 0.0
        %3201 = vmatprep.subr.mxu0 0.0
        %3202 = vmatpush2.xpose.msra.mxu0 0.0
        %3203 = vmatprep.subr.mxu0 0.0
        %3204 = vmatpush2.xpose.msra.mxu0 0.0
        %3205 = vmatprep.subr.mxu0 0.0
        %3206 = vmatpush2.xpose.msra.mxu0 0.0
        %3207 = vmatprep.subr.mxu0 0.0
        %3208 = vmatpush2.xpose.msra.mxu0 0.0
        %3209 = vmatprep.subr.mxu0 0.0
        %3210 = vmatpush2.xpose.msra.mxu0 0.0
        %3211 = vmatprep.subr.mxu0 0.0
        %3212 = vmatpush2.xpose.msra.mxu0 0.0
        %3213 = vmatprep.subr.mxu0 0.0
        %3214 = vmatpush2.xpose.msra.mxu0 0.0
        %3215 = vmatprep.subr.mxu0 0.0
        %3216 = vmatpush2.xpose.msra.mxu0 0.0
        %3217 = vmatprep.subr.mxu0 0.0
        %3218 = vmatpush2.xpose.msra.mxu0 0.0
        %3219 = vmatprep.subr.mxu0 0.0
        %3220 = vmatpush2.xpose.msra.mxu0 0.0
        %3221 = vmatprep.subr.mxu0 0.0
        %3222 = vmatpush2.xpose.msra.mxu0 0.0
        %3223 = vmatprep.subr.mxu0 0.0
        %3224 = vmatpush2.xpose.msra.mxu0 0.0
        %3225 = vmatprep.mubr.f32.mxu0 0.0
        %3226 = vmatmul.mubr.f32.gmra.mxu0 %v3157
        %v3227 = vpop.f32.mrf.mxu0
        %v3228 = vadd.f32 0.0, %v3227
        %v3229 = vpop.f32.mrf.mxu0
        %3230 = vdwg.mxu0
        %v3231 = vsel %vm554, %v3228, -inf
        %3232 = vmax.xlane.f32.xlu0 %v3231
        %v3233 = vpop.xlane.xlu0 %3232
        %v3234 = vsub.f32 %v3228, %v3233
        %v3235 = vmul.f32 %v3234, 1.442695
        %v3236 = vpow.pop %v3235
        %v3237 = vsel %vm554, %v3236, 0.0
        %3238 = vadd.xlane.f32.xlu0 %v3237
        %v3239 = vpop.xlane.xlu0 %3238
        %v3240 = vrcp.pop %v3239
        %v3241 = vmul.f32 %v3236, %v3240
        %3242 = vrot.lane.b32.xlu0 %v2746, 48
        %v3243 = vpop.permute.xlu0 %3242
        %v3246 = vsel %vm554, %v3241, 0
        %3248 = vmatprep.subr.mxu0 0.0
        %3249 = vmatpush1.msra.mxu0 0.0
        %3250 = vmatprep.subr.mxu0 0.0
        %3251 = vmatpush1.msra.mxu0 0.0
        %3252 = vmatprep.subr.mxu0 0.0
        %3253 = vmatpush1.msra.mxu0 0.0
        %3254 = vmatprep.subr.mxu0 0.0
        %3255 = vmatpush1.msra.mxu0 0.0
        %3256 = vmatprep.subr.mxu0 0.0
        %3257 = vmatpush1.msra.mxu0 0.0
        %3258 = vmatprep.subr.mxu0 0.0
        %3259 = vmatpush1.msra.mxu0 0.0
        %3260 = vmatprep.subr.mxu0 0.0
        %3261 = vmatpush1.msra.mxu0 0.0
        %3262 = vmatprep.subr.mxu0 0.0
        %3263 = vmatpush1.msra.mxu0 0.0
        %3264 = vmatprep.subr.mxu0 0.0
        %3265 = vmatpush1.msra.mxu0 0.0
        %3266 = vmatprep.subr.mxu0 0.0
        %3267 = vmatpush1.msra.mxu0 0.0
        %3268 = vmatprep.subr.mxu0 0.0
        %3269 = vmatpush1.msra.mxu0 0.0
        %3270 = vmatprep.subr.mxu0 0.0
        %3271 = vmatpush1.msra.mxu0 0.0
        %3272 = vmatprep.subr.mxu0 0.0
        %3273 = vmatpush1.msra.mxu0 0.0
        %3274 = vmatprep.subr.mxu0 0.0
        %3275 = vmatpush1.msra.mxu0 0.0
        %3276 = vmatprep.subr.mxu0 0.0
        %3277 = vmatpush1.msra.mxu0 0.0
        %3278 = vmatprep.subr.mxu0 0.0
        %3279 = vmatpush1.msra.mxu0 %v3243
        %3280 = vmatprep.subr.mxu0 0.0
        %3281 = vmatpush2.msra.mxu0 0.0
        %3282 = vmatprep.subr.mxu0 0.0
        %3283 = vmatpush2.msra.mxu0 0.0
        %3284 = vmatprep.subr.mxu0 0.0
        %3285 = vmatpush2.msra.mxu0 0.0
        %3286 = vmatprep.subr.mxu0 0.0
        %3287 = vmatpush2.msra.mxu0 0.0
        %3288 = vmatprep.subr.mxu0 0.0
        %3289 = vmatpush2.msra.mxu0 0.0
        %3290 = vmatprep.subr.mxu0 0.0
        %3291 = vmatpush2.msra.mxu0 0.0
        %3292 = vmatprep.subr.mxu0 0.0
        %3293 = vmatpush2.msra.mxu0 0.0
        %3294 = vmatprep.subr.mxu0 0.0
        %3295 = vmatpush2.msra.mxu0 0.0
        %3296 = vmatprep.subr.mxu0 0.0
        %3297 = vmatpush2.msra.mxu0 0.0
        %3298 = vmatprep.subr.mxu0 0.0
        %3299 = vmatpush2.msra.mxu0 0.0
        %3300 = vmatprep.subr.mxu0 0.0
        %3301 = vmatpush2.msra.mxu0 0.0
        %3302 = vmatprep.subr.mxu0 0.0
        %3303 = vmatpush2.msra.mxu0 0.0
        %3304 = vmatprep.subr.mxu0 0.0
        %3305 = vmatpush2.msra.mxu0 0.0
        %3306 = vmatprep.subr.mxu0 0.0
        %3307 = vmatpush2.msra.mxu0 0.0
        %3308 = vmatprep.subr.mxu0 0.0
        %3309 = vmatpush2.msra.mxu0 0.0
        %3310 = vmatprep.subr.mxu0 0.0
        %3311 = vmatpush2.msra.mxu0 0.0
        %3312 = vmatprep.mubr.f32.mxu0 0.0
        %3313 = vmatmul.mubr.f32.gmra.mxu0 %v3246
        %v3314 = vpop.f32.mrf.mxu0
        %v3315 = vadd.f32 0.0, %v3314
        %v3316 = vpop.f32.mrf.mxu0
        %3317 = vdwg.mxu0
        %3318 = vrot.lane.b32.xlu0 %v2822, 104
        %v3319 = vpop.permute.xlu0 %3318
        %3320 = vrot.lane.b32.xlu0 %v2822, 72
        %v3321 = vpop.permute.xlu0 %3320
        %v3322 = vsel %vm554, %v3319, 0
        %v3324 = vsel %vm554, %v3321, 0
        %3326 = vmatprep.subr.mxu0 0.0
        %3327 = vmatpush1.xpose.msra.mxu0 0.0
        %3328 = vmatprep.subr.mxu0 0.0
        %3329 = vmatpush1.xpose.msra.mxu0 0.0
        %3330 = vmatprep.subr.mxu0 0.0
        %3331 = vmatpush1.xpose.msra.mxu0 0.0
        %3332 = vmatprep.subr.mxu0 0.0
        %3333 = vmatpush1.xpose.msra.mxu0 0.0
        %3334 = vmatprep.subr.mxu0 0.0
        %3335 = vmatpush1.xpose.msra.mxu0 0.0
        %3336 = vmatprep.subr.mxu0 0.0
        %3337 = vmatpush1.xpose.msra.mxu0 0.0
        %3338 = vmatprep.subr.mxu0 0.0
        %3339 = vmatpush1.xpose.msra.mxu0 0.0
        %3340 = vmatprep.subr.mxu0 0.0
        %3341 = vmatpush1.xpose.msra.mxu0 0.0
        %3342 = vmatprep.subr.mxu0 0.0
        %3343 = vmatpush1.xpose.msra.mxu0 0.0
        %3344 = vmatprep.subr.mxu0 0.0
        %3345 = vmatpush1.xpose.msra.mxu0 0.0
        %3346 = vmatprep.subr.mxu0 0.0
        %3347 = vmatpush1.xpose.msra.mxu0 0.0
        %3348 = vmatprep.subr.mxu0 0.0
        %3349 = vmatpush1.xpose.msra.mxu0 0.0
        %3350 = vmatprep.subr.mxu0 0.0
        %3351 = vmatpush1.xpose.msra.mxu0 0.0
        %3352 = vmatprep.subr.mxu0 0.0
        %3353 = vmatpush1.xpose.msra.mxu0 0.0
        %3354 = vmatprep.subr.mxu0 0.0
        %3355 = vmatpush1.xpose.msra.mxu0 0.0
        %3356 = vmatprep.subr.mxu0 0.0
        %3357 = vmatpush1.xpose.msra.mxu0 %v3324
        %3358 = vmatprep.subr.mxu0 0.0
        %3359 = vmatpush2.xpose.msra.mxu0 0.0
        %3360 = vmatprep.subr.mxu0 0.0
        %3361 = vmatpush2.xpose.msra.mxu0 0.0
        %3362 = vmatprep.subr.mxu0 0.0
        %3363 = vmatpush2.xpose.msra.mxu0 0.0
        %3364 = vmatprep.subr.mxu0 0.0
        %3365 = vmatpush2.xpose.msra.mxu0 0.0
        %3366 = vmatprep.subr.mxu0 0.0
        %3367 = vmatpush2.xpose.msra.mxu0 0.0
        %3368 = vmatprep.subr.mxu0 0.0
        %3369 = vmatpush2.xpose.msra.mxu0 0.0
        %3370 = vmatprep.subr.mxu0 0.0
        %3371 = vmatpush2.xpose.msra.mxu0 0.0
        %3372 = vmatprep.subr.mxu0 0.0
        %3373 = vmatpush2.xpose.msra.mxu0 0.0
        %3374 = vmatprep.subr.mxu0 0.0
        %3375 = vmatpush2.xpose.msra.mxu0 0.0
        %3376 = vmatprep.subr.mxu0 0.0
        %3377 = vmatpush2.xpose.msra.mxu0 0.0
        %3378 = vmatprep.subr.mxu0 0.0
        %3379 = vmatpush2.xpose.msra.mxu0 0.0
        %3380 = vmatprep.subr.mxu0 0.0
        %3381 = vmatpush2.xpose.msra.mxu0 0.0
        %3382 = vmatprep.subr.mxu0 0.0
        %3383 = vmatpush2.xpose.msra.mxu0 0.0
        %3384 = vmatprep.subr.mxu0 0.0
        %3385 = vmatpush2.xpose.msra.mxu0 0.0
        %3386 = vmatprep.subr.mxu0 0.0
        %3387 = vmatpush2.xpose.msra.mxu0 0.0
        %3388 = vmatprep.subr.mxu0 0.0
        %3389 = vmatpush2.xpose.msra.mxu0 0.0
        %3390 = vmatprep.mubr.f32.mxu0 0.0
        %3391 = vmatmul.mubr.f32.gmra.mxu0 %v3322
        %v3392 = vpop.f32.mrf.mxu0
        %v3393 = vadd.f32 0.0, %v3392
        %v3394 = vpop.f32.mrf.mxu0
        %3395 = vdwg.mxu0
        %v3396 = vsel %vm554, %v3393, -inf
        %3397 = vmax.xlane.f32.xlu0 %v3396
        %v3398 = vpop.xlane.xlu0 %3397
        %v3399 = vsub.f32 %v3393, %v3398
        %v3400 = vmul.f32 %v3399, 1.442695
        %v3401 = vpow.pop %v3400
        %v3402 = vsel %vm554, %v3401, 0.0
        %3403 = vadd.xlane.f32.xlu0 %v3402
        %v3404 = vpop.xlane.xlu0 %3403
        %v3405 = vrcp.pop %v3404
        %v3406 = vmul.f32 %v3401, %v3405
        %3407 = vrot.lane.b32.xlu0 %v2746, 40
        %v3408 = vpop.permute.xlu0 %3407
        %v3411 = vsel %vm554, %v3406, 0
        %3413 = vmatprep.subr.mxu0 0.0
        %3414 = vmatpush1.msra.mxu0 0.0
        %3415 = vmatprep.subr.mxu0 0.0
        %3416 = vmatpush1.msra.mxu0 0.0
        %3417 = vmatprep.subr.mxu0 0.0
        %3418 = vmatpush1.msra.mxu0 0.0
        %3419 = vmatprep.subr.mxu0 0.0
        %3420 = vmatpush1.msra.mxu0 0.0
        %3421 = vmatprep.subr.mxu0 0.0
        %3422 = vmatpush1.msra.mxu0 0.0
        %3423 = vmatprep.subr.mxu0 0.0
        %3424 = vmatpush1.msra.mxu0 0.0
        %3425 = vmatprep.subr.mxu0 0.0
        %3426 = vmatpush1.msra.mxu0 0.0
        %3427 = vmatprep.subr.mxu0 0.0
        %3428 = vmatpush1.msra.mxu0 0.0
        %3429 = vmatprep.subr.mxu0 0.0
        %3430 = vmatpush1.msra.mxu0 0.0
        %3431 = vmatprep.subr.mxu0 0.0
        %3432 = vmatpush1.msra.mxu0 0.0
        %3433 = vmatprep.subr.mxu0 0.0
        %3434 = vmatpush1.msra.mxu0 0.0
        %3435 = vmatprep.subr.mxu0 0.0
        %3436 = vmatpush1.msra.mxu0 0.0
        %3437 = vmatprep.subr.mxu0 0.0
        %3438 = vmatpush1.msra.mxu0 0.0
        %3439 = vmatprep.subr.mxu0 0.0
        %3440 = vmatpush1.msra.mxu0 0.0
        %3441 = vmatprep.subr.mxu0 0.0
        %3442 = vmatpush1.msra.mxu0 0.0
        %3443 = vmatprep.subr.mxu0 0.0
        %3444 = vmatpush1.msra.mxu0 %v3408
        %3445 = vmatprep.subr.mxu0 0.0
        %3446 = vmatpush2.msra.mxu0 0.0
        %3447 = vmatprep.subr.mxu0 0.0
        %3448 = vmatpush2.msra.mxu0 0.0
        %3449 = vmatprep.subr.mxu0 0.0
        %3450 = vmatpush2.msra.mxu0 0.0
        %3451 = vmatprep.subr.mxu0 0.0
        %3452 = vmatpush2.msra.mxu0 0.0
        %3453 = vmatprep.subr.mxu0 0.0
        %3454 = vmatpush2.msra.mxu0 0.0
        %3455 = vmatprep.subr.mxu0 0.0
        %3456 = vmatpush2.msra.mxu0 0.0
        %3457 = vmatprep.subr.mxu0 0.0
        %3458 = vmatpush2.msra.mxu0 0.0
        %3459 = vmatprep.subr.mxu0 0.0
        %3460 = vmatpush2.msra.mxu0 0.0
        %3461 = vmatprep.subr.mxu0 0.0
        %3462 = vmatpush2.msra.mxu0 0.0
        %3463 = vmatprep.subr.mxu0 0.0
        %3464 = vmatpush2.msra.mxu0 0.0
        %3465 = vmatprep.subr.mxu0 0.0
        %3466 = vmatpush2.msra.mxu0 0.0
        %3467 = vmatprep.subr.mxu0 0.0
        %3468 = vmatpush2.msra.mxu0 0.0
        %3469 = vmatprep.subr.mxu0 0.0
        %3470 = vmatpush2.msra.mxu0 0.0
        %3471 = vmatprep.subr.mxu0 0.0
        %3472 = vmatpush2.msra.mxu0 0.0
        %3473 = vmatprep.subr.mxu0 0.0
        %3474 = vmatpush2.msra.mxu0 0.0
        %3475 = vmatprep.subr.mxu0 0.0
        %3476 = vmatpush2.msra.mxu0 0.0
        %3477 = vmatprep.mubr.f32.mxu0 0.0
        %3478 = vmatmul.mubr.f32.gmra.mxu0 %v3411
        %v3479 = vpop.f32.mrf.mxu0
        %v3480 = vadd.f32 0.0, %v3479
        %v3481 = vpop.f32.mrf.mxu0
        %3482 = vdwg.mxu0
        %3484 = vrot.lane.b32.xlu0 %v3150, 8
        %v3485 = vpop.permute.xlu0 %3484
        %3488 = vrot.lane.b32.xlu0 %v3315, 16
        %v3489 = vpop.permute.xlu0 %3488
        %3492 = vrot.lane.b32.xlu0 %v3480, 24
        %v3493 = vpop.permute.xlu0 %3492
        %v3495 = vsel %vm554, %v2985, %v3485
        %v3496 = vsel %vm1225, %v3495, %v3489
        %v3497 = vsel %vm1227, %v3496, %v3493
        %v3498 = vld [vmem:[#allocation8 + $0x20] sm:$0xff]
        %v3499 = vld [vmem:[#allocation8 + $0x28] sm:$0xff]
        %v3500 = vld [vmem:[#allocation8 + $0x30] sm:$0xff]
        %v3501 = vld [vmem:[#allocation8 + $0x38] sm:$0xff]
        %v3502 = vld [vmem:[#allocation8 + $0xe1] sm:$0x1]
        %v3503 = vlaneseq
        %v3504 = vshrl.u32 %v3503, 7
        %v3505 = vsub.s32 0, %v3504
        %v3506 = vrot.slane %v3502, %v3505
        %v3508 = vsel %vm397, %v3497, 0
        %3510 = vmatprep.subr.mxu0 0.0
        %3511 = vmatpush1.msra.mxu0 0.0
        %3512 = vmatprep.subr.mxu0 0.0
        %3513 = vmatpush1.msra.mxu0 0.0
        %3514 = vmatprep.subr.mxu0 0.0
        %3515 = vmatpush1.msra.mxu0 0.0
        %3516 = vmatprep.subr.mxu0 0.0
        %3517 = vmatpush1.msra.mxu0 0.0
        %3518 = vmatprep.subr.mxu0 0.0
        %3519 = vmatpush1.msra.mxu0 0.0
        %3520 = vmatprep.subr.mxu0 0.0
        %3521 = vmatpush1.msra.mxu0 0.0
        %3522 = vmatprep.subr.mxu0 0.0
        %3523 = vmatpush1.msra.mxu0 0.0
        %3524 = vmatprep.subr.mxu0 0.0
        %3525 = vmatpush1.msra.mxu0 0.0
        %3526 = vmatprep.subr.mxu0 0.0
        %3527 = vmatpush1.msra.mxu0 0.0
        %3528 = vmatprep.subr.mxu0 0.0
        %3529 = vmatpush1.msra.mxu0 0.0
        %3530 = vmatprep.subr.mxu0 0.0
        %3531 = vmatpush1.msra.mxu0 0.0
        %3532 = vmatprep.subr.mxu0 0.0
        %3533 = vmatpush1.msra.mxu0 0.0
        %3534 = vmatprep.subr.mxu0 0.0
        %3535 = vmatpush1.msra.mxu0 %v3501
        %3536 = vmatprep.subr.mxu0 0.0
        %3537 = vmatpush1.msra.mxu0 %v3500
        %3538 = vmatprep.subr.mxu0 0.0
        %3539 = vmatpush1.msra.mxu0 %v3499
        %3540 = vmatprep.subr.mxu0 0.0
        %3541 = vmatpush1.msra.mxu0 %v3498
        %3542 = vmatprep.subr.mxu0 0.0
        %3543 = vmatpush2.msra.mxu0 0.0
        %3544 = vmatprep.subr.mxu0 0.0
        %3545 = vmatpush2.msra.mxu0 0.0
        %3546 = vmatprep.subr.mxu0 0.0
        %3547 = vmatpush2.msra.mxu0 0.0
        %3548 = vmatprep.subr.mxu0 0.0
        %3549 = vmatpush2.msra.mxu0 0.0
        %3550 = vmatprep.subr.mxu0 0.0
        %3551 = vmatpush2.msra.mxu0 0.0
        %3552 = vmatprep.subr.mxu0 0.0
        %3553 = vmatpush2.msra.mxu0 0.0
        %3554 = vmatprep.subr.mxu0 0.0
        %3555 = vmatpush2.msra.mxu0 0.0
        %3556 = vmatprep.subr.mxu0 0.0
        %3557 = vmatpush2.msra.mxu0 0.0
        %3558 = vmatprep.subr.mxu0 0.0
        %3559 = vmatpush2.msra.mxu0 0.0
        %3560 = vmatprep.subr.mxu0 0.0
        %3561 = vmatpush2.msra.mxu0 0.0
        %3562 = vmatprep.subr.mxu0 0.0
        %3563 = vmatpush2.msra.mxu0 0.0
        %3564 = vmatprep.subr.mxu0 0.0
        %3565 = vmatpush2.msra.mxu0 0.0
        %3566 = vmatprep.subr.mxu0 0.0
        %3567 = vmatpush2.msra.mxu0 0.0
        %3568 = vmatprep.subr.mxu0 0.0
        %3569 = vmatpush2.msra.mxu0 0.0
        %3570 = vmatprep.subr.mxu0 0.0
        %3571 = vmatpush2.msra.mxu0 0.0
        %3572 = vmatprep.subr.mxu0 0.0
        %3573 = vmatpush2.msra.mxu0 0.0
        %3574 = vmatprep.mubr.f32.mxu0 0.0
        %3575 = vmatmul.mubr.f32.gmra.mxu0 %v3508
        %v3576 = vpop.f32.mrf.mxu0
        %v3577 = vadd.f32 %v3506, %v3576
        %v3578 = vpop.f32.mrf.mxu0
        %3579 = vdwg.mxu0
        %v3580 = vadd.f32 %v3577, 0.0
        %v3581 = vld [vmem:[#allocation8 + $0xe6] sm:$0x1]
        %v3582 = vld [vmem:[#allocation8 + $0xe7] sm:$0x1]
        %v3583 = vsel %vm397, %v3580, 0.0
        %3584 = vadd.xlane.f32.xlu0 %v3583
        %v3585 = vpop.xlane.xlu0 %3584
        %v3586 = vmul.f32 %v3585, %v1317
        %v3587 = vsub.f32 %v3580, %v3586
        %v3588 = vmul.f32 %v3587, %v3587
        %v3589 = vsel %vm397, %v3588, 0.0
        %3590 = vadd.xlane.f32.xlu0 %v3589
        %v3591 = vpop.xlane.xlu0 %3590
        %v3592 = vmul.f32 %v3591, %v1317
        %v3593 = vadd.f32 %v3592, 1e-05
        %v3594 = vrsqrt.pop %v3593
        %v3595 = vmul.f32 %v3587, %v3594
        %v3596 = vlaneseq
        %v3597 = vshrl.u32 %v3596, 7
        %v3598 = vsub.s32 0, %v3597
        %v3599 = vrot.slane %v3581, %v3598
        %v3600 = vmul.f32 %v3595, %v3599
        %v3601 = vlaneseq
        %v3602 = vshrl.u32 %v3601, 7
        %v3603 = vsub.s32 0, %v3602
        %v3604 = vrot.slane %v3582, %v3603
        %v3605 = vadd.f32 %v3600, %v3604
        %v3606 = vld [vmem:[#allocation8 + $0x40] sm:$0xff]
        %v3607 = vld [vmem:[#allocation8 + $0x48] sm:$0xff]
        %v3608 = vld [vmem:[#allocation8 + $0x50] sm:$0xff]
        %v3609 = vld [vmem:[#allocation8 + $0x58] sm:$0xff]
        %v3610 = vld [vmem:[#allocation8 + $0xe2] sm:$0x1]
        %v3611 = vadd.f32 %v3605, %v2666
        %v3612 = vlaneseq
        %v3613 = vshrl.u32 %v3612, 7
        %v3614 = vsub.s32 0, %v3613
        %v3615 = vrot.slane %v3610, %v3614
        %v3617 = vsel %vm397, %v3611, 0
        %3619 = vmatprep.subr.mxu0 0.0
        %3620 = vmatpush1.msra.mxu0 0.0
        %3621 = vmatprep.subr.mxu0 0.0
        %3622 = vmatpush1.msra.mxu0 0.0
        %3623 = vmatprep.subr.mxu0 0.0
        %3624 = vmatpush1.msra.mxu0 0.0
        %3625 = vmatprep.subr.mxu0 0.0
        %3626 = vmatpush1.msra.mxu0 0.0
        %3627 = vmatprep.subr.mxu0 0.0
        %3628 = vmatpush1.msra.mxu0 0.0
        %3629 = vmatprep.subr.mxu0 0.0
        %3630 = vmatpush1.msra.mxu0 0.0
        %3631 = vmatprep.subr.mxu0 0.0
        %3632 = vmatpush1.msra.mxu0 0.0
        %3633 = vmatprep.subr.mxu0 0.0
        %3634 = vmatpush1.msra.mxu0 0.0
        %3635 = vmatprep.subr.mxu0 0.0
        %3636 = vmatpush1.msra.mxu0 0.0
        %3637 = vmatprep.subr.mxu0 0.0
        %3638 = vmatpush1.msra.mxu0 0.0
        %3639 = vmatprep.subr.mxu0 0.0
        %3640 = vmatpush1.msra.mxu0 0.0
        %3641 = vmatprep.subr.mxu0 0.0
        %3642 = vmatpush1.msra.mxu0 0.0
        %3643 = vmatprep.subr.mxu0 0.0
        %3644 = vmatpush1.msra.mxu0 %v3609
        %3645 = vmatprep.subr.mxu0 0.0
        %3646 = vmatpush1.msra.mxu0 %v3608
        %3647 = vmatprep.subr.mxu0 0.0
        %3648 = vmatpush1.msra.mxu0 %v3607
        %3649 = vmatprep.subr.mxu0 0.0
        %3650 = vmatpush1.msra.mxu0 %v3606
        %3651 = vmatprep.subr.mxu0 0.0
        %3652 = vmatpush2.msra.mxu0 0.0
        %3653 = vmatprep.subr.mxu0 0.0
        %3654 = vmatpush2.msra.mxu0 0.0
        %3655 = vmatprep.subr.mxu0 0.0
        %3656 = vmatpush2.msra.mxu0 0.0
        %3657 = vmatprep.subr.mxu0 0.0
        %3658 = vmatpush2.msra.mxu0 0.0
        %3659 = vmatprep.subr.mxu0 0.0
        %3660 = vmatpush2.msra.mxu0 0.0
        %3661 = vmatprep.subr.mxu0 0.0
        %3662 = vmatpush2.msra.mxu0 0.0
        %3663 = vmatprep.subr.mxu0 0.0
        %3664 = vmatpush2.msra.mxu0 0.0
        %3665 = vmatprep.subr.mxu0 0.0
        %3666 = vmatpush2.msra.mxu0 0.0
        %3667 = vmatprep.subr.mxu0 0.0
        %3668 = vmatpush2.msra.mxu0 0.0
        %3669 = vmatprep.subr.mxu0 0.0
        %3670 = vmatpush2.msra.mxu0 0.0
        %3671 = vmatprep.subr.mxu0 0.0
        %3672 = vmatpush2.msra.mxu0 0.0
        %3673 = vmatprep.subr.mxu0 0.0
        %3674 = vmatpush2.msra.mxu0 0.0
        %3675 = vmatprep.subr.mxu0 0.0
        %3676 = vmatpush2.msra.mxu0 0.0
        %3677 = vmatprep.subr.mxu0 0.0
        %3678 = vmatpush2.msra.mxu0 0.0
        %3679 = vmatprep.subr.mxu0 0.0
        %3680 = vmatpush2.msra.mxu0 0.0
        %3681 = vmatprep.subr.mxu0 0.0
        %3682 = vmatpush2.msra.mxu0 0.0
        %3683 = vmatprep.mubr.f32.mxu0 0.0
        %3684 = vmatmul.mubr.f32.gmra.mxu0 %v3617
        %v3685 = vpop.f32.mrf.mxu0
        %v3686 = vadd.f32 %v3615, %v3685
        %v3687 = vpop.f32.mrf.mxu0
        %3688 = vdwg.mxu0
        %3693 = vrot.lane.b32.xlu0 %v3606, 96
        %v3694 = vpop.permute.xlu0 %3693
        %3695 = vrot.lane.b32.xlu0 %v3607, 96
        %v3696 = vpop.permute.xlu0 %3695
        %3697 = vrot.lane.b32.xlu0 %v3608, 96
        %v3698 = vpop.permute.xlu0 %3697
        %3699 = vrot.lane.b32.xlu0 %v3609, 96
        %v3700 = vpop.permute.xlu0 %3699
        %3706 = vrot.lane.b32.xlu0 %v3615, 96
        %v3707 = vpop.permute.xlu0 %3706
        %v3710 = vsel %vm397, %v2664, 0
        %3712 = vmatprep.subr.mxu0 0.0
        %3713 = vmatpush1.msra.mxu0 0.0
        %3714 = vmatprep.subr.mxu0 0.0
        %3715 = vmatpush1.msra.mxu0 0.0
        %3716 = vmatprep.subr.mxu0 0.0
        %3717 = vmatpush1.msra.mxu0 0.0
        %3718 = vmatprep.subr.mxu0 0.0
        %3719 = vmatpush1.msra.mxu0 0.0
        %3720 = vmatprep.subr.mxu0 0.0
        %3721 = vmatpush1.msra.mxu0 0.0
        %3722 = vmatprep.subr.mxu0 0.0
        %3723 = vmatpush1.msra.mxu0 0.0
        %3724 = vmatprep.subr.mxu0 0.0
        %3725 = vmatpush1.msra.mxu0 0.0
        %3726 = vmatprep.subr.mxu0 0.0
        %3727 = vmatpush1.msra.mxu0 0.0
        %3728 = vmatprep.subr.mxu0 0.0
        %3729 = vmatpush1.msra.mxu0 0.0
        %3730 = vmatprep.subr.mxu0 0.0
        %3731 = vmatpush1.msra.mxu0 0.0
        %3732 = vmatprep.subr.mxu0 0.0
        %3733 = vmatpush1.msra.mxu0 0.0
        %3734 = vmatprep.subr.mxu0 0.0
        %3735 = vmatpush1.msra.mxu0 0.0
        %3736 = vmatprep.subr.mxu0 0.0
        %3737 = vmatpush1.msra.mxu0 %v3700
        %3738 = vmatprep.subr.mxu0 0.0
        %3739 = vmatpush1.msra.mxu0 %v3698
        %3740 = vmatprep.subr.mxu0 0.0
        %3741 = vmatpush1.msra.mxu0 %v3696
        %3742 = vmatprep.subr.mxu0 0.0
        %3743 = vmatpush1.msra.mxu0 %v3694
        %3744 = vmatprep.subr.mxu0 0.0
        %3745 = vmatpush2.msra.mxu0 0.0
        %3746 = vmatprep.subr.mxu0 0.0
        %3747 = vmatpush2.msra.mxu0 0.0
        %3748 = vmatprep.subr.mxu0 0.0
        %3749 = vmatpush2.msra.mxu0 0.0
        %3750 = vmatprep.subr.mxu0 0.0
        %3751 = vmatpush2.msra.mxu0 0.0
        %3752 = vmatprep.subr.mxu0 0.0
        %3753 = vmatpush2.msra.mxu0 0.0
        %3754 = vmatprep.subr.mxu0 0.0
        %3755 = vmatpush2.msra.mxu0 0.0
        %3756 = vmatprep.subr.mxu0 0.0
        %3757 = vmatpush2.msra.mxu0 0.0
        %3758 = vmatprep.subr.mxu0 0.0
        %3759 = vmatpush2.msra.mxu0 0.0
        %3760 = vmatprep.subr.mxu0 0.0
        %3761 = vmatpush2.msra.mxu0 0.0
        %3762 = vmatprep.subr.mxu0 0.0
        %3763 = vmatpush2.msra.mxu0 0.0
        %3764 = vmatprep.subr.mxu0 0.0
        %3765 = vmatpush2.msra.mxu0 0.0
        %3766 = vmatprep.subr.mxu0 0.0
        %3767 = vmatpush2.msra.mxu0 0.0
        %3768 = vmatprep.subr.mxu0 0.0
        %3769 = vmatpush2.msra.mxu0 0.0
        %3770 = vmatprep.subr.mxu0 0.0
        %3771 = vmatpush2.msra.mxu0 0.0
        %3772 = vmatprep.subr.mxu0 0.0
        %3773 = vmatpush2.msra.mxu0 0.0
        %3774 = vmatprep.subr.mxu0 0.0
        %3775 = vmatpush2.msra.mxu0 0.0
        %3776 = vmatprep.mubr.f32.mxu0 0.0
        %3777 = vmatmul.mubr.f32.gmra.mxu0 %v3710
        %v3778 = vpop.f32.mrf.mxu0
        %v3779 = vadd.f32 %v3707, %v3778
        %v3780 = vpop.f32.mrf.mxu0
        %3781 = vdwg.mxu0
        %3782 = vmatprep.subr.mxu0 0.0
        %3783 = vmatpush1.msra.mxu0 0.0
        %3784 = vmatprep.subr.mxu0 0.0
        %3785 = vmatpush1.msra.mxu0 0.0
        %3786 = vmatprep.subr.mxu0 0.0
        %3787 = vmatpush1.msra.mxu0 0.0
        %3788 = vmatprep.subr.mxu0 0.0
        %3789 = vmatpush1.msra.mxu0 0.0
        %3790 = vmatprep.subr.mxu0 0.0
        %3791 = vmatpush1.msra.mxu0 0.0
        %3792 = vmatprep.subr.mxu0 0.0
        %3793 = vmatpush1.msra.mxu0 0.0
        %3794 = vmatprep.subr.mxu0 0.0
        %3795 = vmatpush1.msra.mxu0 0.0
        %3796 = vmatprep.subr.mxu0 0.0
        %3797 = vmatpush1.msra.mxu0 0.0
        %3798 = vmatprep.subr.mxu0 0.0
        %3799 = vmatpush1.msra.mxu0 0.0
        %3800 = vmatprep.subr.mxu0 0.0
        %3801 = vmatpush1.msra.mxu0 0.0
        %3802 = vmatprep.subr.mxu0 0.0
        %3803 = vmatpush1.msra.mxu0 0.0
        %3804 = vmatprep.subr.mxu0 0.0
        %3805 = vmatpush1.msra.mxu0 0.0
        %3806 = vmatprep.subr.mxu0 0.0
        %3807 = vmatpush1.msra.mxu0 %v3700
        %3808 = vmatprep.subr.mxu0 0.0
        %3809 = vmatpush1.msra.mxu0 %v3698
        %3810 = vmatprep.subr.mxu0 0.0
        %3811 = vmatpush1.msra.mxu0 %v3696
        %3812 = vmatprep.subr.mxu0 0.0
        %3813 = vmatpush1.msra.mxu0 %v3694
        %3814 = vmatprep.subr.mxu0 0.0
        %3815 = vmatpush2.msra.mxu0 0.0
        %3816 = vmatprep.subr.mxu0 0.0
        %3817 = vmatpush2.msra.mxu0 0.0
        %3818 = vmatprep.subr.mxu0 0.0
        %3819 = vmatpush2.msra.mxu0 0.0
        %3820 = vmatprep.subr.mxu0 0.0
        %3821 = vmatpush2.msra.mxu0 0.0
        %3822 = vmatprep.subr.mxu0 0.0
        %3823 = vmatpush2.msra.mxu0 0.0
        %3824 = vmatprep.subr.mxu0 0.0
        %3825 = vmatpush2.msra.mxu0 0.0
        %3826 = vmatprep.subr.mxu0 0.0
        %3827 = vmatpush2.msra.mxu0 0.0
        %3828 = vmatprep.subr.mxu0 0.0
        %3829 = vmatpush2.msra.mxu0 0.0
        %3830 = vmatprep.subr.mxu0 0.0
        %3831 = vmatpush2.msra.mxu0 0.0
        %3832 = vmatprep.subr.mxu0 0.0
        %3833 = vmatpush2.msra.mxu0 0.0
        %3834 = vmatprep.subr.mxu0 0.0
        %3835 = vmatpush2.msra.mxu0 0.0
        %3836 = vmatprep.subr.mxu0 0.0
        %3837 = vmatpush2.msra.mxu0 0.0
        %3838 = vmatprep.subr.mxu0 0.0
        %3839 = vmatpush2.msra.mxu0 0.0
        %3840 = vmatprep.subr.mxu0 0.0
        %3841 = vmatpush2.msra.mxu0 0.0
        %3842 = vmatprep.subr.mxu0 0.0
        %3843 = vmatpush2.msra.mxu0 0.0
        %3844 = vmatprep.subr.mxu0 0.0
        %3845 = vmatpush2.msra.mxu0 0.0
        %3846 = vmatprep.mubr.f32.mxu0 0.0
        %3847 = vmatmul.mubr.f32.gmra.mxu0 %v472
        %v3848 = vpop.f32.mrf.mxu0
        %v3849 = vadd.f32 0.0, %v3848
        %v3850 = vpop.f32.mrf.mxu0
        %3851 = vdwg.mxu0
        %v3852 = vadd.f32 %v3779, %v3849
        %v3854 = vsel %vm554, %v3686, 0
        %v3857 = vsel %vm554, %v3852, 0
        %3859 = vmatprep.subr.mxu0 0.0
        %3860 = vmatpush1.xpose.msra.mxu0 0.0
        %3861 = vmatprep.subr.mxu0 0.0
        %3862 = vmatpush1.xpose.msra.mxu0 0.0
        %3863 = vmatprep.subr.mxu0 0.0
        %3864 = vmatpush1.xpose.msra.mxu0 0.0
        %3865 = vmatprep.subr.mxu0 0.0
        %3866 = vmatpush1.xpose.msra.mxu0 0.0
        %3867 = vmatprep.subr.mxu0 0.0
        %3868 = vmatpush1.xpose.msra.mxu0 0.0
        %3869 = vmatprep.subr.mxu0 0.0
        %3870 = vmatpush1.xpose.msra.mxu0 0.0
        %3871 = vmatprep.subr.mxu0 0.0
        %3872 = vmatpush1.xpose.msra.mxu0 0.0
        %3873 = vmatprep.subr.mxu0 0.0
        %3874 = vmatpush1.xpose.msra.mxu0 0.0
        %3875 = vmatprep.subr.mxu0 0.0
        %3876 = vmatpush1.xpose.msra.mxu0 0.0
        %3877 = vmatprep.subr.mxu0 0.0
        %3878 = vmatpush1.xpose.msra.mxu0 0.0
        %3879 = vmatprep.subr.mxu0 0.0
        %3880 = vmatpush1.xpose.msra.mxu0 0.0
        %3881 = vmatprep.subr.mxu0 0.0
        %3882 = vmatpush1.xpose.msra.mxu0 0.0
        %3883 = vmatprep.subr.mxu0 0.0
        %3884 = vmatpush1.xpose.msra.mxu0 0.0
        %3885 = vmatprep.subr.mxu0 0.0
        %3886 = vmatpush1.xpose.msra.mxu0 0.0
        %3887 = vmatprep.subr.mxu0 0.0
        %3888 = vmatpush1.xpose.msra.mxu0 0.0
        %3889 = vmatprep.subr.mxu0 0.0
        %3890 = vmatpush1.xpose.msra.mxu0 %v3857
        %3891 = vmatprep.subr.mxu0 0.0
        %3892 = vmatpush2.xpose.msra.mxu0 0.0
        %3893 = vmatprep.subr.mxu0 0.0
        %3894 = vmatpush2.xpose.msra.mxu0 0.0
        %3895 = vmatprep.subr.mxu0 0.0
        %3896 = vmatpush2.xpose.msra.mxu0 0.0
        %3897 = vmatprep.subr.mxu0 0.0
        %3898 = vmatpush2.xpose.msra.mxu0 0.0
        %3899 = vmatprep.subr.mxu0 0.0
        %3900 = vmatpush2.xpose.msra.mxu0 0.0
        %3901 = vmatprep.subr.mxu0 0.0
        %3902 = vmatpush2.xpose.msra.mxu0 0.0
        %3903 = vmatprep.subr.mxu0 0.0
        %3904 = vmatpush2.xpose.msra.mxu0 0.0
        %3905 = vmatprep.subr.mxu0 0.0
        %3906 = vmatpush2.xpose.msra.mxu0 0.0
        %3907 = vmatprep.subr.mxu0 0.0
        %3908 = vmatpush2.xpose.msra.mxu0 0.0
        %3909 = vmatprep.subr.mxu0 0.0
        %3910 = vmatpush2.xpose.msra.mxu0 0.0
        %3911 = vmatprep.subr.mxu0 0.0
        %3912 = vmatpush2.xpose.msra.mxu0 0.0
        %3913 = vmatprep.subr.mxu0 0.0
        %3914 = vmatpush2.xpose.msra.mxu0 0.0
        %3915 = vmatprep.subr.mxu0 0.0
        %3916 = vmatpush2.xpose.msra.mxu0 0.0
        %3917 = vmatprep.subr.mxu0 0.0
        %3918 = vmatpush2.xpose.msra.mxu0 0.0
        %3919 = vmatprep.subr.mxu0 0.0
        %3920 = vmatpush2.xpose.msra.mxu0 0.0
        %3921 = vmatprep.subr.mxu0 0.0
        %3922 = vmatpush2.xpose.msra.mxu0 0.0
        %3923 = vmatprep.mubr.f32.mxu0 0.0
        %3924 = vmatmul.mubr.f32.gmra.mxu0 %v3854
        %v3925 = vpop.f32.mrf.mxu0
        %v3926 = vadd.f32 %v549, %v3925
        %v3927 = vpop.f32.mrf.mxu0
        %3928 = vdwg.mxu0
        %v3929 = vsel %vm554, %v3926, -inf
        %3930 = vmax.xlane.f32.xlu0 %v3929
        %v3931 = vpop.xlane.xlu0 %3930
        %v3932 = vsub.f32 %v3926, %v3931
        %v3933 = vmul.f32 %v3932, 1.442695
        %v3934 = vpow.pop %v3933
        %v3935 = vsel %vm554, %v3934, 0.0
        %3936 = vadd.xlane.f32.xlu0 %v3935
        %v3937 = vpop.xlane.xlu0 %3936
        %v3938 = vrcp.pop %v3937
        %v3939 = vmul.f32 %v3934, %v3938
        %3941 = vrot.lane.b32.xlu0 %v3779, 96
        %v3942 = vpop.permute.xlu0 %3941
        %v3945 = vsel %vm554, %v3939, 0
        %3947 = vmatprep.subr.mxu0 0.0
        %3948 = vmatpush1.msra.mxu0 0.0
        %3949 = vmatprep.subr.mxu0 0.0
        %3950 = vmatpush1.msra.mxu0 0.0
        %3951 = vmatprep.subr.mxu0 0.0
        %3952 = vmatpush1.msra.mxu0 0.0
        %3953 = vmatprep.subr.mxu0 0.0
        %3954 = vmatpush1.msra.mxu0 0.0
        %3955 = vmatprep.subr.mxu0 0.0
        %3956 = vmatpush1.msra.mxu0 0.0
        %3957 = vmatprep.subr.mxu0 0.0
        %3958 = vmatpush1.msra.mxu0 0.0
        %3959 = vmatprep.subr.mxu0 0.0
        %3960 = vmatpush1.msra.mxu0 0.0
        %3961 = vmatprep.subr.mxu0 0.0
        %3962 = vmatpush1.msra.mxu0 0.0
        %3963 = vmatprep.subr.mxu0 0.0
        %3964 = vmatpush1.msra.mxu0 0.0
        %3965 = vmatprep.subr.mxu0 0.0
        %3966 = vmatpush1.msra.mxu0 0.0
        %3967 = vmatprep.subr.mxu0 0.0
        %3968 = vmatpush1.msra.mxu0 0.0
        %3969 = vmatprep.subr.mxu0 0.0
        %3970 = vmatpush1.msra.mxu0 0.0
        %3971 = vmatprep.subr.mxu0 0.0
        %3972 = vmatpush1.msra.mxu0 0.0
        %3973 = vmatprep.subr.mxu0 0.0
        %3974 = vmatpush1.msra.mxu0 0.0
        %3975 = vmatprep.subr.mxu0 0.0
        %3976 = vmatpush1.msra.mxu0 0.0
        %3977 = vmatprep.subr.mxu0 0.0
        %3978 = vmatpush1.msra.mxu0 %v3942
        %3979 = vmatprep.subr.mxu0 0.0
        %3980 = vmatpush2.msra.mxu0 0.0
        %3981 = vmatprep.subr.mxu0 0.0
        %3982 = vmatpush2.msra.mxu0 0.0
        %3983 = vmatprep.subr.mxu0 0.0
        %3984 = vmatpush2.msra.mxu0 0.0
        %3985 = vmatprep.subr.mxu0 0.0
        %3986 = vmatpush2.msra.mxu0 0.0
        %3987 = vmatprep.subr.mxu0 0.0
        %3988 = vmatpush2.msra.mxu0 0.0
        %3989 = vmatprep.subr.mxu0 0.0
        %3990 = vmatpush2.msra.mxu0 0.0
        %3991 = vmatprep.subr.mxu0 0.0
        %3992 = vmatpush2.msra.mxu0 0.0
        %3993 = vmatprep.subr.mxu0 0.0
        %3994 = vmatpush2.msra.mxu0 0.0
        %3995 = vmatprep.subr.mxu0 0.0
        %3996 = vmatpush2.msra.mxu0 0.0
        %3997 = vmatprep.subr.mxu0 0.0
        %3998 = vmatpush2.msra.mxu0 0.0
        %3999 = vmatprep.subr.mxu0 0.0
        %4000 = vmatpush2.msra.mxu0 0.0
        %4001 = vmatprep.subr.mxu0 0.0
        %4002 = vmatpush2.msra.mxu0 0.0
        %4003 = vmatprep.subr.mxu0 0.0
        %4004 = vmatpush2.msra.mxu0 0.0
        %4005 = vmatprep.subr.mxu0 0.0
        %4006 = vmatpush2.msra.mxu0 0.0
        %4007 = vmatprep.subr.mxu0 0.0
        %4008 = vmatpush2.msra.mxu0 0.0
        %4009 = vmatprep.subr.mxu0 0.0
        %4010 = vmatpush2.msra.mxu0 0.0
        %4011 = vmatprep.mubr.f32.mxu0 0.0
        %4012 = vmatmul.mubr.f32.gmra.mxu0 %v3945
        %v4013 = vpop.f32.mrf.mxu0
        %v4014 = vadd.f32 0.0, %v4013
        %v4015 = vpop.f32.mrf.mxu0
        %4016 = vdwg.mxu0
        %4017 = vrot.lane.b32.xlu0 %v3686, 120
        %v4018 = vpop.permute.xlu0 %4017
        %4019 = vrot.lane.b32.xlu0 %v3852, 120
        %v4020 = vpop.permute.xlu0 %4019
        %v4021 = vsel %vm554, %v4018, 0
        %v4023 = vsel %vm554, %v4020, 0
        %4025 = vmatprep.subr.mxu0 0.0
        %4026 = vmatpush1.xpose.msra.mxu0 0.0
        %4027 = vmatprep.subr.mxu0 0.0
        %4028 = vmatpush1.xpose.msra.mxu0 0.0
        %4029 = vmatprep.subr.mxu0 0.0
        %4030 = vmatpush1.xpose.msra.mxu0 0.0
        %4031 = vmatprep.subr.mxu0 0.0
        %4032 = vmatpush1.xpose.msra.mxu0 0.0
        %4033 = vmatprep.subr.mxu0 0.0
        %4034 = vmatpush1.xpose.msra.mxu0 0.0
        %4035 = vmatprep.subr.mxu0 0.0
        %4036 = vmatpush1.xpose.msra.mxu0 0.0
        %4037 = vmatprep.subr.mxu0 0.0
        %4038 = vmatpush1.xpose.msra.mxu0 0.0
        %4039 = vmatprep.subr.mxu0 0.0
        %4040 = vmatpush1.xpose.msra.mxu0 0.0
        %4041 = vmatprep.subr.mxu0 0.0
        %4042 = vmatpush1.xpose.msra.mxu0 0.0
        %4043 = vmatprep.subr.mxu0 0.0
        %4044 = vmatpush1.xpose.msra.mxu0 0.0
        %4045 = vmatprep.subr.mxu0 0.0
        %4046 = vmatpush1.xpose.msra.mxu0 0.0
        %4047 = vmatprep.subr.mxu0 0.0
        %4048 = vmatpush1.xpose.msra.mxu0 0.0
        %4049 = vmatprep.subr.mxu0 0.0
        %4050 = vmatpush1.xpose.msra.mxu0 0.0
        %4051 = vmatprep.subr.mxu0 0.0
        %4052 = vmatpush1.xpose.msra.mxu0 0.0
        %4053 = vmatprep.subr.mxu0 0.0
        %4054 = vmatpush1.xpose.msra.mxu0 0.0
        %4055 = vmatprep.subr.mxu0 0.0
        %4056 = vmatpush1.xpose.msra.mxu0 %v4023
        %4057 = vmatprep.subr.mxu0 0.0
        %4058 = vmatpush2.xpose.msra.mxu0 0.0
        %4059 = vmatprep.subr.mxu0 0.0
        %4060 = vmatpush2.xpose.msra.mxu0 0.0
        %4061 = vmatprep.subr.mxu0 0.0
        %4062 = vmatpush2.xpose.msra.mxu0 0.0
        %4063 = vmatprep.subr.mxu0 0.0
        %4064 = vmatpush2.xpose.msra.mxu0 0.0
        %4065 = vmatprep.subr.mxu0 0.0
        %4066 = vmatpush2.xpose.msra.mxu0 0.0
        %4067 = vmatprep.subr.mxu0 0.0
        %4068 = vmatpush2.xpose.msra.mxu0 0.0
        %4069 = vmatprep.subr.mxu0 0.0
        %4070 = vmatpush2.xpose.msra.mxu0 0.0
        %4071 = vmatprep.subr.mxu0 0.0
        %4072 = vmatpush2.xpose.msra.mxu0 0.0
        %4073 = vmatprep.subr.mxu0 0.0
        %4074 = vmatpush2.xpose.msra.mxu0 0.0
        %4075 = vmatprep.subr.mxu0 0.0
        %4076 = vmatpush2.xpose.msra.mxu0 0.0
        %4077 = vmatprep.subr.mxu0 0.0
        %4078 = vmatpush2.xpose.msra.mxu0 0.0
        %4079 = vmatprep.subr.mxu0 0.0
        %4080 = vmatpush2.xpose.msra.mxu0 0.0
        %4081 = vmatprep.subr.mxu0 0.0
        %4082 = vmatpush2.xpose.msra.mxu0 0.0
        %4083 = vmatprep.subr.mxu0 0.0
        %4084 = vmatpush2.xpose.msra.mxu0 0.0
        %4085 = vmatprep.subr.mxu0 0.0
        %4086 = vmatpush2.xpose.msra.mxu0 0.0
        %4087 = vmatprep.subr.mxu0 0.0
        %4088 = vmatpush2.xpose.msra.mxu0 0.0
        %4089 = vmatprep.mubr.f32.mxu0 0.0
        %4090 = vmatmul.mubr.f32.gmra.mxu0 %v4021
        %v4091 = vpop.f32.mrf.mxu0
        %v4092 = vadd.f32 %v549, %v4091
        %v4093 = vpop.f32.mrf.mxu0
        %4094 = vdwg.mxu0
        %v4095 = vsel %vm554, %v4092, -inf
        %4096 = vmax.xlane.f32.xlu0 %v4095
        %v4097 = vpop.xlane.xlu0 %4096
        %v4098 = vsub.f32 %v4092, %v4097
        %v4099 = vmul.f32 %v4098, 1.442695
        %v4100 = vpow.pop %v4099
        %v4101 = vsel %vm554, %v4100, 0.0
        %4102 = vadd.xlane.f32.xlu0 %v4101
        %v4103 = vpop.xlane.xlu0 %4102
        %v4104 = vrcp.pop %v4103
        %v4105 = vmul.f32 %v4100, %v4104
        %4106 = vrot.lane.b32.xlu0 %v3779, 88
        %v4107 = vpop.permute.xlu0 %4106
        %v4110 = vsel %vm554, %v4105, 0
        %4112 = vmatprep.subr.mxu0 0.0
        %4113 = vmatpush1.msra.mxu0 0.0
        %4114 = vmatprep.subr.mxu0 0.0
        %4115 = vmatpush1.msra.mxu0 0.0
        %4116 = vmatprep.subr.mxu0 0.0
        %4117 = vmatpush1.msra.mxu0 0.0
        %4118 = vmatprep.subr.mxu0 0.0
        %4119 = vmatpush1.msra.mxu0 0.0
        %4120 = vmatprep.subr.mxu0 0.0
        %4121 = vmatpush1.msra.mxu0 0.0
        %4122 = vmatprep.subr.mxu0 0.0
        %4123 = vmatpush1.msra.mxu0 0.0
        %4124 = vmatprep.subr.mxu0 0.0
        %4125 = vmatpush1.msra.mxu0 0.0
        %4126 = vmatprep.subr.mxu0 0.0
        %4127 = vmatpush1.msra.mxu0 0.0
        %4128 = vmatprep.subr.mxu0 0.0
        %4129 = vmatpush1.msra.mxu0 0.0
        %4130 = vmatprep.subr.mxu0 0.0
        %4131 = vmatpush1.msra.mxu0 0.0
        %4132 = vmatprep.subr.mxu0 0.0
        %4133 = vmatpush1.msra.mxu0 0.0
        %4134 = vmatprep.subr.mxu0 0.0
        %4135 = vmatpush1.msra.mxu0 0.0
        %4136 = vmatprep.subr.mxu0 0.0
        %4137 = vmatpush1.msra.mxu0 0.0
        %4138 = vmatprep.subr.mxu0 0.0
        %4139 = vmatpush1.msra.mxu0 0.0
        %4140 = vmatprep.subr.mxu0 0.0
        %4141 = vmatpush1.msra.mxu0 0.0
        %4142 = vmatprep.subr.mxu0 0.0
        %4143 = vmatpush1.msra.mxu0 %v4107
        %4144 = vmatprep.subr.mxu0 0.0
        %4145 = vmatpush2.msra.mxu0 0.0
        %4146 = vmatprep.subr.mxu0 0.0
        %4147 = vmatpush2.msra.mxu0 0.0
        %4148 = vmatprep.subr.mxu0 0.0
        %4149 = vmatpush2.msra.mxu0 0.0
        %4150 = vmatprep.subr.mxu0 0.0
        %4151 = vmatpush2.msra.mxu0 0.0
        %4152 = vmatprep.subr.mxu0 0.0
        %4153 = vmatpush2.msra.mxu0 0.0
        %4154 = vmatprep.subr.mxu0 0.0
        %4155 = vmatpush2.msra.mxu0 0.0
        %4156 = vmatprep.subr.mxu0 0.0
        %4157 = vmatpush2.msra.mxu0 0.0
        %4158 = vmatprep.subr.mxu0 0.0
        %4159 = vmatpush2.msra.mxu0 0.0
        %4160 = vmatprep.subr.mxu0 0.0
        %4161 = vmatpush2.msra.mxu0 0.0
        %4162 = vmatprep.subr.mxu0 0.0
        %4163 = vmatpush2.msra.mxu0 0.0
        %4164 = vmatprep.subr.mxu0 0.0
        %4165 = vmatpush2.msra.mxu0 0.0
        %4166 = vmatprep.subr.mxu0 0.0
        %4167 = vmatpush2.msra.mxu0 0.0
        %4168 = vmatprep.subr.mxu0 0.0
        %4169 = vmatpush2.msra.mxu0 0.0
        %4170 = vmatprep.subr.mxu0 0.0
        %4171 = vmatpush2.msra.mxu0 0.0
        %4172 = vmatprep.subr.mxu0 0.0
        %4173 = vmatpush2.msra.mxu0 0.0
        %4174 = vmatprep.subr.mxu0 0.0
        %4175 = vmatpush2.msra.mxu0 0.0
        %4176 = vmatprep.mubr.f32.mxu0 0.0
        %4177 = vmatmul.mubr.f32.gmra.mxu0 %v4110
        %v4178 = vpop.f32.mrf.mxu0
        %v4179 = vadd.f32 0.0, %v4178
        %v4180 = vpop.f32.mrf.mxu0
        %4181 = vdwg.mxu0
        %4182 = vrot.lane.b32.xlu0 %v3686, 112
        %v4183 = vpop.permute.xlu0 %4182
        %4184 = vrot.lane.b32.xlu0 %v3852, 112
        %v4185 = vpop.permute.xlu0 %4184
        %v4186 = vsel %vm554, %v4183, 0
        %v4188 = vsel %vm554, %v4185, 0
        %4190 = vmatprep.subr.mxu0 0.0
        %4191 = vmatpush1.xpose.msra.mxu0 0.0
        %4192 = vmatprep.subr.mxu0 0.0
        %4193 = vmatpush1.xpose.msra.mxu0 0.0
        %4194 = vmatprep.subr.mxu0 0.0
        %4195 = vmatpush1.xpose.msra.mxu0 0.0
        %4196 = vmatprep.subr.mxu0 0.0
        %4197 = vmatpush1.xpose.msra.mxu0 0.0
        %4198 = vmatprep.subr.mxu0 0.0
        %4199 = vmatpush1.xpose.msra.mxu0 0.0
        %4200 = vmatprep.subr.mxu0 0.0
        %4201 = vmatpush1.xpose.msra.mxu0 0.0
        %4202 = vmatprep.subr.mxu0 0.0
        %4203 = vmatpush1.xpose.msra.mxu0 0.0
        %4204 = vmatprep.subr.mxu0 0.0
        %4205 = vmatpush1.xpose.msra.mxu0 0.0
        %4206 = vmatprep.subr.mxu0 0.0
        %4207 = vmatpush1.xpose.msra.mxu0 0.0
        %4208 = vmatprep.subr.mxu0 0.0
        %4209 = vmatpush1.xpose.msra.mxu0 0.0
        %4210 = vmatprep.subr.mxu0 0.0
        %4211 = vmatpush1.xpose.msra.mxu0 0.0
        %4212 = vmatprep.subr.mxu0 0.0
        %4213 = vmatpush1.xpose.msra.mxu0 0.0
        %4214 = vmatprep.subr.mxu0 0.0
        %4215 = vmatpush1.xpose.msra.mxu0 0.0
        %4216 = vmatprep.subr.mxu0 0.0
        %4217 = vmatpush1.xpose.msra.mxu0 0.0
        %4218 = vmatprep.subr.mxu0 0.0
        %4219 = vmatpush1.xpose.msra.mxu0 0.0
        %4220 = vmatprep.subr.mxu0 0.0
        %4221 = vmatpush1.xpose.msra.mxu0 %v4188
        %4222 = vmatprep.subr.mxu0 0.0
        %4223 = vmatpush2.xpose.msra.mxu0 0.0
        %4224 = vmatprep.subr.mxu0 0.0
        %4225 = vmatpush2.xpose.msra.mxu0 0.0
        %4226 = vmatprep.subr.mxu0 0.0
        %4227 = vmatpush2.xpose.msra.mxu0 0.0
        %4228 = vmatprep.subr.mxu0 0.0
        %4229 = vmatpush2.xpose.msra.mxu0 0.0
        %4230 = vmatprep.subr.mxu0 0.0
        %4231 = vmatpush2.xpose.msra.mxu0 0.0
        %4232 = vmatprep.subr.mxu0 0.0
        %4233 = vmatpush2.xpose.msra.mxu0 0.0
        %4234 = vmatprep.subr.mxu0 0.0
        %4235 = vmatpush2.xpose.msra.mxu0 0.0
        %4236 = vmatprep.subr.mxu0 0.0
        %4237 = vmatpush2.xpose.msra.mxu0 0.0
        %4238 = vmatprep.subr.mxu0 0.0
        %4239 = vmatpush2.xpose.msra.mxu0 0.0
        %4240 = vmatprep.subr.mxu0 0.0
        %4241 = vmatpush2.xpose.msra.mxu0 0.0
        %4242 = vmatprep.subr.mxu0 0.0
        %4243 = vmatpush2.xpose.msra.mxu0 0.0
        %4244 = vmatprep.subr.mxu0 0.0
        %4245 = vmatpush2.xpose.msra.mxu0 0.0
        %4246 = vmatprep.subr.mxu0 0.0
        %4247 = vmatpush2.xpose.msra.mxu0 0.0
        %4248 = vmatprep.subr.mxu0 0.0
        %4249 = vmatpush2.xpose.msra.mxu0 0.0
        %4250 = vmatprep.subr.mxu0 0.0
        %4251 = vmatpush2.xpose.msra.mxu0 0.0
        %4252 = vmatprep.subr.mxu0 0.0
        %4253 = vmatpush2.xpose.msra.mxu0 0.0
        %4254 = vmatprep.mubr.f32.mxu0 0.0
        %4255 = vmatmul.mubr.f32.gmra.mxu0 %v4186
        %v4256 = vpop.f32.mrf.mxu0
        %v4257 = vadd.f32 %v549, %v4256
        %v4258 = vpop.f32.mrf.mxu0
        %4259 = vdwg.mxu0
        %v4260 = vsel %vm554, %v4257, -inf
        %4261 = vmax.xlane.f32.xlu0 %v4260
        %v4262 = vpop.xlane.xlu0 %4261
        %v4263 = vsub.f32 %v4257, %v4262
        %v4264 = vmul.f32 %v4263, 1.442695
        %v4265 = vpow.pop %v4264
        %v4266 = vsel %vm554, %v4265, 0.0
        %4267 = vadd.xlane.f32.xlu0 %v4266
        %v4268 = vpop.xlane.xlu0 %4267
        %v4269 = vrcp.pop %v4268
        %v4270 = vmul.f32 %v4265, %v4269
        %4271 = vrot.lane.b32.xlu0 %v3779, 80
        %v4272 = vpop.permute.xlu0 %4271
        %v4275 = vsel %vm554, %v4270, 0
        %4277 = vmatprep.subr.mxu0 0.0
        %4278 = vmatpush1.msra.mxu0 0.0
        %4279 = vmatprep.subr.mxu0 0.0
        %4280 = vmatpush1.msra.mxu0 0.0
        %4281 = vmatprep.subr.mxu0 0.0
        %4282 = vmatpush1.msra.mxu0 0.0
        %4283 = vmatprep.subr.mxu0 0.0
        %4284 = vmatpush1.msra.mxu0 0.0
        %4285 = vmatprep.subr.mxu0 0.0
        %4286 = vmatpush1.msra.mxu0 0.0
        %4287 = vmatprep.subr.mxu0 0.0
        %4288 = vmatpush1.msra.mxu0 0.0
        %4289 = vmatprep.subr.mxu0 0.0
        %4290 = vmatpush1.msra.mxu0 0.0
        %4291 = vmatprep.subr.mxu0 0.0
        %4292 = vmatpush1.msra.mxu0 0.0
        %4293 = vmatprep.subr.mxu0 0.0
        %4294 = vmatpush1.msra.mxu0 0.0
        %4295 = vmatprep.subr.mxu0 0.0
        %4296 = vmatpush1.msra.mxu0 0.0
        %4297 = vmatprep.subr.mxu0 0.0
        %4298 = vmatpush1.msra.mxu0 0.0
        %4299 = vmatprep.subr.mxu0 0.0
        %4300 = vmatpush1.msra.mxu0 0.0
        %4301 = vmatprep.subr.mxu0 0.0
        %4302 = vmatpush1.msra.mxu0 0.0
        %4303 = vmatprep.subr.mxu0 0.0
        %4304 = vmatpush1.msra.mxu0 0.0
        %4305 = vmatprep.subr.mxu0 0.0
        %4306 = vmatpush1.msra.mxu0 0.0
        %4307 = vmatprep.subr.mxu0 0.0
        %4308 = vmatpush1.msra.mxu0 %v4272
        %4309 = vmatprep.subr.mxu0 0.0
        %4310 = vmatpush2.msra.mxu0 0.0
        %4311 = vmatprep.subr.mxu0 0.0
        %4312 = vmatpush2.msra.mxu0 0.0
        %4313 = vmatprep.subr.mxu0 0.0
        %4314 = vmatpush2.msra.mxu0 0.0
        %4315 = vmatprep.subr.mxu0 0.0
        %4316 = vmatpush2.msra.mxu0 0.0
        %4317 = vmatprep.subr.mxu0 0.0
        %4318 = vmatpush2.msra.mxu0 0.0
        %4319 = vmatprep.subr.mxu0 0.0
        %4320 = vmatpush2.msra.mxu0 0.0
        %4321 = vmatprep.subr.mxu0 0.0
        %4322 = vmatpush2.msra.mxu0 0.0
        %4323 = vmatprep.subr.mxu0 0.0
        %4324 = vmatpush2.msra.mxu0 0.0
        %4325 = vmatprep.subr.mxu0 0.0
        %4326 = vmatpush2.msra.mxu0 0.0
        %4327 = vmatprep.subr.mxu0 0.0
        %4328 = vmatpush2.msra.mxu0 0.0
        %4329 = vmatprep.subr.mxu0 0.0
        %4330 = vmatpush2.msra.mxu0 0.0
        %4331 = vmatprep.subr.mxu0 0.0
        %4332 = vmatpush2.msra.mxu0 0.0
        %4333 = vmatprep.subr.mxu0 0.0
        %4334 = vmatpush2.msra.mxu0 0.0
        %4335 = vmatprep.subr.mxu0 0.0
        %4336 = vmatpush2.msra.mxu0 0.0
        %4337 = vmatprep.subr.mxu0 0.0
        %4338 = vmatpush2.msra.mxu0 0.0
        %4339 = vmatprep.subr.mxu0 0.0
        %4340 = vmatpush2.msra.mxu0 0.0
        %4341 = vmatprep.mubr.f32.mxu0 0.0
        %4342 = vmatmul.mubr.f32.gmra.mxu0 %v4275
        %v4343 = vpop.f32.mrf.mxu0
        %v4344 = vadd.f32 0.0, %v4343
        %v4345 = vpop.f32.mrf.mxu0
        %4346 = vdwg.mxu0
        %4347 = vrot.lane.b32.xlu0 %v3686, 104
        %v4348 = vpop.permute.xlu0 %4347
        %4349 = vrot.lane.b32.xlu0 %v3852, 104
        %v4350 = vpop.permute.xlu0 %4349
        %v4351 = vsel %vm554, %v4348, 0
        %v4353 = vsel %vm554, %v4350, 0
        %4355 = vmatprep.subr.mxu0 0.0
        %4356 = vmatpush1.xpose.msra.mxu0 0.0
        %4357 = vmatprep.subr.mxu0 0.0
        %4358 = vmatpush1.xpose.msra.mxu0 0.0
        %4359 = vmatprep.subr.mxu0 0.0
        %4360 = vmatpush1.xpose.msra.mxu0 0.0
        %4361 = vmatprep.subr.mxu0 0.0
        %4362 = vmatpush1.xpose.msra.mxu0 0.0
        %4363 = vmatprep.subr.mxu0 0.0
        %4364 = vmatpush1.xpose.msra.mxu0 0.0
        %4365 = vmatprep.subr.mxu0 0.0
        %4366 = vmatpush1.xpose.msra.mxu0 0.0
        %4367 = vmatprep.subr.mxu0 0.0
        %4368 = vmatpush1.xpose.msra.mxu0 0.0
        %4369 = vmatprep.subr.mxu0 0.0
        %4370 = vmatpush1.xpose.msra.mxu0 0.0
        %4371 = vmatprep.subr.mxu0 0.0
        %4372 = vmatpush1.xpose.msra.mxu0 0.0
        %4373 = vmatprep.subr.mxu0 0.0
        %4374 = vmatpush1.xpose.msra.mxu0 0.0
        %4375 = vmatprep.subr.mxu0 0.0
        %4376 = vmatpush1.xpose.msra.mxu0 0.0
        %4377 = vmatprep.subr.mxu0 0.0
        %4378 = vmatpush1.xpose.msra.mxu0 0.0
        %4379 = vmatprep.subr.mxu0 0.0
        %4380 = vmatpush1.xpose.msra.mxu0 0.0
        %4381 = vmatprep.subr.mxu0 0.0
        %4382 = vmatpush1.xpose.msra.mxu0 0.0
        %4383 = vmatprep.subr.mxu0 0.0
        %4384 = vmatpush1.xpose.msra.mxu0 0.0
        %4385 = vmatprep.subr.mxu0 0.0
        %4386 = vmatpush1.xpose.msra.mxu0 %v4353
        %4387 = vmatprep.subr.mxu0 0.0
        %4388 = vmatpush2.xpose.msra.mxu0 0.0
        %4389 = vmatprep.subr.mxu0 0.0
        %4390 = vmatpush2.xpose.msra.mxu0 0.0
        %4391 = vmatprep.subr.mxu0 0.0
        %4392 = vmatpush2.xpose.msra.mxu0 0.0
        %4393 = vmatprep.subr.mxu0 0.0
        %4394 = vmatpush2.xpose.msra.mxu0 0.0
        %4395 = vmatprep.subr.mxu0 0.0
        %4396 = vmatpush2.xpose.msra.mxu0 0.0
        %4397 = vmatprep.subr.mxu0 0.0
        %4398 = vmatpush2.xpose.msra.mxu0 0.0
        %4399 = vmatprep.subr.mxu0 0.0
        %4400 = vmatpush2.xpose.msra.mxu0 0.0
        %4401 = vmatprep.subr.mxu0 0.0
        %4402 = vmatpush2.xpose.msra.mxu0 0.0
        %4403 = vmatprep.subr.mxu0 0.0
        %4404 = vmatpush2.xpose.msra.mxu0 0.0
        %4405 = vmatprep.subr.mxu0 0.0
        %4406 = vmatpush2.xpose.msra.mxu0 0.0
        %4407 = vmatprep.subr.mxu0 0.0
        %4408 = vmatpush2.xpose.msra.mxu0 0.0
        %4409 = vmatprep.subr.mxu0 0.0
        %4410 = vmatpush2.xpose.msra.mxu0 0.0
        %4411 = vmatprep.subr.mxu0 0.0
        %4412 = vmatpush2.xpose.msra.mxu0 0.0
        %4413 = vmatprep.subr.mxu0 0.0
        %4414 = vmatpush2.xpose.msra.mxu0 0.0
        %4415 = vmatprep.subr.mxu0 0.0
        %4416 = vmatpush2.xpose.msra.mxu0 0.0
        %4417 = vmatprep.subr.mxu0 0.0
        %4418 = vmatpush2.xpose.msra.mxu0 0.0
        %4419 = vmatprep.mubr.f32.mxu0 0.0
        %4420 = vmatmul.mubr.f32.gmra.mxu0 %v4351
        %v4421 = vpop.f32.mrf.mxu0
        %v4422 = vadd.f32 %v549, %v4421
        %v4423 = vpop.f32.mrf.mxu0
        %4424 = vdwg.mxu0
        %v4425 = vsel %vm554, %v4422, -inf
        %4426 = vmax.xlane.f32.xlu0 %v4425
        %v4427 = vpop.xlane.xlu0 %4426
        %v4428 = vsub.f32 %v4422, %v4427
        %v4429 = vmul.f32 %v4428, 1.442695
        %v4430 = vpow.pop %v4429
        %v4431 = vsel %vm554, %v4430, 0.0
        %4432 = vadd.xlane.f32.xlu0 %v4431
        %v4433 = vpop.xlane.xlu0 %4432
        %v4434 = vrcp.pop %v4433
        %v4435 = vmul.f32 %v4430, %v4434
        %4436 = vrot.lane.b32.xlu0 %v3779, 72
        %v4437 = vpop.permute.xlu0 %4436
        %v4440 = vsel %vm554, %v4435, 0
        %4442 = vmatprep.subr.mxu0 0.0
        %4443 = vmatpush1.msra.mxu0 0.0
        %4444 = vmatprep.subr.mxu0 0.0
        %4445 = vmatpush1.msra.mxu0 0.0
        %4446 = vmatprep.subr.mxu0 0.0
        %4447 = vmatpush1.msra.mxu0 0.0
        %4448 = vmatprep.subr.mxu0 0.0
        %4449 = vmatpush1.msra.mxu0 0.0
        %4450 = vmatprep.subr.mxu0 0.0
        %4451 = vmatpush1.msra.mxu0 0.0
        %4452 = vmatprep.subr.mxu0 0.0
        %4453 = vmatpush1.msra.mxu0 0.0
        %4454 = vmatprep.subr.mxu0 0.0
        %4455 = vmatpush1.msra.mxu0 0.0
        %4456 = vmatprep.subr.mxu0 0.0
        %4457 = vmatpush1.msra.mxu0 0.0
        %4458 = vmatprep.subr.mxu0 0.0
        %4459 = vmatpush1.msra.mxu0 0.0
        %4460 = vmatprep.subr.mxu0 0.0
        %4461 = vmatpush1.msra.mxu0 0.0
        %4462 = vmatprep.subr.mxu0 0.0
        %4463 = vmatpush1.msra.mxu0 0.0
        %4464 = vmatprep.subr.mxu0 0.0
        %4465 = vmatpush1.msra.mxu0 0.0
        %4466 = vmatprep.subr.mxu0 0.0
        %4467 = vmatpush1.msra.mxu0 0.0
        %4468 = vmatprep.subr.mxu0 0.0
        %4469 = vmatpush1.msra.mxu0 0.0
        %4470 = vmatprep.subr.mxu0 0.0
        %4471 = vmatpush1.msra.mxu0 0.0
        %4472 = vmatprep.subr.mxu0 0.0
        %4473 = vmatpush1.msra.mxu0 %v4437
        %4474 = vmatprep.subr.mxu0 0.0
        %4475 = vmatpush2.msra.mxu0 0.0
        %4476 = vmatprep.subr.mxu0 0.0
        %4477 = vmatpush2.msra.mxu0 0.0
        %4478 = vmatprep.subr.mxu0 0.0
        %4479 = vmatpush2.msra.mxu0 0.0
        %4480 = vmatprep.subr.mxu0 0.0
        %4481 = vmatpush2.msra.mxu0 0.0
        %4482 = vmatprep.subr.mxu0 0.0
        %4483 = vmatpush2.msra.mxu0 0.0
        %4484 = vmatprep.subr.mxu0 0.0
        %4485 = vmatpush2.msra.mxu0 0.0
        %4486 = vmatprep.subr.mxu0 0.0
        %4487 = vmatpush2.msra.mxu0 0.0
        %4488 = vmatprep.subr.mxu0 0.0
        %4489 = vmatpush2.msra.mxu0 0.0
        %4490 = vmatprep.subr.mxu0 0.0
        %4491 = vmatpush2.msra.mxu0 0.0
        %4492 = vmatprep.subr.mxu0 0.0
        %4493 = vmatpush2.msra.mxu0 0.0
        %4494 = vmatprep.subr.mxu0 0.0
        %4495 = vmatpush2.msra.mxu0 0.0
        %4496 = vmatprep.subr.mxu0 0.0
        %4497 = vmatpush2.msra.mxu0 0.0
        %4498 = vmatprep.subr.mxu0 0.0
        %4499 = vmatpush2.msra.mxu0 0.0
        %4500 = vmatprep.subr.mxu0 0.0
        %4501 = vmatpush2.msra.mxu0 0.0
        %4502 = vmatprep.subr.mxu0 0.0
        %4503 = vmatpush2.msra.mxu0 0.0
        %4504 = vmatprep.subr.mxu0 0.0
        %4505 = vmatpush2.msra.mxu0 0.0
        %4506 = vmatprep.mubr.f32.mxu0 0.0
        %4507 = vmatmul.mubr.f32.gmra.mxu0 %v4440
        %v4508 = vpop.f32.mrf.mxu0
        %v4509 = vadd.f32 0.0, %v4508
        %v4510 = vpop.f32.mrf.mxu0
        %4511 = vdwg.mxu0
        %4513 = vrot.lane.b32.xlu0 %v4179, 8
        %v4514 = vpop.permute.xlu0 %4513
        %4517 = vrot.lane.b32.xlu0 %v4344, 16
        %v4518 = vpop.permute.xlu0 %4517
        %4521 = vrot.lane.b32.xlu0 %v4509, 24
        %v4522 = vpop.permute.xlu0 %4521
        %v4524 = vsel %vm554, %v4014, %v4514
        %v4525 = vsel %vm1225, %v4524, %v4518
        %v4526 = vsel %vm1227, %v4525, %v4522
        %v4527 = vld [vmem:[#allocation8 + $0x60] sm:$0xff]
        %v4528 = vld [vmem:[#allocation8 + $0x68] sm:$0xff]
        %v4529 = vld [vmem:[#allocation8 + $0x70] sm:$0xff]
        %v4530 = vld [vmem:[#allocation8 + $0x78] sm:$0xff]
        %v4531 = vld [vmem:[#allocation8 + $0xe3] sm:$0x1]
        %v4532 = vlaneseq
        %v4533 = vshrl.u32 %v4532, 7
        %v4534 = vsub.s32 0, %v4533
        %v4535 = vrot.slane %v4531, %v4534
        %v4537 = vsel %vm397, %v4526, 0
        %4539 = vmatprep.subr.mxu0 0.0
        %4540 = vmatpush1.msra.mxu0 0.0
        %4541 = vmatprep.subr.mxu0 0.0
        %4542 = vmatpush1.msra.mxu0 0.0
        %4543 = vmatprep.subr.mxu0 0.0
        %4544 = vmatpush1.msra.mxu0 0.0
        %4545 = vmatprep.subr.mxu0 0.0
        %4546 = vmatpush1.msra.mxu0 0.0
        %4547 = vmatprep.subr.mxu0 0.0
        %4548 = vmatpush1.msra.mxu0 0.0
        %4549 = vmatprep.subr.mxu0 0.0
        %4550 = vmatpush1.msra.mxu0 0.0
        %4551 = vmatprep.subr.mxu0 0.0
        %4552 = vmatpush1.msra.mxu0 0.0
        %4553 = vmatprep.subr.mxu0 0.0
        %4554 = vmatpush1.msra.mxu0 0.0
        %4555 = vmatprep.subr.mxu0 0.0
        %4556 = vmatpush1.msra.mxu0 0.0
        %4557 = vmatprep.subr.mxu0 0.0
        %4558 = vmatpush1.msra.mxu0 0.0
        %4559 = vmatprep.subr.mxu0 0.0
        %4560 = vmatpush1.msra.mxu0 0.0
        %4561 = vmatprep.subr.mxu0 0.0
        %4562 = vmatpush1.msra.mxu0 0.0
        %4563 = vmatprep.subr.mxu0 0.0
        %4564 = vmatpush1.msra.mxu0 %v4530
        %4565 = vmatprep.subr.mxu0 0.0
        %4566 = vmatpush1.msra.mxu0 %v4529
        %4567 = vmatprep.subr.mxu0 0.0
        %4568 = vmatpush1.msra.mxu0 %v4528
        %4569 = vmatprep.subr.mxu0 0.0
        %4570 = vmatpush1.msra.mxu0 %v4527
        %4571 = vmatprep.subr.mxu0 0.0
        %4572 = vmatpush2.msra.mxu0 0.0
        %4573 = vmatprep.subr.mxu0 0.0
        %4574 = vmatpush2.msra.mxu0 0.0
        %4575 = vmatprep.subr.mxu0 0.0
        %4576 = vmatpush2.msra.mxu0 0.0
        %4577 = vmatprep.subr.mxu0 0.0
        %4578 = vmatpush2.msra.mxu0 0.0
        %4579 = vmatprep.subr.mxu0 0.0
        %4580 = vmatpush2.msra.mxu0 0.0
        %4581 = vmatprep.subr.mxu0 0.0
        %4582 = vmatpush2.msra.mxu0 0.0
        %4583 = vmatprep.subr.mxu0 0.0
        %4584 = vmatpush2.msra.mxu0 0.0
        %4585 = vmatprep.subr.mxu0 0.0
        %4586 = vmatpush2.msra.mxu0 0.0
        %4587 = vmatprep.subr.mxu0 0.0
        %4588 = vmatpush2.msra.mxu0 0.0
        %4589 = vmatprep.subr.mxu0 0.0
        %4590 = vmatpush2.msra.mxu0 0.0
        %4591 = vmatprep.subr.mxu0 0.0
        %4592 = vmatpush2.msra.mxu0 0.0
        %4593 = vmatprep.subr.mxu0 0.0
        %4594 = vmatpush2.msra.mxu0 0.0
        %4595 = vmatprep.subr.mxu0 0.0
        %4596 = vmatpush2.msra.mxu0 0.0
        %4597 = vmatprep.subr.mxu0 0.0
        %4598 = vmatpush2.msra.mxu0 0.0
        %4599 = vmatprep.subr.mxu0 0.0
        %4600 = vmatpush2.msra.mxu0 0.0
        %4601 = vmatprep.subr.mxu0 0.0
        %4602 = vmatpush2.msra.mxu0 0.0
        %4603 = vmatprep.mubr.f32.mxu0 0.0
        %4604 = vmatmul.mubr.f32.gmra.mxu0 %v4537
        %v4605 = vpop.f32.mrf.mxu0
        %v4606 = vadd.f32 %v4535, %v4605
        %v4607 = vpop.f32.mrf.mxu0
        %4608 = vdwg.mxu0
        %v4609 = vadd.f32 %v3605, %v4606
        %v4610 = vld [vmem:[#allocation8 + $0xe8] sm:$0x1]
        %v4611 = vld [vmem:[#allocation8 + $0xe9] sm:$0x1]
        %v4612 = vsel %vm397, %v4609, 0.0
        %4613 = vadd.xlane.f32.xlu0 %v4612
        %v4614 = vpop.xlane.xlu0 %4613
        %v4615 = vmul.f32 %v4614, %v1317
        %v4616 = vsub.f32 %v4609, %v4615
        %v4617 = vmul.f32 %v4616, %v4616
        %v4618 = vsel %vm397, %v4617, 0.0
        %4619 = vadd.xlane.f32.xlu0 %v4618
        %v4620 = vpop.xlane.xlu0 %4619
        %v4621 = vmul.f32 %v4620, %v1317
        %v4622 = vadd.f32 %v4621, 1e-05
        %v4623 = vrsqrt.pop %v4622
        %v4624 = vmul.f32 %v4616, %v4623
        %v4625 = vlaneseq
        %v4626 = vshrl.u32 %v4625, 7
        %v4627 = vsub.s32 0, %v4626
        %v4628 = vrot.slane %v4610, %v4627
        %v4629 = vmul.f32 %v4624, %v4628
        %v4630 = vlaneseq
        %v4631 = vshrl.u32 %v4630, 7
        %v4632 = vsub.s32 0, %v4631
        %v4633 = vrot.slane %v4611, %v4632
        %v4634 = vadd.f32 %v4629, %v4633
        %v4635 = vld [vmem:[#allocation8 + $0x80] sm:$0xff]
        %v4636 = vld [vmem:[#allocation8 + $0x88] sm:$0xff]
        %v4637 = vld [vmem:[#allocation8 + $0x90] sm:$0xff]
        %v4638 = vld [vmem:[#allocation8 + $0x98] sm:$0xff]
        %v4639 = vld [vmem:[#allocation8 + $0xe4] sm:$0x1]
        %v4640 = vld [vmem:[#allocation8 + $0xa0] sm:$0xff]
        %v4641 = vld [vmem:[#allocation8 + $0xa8] sm:$0xff]
        %v4642 = vld [vmem:[#allocation8 + $0xb0] sm:$0xff]
        %v4643 = vld [vmem:[#allocation8 + $0xb8] sm:$0xff]
        %v4644 = vld [vmem:[#allocation8 + $0xc0] sm:$0xff]
        %v4645 = vld [vmem:[#allocation8 + $0xc8] sm:$0xff]
        %v4646 = vld [vmem:[#allocation8 + $0xd0] sm:$0xff]
        %v4647 = vld [vmem:[#allocation8 + $0xd8] sm:$0xff]
        %v4648 = vld [vmem:[#allocation8 + $0xe5] sm:$0x1]
        %v4649 = vlaneseq
        %v4650 = vshrl.u32 %v4649, 7
        %v4651 = vsub.s32 0, %v4650
        %v4652 = vrot.slane %v4639, %v4651
        %v4654 = vsel %vm397, %v4634, 0
        %4656 = vmatprep.subr.mxu0 0.0
        %4657 = vmatpush1.msra.mxu0 0.0
        %4658 = vmatprep.subr.mxu0 0.0
        %4659 = vmatpush1.msra.mxu0 0.0
        %4660 = vmatprep.subr.mxu0 0.0
        %4661 = vmatpush1.msra.mxu0 0.0
        %4662 = vmatprep.subr.mxu0 0.0
        %4663 = vmatpush1.msra.mxu0 0.0
        %4664 = vmatprep.subr.mxu0 0.0
        %4665 = vmatpush1.msra.mxu0 0.0
        %4666 = vmatprep.subr.mxu0 0.0
        %4667 = vmatpush1.msra.mxu0 0.0
        %4668 = vmatprep.subr.mxu0 0.0
        %4669 = vmatpush1.msra.mxu0 0.0
        %4670 = vmatprep.subr.mxu0 0.0
        %4671 = vmatpush1.msra.mxu0 0.0
        %4672 = vmatprep.subr.mxu0 0.0
        %4673 = vmatpush1.msra.mxu0 0.0
        %4674 = vmatprep.subr.mxu0 0.0
        %4675 = vmatpush1.msra.mxu0 0.0
        %4676 = vmatprep.subr.mxu0 0.0
        %4677 = vmatpush1.msra.mxu0 0.0
        %4678 = vmatprep.subr.mxu0 0.0
        %4679 = vmatpush1.msra.mxu0 0.0
        %4680 = vmatprep.subr.mxu0 0.0
        %4681 = vmatpush1.msra.mxu0 %v4638
        %4682 = vmatprep.subr.mxu0 0.0
        %4683 = vmatpush1.msra.mxu0 %v4637
        %4684 = vmatprep.subr.mxu0 0.0
        %4685 = vmatpush1.msra.mxu0 %v4636
        %4686 = vmatprep.subr.mxu0 0.0
        %4687 = vmatpush1.msra.mxu0 %v4635
        %4688 = vmatprep.subr.mxu0 0.0
        %4689 = vmatpush2.msra.mxu0 0.0
        %4690 = vmatprep.subr.mxu0 0.0
        %4691 = vmatpush2.msra.mxu0 0.0
        %4692 = vmatprep.subr.mxu0 0.0
        %4693 = vmatpush2.msra.mxu0 0.0
        %4694 = vmatprep.subr.mxu0 0.0
        %4695 = vmatpush2.msra.mxu0 0.0
        %4696 = vmatprep.subr.mxu0 0.0
        %4697 = vmatpush2.msra.mxu0 0.0
        %4698 = vmatprep.subr.mxu0 0.0
        %4699 = vmatpush2.msra.mxu0 0.0
        %4700 = vmatprep.subr.mxu0 0.0
        %4701 = vmatpush2.msra.mxu0 0.0
        %4702 = vmatprep.subr.mxu0 0.0
        %4703 = vmatpush2.msra.mxu0 0.0
        %4704 = vmatprep.subr.mxu0 0.0
        %4705 = vmatpush2.msra.mxu0 0.0
        %4706 = vmatprep.subr.mxu0 0.0
        %4707 = vmatpush2.msra.mxu0 0.0
        %4708 = vmatprep.subr.mxu0 0.0
        %4709 = vmatpush2.msra.mxu0 0.0
        %4710 = vmatprep.subr.mxu0 0.0
        %4711 = vmatpush2.msra.mxu0 0.0
        %4712 = vmatprep.subr.mxu0 0.0
        %4713 = vmatpush2.msra.mxu0 0.0
        %4714 = vmatprep.subr.mxu0 0.0
        %4715 = vmatpush2.msra.mxu0 0.0
        %4716 = vmatprep.subr.mxu0 0.0
        %4717 = vmatpush2.msra.mxu0 0.0
        %4718 = vmatprep.subr.mxu0 0.0
        %4719 = vmatpush2.msra.mxu0 0.0
        %4720 = vmatprep.mubr.f32.mxu0 0.0
        %4721 = vmatmul.mubr.f32.gmra.mxu0 %v4654
        %v4722 = vpop.f32.mrf.mxu0
        %v4723 = vadd.f32 %v4652, %v4722
        %v4724 = vpop.f32.mrf.mxu0
        %4725 = vdwg.mxu0
        %v4726 = vmax.f32 %v4723, 0.0
        %v4727 = vlaneseq
        %v4728 = vshrl.u32 %v4727, 7
        %v4729 = vsub.s32 0, %v4728
        %v4730 = vrot.slane %v4648, %v4729
        %v4732 = vsel %vm1434, %v4726, 0
        %4734 = vmatprep.subr.mxu0 0.0
        %4735 = vmatpush1.msra.mxu0 0.0
        %4736 = vmatprep.subr.mxu0 0.0
        %4737 = vmatpush1.msra.mxu0 0.0
        %4738 = vmatprep.subr.mxu0 0.0
        %4739 = vmatpush1.msra.mxu0 0.0
        %4740 = vmatprep.subr.mxu0 0.0
        %4741 = vmatpush1.msra.mxu0 0.0
        %4742 = vmatprep.subr.mxu0 0.0
        %4743 = vmatpush1.msra.mxu0 0.0
        %4744 = vmatprep.subr.mxu0 0.0
        %4745 = vmatpush1.msra.mxu0 0.0
        %4746 = vmatprep.subr.mxu0 0.0
        %4747 = vmatpush1.msra.mxu0 0.0
        %4748 = vmatprep.subr.mxu0 0.0
        %4749 = vmatpush1.msra.mxu0 0.0
        %4750 = vmatprep.subr.mxu0 0.0
        %4751 = vmatpush1.msra.mxu0 %v4647
        %4752 = vmatprep.subr.mxu0 0.0
        %4753 = vmatpush1.msra.mxu0 %v4646
        %4754 = vmatprep.subr.mxu0 0.0
        %4755 = vmatpush1.msra.mxu0 %v4645
        %4756 = vmatprep.subr.mxu0 0.0
        %4757 = vmatpush1.msra.mxu0 %v4644
        %4758 = vmatprep.subr.mxu0 0.0
        %4759 = vmatpush1.msra.mxu0 %v4643
        %4760 = vmatprep.subr.mxu0 0.0
        %4761 = vmatpush1.msra.mxu0 %v4642
        %4762 = vmatprep.subr.mxu0 0.0
        %4763 = vmatpush1.msra.mxu0 %v4641
        %4764 = vmatprep.subr.mxu0 0.0
        %4765 = vmatpush1.msra.mxu0 %v4640
        %4766 = vmatprep.subr.mxu0 0.0
        %4767 = vmatpush2.msra.mxu0 0.0
        %4768 = vmatprep.subr.mxu0 0.0
        %4769 = vmatpush2.msra.mxu0 0.0
        %4770 = vmatprep.subr.mxu0 0.0
        %4771 = vmatpush2.msra.mxu0 0.0
        %4772 = vmatprep.subr.mxu0 0.0
        %4773 = vmatpush2.msra.mxu0 0.0
        %4774 = vmatprep.subr.mxu0 0.0
        %4775 = vmatpush2.msra.mxu0 0.0
        %4776 = vmatprep.subr.mxu0 0.0
        %4777 = vmatpush2.msra.mxu0 0.0
        %4778 = vmatprep.subr.mxu0 0.0
        %4779 = vmatpush2.msra.mxu0 0.0
        %4780 = vmatprep.subr.mxu0 0.0
        %4781 = vmatpush2.msra.mxu0 0.0
        %4782 = vmatprep.subr.mxu0 0.0
        %4783 = vmatpush2.msra.mxu0 0.0
        %4784 = vmatprep.subr.mxu0 0.0
        %4785 = vmatpush2.msra.mxu0 0.0
        %4786 = vmatprep.subr.mxu0 0.0
        %4787 = vmatpush2.msra.mxu0 0.0
        %4788 = vmatprep.subr.mxu0 0.0
        %4789 = vmatpush2.msra.mxu0 0.0
        %4790 = vmatprep.subr.mxu0 0.0
        %4791 = vmatpush2.msra.mxu0 0.0
        %4792 = vmatprep.subr.mxu0 0.0
        %4793 = vmatpush2.msra.mxu0 0.0
        %4794 = vmatprep.subr.mxu0 0.0
        %4795 = vmatpush2.msra.mxu0 0.0
        %4796 = vmatprep.subr.mxu0 0.0
        %4797 = vmatpush2.msra.mxu0 0.0
        %4798 = vmatprep.mubr.f32.mxu0 0.0
        %4799 = vmatmul.mubr.f32.gmra.mxu0 %v4732
        %v4800 = vpop.f32.mrf.mxu0
        %v4801 = vadd.f32 %v4730, %v4800
        %v4802 = vpop.f32.mrf.mxu0
        %4803 = vdwg.mxu0
        %v4804 = vadd.f32 %v4634, %v4801
        %v4805 = vld [vmem:[#allocation8 + $0xea] sm:$0x1]
        %v4806 = vld [vmem:[#allocation8 + $0xeb] sm:$0x1]
        %v4807 = vsel %vm397, %v4804, 0.0
        %4808 = vadd.xlane.f32.xlu0 %v4807
        %v4809 = vpop.xlane.xlu0 %4808
        %v4810 = vmul.f32 %v4809, %v1317
        %v4811 = vsub.f32 %v4804, %v4810
        %v4812 = vmul.f32 %v4811, %v4811
        %v4813 = vsel %vm397, %v4812, 0.0
        %4814 = vadd.xlane.f32.xlu0 %v4813
        %v4815 = vpop.xlane.xlu0 %4814
        %v4816 = vmul.f32 %v4815, %v1317
        %v4817 = vadd.f32 %v4816, 1e-05
        %v4818 = vrsqrt.pop %v4817
        %v4819 = vmul.f32 %v4811, %v4818
        %v4820 = vlaneseq
        %v4821 = vshrl.u32 %v4820, 7
        %v4822 = vsub.s32 0, %v4821
        %v4823 = vrot.slane %v4805, %v4822
        %v4824 = vmul.f32 %v4819, %v4823
        %v4825 = vlaneseq
        %v4826 = vshrl.u32 %v4825, 7
        %v4827 = vsub.s32 0, %v4826
        %v4828 = vrot.slane %v4806, %v4827
        %v4829 = vadd.f32 %v4824, %v4828
        %v4830 = vld [vmem:[#allocation8 + $0xf0] sm:$0xff]
        %v4831 = vld [vmem:[#allocation8 + $0xf8] sm:$0xff]
        %v4832 = vld [vmem:[#allocation8 + $0x100] sm:$0xff]
        %v4833 = vld [vmem:[#allocation8 + $0x108] sm:$0xff]
        %v4834 = vld [vmem:[#allocation8 + $0x1d0] sm:$0x1]
        %v4835 = vlaneseq
        %v4836 = vshrl.u32 %v4835, 7
        %v4837 = vsub.s32 0, %v4836
        %v4838 = vrot.slane %v4834, %v4837
        %v4840 = vsel %vm397, %v4829, 0
        %4842 = vmatprep.subr.mxu0 0.0
        %4843 = vmatpush1.msra.mxu0 0.0
        %4844 = vmatprep.subr.mxu0 0.0
        %4845 = vmatpush1.msra.mxu0 0.0
        %4846 = vmatprep.subr.mxu0 0.0
        %4847 = vmatpush1.msra.mxu0 0.0
        %4848 = vmatprep.subr.mxu0 0.0
        %4849 = vmatpush1.msra.mxu0 0.0
        %4850 = vmatprep.subr.mxu0 0.0
        %4851 = vmatpush1.msra.mxu0 0.0
        %4852 = vmatprep.subr.mxu0 0.0
        %4853 = vmatpush1.msra.mxu0 0.0
        %4854 = vmatprep.subr.mxu0 0.0
        %4855 = vmatpush1.msra.mxu0 0.0
        %4856 = vmatprep.subr.mxu0 0.0
        %4857 = vmatpush1.msra.mxu0 0.0
        %4858 = vmatprep.subr.mxu0 0.0
        %4859 = vmatpush1.msra.mxu0 0.0
        %4860 = vmatprep.subr.mxu0 0.0
        %4861 = vmatpush1.msra.mxu0 0.0
        %4862 = vmatprep.subr.mxu0 0.0
        %4863 = vmatpush1.msra.mxu0 0.0
        %4864 = vmatprep.subr.mxu0 0.0
        %4865 = vmatpush1.msra.mxu0 0.0
        %4866 = vmatprep.subr.mxu0 0.0
        %4867 = vmatpush1.msra.mxu0 %v4833
        %4868 = vmatprep.subr.mxu0 0.0
        %4869 = vmatpush1.msra.mxu0 %v4832
        %4870 = vmatprep.subr.mxu0 0.0
        %4871 = vmatpush1.msra.mxu0 %v4831
        %4872 = vmatprep.subr.mxu0 0.0
        %4873 = vmatpush1.msra.mxu0 %v4830
        %4874 = vmatprep.subr.mxu0 0.0
        %4875 = vmatpush2.msra.mxu0 0.0
        %4876 = vmatprep.subr.mxu0 0.0
        %4877 = vmatpush2.msra.mxu0 0.0
        %4878 = vmatprep.subr.mxu0 0.0
        %4879 = vmatpush2.msra.mxu0 0.0
        %4880 = vmatprep.subr.mxu0 0.0
        %4881 = vmatpush2.msra.mxu0 0.0
        %4882 = vmatprep.subr.mxu0 0.0
        %4883 = vmatpush2.msra.mxu0 0.0
        %4884 = vmatprep.subr.mxu0 0.0
        %4885 = vmatpush2.msra.mxu0 0.0
        %4886 = vmatprep.subr.mxu0 0.0
        %4887 = vmatpush2.msra.mxu0 0.0
        %4888 = vmatprep.subr.mxu0 0.0
        %4889 = vmatpush2.msra.mxu0 0.0
        %4890 = vmatprep.subr.mxu0 0.0
        %4891 = vmatpush2.msra.mxu0 0.0
        %4892 = vmatprep.subr.mxu0 0.0
        %4893 = vmatpush2.msra.mxu0 0.0
        %4894 = vmatprep.subr.mxu0 0.0
        %4895 = vmatpush2.msra.mxu0 0.0
        %4896 = vmatprep.subr.mxu0 0.0
        %4897 = vmatpush2.msra.mxu0 0.0
        %4898 = vmatprep.subr.mxu0 0.0
        %4899 = vmatpush2.msra.mxu0 0.0
        %4900 = vmatprep.subr.mxu0 0.0
        %4901 = vmatpush2.msra.mxu0 0.0
        %4902 = vmatprep.subr.mxu0 0.0
        %4903 = vmatpush2.msra.mxu0 0.0
        %4904 = vmatprep.subr.mxu0 0.0
        %4905 = vmatpush2.msra.mxu0 0.0
        %4906 = vmatprep.mubr.f32.mxu0 0.0
        %4907 = vmatmul.mubr.f32.gmra.mxu0 %v4840
        %v4908 = vpop.f32.mrf.mxu0
        %v4909 = vadd.f32 %v4838, %v4908
        %v4910 = vpop.f32.mrf.mxu0
        %4911 = vdwg.mxu0
        %4912 = vmatprep.subr.mxu0 0.0
        %4913 = vmatpush1.msra.mxu0 0.0
        %4914 = vmatprep.subr.mxu0 0.0
        %4915 = vmatpush1.msra.mxu0 0.0
        %4916 = vmatprep.subr.mxu0 0.0
        %4917 = vmatpush1.msra.mxu0 0.0
        %4918 = vmatprep.subr.mxu0 0.0
        %4919 = vmatpush1.msra.mxu0 0.0
        %4920 = vmatprep.subr.mxu0 0.0
        %4921 = vmatpush1.msra.mxu0 0.0
        %4922 = vmatprep.subr.mxu0 0.0
        %4923 = vmatpush1.msra.mxu0 0.0
        %4924 = vmatprep.subr.mxu0 0.0
        %4925 = vmatpush1.msra.mxu0 0.0
        %4926 = vmatprep.subr.mxu0 0.0
        %4927 = vmatpush1.msra.mxu0 0.0
        %4928 = vmatprep.subr.mxu0 0.0
        %4929 = vmatpush1.msra.mxu0 0.0
        %4930 = vmatprep.subr.mxu0 0.0
        %4931 = vmatpush1.msra.mxu0 0.0
        %4932 = vmatprep.subr.mxu0 0.0
        %4933 = vmatpush1.msra.mxu0 0.0
        %4934 = vmatprep.subr.mxu0 0.0
        %4935 = vmatpush1.msra.mxu0 0.0
        %4936 = vmatprep.subr.mxu0 0.0
        %4937 = vmatpush1.msra.mxu0 %v4833
        %4938 = vmatprep.subr.mxu0 0.0
        %4939 = vmatpush1.msra.mxu0 %v4832
        %4940 = vmatprep.subr.mxu0 0.0
        %4941 = vmatpush1.msra.mxu0 %v4831
        %4942 = vmatprep.subr.mxu0 0.0
        %4943 = vmatpush1.msra.mxu0 %v4830
        %4944 = vmatprep.subr.mxu0 0.0
        %4945 = vmatpush2.msra.mxu0 0.0
        %4946 = vmatprep.subr.mxu0 0.0
        %4947 = vmatpush2.msra.mxu0 0.0
        %4948 = vmatprep.subr.mxu0 0.0
        %4949 = vmatpush2.msra.mxu0 0.0
        %4950 = vmatprep.subr.mxu0 0.0
        %4951 = vmatpush2.msra.mxu0 0.0
        %4952 = vmatprep.subr.mxu0 0.0
        %4953 = vmatpush2.msra.mxu0 0.0
        %4954 = vmatprep.subr.mxu0 0.0
        %4955 = vmatpush2.msra.mxu0 0.0
        %4956 = vmatprep.subr.mxu0 0.0
        %4957 = vmatpush2.msra.mxu0 0.0
        %4958 = vmatprep.subr.mxu0 0.0
        %4959 = vmatpush2.msra.mxu0 0.0
        %4960 = vmatprep.subr.mxu0 0.0
        %4961 = vmatpush2.msra.mxu0 0.0
        %4962 = vmatprep.subr.mxu0 0.0
        %4963 = vmatpush2.msra.mxu0 0.0
        %4964 = vmatprep.subr.mxu0 0.0
        %4965 = vmatpush2.msra.mxu0 0.0
        %4966 = vmatprep.subr.mxu0 0.0
        %4967 = vmatpush2.msra.mxu0 0.0
        %4968 = vmatprep.subr.mxu0 0.0
        %4969 = vmatpush2.msra.mxu0 0.0
        %4970 = vmatprep.subr.mxu0 0.0
        %4971 = vmatpush2.msra.mxu0 0.0
        %4972 = vmatprep.subr.mxu0 0.0
        %4973 = vmatpush2.msra.mxu0 0.0
        %4974 = vmatprep.subr.mxu0 0.0
        %4975 = vmatpush2.msra.mxu0 0.0
        %4976 = vmatprep.mubr.f32.mxu0 0.0
        %4977 = vmatmul.mubr.f32.gmra.mxu0 %v2750
        %v4978 = vpop.f32.mrf.mxu0
        %v4979 = vadd.f32 0.0, %v4978
        %v4980 = vpop.f32.mrf.mxu0
        %4981 = vdwg.mxu0
        %v4982 = vadd.f32 %v4909, %v4979
        %4984 = vrot.lane.b32.xlu0 %v4982, 96
        %v4985 = vpop.permute.xlu0 %4984
        %v4986 = vsel %vm554, %v4982, 0
        %v4988 = vsel %vm554, %v4985, 0
        %4990 = vmatprep.subr.mxu0 0.0
        %4991 = vmatpush1.xpose.msra.mxu0 0.0
        %4992 = vmatprep.subr.mxu0 0.0
        %4993 = vmatpush1.xpose.msra.mxu0 0.0
        %4994 = vmatprep.subr.mxu0 0.0
        %4995 = vmatpush1.xpose.msra.mxu0 0.0
        %4996 = vmatprep.subr.mxu0 0.0
        %4997 = vmatpush1.xpose.msra.mxu0 0.0
        %4998 = vmatprep.subr.mxu0 0.0
        %4999 = vmatpush1.xpose.msra.mxu0 0.0
        %5000 = vmatprep.subr.mxu0 0.0
        %5001 = vmatpush1.xpose.msra.mxu0 0.0
        %5002 = vmatprep.subr.mxu0 0.0
        %5003 = vmatpush1.xpose.msra.mxu0 0.0
        %5004 = vmatprep.subr.mxu0 0.0
        %5005 = vmatpush1.xpose.msra.mxu0 0.0
        %5006 = vmatprep.subr.mxu0 0.0
        %5007 = vmatpush1.xpose.msra.mxu0 0.0
        %5008 = vmatprep.subr.mxu0 0.0
        %5009 = vmatpush1.xpose.msra.mxu0 0.0
        %5010 = vmatprep.subr.mxu0 0.0
        %5011 = vmatpush1.xpose.msra.mxu0 0.0
        %5012 = vmatprep.subr.mxu0 0.0
        %5013 = vmatpush1.xpose.msra.mxu0 0.0
        %5014 = vmatprep.subr.mxu0 0.0
        %5015 = vmatpush1.xpose.msra.mxu0 0.0
        %5016 = vmatprep.subr.mxu0 0.0
        %5017 = vmatpush1.xpose.msra.mxu0 0.0
        %5018 = vmatprep.subr.mxu0 0.0
        %5019 = vmatpush1.xpose.msra.mxu0 0.0
        %5020 = vmatprep.subr.mxu0 0.0
        %5021 = vmatpush1.xpose.msra.mxu0 %v4988
        %5022 = vmatprep.subr.mxu0 0.0
        %5023 = vmatpush2.xpose.msra.mxu0 0.0
        %5024 = vmatprep.subr.mxu0 0.0
        %5025 = vmatpush2.xpose.msra.mxu0 0.0
        %5026 = vmatprep.subr.mxu0 0.0
        %5027 = vmatpush2.xpose.msra.mxu0 0.0
        %5028 = vmatprep.subr.mxu0 0.0
        %5029 = vmatpush2.xpose.msra.mxu0 0.0
        %5030 = vmatprep.subr.mxu0 0.0
        %5031 = vmatpush2.xpose.msra.mxu0 0.0
        %5032 = vmatprep.subr.mxu0 0.0
        %5033 = vmatpush2.xpose.msra.mxu0 0.0
        %5034 = vmatprep.subr.mxu0 0.0
        %5035 = vmatpush2.xpose.msra.mxu0 0.0
        %5036 = vmatprep.subr.mxu0 0.0
        %5037 = vmatpush2.xpose.msra.mxu0 0.0
        %5038 = vmatprep.subr.mxu0 0.0
        %5039 = vmatpush2.xpose.msra.mxu0 0.0
        %5040 = vmatprep.subr.mxu0 0.0
        %5041 = vmatpush2.xpose.msra.mxu0 0.0
        %5042 = vmatprep.subr.mxu0 0.0
        %5043 = vmatpush2.xpose.msra.mxu0 0.0
        %5044 = vmatprep.subr.mxu0 0.0
        %5045 = vmatpush2.xpose.msra.mxu0 0.0
        %5046 = vmatprep.subr.mxu0 0.0
        %5047 = vmatpush2.xpose.msra.mxu0 0.0
        %5048 = vmatprep.subr.mxu0 0.0
        %5049 = vmatpush2.xpose.msra.mxu0 0.0
        %5050 = vmatprep.subr.mxu0 0.0
        %5051 = vmatpush2.xpose.msra.mxu0 0.0
        %5052 = vmatprep.subr.mxu0 0.0
        %5053 = vmatpush2.xpose.msra.mxu0 0.0
        %5054 = vmatprep.mubr.f32.mxu0 0.0
        %5055 = vmatmul.mubr.f32.gmra.mxu0 %v4986
        %v5056 = vpop.f32.mrf.mxu0
        %v5057 = vadd.f32 0.0, %v5056
        %v5058 = vpop.f32.mrf.mxu0
        %5059 = vdwg.mxu0
        %v5060 = vsel %vm554, %v5057, -inf
        %5061 = vmax.xlane.f32.xlu0 %v5060
        %v5062 = vpop.xlane.xlu0 %5061
        %v5063 = vsub.f32 %v5057, %v5062
        %v5064 = vmul.f32 %v5063, 1.442695
        %v5065 = vpow.pop %v5064
        %v5066 = vsel %vm554, %v5065, 0.0
        %5067 = vadd.xlane.f32.xlu0 %v5066
        %v5068 = vpop.xlane.xlu0 %5067
        %v5069 = vrcp.pop %v5068
        %v5070 = vmul.f32 %v5065, %v5069
        %5072 = vrot.lane.b32.xlu0 %v4909, 64
        %v5073 = vpop.permute.xlu0 %5072
        %v5076 = vsel %vm554, %v5070, 0
        %5078 = vmatprep.subr.mxu0 0.0
        %5079 = vmatpush1.msra.mxu0 0.0
        %5080 = vmatprep.subr.mxu0 0.0
        %5081 = vmatpush1.msra.mxu0 0.0
        %5082 = vmatprep.subr.mxu0 0.0
        %5083 = vmatpush1.msra.mxu0 0.0
        %5084 = vmatprep.subr.mxu0 0.0
        %5085 = vmatpush1.msra.mxu0 0.0
        %5086 = vmatprep.subr.mxu0 0.0
        %5087 = vmatpush1.msra.mxu0 0.0
        %5088 = vmatprep.subr.mxu0 0.0
        %5089 = vmatpush1.msra.mxu0 0.0
        %5090 = vmatprep.subr.mxu0 0.0
        %5091 = vmatpush1.msra.mxu0 0.0
        %5092 = vmatprep.subr.mxu0 0.0
        %5093 = vmatpush1.msra.mxu0 0.0
        %5094 = vmatprep.subr.mxu0 0.0
        %5095 = vmatpush1.msra.mxu0 0.0
        %5096 = vmatprep.subr.mxu0 0.0
        %5097 = vmatpush1.msra.mxu0 0.0
        %5098 = vmatprep.subr.mxu0 0.0
        %5099 = vmatpush1.msra.mxu0 0.0
        %5100 = vmatprep.subr.mxu0 0.0
        %5101 = vmatpush1.msra.mxu0 0.0
        %5102 = vmatprep.subr.mxu0 0.0
        %5103 = vmatpush1.msra.mxu0 0.0
        %5104 = vmatprep.subr.mxu0 0.0
        %5105 = vmatpush1.msra.mxu0 0.0
        %5106 = vmatprep.subr.mxu0 0.0
        %5107 = vmatpush1.msra.mxu0 0.0
        %5108 = vmatprep.subr.mxu0 0.0
        %5109 = vmatpush1.msra.mxu0 %v5073
        %5110 = vmatprep.subr.mxu0 0.0
        %5111 = vmatpush2.msra.mxu0 0.0
        %5112 = vmatprep.subr.mxu0 0.0
        %5113 = vmatpush2.msra.mxu0 0.0
        %5114 = vmatprep.subr.mxu0 0.0
        %5115 = vmatpush2.msra.mxu0 0.0
        %5116 = vmatprep.subr.mxu0 0.0
        %5117 = vmatpush2.msra.mxu0 0.0
        %5118 = vmatprep.subr.mxu0 0.0
        %5119 = vmatpush2.msra.mxu0 0.0
        %5120 = vmatprep.subr.mxu0 0.0
        %5121 = vmatpush2.msra.mxu0 0.0
        %5122 = vmatprep.subr.mxu0 0.0
        %5123 = vmatpush2.msra.mxu0 0.0
        %5124 = vmatprep.subr.mxu0 0.0
        %5125 = vmatpush2.msra.mxu0 0.0
        %5126 = vmatprep.subr.mxu0 0.0
        %5127 = vmatpush2.msra.mxu0 0.0
        %5128 = vmatprep.subr.mxu0 0.0
        %5129 = vmatpush2.msra.mxu0 0.0
        %5130 = vmatprep.subr.mxu0 0.0
        %5131 = vmatpush2.msra.mxu0 0.0
        %5132 = vmatprep.subr.mxu0 0.0
        %5133 = vmatpush2.msra.mxu0 0.0
        %5134 = vmatprep.subr.mxu0 0.0
        %5135 = vmatpush2.msra.mxu0 0.0
        %5136 = vmatprep.subr.mxu0 0.0
        %5137 = vmatpush2.msra.mxu0 0.0
        %5138 = vmatprep.subr.mxu0 0.0
        %5139 = vmatpush2.msra.mxu0 0.0
        %5140 = vmatprep.subr.mxu0 0.0
        %5141 = vmatpush2.msra.mxu0 0.0
        %5142 = vmatprep.mubr.f32.mxu0 0.0
        %5143 = vmatmul.mubr.f32.gmra.mxu0 %v5076
        %v5144 = vpop.f32.mrf.mxu0
        %v5145 = vadd.f32 0.0, %v5144
        %v5146 = vpop.f32.mrf.mxu0
        %5147 = vdwg.mxu0
        %5148 = vrot.lane.b32.xlu0 %v4982, 120
        %v5149 = vpop.permute.xlu0 %5148
        %5150 = vrot.lane.b32.xlu0 %v4982, 88
        %v5151 = vpop.permute.xlu0 %5150
        %v5152 = vsel %vm554, %v5149, 0
        %v5154 = vsel %vm554, %v5151, 0
        %5156 = vmatprep.subr.mxu0 0.0
        %5157 = vmatpush1.xpose.msra.mxu0 0.0
        %5158 = vmatprep.subr.mxu0 0.0
        %5159 = vmatpush1.xpose.msra.mxu0 0.0
        %5160 = vmatprep.subr.mxu0 0.0
        %5161 = vmatpush1.xpose.msra.mxu0 0.0
        %5162 = vmatprep.subr.mxu0 0.0
        %5163 = vmatpush1.xpose.msra.mxu0 0.0
        %5164 = vmatprep.subr.mxu0 0.0
        %5165 = vmatpush1.xpose.msra.mxu0 0.0
        %5166 = vmatprep.subr.mxu0 0.0
        %5167 = vmatpush1.xpose.msra.mxu0 0.0
        %5168 = vmatprep.subr.mxu0 0.0
        %5169 = vmatpush1.xpose.msra.mxu0 0.0
        %5170 = vmatprep.subr.mxu0 0.0
        %5171 = vmatpush1.xpose.msra.mxu0 0.0
        %5172 = vmatprep.subr.mxu0 0.0
        %5173 = vmatpush1.xpose.msra.mxu0 0.0
        %5174 = vmatprep.subr.mxu0 0.0
        %5175 = vmatpush1.xpose.msra.mxu0 0.0
        %5176 = vmatprep.subr.mxu0 0.0
        %5177 = vmatpush1.xpose.msra.mxu0 0.0
        %5178 = vmatprep.subr.mxu0 0.0
        %5179 = vmatpush1.xpose.msra.mxu0 0.0
        %5180 = vmatprep.subr.mxu0 0.0
        %5181 = vmatpush1.xpose.msra.mxu0 0.0
        %5182 = vmatprep.subr.mxu0 0.0
        %5183 = vmatpush1.xpose.msra.mxu0 0.0
        %5184 = vmatprep.subr.mxu0 0.0
        %5185 = vmatpush1.xpose.msra.mxu0 0.0
        %5186 = vmatprep.subr.mxu0 0.0
        %5187 = vmatpush1.xpose.msra.mxu0 %v5154
        %5188 = vmatprep.subr.mxu0 0.0
        %5189 = vmatpush2.xpose.msra.mxu0 0.0
        %5190 = vmatprep.subr.mxu0 0.0
        %5191 = vmatpush2.xpose.msra.mxu0 0.0
        %5192 = vmatprep.subr.mxu0 0.0
        %5193 = vmatpush2.xpose.msra.mxu0 0.0
        %5194 = vmatprep.subr.mxu0 0.0
        %5195 = vmatpush2.xpose.msra.mxu0 0.0
        %5196 = vmatprep.subr.mxu0 0.0
        %5197 = vmatpush2.xpose.msra.mxu0 0.0
        %5198 = vmatprep.subr.mxu0 0.0
        %5199 = vmatpush2.xpose.msra.mxu0 0.0
        %5200 = vmatprep.subr.mxu0 0.0
        %5201 = vmatpush2.xpose.msra.mxu0 0.0
        %5202 = vmatprep.subr.mxu0 0.0
        %5203 = vmatpush2.xpose.msra.mxu0 0.0
        %5204 = vmatprep.subr.mxu0 0.0
        %5205 = vmatpush2.xpose.msra.mxu0 0.0
        %5206 = vmatprep.subr.mxu0 0.0
        %5207 = vmatpush2.xpose.msra.mxu0 0.0
        %5208 = vmatprep.subr.mxu0 0.0
        %5209 = vmatpush2.xpose.msra.mxu0 0.0
        %5210 = vmatprep.subr.mxu0 0.0
        %5211 = vmatpush2.xpose.msra.mxu0 0.0
        %5212 = vmatprep.subr.mxu0 0.0
        %5213 = vmatpush2.xpose.msra.mxu0 0.0
        %5214 = vmatprep.subr.mxu0 0.0
        %5215 = vmatpush2.xpose.msra.mxu0 0.0
        %5216 = vmatprep.subr.mxu0 0.0
        %5217 = vmatpush2.xpose.msra.mxu0 0.0
        %5218 = vmatprep.subr.mxu0 0.0
        %5219 = vmatpush2.xpose.msra.mxu0 0.0
        %5220 = vmatprep.mubr.f32.mxu0 0.0
        %5221 = vmatmul.mubr.f32.gmra.mxu0 %v5152
        %v5222 = vpop.f32.mrf.mxu0
        %v5223 = vadd.f32 0.0, %v5222
        %v5224 = vpop.f32.mrf.mxu0
        %5225 = vdwg.mxu0
        %v5226 = vsel %vm554, %v5223, -inf
        %5227 = vmax.xlane.f32.xlu0 %v5226
        %v5228 = vpop.xlane.xlu0 %5227
        %v5229 = vsub.f32 %v5223, %v5228
        %v5230 = vmul.f32 %v5229, 1.442695
        %v5231 = vpow.pop %v5230
        %v5232 = vsel %vm554, %v5231, 0.0
        %5233 = vadd.xlane.f32.xlu0 %v5232
        %v5234 = vpop.xlane.xlu0 %5233
        %v5235 = vrcp.pop %v5234
        %v5236 = vmul.f32 %v5231, %v5235
        %5237 = vrot.lane.b32.xlu0 %v4909, 56
        %v5238 = vpop.permute.xlu0 %5237
        %v5241 = vsel %vm554, %v5236, 0
        %5243 = vmatprep.subr.mxu0 0.0
        %5244 = vmatpush1.msra.mxu0 0.0
        %5245 = vmatprep.subr.mxu0 0.0
        %5246 = vmatpush1.msra.mxu0 0.0
        %5247 = vmatprep.subr.mxu0 0.0
        %5248 = vmatpush1.msra.mxu0 0.0
        %5249 = vmatprep.subr.mxu0 0.0
        %5250 = vmatpush1.msra.mxu0 0.0
        %5251 = vmatprep.subr.mxu0 0.0
        %5252 = vmatpush1.msra.mxu0 0.0
        %5253 = vmatprep.subr.mxu0 0.0
        %5254 = vmatpush1.msra.mxu0 0.0
        %5255 = vmatprep.subr.mxu0 0.0
        %5256 = vmatpush1.msra.mxu0 0.0
        %5257 = vmatprep.subr.mxu0 0.0
        %5258 = vmatpush1.msra.mxu0 0.0
        %5259 = vmatprep.subr.mxu0 0.0
        %5260 = vmatpush1.msra.mxu0 0.0
        %5261 = vmatprep.subr.mxu0 0.0
        %5262 = vmatpush1.msra.mxu0 0.0
        %5263 = vmatprep.subr.mxu0 0.0
        %5264 = vmatpush1.msra.mxu0 0.0
        %5265 = vmatprep.subr.mxu0 0.0
        %5266 = vmatpush1.msra.mxu0 0.0
        %5267 = vmatprep.subr.mxu0 0.0
        %5268 = vmatpush1.msra.mxu0 0.0
        %5269 = vmatprep.subr.mxu0 0.0
        %5270 = vmatpush1.msra.mxu0 0.0
        %5271 = vmatprep.subr.mxu0 0.0
        %5272 = vmatpush1.msra.mxu0 0.0
        %5273 = vmatprep.subr.mxu0 0.0
        %5274 = vmatpush1.msra.mxu0 %v5238
        %5275 = vmatprep.subr.mxu0 0.0
        %5276 = vmatpush2.msra.mxu0 0.0
        %5277 = vmatprep.subr.mxu0 0.0
        %5278 = vmatpush2.msra.mxu0 0.0
        %5279 = vmatprep.subr.mxu0 0.0
        %5280 = vmatpush2.msra.mxu0 0.0
        %5281 = vmatprep.subr.mxu0 0.0
        %5282 = vmatpush2.msra.mxu0 0.0
        %5283 = vmatprep.subr.mxu0 0.0
        %5284 = vmatpush2.msra.mxu0 0.0
        %5285 = vmatprep.subr.mxu0 0.0
        %5286 = vmatpush2.msra.mxu0 0.0
        %5287 = vmatprep.subr.mxu0 0.0
        %5288 = vmatpush2.msra.mxu0 0.0
        %5289 = vmatprep.subr.mxu0 0.0
        %5290 = vmatpush2.msra.mxu0 0.0
        %5291 = vmatprep.subr.mxu0 0.0
        %5292 = vmatpush2.msra.mxu0 0.0
        %5293 = vmatprep.subr.mxu0 0.0
        %5294 = vmatpush2.msra.mxu0 0.0
        %5295 = vmatprep.subr.mxu0 0.0
        %5296 = vmatpush2.msra.mxu0 0.0
        %5297 = vmatprep.subr.mxu0 0.0
        %5298 = vmatpush2.msra.mxu0 0.0
        %5299 = vmatprep.subr.mxu0 0.0
        %5300 = vmatpush2.msra.mxu0 0.0
        %5301 = vmatprep.subr.mxu0 0.0
        %5302 = vmatpush2.msra.mxu0 0.0
        %5303 = vmatprep.subr.mxu0 0.0
        %5304 = vmatpush2.msra.mxu0 0.0
        %5305 = vmatprep.subr.mxu0 0.0
        %5306 = vmatpush2.msra.mxu0 0.0
        %5307 = vmatprep.mubr.f32.mxu0 0.0
        %5308 = vmatmul.mubr.f32.gmra.mxu0 %v5241
        %v5309 = vpop.f32.mrf.mxu0
        %v5310 = vadd.f32 0.0, %v5309
        %v5311 = vpop.f32.mrf.mxu0
        %5312 = vdwg.mxu0
        %5313 = vrot.lane.b32.xlu0 %v4982, 112
        %v5314 = vpop.permute.xlu0 %5313
        %5315 = vrot.lane.b32.xlu0 %v4982, 80
        %v5316 = vpop.permute.xlu0 %5315
        %v5317 = vsel %vm554, %v5314, 0
        %v5319 = vsel %vm554, %v5316, 0
        %5321 = vmatprep.subr.mxu0 0.0
        %5322 = vmatpush1.xpose.msra.mxu0 0.0
        %5323 = vmatprep.subr.mxu0 0.0
        %5324 = vmatpush1.xpose.msra.mxu0 0.0
        %5325 = vmatprep.subr.mxu0 0.0
        %5326 = vmatpush1.xpose.msra.mxu0 0.0
        %5327 = vmatprep.subr.mxu0 0.0
        %5328 = vmatpush1.xpose.msra.mxu0 0.0
        %5329 = vmatprep.subr.mxu0 0.0
        %5330 = vmatpush1.xpose.msra.mxu0 0.0
        %5331 = vmatprep.subr.mxu0 0.0
        %5332 = vmatpush1.xpose.msra.mxu0 0.0
        %5333 = vmatprep.subr.mxu0 0.0
        %5334 = vmatpush1.xpose.msra.mxu0 0.0
        %5335 = vmatprep.subr.mxu0 0.0
        %5336 = vmatpush1.xpose.msra.mxu0 0.0
        %5337 = vmatprep.subr.mxu0 0.0
        %5338 = vmatpush1.xpose.msra.mxu0 0.0
        %5339 = vmatprep.subr.mxu0 0.0
        %5340 = vmatpush1.xpose.msra.mxu0 0.0
        %5341 = vmatprep.subr.mxu0 0.0
        %5342 = vmatpush1.xpose.msra.mxu0 0.0
        %5343 = vmatprep.subr.mxu0 0.0
        %5344 = vmatpush1.xpose.msra.mxu0 0.0
        %5345 = vmatprep.subr.mxu0 0.0
        %5346 = vmatpush1.xpose.msra.mxu0 0.0
        %5347 = vmatprep.subr.mxu0 0.0
        %5348 = vmatpush1.xpose.msra.mxu0 0.0
        %5349 = vmatprep.subr.mxu0 0.0
        %5350 = vmatpush1.xpose.msra.mxu0 0.0
        %5351 = vmatprep.subr.mxu0 0.0
        %5352 = vmatpush1.xpose.msra.mxu0 %v5319
        %5353 = vmatprep.subr.mxu0 0.0
        %5354 = vmatpush2.xpose.msra.mxu0 0.0
        %5355 = vmatprep.subr.mxu0 0.0
        %5356 = vmatpush2.xpose.msra.mxu0 0.0
        %5357 = vmatprep.subr.mxu0 0.0
        %5358 = vmatpush2.xpose.msra.mxu0 0.0
        %5359 = vmatprep.subr.mxu0 0.0
        %5360 = vmatpush2.xpose.msra.mxu0 0.0
        %5361 = vmatprep.subr.mxu0 0.0
        %5362 = vmatpush2.xpose.msra.mxu0 0.0
        %5363 = vmatprep.subr.mxu0 0.0
        %5364 = vmatpush2.xpose.msra.mxu0 0.0
        %5365 = vmatprep.subr.mxu0 0.0
        %5366 = vmatpush2.xpose.msra.mxu0 0.0
        %5367 = vmatprep.subr.mxu0 0.0
        %5368 = vmatpush2.xpose.msra.mxu0 0.0
        %5369 = vmatprep.subr.mxu0 0.0
        %5370 = vmatpush2.xpose.msra.mxu0 0.0
        %5371 = vmatprep.subr.mxu0 0.0
        %5372 = vmatpush2.xpose.msra.mxu0 0.0
        %5373 = vmatprep.subr.mxu0 0.0
        %5374 = vmatpush2.xpose.msra.mxu0 0.0
        %5375 = vmatprep.subr.mxu0 0.0
        %5376 = vmatpush2.xpose.msra.mxu0 0.0
        %5377 = vmatprep.subr.mxu0 0.0
        %5378 = vmatpush2.xpose.msra.mxu0 0.0
        %5379 = vmatprep.subr.mxu0 0.0
        %5380 = vmatpush2.xpose.msra.mxu0 0.0
        %5381 = vmatprep.subr.mxu0 0.0
        %5382 = vmatpush2.xpose.msra.mxu0 0.0
        %5383 = vmatprep.subr.mxu0 0.0
        %5384 = vmatpush2.xpose.msra.mxu0 0.0
        %5385 = vmatprep.mubr.f32.mxu0 0.0
        %5386 = vmatmul.mubr.f32.gmra.mxu0 %v5317
        %v5387 = vpop.f32.mrf.mxu0
        %v5388 = vadd.f32 0.0, %v5387
        %v5389 = vpop.f32.mrf.mxu0
        %5390 = vdwg.mxu0
        %v5391 = vsel %vm554, %v5388, -inf
        %5392 = vmax.xlane.f32.xlu0 %v5391
        %v5393 = vpop.xlane.xlu0 %5392
        %v5394 = vsub.f32 %v5388, %v5393
        %v5395 = vmul.f32 %v5394, 1.442695
        %v5396 = vpow.pop %v5395
        %v5397 = vsel %vm554, %v5396, 0.0
        %5398 = vadd.xlane.f32.xlu0 %v5397
        %v5399 = vpop.xlane.xlu0 %5398
        %v5400 = vrcp.pop %v5399
        %v5401 = vmul.f32 %v5396, %v5400
        %5402 = vrot.lane.b32.xlu0 %v4909, 48
        %v5403 = vpop.permute.xlu0 %5402
        %v5406 = vsel %vm554, %v5401, 0
        %5408 = vmatprep.subr.mxu0 0.0
        %5409 = vmatpush1.msra.mxu0 0.0
        %5410 = vmatprep.subr.mxu0 0.0
        %5411 = vmatpush1.msra.mxu0 0.0
        %5412 = vmatprep.subr.mxu0 0.0
        %5413 = vmatpush1.msra.mxu0 0.0
        %5414 = vmatprep.subr.mxu0 0.0
        %5415 = vmatpush1.msra.mxu0 0.0
        %5416 = vmatprep.subr.mxu0 0.0
        %5417 = vmatpush1.msra.mxu0 0.0
        %5418 = vmatprep.subr.mxu0 0.0
        %5419 = vmatpush1.msra.mxu0 0.0
        %5420 = vmatprep.subr.mxu0 0.0
        %5421 = vmatpush1.msra.mxu0 0.0
        %5422 = vmatprep.subr.mxu0 0.0
        %5423 = vmatpush1.msra.mxu0 0.0
        %5424 = vmatprep.subr.mxu0 0.0
        %5425 = vmatpush1.msra.mxu0 0.0
        %5426 = vmatprep.subr.mxu0 0.0
        %5427 = vmatpush1.msra.mxu0 0.0
        %5428 = vmatprep.subr.mxu0 0.0
        %5429 = vmatpush1.msra.mxu0 0.0
        %5430 = vmatprep.subr.mxu0 0.0
        %5431 = vmatpush1.msra.mxu0 0.0
        %5432 = vmatprep.subr.mxu0 0.0
        %5433 = vmatpush1.msra.mxu0 0.0
        %5434 = vmatprep.subr.mxu0 0.0
        %5435 = vmatpush1.msra.mxu0 0.0
        %5436 = vmatprep.subr.mxu0 0.0
        %5437 = vmatpush1.msra.mxu0 0.0
        %5438 = vmatprep.subr.mxu0 0.0
        %5439 = vmatpush1.msra.mxu0 %v5403
        %5440 = vmatprep.subr.mxu0 0.0
        %5441 = vmatpush2.msra.mxu0 0.0
        %5442 = vmatprep.subr.mxu0 0.0
        %5443 = vmatpush2.msra.mxu0 0.0
        %5444 = vmatprep.subr.mxu0 0.0
        %5445 = vmatpush2.msra.mxu0 0.0
        %5446 = vmatprep.subr.mxu0 0.0
        %5447 = vmatpush2.msra.mxu0 0.0
        %5448 = vmatprep.subr.mxu0 0.0
        %5449 = vmatpush2.msra.mxu0 0.0
        %5450 = vmatprep.subr.mxu0 0.0
        %5451 = vmatpush2.msra.mxu0 0.0
        %5452 = vmatprep.subr.mxu0 0.0
        %5453 = vmatpush2.msra.mxu0 0.0
        %5454 = vmatprep.subr.mxu0 0.0
        %5455 = vmatpush2.msra.mxu0 0.0
        %5456 = vmatprep.subr.mxu0 0.0
        %5457 = vmatpush2.msra.mxu0 0.0
        %5458 = vmatprep.subr.mxu0 0.0
        %5459 = vmatpush2.msra.mxu0 0.0
        %5460 = vmatprep.subr.mxu0 0.0
        %5461 = vmatpush2.msra.mxu0 0.0
        %5462 = vmatprep.subr.mxu0 0.0
        %5463 = vmatpush2.msra.mxu0 0.0
        %5464 = vmatprep.subr.mxu0 0.0
        %5465 = vmatpush2.msra.mxu0 0.0
        %5466 = vmatprep.subr.mxu0 0.0
        %5467 = vmatpush2.msra.mxu0 0.0
        %5468 = vmatprep.subr.mxu0 0.0
        %5469 = vmatpush2.msra.mxu0 0.0
        %5470 = vmatprep.subr.mxu0 0.0
        %5471 = vmatpush2.msra.mxu0 0.0
        %5472 = vmatprep.mubr.f32.mxu0 0.0
        %5473 = vmatmul.mubr.f32.gmra.mxu0 %v5406
        %v5474 = vpop.f32.mrf.mxu0
        %v5475 = vadd.f32 0.0, %v5474
        %v5476 = vpop.f32.mrf.mxu0
        %5477 = vdwg.mxu0
        %5478 = vrot.lane.b32.xlu0 %v4982, 104
        %v5479 = vpop.permute.xlu0 %5478
        %5480 = vrot.lane.b32.xlu0 %v4982, 72
        %v5481 = vpop.permute.xlu0 %5480
        %v5482 = vsel %vm554, %v5479, 0
        %v5484 = vsel %vm554, %v5481, 0
        %5486 = vmatprep.subr.mxu0 0.0
        %5487 = vmatpush1.xpose.msra.mxu0 0.0
        %5488 = vmatprep.subr.mxu0 0.0
        %5489 = vmatpush1.xpose.msra.mxu0 0.0
        %5490 = vmatprep.subr.mxu0 0.0
        %5491 = vmatpush1.xpose.msra.mxu0 0.0
        %5492 = vmatprep.subr.mxu0 0.0
        %5493 = vmatpush1.xpose.msra.mxu0 0.0
        %5494 = vmatprep.subr.mxu0 0.0
        %5495 = vmatpush1.xpose.msra.mxu0 0.0
        %5496 = vmatprep.subr.mxu0 0.0
        %5497 = vmatpush1.xpose.msra.mxu0 0.0
        %5498 = vmatprep.subr.mxu0 0.0
        %5499 = vmatpush1.xpose.msra.mxu0 0.0
        %5500 = vmatprep.subr.mxu0 0.0
        %5501 = vmatpush1.xpose.msra.mxu0 0.0
        %5502 = vmatprep.subr.mxu0 0.0
        %5503 = vmatpush1.xpose.msra.mxu0 0.0
        %5504 = vmatprep.subr.mxu0 0.0
        %5505 = vmatpush1.xpose.msra.mxu0 0.0
        %5506 = vmatprep.subr.mxu0 0.0
        %5507 = vmatpush1.xpose.msra.mxu0 0.0
        %5508 = vmatprep.subr.mxu0 0.0
        %5509 = vmatpush1.xpose.msra.mxu0 0.0
        %5510 = vmatprep.subr.mxu0 0.0
        %5511 = vmatpush1.xpose.msra.mxu0 0.0
        %5512 = vmatprep.subr.mxu0 0.0
        %5513 = vmatpush1.xpose.msra.mxu0 0.0
        %5514 = vmatprep.subr.mxu0 0.0
        %5515 = vmatpush1.xpose.msra.mxu0 0.0
        %5516 = vmatprep.subr.mxu0 0.0
        %5517 = vmatpush1.xpose.msra.mxu0 %v5484
        %5518 = vmatprep.subr.mxu0 0.0
        %5519 = vmatpush2.xpose.msra.mxu0 0.0
        %5520 = vmatprep.subr.mxu0 0.0
        %5521 = vmatpush2.xpose.msra.mxu0 0.0
        %5522 = vmatprep.subr.mxu0 0.0
        %5523 = vmatpush2.xpose.msra.mxu0 0.0
        %5524 = vmatprep.subr.mxu0 0.0
        %5525 = vmatpush2.xpose.msra.mxu0 0.0
        %5526 = vmatprep.subr.mxu0 0.0
        %5527 = vmatpush2.xpose.msra.mxu0 0.0
        %5528 = vmatprep.subr.mxu0 0.0
        %5529 = vmatpush2.xpose.msra.mxu0 0.0
        %5530 = vmatprep.subr.mxu0 0.0
        %5531 = vmatpush2.xpose.msra.mxu0 0.0
        %5532 = vmatprep.subr.mxu0 0.0
        %5533 = vmatpush2.xpose.msra.mxu0 0.0
        %5534 = vmatprep.subr.mxu0 0.0
        %5535 = vmatpush2.xpose.msra.mxu0 0.0
        %5536 = vmatprep.subr.mxu0 0.0
        %5537 = vmatpush2.xpose.msra.mxu0 0.0
        %5538 = vmatprep.subr.mxu0 0.0
        %5539 = vmatpush2.xpose.msra.mxu0 0.0
        %5540 = vmatprep.subr.mxu0 0.0
        %5541 = vmatpush2.xpose.msra.mxu0 0.0
        %5542 = vmatprep.subr.mxu0 0.0
        %5543 = vmatpush2.xpose.msra.mxu0 0.0
        %5544 = vmatprep.subr.mxu0 0.0
        %5545 = vmatpush2.xpose.msra.mxu0 0.0
        %5546 = vmatprep.subr.mxu0 0.0
        %5547 = vmatpush2.xpose.msra.mxu0 0.0
        %5548 = vmatprep.subr.mxu0 0.0
        %5549 = vmatpush2.xpose.msra.mxu0 0.0
        %5550 = vmatprep.mubr.f32.mxu0 0.0
        %5551 = vmatmul.mubr.f32.gmra.mxu0 %v5482
        %v5552 = vpop.f32.mrf.mxu0
        %v5553 = vadd.f32 0.0, %v5552
        %v5554 = vpop.f32.mrf.mxu0
        %5555 = vdwg.mxu0
        %v5556 = vsel %vm554, %v5553, -inf
        %5557 = vmax.xlane.f32.xlu0 %v5556
        %v5558 = vpop.xlane.xlu0 %5557
        %v5559 = vsub.f32 %v5553, %v5558
        %v5560 = vmul.f32 %v5559, 1.442695
        %v5561 = vpow.pop %v5560
        %v5562 = vsel %vm554, %v5561, 0.0
        %5563 = vadd.xlane.f32.xlu0 %v5562
        %v5564 = vpop.xlane.xlu0 %5563
        %v5565 = vrcp.pop %v5564
        %v5566 = vmul.f32 %v5561, %v5565
        %5567 = vrot.lane.b32.xlu0 %v4909, 40
        %v5568 = vpop.permute.xlu0 %5567
        %v5571 = vsel %vm554, %v5566, 0
        %5573 = vmatprep.subr.mxu0 0.0
        %5574 = vmatpush1.msra.mxu0 0.0
        %5575 = vmatprep.subr.mxu0 0.0
        %5576 = vmatpush1.msra.mxu0 0.0
        %5577 = vmatprep.subr.mxu0 0.0
        %5578 = vmatpush1.msra.mxu0 0.0
        %5579 = vmatprep.subr.mxu0 0.0
        %5580 = vmatpush1.msra.mxu0 0.0
        %5581 = vmatprep.subr.mxu0 0.0
        %5582 = vmatpush1.msra.mxu0 0.0
        %5583 = vmatprep.subr.mxu0 0.0
        %5584 = vmatpush1.msra.mxu0 0.0
        %5585 = vmatprep.subr.mxu0 0.0
        %5586 = vmatpush1.msra.mxu0 0.0
        %5587 = vmatprep.subr.mxu0 0.0
        %5588 = vmatpush1.msra.mxu0 0.0
        %5589 = vmatprep.subr.mxu0 0.0
        %5590 = vmatpush1.msra.mxu0 0.0
        %5591 = vmatprep.subr.mxu0 0.0
        %5592 = vmatpush1.msra.mxu0 0.0
        %5593 = vmatprep.subr.mxu0 0.0
        %5594 = vmatpush1.msra.mxu0 0.0
        %5595 = vmatprep.subr.mxu0 0.0
        %5596 = vmatpush1.msra.mxu0 0.0
        %5597 = vmatprep.subr.mxu0 0.0
        %5598 = vmatpush1.msra.mxu0 0.0
        %5599 = vmatprep.subr.mxu0 0.0
        %5600 = vmatpush1.msra.mxu0 0.0
        %5601 = vmatprep.subr.mxu0 0.0
        %5602 = vmatpush1.msra.mxu0 0.0
        %5603 = vmatprep.subr.mxu0 0.0
        %5604 = vmatpush1.msra.mxu0 %v5568
        %5605 = vmatprep.subr.mxu0 0.0
        %5606 = vmatpush2.msra.mxu0 0.0
        %5607 = vmatprep.subr.mxu0 0.0
        %5608 = vmatpush2.msra.mxu0 0.0
        %5609 = vmatprep.subr.mxu0 0.0
        %5610 = vmatpush2.msra.mxu0 0.0
        %5611 = vmatprep.subr.mxu0 0.0
        %5612 = vmatpush2.msra.mxu0 0.0
        %5613 = vmatprep.subr.mxu0 0.0
        %5614 = vmatpush2.msra.mxu0 0.0
        %5615 = vmatprep.subr.mxu0 0.0
        %5616 = vmatpush2.msra.mxu0 0.0
        %5617 = vmatprep.subr.mxu0 0.0
        %5618 = vmatpush2.msra.mxu0 0.0
        %5619 = vmatprep.subr.mxu0 0.0
        %5620 = vmatpush2.msra.mxu0 0.0
        %5621 = vmatprep.subr.mxu0 0.0
        %5622 = vmatpush2.msra.mxu0 0.0
        %5623 = vmatprep.subr.mxu0 0.0
        %5624 = vmatpush2.msra.mxu0 0.0
        %5625 = vmatprep.subr.mxu0 0.0
        %5626 = vmatpush2.msra.mxu0 0.0
        %5627 = vmatprep.subr.mxu0 0.0
        %5628 = vmatpush2.msra.mxu0 0.0
        %5629 = vmatprep.subr.mxu0 0.0
        %5630 = vmatpush2.msra.mxu0 0.0
        %5631 = vmatprep.subr.mxu0 0.0
        %5632 = vmatpush2.msra.mxu0 0.0
        %5633 = vmatprep.subr.mxu0 0.0
        %5634 = vmatpush2.msra.mxu0 0.0
        %5635 = vmatprep.subr.mxu0 0.0
        %5636 = vmatpush2.msra.mxu0 0.0
        %5637 = vmatprep.mubr.f32.mxu0 0.0
        %5638 = vmatmul.mubr.f32.gmra.mxu0 %v5571
        %v5639 = vpop.f32.mrf.mxu0
        %v5640 = vadd.f32 0.0, %v5639
        %v5641 = vpop.f32.mrf.mxu0
        %5642 = vdwg.mxu0
        %5644 = vrot.lane.b32.xlu0 %v5310, 8
        %v5645 = vpop.permute.xlu0 %5644
        %5648 = vrot.lane.b32.xlu0 %v5475, 16
        %v5649 = vpop.permute.xlu0 %5648
        %5652 = vrot.lane.b32.xlu0 %v5640, 24
        %v5653 = vpop.permute.xlu0 %5652
        %v5655 = vsel %vm554, %v5145, %v5645
        %v5656 = vsel %vm1225, %v5655, %v5649
        %v5657 = vsel %vm1227, %v5656, %v5653
        %v5658 = vld [vmem:[#allocation8 + $0x110] sm:$0xff]
        %v5659 = vld [vmem:[#allocation8 + $0x118] sm:$0xff]
        %v5660 = vld [vmem:[#allocation8 + $0x120] sm:$0xff]
        %v5661 = vld [vmem:[#allocation8 + $0x128] sm:$0xff]
        %v5662 = vld [vmem:[#allocation8 + $0x1d1] sm:$0x1]
        %v5663 = vlaneseq
        %v5664 = vshrl.u32 %v5663, 7
        %v5665 = vsub.s32 0, %v5664
        %v5666 = vrot.slane %v5662, %v5665
        %v5668 = vsel %vm397, %v5657, 0
        %5670 = vmatprep.subr.mxu0 0.0
        %5671 = vmatpush1.msra.mxu0 0.0
        %5672 = vmatprep.subr.mxu0 0.0
        %5673 = vmatpush1.msra.mxu0 0.0
        %5674 = vmatprep.subr.mxu0 0.0
        %5675 = vmatpush1.msra.mxu0 0.0
        %5676 = vmatprep.subr.mxu0 0.0
        %5677 = vmatpush1.msra.mxu0 0.0
        %5678 = vmatprep.subr.mxu0 0.0
        %5679 = vmatpush1.msra.mxu0 0.0
        %5680 = vmatprep.subr.mxu0 0.0
        %5681 = vmatpush1.msra.mxu0 0.0
        %5682 = vmatprep.subr.mxu0 0.0
        %5683 = vmatpush1.msra.mxu0 0.0
        %5684 = vmatprep.subr.mxu0 0.0
        %5685 = vmatpush1.msra.mxu0 0.0
        %5686 = vmatprep.subr.mxu0 0.0
        %5687 = vmatpush1.msra.mxu0 0.0
        %5688 = vmatprep.subr.mxu0 0.0
        %5689 = vmatpush1.msra.mxu0 0.0
        %5690 = vmatprep.subr.mxu0 0.0
        %5691 = vmatpush1.msra.mxu0 0.0
        %5692 = vmatprep.subr.mxu0 0.0
        %5693 = vmatpush1.msra.mxu0 0.0
        %5694 = vmatprep.subr.mxu0 0.0
        %5695 = vmatpush1.msra.mxu0 %v5661
        %5696 = vmatprep.subr.mxu0 0.0
        %5697 = vmatpush1.msra.mxu0 %v5660
        %5698 = vmatprep.subr.mxu0 0.0
        %5699 = vmatpush1.msra.mxu0 %v5659
        %5700 = vmatprep.subr.mxu0 0.0
        %5701 = vmatpush1.msra.mxu0 %v5658
        %5702 = vmatprep.subr.mxu0 0.0
        %5703 = vmatpush2.msra.mxu0 0.0
        %5704 = vmatprep.subr.mxu0 0.0
        %5705 = vmatpush2.msra.mxu0 0.0
        %5706 = vmatprep.subr.mxu0 0.0
        %5707 = vmatpush2.msra.mxu0 0.0
        %5708 = vmatprep.subr.mxu0 0.0
        %5709 = vmatpush2.msra.mxu0 0.0
        %5710 = vmatprep.subr.mxu0 0.0
        %5711 = vmatpush2.msra.mxu0 0.0
        %5712 = vmatprep.subr.mxu0 0.0
        %5713 = vmatpush2.msra.mxu0 0.0
        %5714 = vmatprep.subr.mxu0 0.0
        %5715 = vmatpush2.msra.mxu0 0.0
        %5716 = vmatprep.subr.mxu0 0.0
        %5717 = vmatpush2.msra.mxu0 0.0
        %5718 = vmatprep.subr.mxu0 0.0
        %5719 = vmatpush2.msra.mxu0 0.0
        %5720 = vmatprep.subr.mxu0 0.0
        %5721 = vmatpush2.msra.mxu0 0.0
        %5722 = vmatprep.subr.mxu0 0.0
        %5723 = vmatpush2.msra.mxu0 0.0
        %5724 = vmatprep.subr.mxu0 0.0
        %5725 = vmatpush2.msra.mxu0 0.0
        %5726 = vmatprep.subr.mxu0 0.0
        %5727 = vmatpush2.msra.mxu0 0.0
        %5728 = vmatprep.subr.mxu0 0.0
        %5729 = vmatpush2.msra.mxu0 0.0
        %5730 = vmatprep.subr.mxu0 0.0
        %5731 = vmatpush2.msra.mxu0 0.0
        %5732 = vmatprep.subr.mxu0 0.0
        %5733 = vmatpush2.msra.mxu0 0.0
        %5734 = vmatprep.mubr.f32.mxu0 0.0
        %5735 = vmatmul.mubr.f32.gmra.mxu0 %v5668
        %v5736 = vpop.f32.mrf.mxu0
        %v5737 = vadd.f32 %v5666, %v5736
        %v5738 = vpop.f32.mrf.mxu0
        %5739 = vdwg.mxu0
        %v5740 = vadd.f32 %v4829, %v5737
        %v5741 = vld [vmem:[#allocation8 + $0x1d6] sm:$0x1]
        %v5742 = vld [vmem:[#allocation8 + $0x1d7] sm:$0x1]
        %v5743 = vsel %vm397, %v5740, 0.0
        %5744 = vadd.xlane.f32.xlu0 %v5743
        %v5745 = vpop.xlane.xlu0 %5744
        %v5746 = vmul.f32 %v5745, %v1317
        %v5747 = vsub.f32 %v5740, %v5746
        %v5748 = vmul.f32 %v5747, %v5747
        %v5749 = vsel %vm397, %v5748, 0.0
        %5750 = vadd.xlane.f32.xlu0 %v5749
        %v5751 = vpop.xlane.xlu0 %5750
        %v5752 = vmul.f32 %v5751, %v1317
        %v5753 = vadd.f32 %v5752, 1e-05
        %v5754 = vrsqrt.pop %v5753
        %v5755 = vmul.f32 %v5747, %v5754
        %v5756 = vlaneseq
        %v5757 = vshrl.u32 %v5756, 7
        %v5758 = vsub.s32 0, %v5757
        %v5759 = vrot.slane %v5741, %v5758
        %v5760 = vmul.f32 %v5755, %v5759
        %v5761 = vlaneseq
        %v5762 = vshrl.u32 %v5761, 7
        %v5763 = vsub.s32 0, %v5762
        %v5764 = vrot.slane %v5742, %v5763
        %v5765 = vadd.f32 %v5760, %v5764
        %v5766 = vld [vmem:[#allocation8 + $0x130] sm:$0xff]
        %v5767 = vld [vmem:[#allocation8 + $0x138] sm:$0xff]
        %v5768 = vld [vmem:[#allocation8 + $0x140] sm:$0xff]
        %v5769 = vld [vmem:[#allocation8 + $0x148] sm:$0xff]
        %v5770 = vld [vmem:[#allocation8 + $0x1d2] sm:$0x1]
        %v5771 = vadd.f32 %v5765, %v2666
        %v5772 = vlaneseq
        %v5773 = vshrl.u32 %v5772, 7
        %v5774 = vsub.s32 0, %v5773
        %v5775 = vrot.slane %v5770, %v5774
        %v5777 = vsel %vm397, %v5771, 0
        %5779 = vmatprep.subr.mxu0 0.0
        %5780 = vmatpush1.msra.mxu0 0.0
        %5781 = vmatprep.subr.mxu0 0.0
        %5782 = vmatpush1.msra.mxu0 0.0
        %5783 = vmatprep.subr.mxu0 0.0
        %5784 = vmatpush1.msra.mxu0 0.0
        %5785 = vmatprep.subr.mxu0 0.0
        %5786 = vmatpush1.msra.mxu0 0.0
        %5787 = vmatprep.subr.mxu0 0.0
        %5788 = vmatpush1.msra.mxu0 0.0
        %5789 = vmatprep.subr.mxu0 0.0
        %5790 = vmatpush1.msra.mxu0 0.0
        %5791 = vmatprep.subr.mxu0 0.0
        %5792 = vmatpush1.msra.mxu0 0.0
        %5793 = vmatprep.subr.mxu0 0.0
        %5794 = vmatpush1.msra.mxu0 0.0
        %5795 = vmatprep.subr.mxu0 0.0
        %5796 = vmatpush1.msra.mxu0 0.0
        %5797 = vmatprep.subr.mxu0 0.0
        %5798 = vmatpush1.msra.mxu0 0.0
        %5799 = vmatprep.subr.mxu0 0.0
        %5800 = vmatpush1.msra.mxu0 0.0
        %5801 = vmatprep.subr.mxu0 0.0
        %5802 = vmatpush1.msra.mxu0 0.0
        %5803 = vmatprep.subr.mxu0 0.0
        %5804 = vmatpush1.msra.mxu0 %v5769
        %5805 = vmatprep.subr.mxu0 0.0
        %5806 = vmatpush1.msra.mxu0 %v5768
        %5807 = vmatprep.subr.mxu0 0.0
        %5808 = vmatpush1.msra.mxu0 %v5767
        %5809 = vmatprep.subr.mxu0 0.0
        %5810 = vmatpush1.msra.mxu0 %v5766
        %5811 = vmatprep.subr.mxu0 0.0
        %5812 = vmatpush2.msra.mxu0 0.0
        %5813 = vmatprep.subr.mxu0 0.0
        %5814 = vmatpush2.msra.mxu0 0.0
        %5815 = vmatprep.subr.mxu0 0.0
        %5816 = vmatpush2.msra.mxu0 0.0
        %5817 = vmatprep.subr.mxu0 0.0
        %5818 = vmatpush2.msra.mxu0 0.0
        %5819 = vmatprep.subr.mxu0 0.0
        %5820 = vmatpush2.msra.mxu0 0.0
        %5821 = vmatprep.subr.mxu0 0.0
        %5822 = vmatpush2.msra.mxu0 0.0
        %5823 = vmatprep.subr.mxu0 0.0
        %5824 = vmatpush2.msra.mxu0 0.0
        %5825 = vmatprep.subr.mxu0 0.0
        %5826 = vmatpush2.msra.mxu0 0.0
        %5827 = vmatprep.subr.mxu0 0.0
        %5828 = vmatpush2.msra.mxu0 0.0
        %5829 = vmatprep.subr.mxu0 0.0
        %5830 = vmatpush2.msra.mxu0 0.0
        %5831 = vmatprep.subr.mxu0 0.0
        %5832 = vmatpush2.msra.mxu0 0.0
        %5833 = vmatprep.subr.mxu0 0.0
        %5834 = vmatpush2.msra.mxu0 0.0
        %5835 = vmatprep.subr.mxu0 0.0
        %5836 = vmatpush2.msra.mxu0 0.0
        %5837 = vmatprep.subr.mxu0 0.0
        %5838 = vmatpush2.msra.mxu0 0.0
        %5839 = vmatprep.subr.mxu0 0.0
        %5840 = vmatpush2.msra.mxu0 0.0
        %5841 = vmatprep.subr.mxu0 0.0
        %5842 = vmatpush2.msra.mxu0 0.0
        %5843 = vmatprep.mubr.f32.mxu0 0.0
        %5844 = vmatmul.mubr.f32.gmra.mxu0 %v5777
        %v5845 = vpop.f32.mrf.mxu0
        %v5846 = vadd.f32 %v5775, %v5845
        %v5847 = vpop.f32.mrf.mxu0
        %5848 = vdwg.mxu0
        %5853 = vrot.lane.b32.xlu0 %v5766, 96
        %v5854 = vpop.permute.xlu0 %5853
        %5855 = vrot.lane.b32.xlu0 %v5767, 96
        %v5856 = vpop.permute.xlu0 %5855
        %5857 = vrot.lane.b32.xlu0 %v5768, 96
        %v5858 = vpop.permute.xlu0 %5857
        %5859 = vrot.lane.b32.xlu0 %v5769, 96
        %v5860 = vpop.permute.xlu0 %5859
        %5866 = vrot.lane.b32.xlu0 %v5775, 96
        %v5867 = vpop.permute.xlu0 %5866
        %5869 = vmatprep.subr.mxu0 0.0
        %5870 = vmatpush1.msra.mxu0 0.0
        %5871 = vmatprep.subr.mxu0 0.0
        %5872 = vmatpush1.msra.mxu0 0.0
        %5873 = vmatprep.subr.mxu0 0.0
        %5874 = vmatpush1.msra.mxu0 0.0
        %5875 = vmatprep.subr.mxu0 0.0
        %5876 = vmatpush1.msra.mxu0 0.0
        %5877 = vmatprep.subr.mxu0 0.0
        %5878 = vmatpush1.msra.mxu0 0.0
        %5879 = vmatprep.subr.mxu0 0.0
        %5880 = vmatpush1.msra.mxu0 0.0
        %5881 = vmatprep.subr.mxu0 0.0
        %5882 = vmatpush1.msra.mxu0 0.0
        %5883 = vmatprep.subr.mxu0 0.0
        %5884 = vmatpush1.msra.mxu0 0.0
        %5885 = vmatprep.subr.mxu0 0.0
        %5886 = vmatpush1.msra.mxu0 0.0
        %5887 = vmatprep.subr.mxu0 0.0
        %5888 = vmatpush1.msra.mxu0 0.0
        %5889 = vmatprep.subr.mxu0 0.0
        %5890 = vmatpush1.msra.mxu0 0.0
        %5891 = vmatprep.subr.mxu0 0.0
        %5892 = vmatpush1.msra.mxu0 0.0
        %5893 = vmatprep.subr.mxu0 0.0
        %5894 = vmatpush1.msra.mxu0 %v5860
        %5895 = vmatprep.subr.mxu0 0.0
        %5896 = vmatpush1.msra.mxu0 %v5858
        %5897 = vmatprep.subr.mxu0 0.0
        %5898 = vmatpush1.msra.mxu0 %v5856
        %5899 = vmatprep.subr.mxu0 0.0
        %5900 = vmatpush1.msra.mxu0 %v5854
        %5901 = vmatprep.subr.mxu0 0.0
        %5902 = vmatpush2.msra.mxu0 0.0
        %5903 = vmatprep.subr.mxu0 0.0
        %5904 = vmatpush2.msra.mxu0 0.0
        %5905 = vmatprep.subr.mxu0 0.0
        %5906 = vmatpush2.msra.mxu0 0.0
        %5907 = vmatprep.subr.mxu0 0.0
        %5908 = vmatpush2.msra.mxu0 0.0
        %5909 = vmatprep.subr.mxu0 0.0
        %5910 = vmatpush2.msra.mxu0 0.0
        %5911 = vmatprep.subr.mxu0 0.0
        %5912 = vmatpush2.msra.mxu0 0.0
        %5913 = vmatprep.subr.mxu0 0.0
        %5914 = vmatpush2.msra.mxu0 0.0
        %5915 = vmatprep.subr.mxu0 0.0
        %5916 = vmatpush2.msra.mxu0 0.0
        %5917 = vmatprep.subr.mxu0 0.0
        %5918 = vmatpush2.msra.mxu0 0.0
        %5919 = vmatprep.subr.mxu0 0.0
        %5920 = vmatpush2.msra.mxu0 0.0
        %5921 = vmatprep.subr.mxu0 0.0
        %5922 = vmatpush2.msra.mxu0 0.0
        %5923 = vmatprep.subr.mxu0 0.0
        %5924 = vmatpush2.msra.mxu0 0.0
        %5925 = vmatprep.subr.mxu0 0.0
        %5926 = vmatpush2.msra.mxu0 0.0
        %5927 = vmatprep.subr.mxu0 0.0
        %5928 = vmatpush2.msra.mxu0 0.0
        %5929 = vmatprep.subr.mxu0 0.0
        %5930 = vmatpush2.msra.mxu0 0.0
        %5931 = vmatprep.subr.mxu0 0.0
        %5932 = vmatpush2.msra.mxu0 0.0
        %5933 = vmatprep.mubr.f32.mxu0 0.0
        %5934 = vmatmul.mubr.f32.gmra.mxu0 %v3710
        %v5935 = vpop.f32.mrf.mxu0
        %v5936 = vadd.f32 %v5867, %v5935
        %v5937 = vpop.f32.mrf.mxu0
        %5938 = vdwg.mxu0
        %5939 = vmatprep.subr.mxu0 0.0
        %5940 = vmatpush1.msra.mxu0 0.0
        %5941 = vmatprep.subr.mxu0 0.0
        %5942 = vmatpush1.msra.mxu0 0.0
        %5943 = vmatprep.subr.mxu0 0.0
        %5944 = vmatpush1.msra.mxu0 0.0
        %5945 = vmatprep.subr.mxu0 0.0
        %5946 = vmatpush1.msra.mxu0 0.0
        %5947 = vmatprep.subr.mxu0 0.0
        %5948 = vmatpush1.msra.mxu0 0.0
        %5949 = vmatprep.subr.mxu0 0.0
        %5950 = vmatpush1.msra.mxu0 0.0
        %5951 = vmatprep.subr.mxu0 0.0
        %5952 = vmatpush1.msra.mxu0 0.0
        %5953 = vmatprep.subr.mxu0 0.0
        %5954 = vmatpush1.msra.mxu0 0.0
        %5955 = vmatprep.subr.mxu0 0.0
        %5956 = vmatpush1.msra.mxu0 0.0
        %5957 = vmatprep.subr.mxu0 0.0
        %5958 = vmatpush1.msra.mxu0 0.0
        %5959 = vmatprep.subr.mxu0 0.0
        %5960 = vmatpush1.msra.mxu0 0.0
        %5961 = vmatprep.subr.mxu0 0.0
        %5962 = vmatpush1.msra.mxu0 0.0
        %5963 = vmatprep.subr.mxu0 0.0
        %5964 = vmatpush1.msra.mxu0 %v5860
        %5965 = vmatprep.subr.mxu0 0.0
        %5966 = vmatpush1.msra.mxu0 %v5858
        %5967 = vmatprep.subr.mxu0 0.0
        %5968 = vmatpush1.msra.mxu0 %v5856
        %5969 = vmatprep.subr.mxu0 0.0
        %5970 = vmatpush1.msra.mxu0 %v5854
        %5971 = vmatprep.subr.mxu0 0.0
        %5972 = vmatpush2.msra.mxu0 0.0
        %5973 = vmatprep.subr.mxu0 0.0
        %5974 = vmatpush2.msra.mxu0 0.0
        %5975 = vmatprep.subr.mxu0 0.0
        %5976 = vmatpush2.msra.mxu0 0.0
        %5977 = vmatprep.subr.mxu0 0.0
        %5978 = vmatpush2.msra.mxu0 0.0
        %5979 = vmatprep.subr.mxu0 0.0
        %5980 = vmatpush2.msra.mxu0 0.0
        %5981 = vmatprep.subr.mxu0 0.0
        %5982 = vmatpush2.msra.mxu0 0.0
        %5983 = vmatprep.subr.mxu0 0.0
        %5984 = vmatpush2.msra.mxu0 0.0
        %5985 = vmatprep.subr.mxu0 0.0
        %5986 = vmatpush2.msra.mxu0 0.0
        %5987 = vmatprep.subr.mxu0 0.0
        %5988 = vmatpush2.msra.mxu0 0.0
        %5989 = vmatprep.subr.mxu0 0.0
        %5990 = vmatpush2.msra.mxu0 0.0
        %5991 = vmatprep.subr.mxu0 0.0
        %5992 = vmatpush2.msra.mxu0 0.0
        %5993 = vmatprep.subr.mxu0 0.0
        %5994 = vmatpush2.msra.mxu0 0.0
        %5995 = vmatprep.subr.mxu0 0.0
        %5996 = vmatpush2.msra.mxu0 0.0
        %5997 = vmatprep.subr.mxu0 0.0
        %5998 = vmatpush2.msra.mxu0 0.0
        %5999 = vmatprep.subr.mxu0 0.0
        %6000 = vmatpush2.msra.mxu0 0.0
        %6001 = vmatprep.subr.mxu0 0.0
        %6002 = vmatpush2.msra.mxu0 0.0
        %6003 = vmatprep.mubr.f32.mxu0 0.0
        %6004 = vmatmul.mubr.f32.gmra.mxu0 %v472
        %v6005 = vpop.f32.mrf.mxu0
        %v6006 = vadd.f32 0.0, %v6005
        %v6007 = vpop.f32.mrf.mxu0
        %6008 = vdwg.mxu0
        %v6009 = vadd.f32 %v5936, %v6006
        %v6011 = vsel %vm554, %v5846, 0
        %v6014 = vsel %vm554, %v6009, 0
        %6016 = vmatprep.subr.mxu0 0.0
        %6017 = vmatpush1.xpose.msra.mxu0 0.0
        %6018 = vmatprep.subr.mxu0 0.0
        %6019 = vmatpush1.xpose.msra.mxu0 0.0
        %6020 = vmatprep.subr.mxu0 0.0
        %6021 = vmatpush1.xpose.msra.mxu0 0.0
        %6022 = vmatprep.subr.mxu0 0.0
        %6023 = vmatpush1.xpose.msra.mxu0 0.0
        %6024 = vmatprep.subr.mxu0 0.0
        %6025 = vmatpush1.xpose.msra.mxu0 0.0
        %6026 = vmatprep.subr.mxu0 0.0
        %6027 = vmatpush1.xpose.msra.mxu0 0.0
        %6028 = vmatprep.subr.mxu0 0.0
        %6029 = vmatpush1.xpose.msra.mxu0 0.0
        %6030 = vmatprep.subr.mxu0 0.0
        %6031 = vmatpush1.xpose.msra.mxu0 0.0
        %6032 = vmatprep.subr.mxu0 0.0
        %6033 = vmatpush1.xpose.msra.mxu0 0.0
        %6034 = vmatprep.subr.mxu0 0.0
        %6035 = vmatpush1.xpose.msra.mxu0 0.0
        %6036 = vmatprep.subr.mxu0 0.0
        %6037 = vmatpush1.xpose.msra.mxu0 0.0
        %6038 = vmatprep.subr.mxu0 0.0
        %6039 = vmatpush1.xpose.msra.mxu0 0.0
        %6040 = vmatprep.subr.mxu0 0.0
        %6041 = vmatpush1.xpose.msra.mxu0 0.0
        %6042 = vmatprep.subr.mxu0 0.0
        %6043 = vmatpush1.xpose.msra.mxu0 0.0
        %6044 = vmatprep.subr.mxu0 0.0
        %6045 = vmatpush1.xpose.msra.mxu0 0.0
        %6046 = vmatprep.subr.mxu0 0.0
        %6047 = vmatpush1.xpose.msra.mxu0 %v6014
        %6048 = vmatprep.subr.mxu0 0.0
        %6049 = vmatpush2.xpose.msra.mxu0 0.0
        %6050 = vmatprep.subr.mxu0 0.0
        %6051 = vmatpush2.xpose.msra.mxu0 0.0
        %6052 = vmatprep.subr.mxu0 0.0
        %6053 = vmatpush2.xpose.msra.mxu0 0.0
        %6054 = vmatprep.subr.mxu0 0.0
        %6055 = vmatpush2.xpose.msra.mxu0 0.0
        %6056 = vmatprep.subr.mxu0 0.0
        %6057 = vmatpush2.xpose.msra.mxu0 0.0
        %6058 = vmatprep.subr.mxu0 0.0
        %6059 = vmatpush2.xpose.msra.mxu0 0.0
        %6060 = vmatprep.subr.mxu0 0.0
        %6061 = vmatpush2.xpose.msra.mxu0 0.0
        %6062 = vmatprep.subr.mxu0 0.0
        %6063 = vmatpush2.xpose.msra.mxu0 0.0
        %6064 = vmatprep.subr.mxu0 0.0
        %6065 = vmatpush2.xpose.msra.mxu0 0.0
        %6066 = vmatprep.subr.mxu0 0.0
        %6067 = vmatpush2.xpose.msra.mxu0 0.0
        %6068 = vmatprep.subr.mxu0 0.0
        %6069 = vmatpush2.xpose.msra.mxu0 0.0
        %6070 = vmatprep.subr.mxu0 0.0
        %6071 = vmatpush2.xpose.msra.mxu0 0.0
        %6072 = vmatprep.subr.mxu0 0.0
        %6073 = vmatpush2.xpose.msra.mxu0 0.0
        %6074 = vmatprep.subr.mxu0 0.0
        %6075 = vmatpush2.xpose.msra.mxu0 0.0
        %6076 = vmatprep.subr.mxu0 0.0
        %6077 = vmatpush2.xpose.msra.mxu0 0.0
        %6078 = vmatprep.subr.mxu0 0.0
        %6079 = vmatpush2.xpose.msra.mxu0 0.0
        %6080 = vmatprep.mubr.f32.mxu0 0.0
        %6081 = vmatmul.mubr.f32.gmra.mxu0 %v6011
        %v6082 = vpop.f32.mrf.mxu0
        %v6083 = vadd.f32 %v549, %v6082
        %v6084 = vpop.f32.mrf.mxu0
        %6085 = vdwg.mxu0
        %v6086 = vsel %vm554, %v6083, -inf
        %6087 = vmax.xlane.f32.xlu0 %v6086
        %v6088 = vpop.xlane.xlu0 %6087
        %v6089 = vsub.f32 %v6083, %v6088
        %v6090 = vmul.f32 %v6089, 1.442695
        %v6091 = vpow.pop %v6090
        %v6092 = vsel %vm554, %v6091, 0.0
        %6093 = vadd.xlane.f32.xlu0 %v6092
        %v6094 = vpop.xlane.xlu0 %6093
        %v6095 = vrcp.pop %v6094
        %v6096 = vmul.f32 %v6091, %v6095
        %6098 = vrot.lane.b32.xlu0 %v5936, 96
        %v6099 = vpop.permute.xlu0 %6098
        %v6102 = vsel %vm554, %v6096, 0
        %6104 = vmatprep.subr.mxu0 0.0
        %6105 = vmatpush1.msra.mxu0 0.0
        %6106 = vmatprep.subr.mxu0 0.0
        %6107 = vmatpush1.msra.mxu0 0.0
        %6108 = vmatprep.subr.mxu0 0.0
        %6109 = vmatpush1.msra.mxu0 0.0
        %6110 = vmatprep.subr.mxu0 0.0
        %6111 = vmatpush1.msra.mxu0 0.0
        %6112 = vmatprep.subr.mxu0 0.0
        %6113 = vmatpush1.msra.mxu0 0.0
        %6114 = vmatprep.subr.mxu0 0.0
        %6115 = vmatpush1.msra.mxu0 0.0
        %6116 = vmatprep.subr.mxu0 0.0
        %6117 = vmatpush1.msra.mxu0 0.0
        %6118 = vmatprep.subr.mxu0 0.0
        %6119 = vmatpush1.msra.mxu0 0.0
        %6120 = vmatprep.subr.mxu0 0.0
        %6121 = vmatpush1.msra.mxu0 0.0
        %6122 = vmatprep.subr.mxu0 0.0
        %6123 = vmatpush1.msra.mxu0 0.0
        %6124 = vmatprep.subr.mxu0 0.0
        %6125 = vmatpush1.msra.mxu0 0.0
        %6126 = vmatprep.subr.mxu0 0.0
        %6127 = vmatpush1.msra.mxu0 0.0
        %6128 = vmatprep.subr.mxu0 0.0
        %6129 = vmatpush1.msra.mxu0 0.0
        %6130 = vmatprep.subr.mxu0 0.0
        %6131 = vmatpush1.msra.mxu0 0.0
        %6132 = vmatprep.subr.mxu0 0.0
        %6133 = vmatpush1.msra.mxu0 0.0
        %6134 = vmatprep.subr.mxu0 0.0
        %6135 = vmatpush1.msra.mxu0 %v6099
        %6136 = vmatprep.subr.mxu0 0.0
        %6137 = vmatpush2.msra.mxu0 0.0
        %6138 = vmatprep.subr.mxu0 0.0
        %6139 = vmatpush2.msra.mxu0 0.0
        %6140 = vmatprep.subr.mxu0 0.0
        %6141 = vmatpush2.msra.mxu0 0.0
        %6142 = vmatprep.subr.mxu0 0.0
        %6143 = vmatpush2.msra.mxu0 0.0
        %6144 = vmatprep.subr.mxu0 0.0
        %6145 = vmatpush2.msra.mxu0 0.0
        %6146 = vmatprep.subr.mxu0 0.0
        %6147 = vmatpush2.msra.mxu0 0.0
        %6148 = vmatprep.subr.mxu0 0.0
        %6149 = vmatpush2.msra.mxu0 0.0
        %6150 = vmatprep.subr.mxu0 0.0
        %6151 = vmatpush2.msra.mxu0 0.0
        %6152 = vmatprep.subr.mxu0 0.0
        %6153 = vmatpush2.msra.mxu0 0.0
        %6154 = vmatprep.subr.mxu0 0.0
        %6155 = vmatpush2.msra.mxu0 0.0
        %6156 = vmatprep.subr.mxu0 0.0
        %6157 = vmatpush2.msra.mxu0 0.0
        %6158 = vmatprep.subr.mxu0 0.0
        %6159 = vmatpush2.msra.mxu0 0.0
        %6160 = vmatprep.subr.mxu0 0.0
        %6161 = vmatpush2.msra.mxu0 0.0
        %6162 = vmatprep.subr.mxu0 0.0
        %6163 = vmatpush2.msra.mxu0 0.0
        %6164 = vmatprep.subr.mxu0 0.0
        %6165 = vmatpush2.msra.mxu0 0.0
        %6166 = vmatprep.subr.mxu0 0.0
        %6167 = vmatpush2.msra.mxu0 0.0
        %6168 = vmatprep.mubr.f32.mxu0 0.0
        %6169 = vmatmul.mubr.f32.gmra.mxu0 %v6102
        %v6170 = vpop.f32.mrf.mxu0
        %v6171 = vadd.f32 0.0, %v6170
        %v6172 = vpop.f32.mrf.mxu0
        %6173 = vdwg.mxu0
        %6174 = vrot.lane.b32.xlu0 %v5846, 120
        %v6175 = vpop.permute.xlu0 %6174
        %6176 = vrot.lane.b32.xlu0 %v6009, 120
        %v6177 = vpop.permute.xlu0 %6176
        %v6178 = vsel %vm554, %v6175, 0
        %v6180 = vsel %vm554, %v6177, 0
        %6182 = vmatprep.subr.mxu0 0.0
        %6183 = vmatpush1.xpose.msra.mxu0 0.0
        %6184 = vmatprep.subr.mxu0 0.0
        %6185 = vmatpush1.xpose.msra.mxu0 0.0
        %6186 = vmatprep.subr.mxu0 0.0
        %6187 = vmatpush1.xpose.msra.mxu0 0.0
        %6188 = vmatprep.subr.mxu0 0.0
        %6189 = vmatpush1.xpose.msra.mxu0 0.0
        %6190 = vmatprep.subr.mxu0 0.0
        %6191 = vmatpush1.xpose.msra.mxu0 0.0
        %6192 = vmatprep.subr.mxu0 0.0
        %6193 = vmatpush1.xpose.msra.mxu0 0.0
        %6194 = vmatprep.subr.mxu0 0.0
        %6195 = vmatpush1.xpose.msra.mxu0 0.0
        %6196 = vmatprep.subr.mxu0 0.0
        %6197 = vmatpush1.xpose.msra.mxu0 0.0
        %6198 = vmatprep.subr.mxu0 0.0
        %6199 = vmatpush1.xpose.msra.mxu0 0.0
        %6200 = vmatprep.subr.mxu0 0.0
        %6201 = vmatpush1.xpose.msra.mxu0 0.0
        %6202 = vmatprep.subr.mxu0 0.0
        %6203 = vmatpush1.xpose.msra.mxu0 0.0
        %6204 = vmatprep.subr.mxu0 0.0
        %6205 = vmatpush1.xpose.msra.mxu0 0.0
        %6206 = vmatprep.subr.mxu0 0.0
        %6207 = vmatpush1.xpose.msra.mxu0 0.0
        %6208 = vmatprep.subr.mxu0 0.0
        %6209 = vmatpush1.xpose.msra.mxu0 0.0
        %6210 = vmatprep.subr.mxu0 0.0
        %6211 = vmatpush1.xpose.msra.mxu0 0.0
        %6212 = vmatprep.subr.mxu0 0.0
        %6213 = vmatpush1.xpose.msra.mxu0 %v6180
        %6214 = vmatprep.subr.mxu0 0.0
        %6215 = vmatpush2.xpose.msra.mxu0 0.0
        %6216 = vmatprep.subr.mxu0 0.0
        %6217 = vmatpush2.xpose.msra.mxu0 0.0
        %6218 = vmatprep.subr.mxu0 0.0
        %6219 = vmatpush2.xpose.msra.mxu0 0.0
        %6220 = vmatprep.subr.mxu0 0.0
        %6221 = vmatpush2.xpose.msra.mxu0 0.0
        %6222 = vmatprep.subr.mxu0 0.0
        %6223 = vmatpush2.xpose.msra.mxu0 0.0
        %6224 = vmatprep.subr.mxu0 0.0
        %6225 = vmatpush2.xpose.msra.mxu0 0.0
        %6226 = vmatprep.subr.mxu0 0.0
        %6227 = vmatpush2.xpose.msra.mxu0 0.0
        %6228 = vmatprep.subr.mxu0 0.0
        %6229 = vmatpush2.xpose.msra.mxu0 0.0
        %6230 = vmatprep.subr.mxu0 0.0
        %6231 = vmatpush2.xpose.msra.mxu0 0.0
        %6232 = vmatprep.subr.mxu0 0.0
        %6233 = vmatpush2.xpose.msra.mxu0 0.0
        %6234 = vmatprep.subr.mxu0 0.0
        %6235 = vmatpush2.xpose.msra.mxu0 0.0
        %6236 = vmatprep.subr.mxu0 0.0
        %6237 = vmatpush2.xpose.msra.mxu0 0.0
        %6238 = vmatprep.subr.mxu0 0.0
        %6239 = vmatpush2.xpose.msra.mxu0 0.0
        %6240 = vmatprep.subr.mxu0 0.0
        %6241 = vmatpush2.xpose.msra.mxu0 0.0
        %6242 = vmatprep.subr.mxu0 0.0
        %6243 = vmatpush2.xpose.msra.mxu0 0.0
        %6244 = vmatprep.subr.mxu0 0.0
        %6245 = vmatpush2.xpose.msra.mxu0 0.0
        %6246 = vmatprep.mubr.f32.mxu0 0.0
        %6247 = vmatmul.mubr.f32.gmra.mxu0 %v6178
        %v6248 = vpop.f32.mrf.mxu0
        %v6249 = vadd.f32 %v549, %v6248
        %v6250 = vpop.f32.mrf.mxu0
        %6251 = vdwg.mxu0
        %v6252 = vsel %vm554, %v6249, -inf
        %6253 = vmax.xlane.f32.xlu0 %v6252
        %v6254 = vpop.xlane.xlu0 %6253
        %v6255 = vsub.f32 %v6249, %v6254
        %v6256 = vmul.f32 %v6255, 1.442695
        %v6257 = vpow.pop %v6256
        %v6258 = vsel %vm554, %v6257, 0.0
        %6259 = vadd.xlane.f32.xlu0 %v6258
        %v6260 = vpop.xlane.xlu0 %6259
        %v6261 = vrcp.pop %v6260
        %v6262 = vmul.f32 %v6257, %v6261
        %6263 = vrot.lane.b32.xlu0 %v5936, 88
        %v6264 = vpop.permute.xlu0 %6263
        %v6267 = vsel %vm554, %v6262, 0
        %6269 = vmatprep.subr.mxu0 0.0
        %6270 = vmatpush1.msra.mxu0 0.0
        %6271 = vmatprep.subr.mxu0 0.0
        %6272 = vmatpush1.msra.mxu0 0.0
        %6273 = vmatprep.subr.mxu0 0.0
        %6274 = vmatpush1.msra.mxu0 0.0
        %6275 = vmatprep.subr.mxu0 0.0
        %6276 = vmatpush1.msra.mxu0 0.0
        %6277 = vmatprep.subr.mxu0 0.0
        %6278 = vmatpush1.msra.mxu0 0.0
        %6279 = vmatprep.subr.mxu0 0.0
        %6280 = vmatpush1.msra.mxu0 0.0
        %6281 = vmatprep.subr.mxu0 0.0
        %6282 = vmatpush1.msra.mxu0 0.0
        %6283 = vmatprep.subr.mxu0 0.0
        %6284 = vmatpush1.msra.mxu0 0.0
        %6285 = vmatprep.subr.mxu0 0.0
        %6286 = vmatpush1.msra.mxu0 0.0
        %6287 = vmatprep.subr.mxu0 0.0
        %6288 = vmatpush1.msra.mxu0 0.0
        %6289 = vmatprep.subr.mxu0 0.0
        %6290 = vmatpush1.msra.mxu0 0.0
        %6291 = vmatprep.subr.mxu0 0.0
        %6292 = vmatpush1.msra.mxu0 0.0
        %6293 = vmatprep.subr.mxu0 0.0
        %6294 = vmatpush1.msra.mxu0 0.0
        %6295 = vmatprep.subr.mxu0 0.0
        %6296 = vmatpush1.msra.mxu0 0.0
        %6297 = vmatprep.subr.mxu0 0.0
        %6298 = vmatpush1.msra.mxu0 0.0
        %6299 = vmatprep.subr.mxu0 0.0
        %6300 = vmatpush1.msra.mxu0 %v6264
        %6301 = vmatprep.subr.mxu0 0.0
        %6302 = vmatpush2.msra.mxu0 0.0
        %6303 = vmatprep.subr.mxu0 0.0
        %6304 = vmatpush2.msra.mxu0 0.0
        %6305 = vmatprep.subr.mxu0 0.0
        %6306 = vmatpush2.msra.mxu0 0.0
        %6307 = vmatprep.subr.mxu0 0.0
        %6308 = vmatpush2.msra.mxu0 0.0
        %6309 = vmatprep.subr.mxu0 0.0
        %6310 = vmatpush2.msra.mxu0 0.0
        %6311 = vmatprep.subr.mxu0 0.0
        %6312 = vmatpush2.msra.mxu0 0.0
        %6313 = vmatprep.subr.mxu0 0.0
        %6314 = vmatpush2.msra.mxu0 0.0
        %6315 = vmatprep.subr.mxu0 0.0
        %6316 = vmatpush2.msra.mxu0 0.0
        %6317 = vmatprep.subr.mxu0 0.0
        %6318 = vmatpush2.msra.mxu0 0.0
        %6319 = vmatprep.subr.mxu0 0.0
        %6320 = vmatpush2.msra.mxu0 0.0
        %6321 = vmatprep.subr.mxu0 0.0
        %6322 = vmatpush2.msra.mxu0 0.0
        %6323 = vmatprep.subr.mxu0 0.0
        %6324 = vmatpush2.msra.mxu0 0.0
        %6325 = vmatprep.subr.mxu0 0.0
        %6326 = vmatpush2.msra.mxu0 0.0
        %6327 = vmatprep.subr.mxu0 0.0
        %6328 = vmatpush2.msra.mxu0 0.0
        %6329 = vmatprep.subr.mxu0 0.0
        %6330 = vmatpush2.msra.mxu0 0.0
        %6331 = vmatprep.subr.mxu0 0.0
        %6332 = vmatpush2.msra.mxu0 0.0
        %6333 = vmatprep.mubr.f32.mxu0 0.0
        %6334 = vmatmul.mubr.f32.gmra.mxu0 %v6267
        %v6335 = vpop.f32.mrf.mxu0
        %v6336 = vadd.f32 0.0, %v6335
        %v6337 = vpop.f32.mrf.mxu0
        %6338 = vdwg.mxu0
        %6339 = vrot.lane.b32.xlu0 %v5846, 112
        %v6340 = vpop.permute.xlu0 %6339
        %6341 = vrot.lane.b32.xlu0 %v6009, 112
        %v6342 = vpop.permute.xlu0 %6341
        %v6343 = vsel %vm554, %v6340, 0
        %v6345 = vsel %vm554, %v6342, 0
        %6347 = vmatprep.subr.mxu0 0.0
        %6348 = vmatpush1.xpose.msra.mxu0 0.0
        %6349 = vmatprep.subr.mxu0 0.0
        %6350 = vmatpush1.xpose.msra.mxu0 0.0
        %6351 = vmatprep.subr.mxu0 0.0
        %6352 = vmatpush1.xpose.msra.mxu0 0.0
        %6353 = vmatprep.subr.mxu0 0.0
        %6354 = vmatpush1.xpose.msra.mxu0 0.0
        %6355 = vmatprep.subr.mxu0 0.0
        %6356 = vmatpush1.xpose.msra.mxu0 0.0
        %6357 = vmatprep.subr.mxu0 0.0
        %6358 = vmatpush1.xpose.msra.mxu0 0.0
        %6359 = vmatprep.subr.mxu0 0.0
        %6360 = vmatpush1.xpose.msra.mxu0 0.0
        %6361 = vmatprep.subr.mxu0 0.0
        %6362 = vmatpush1.xpose.msra.mxu0 0.0
        %6363 = vmatprep.subr.mxu0 0.0
        %6364 = vmatpush1.xpose.msra.mxu0 0.0
        %6365 = vmatprep.subr.mxu0 0.0
        %6366 = vmatpush1.xpose.msra.mxu0 0.0
        %6367 = vmatprep.subr.mxu0 0.0
        %6368 = vmatpush1.xpose.msra.mxu0 0.0
        %6369 = vmatprep.subr.mxu0 0.0
        %6370 = vmatpush1.xpose.msra.mxu0 0.0
        %6371 = vmatprep.subr.mxu0 0.0
        %6372 = vmatpush1.xpose.msra.mxu0 0.0
        %6373 = vmatprep.subr.mxu0 0.0
        %6374 = vmatpush1.xpose.msra.mxu0 0.0
        %6375 = vmatprep.subr.mxu0 0.0
        %6376 = vmatpush1.xpose.msra.mxu0 0.0
        %6377 = vmatprep.subr.mxu0 0.0
        %6378 = vmatpush1.xpose.msra.mxu0 %v6345
        %6379 = vmatprep.subr.mxu0 0.0
        %6380 = vmatpush2.xpose.msra.mxu0 0.0
        %6381 = vmatprep.subr.mxu0 0.0
        %6382 = vmatpush2.xpose.msra.mxu0 0.0
        %6383 = vmatprep.subr.mxu0 0.0
        %6384 = vmatpush2.xpose.msra.mxu0 0.0
        %6385 = vmatprep.subr.mxu0 0.0
        %6386 = vmatpush2.xpose.msra.mxu0 0.0
        %6387 = vmatprep.subr.mxu0 0.0
        %6388 = vmatpush2.xpose.msra.mxu0 0.0
        %6389 = vmatprep.subr.mxu0 0.0
        %6390 = vmatpush2.xpose.msra.mxu0 0.0
        %6391 = vmatprep.subr.mxu0 0.0
        %6392 = vmatpush2.xpose.msra.mxu0 0.0
        %6393 = vmatprep.subr.mxu0 0.0
        %6394 = vmatpush2.xpose.msra.mxu0 0.0
        %6395 = vmatprep.subr.mxu0 0.0
        %6396 = vmatpush2.xpose.msra.mxu0 0.0
        %6397 = vmatprep.subr.mxu0 0.0
        %6398 = vmatpush2.xpose.msra.mxu0 0.0
        %6399 = vmatprep.subr.mxu0 0.0
        %6400 = vmatpush2.xpose.msra.mxu0 0.0
        %6401 = vmatprep.subr.mxu0 0.0
        %6402 = vmatpush2.xpose.msra.mxu0 0.0
        %6403 = vmatprep.subr.mxu0 0.0
        %6404 = vmatpush2.xpose.msra.mxu0 0.0
        %6405 = vmatprep.subr.mxu0 0.0
        %6406 = vmatpush2.xpose.msra.mxu0 0.0
        %6407 = vmatprep.subr.mxu0 0.0
        %6408 = vmatpush2.xpose.msra.mxu0 0.0
        %6409 = vmatprep.subr.mxu0 0.0
        %6410 = vmatpush2.xpose.msra.mxu0 0.0
        %6411 = vmatprep.mubr.f32.mxu0 0.0
        %6412 = vmatmul.mubr.f32.gmra.mxu0 %v6343
        %v6413 = vpop.f32.mrf.mxu0
        %v6414 = vadd.f32 %v549, %v6413
        %v6415 = vpop.f32.mrf.mxu0
        %6416 = vdwg.mxu0
        %v6417 = vsel %vm554, %v6414, -inf
        %6418 = vmax.xlane.f32.xlu0 %v6417
        %v6419 = vpop.xlane.xlu0 %6418
        %v6420 = vsub.f32 %v6414, %v6419
        %v6421 = vmul.f32 %v6420, 1.442695
        %v6422 = vpow.pop %v6421
        %v6423 = vsel %vm554, %v6422, 0.0
        %6424 = vadd.xlane.f32.xlu0 %v6423
        %v6425 = vpop.xlane.xlu0 %6424
        %v6426 = vrcp.pop %v6425
        %v6427 = vmul.f32 %v6422, %v6426
        %6428 = vrot.lane.b32.xlu0 %v5936, 80
        %v6429 = vpop.permute.xlu0 %6428
        %v6432 = vsel %vm554, %v6427, 0
        %6434 = vmatprep.subr.mxu0 0.0
        %6435 = vmatpush1.msra.mxu0 0.0
        %6436 = vmatprep.subr.mxu0 0.0
        %6437 = vmatpush1.msra.mxu0 0.0
        %6438 = vmatprep.subr.mxu0 0.0
        %6439 = vmatpush1.msra.mxu0 0.0
        %6440 = vmatprep.subr.mxu0 0.0
        %6441 = vmatpush1.msra.mxu0 0.0
        %6442 = vmatprep.subr.mxu0 0.0
        %6443 = vmatpush1.msra.mxu0 0.0
        %6444 = vmatprep.subr.mxu0 0.0
        %6445 = vmatpush1.msra.mxu0 0.0
        %6446 = vmatprep.subr.mxu0 0.0
        %6447 = vmatpush1.msra.mxu0 0.0
        %6448 = vmatprep.subr.mxu0 0.0
        %6449 = vmatpush1.msra.mxu0 0.0
        %6450 = vmatprep.subr.mxu0 0.0
        %6451 = vmatpush1.msra.mxu0 0.0
        %6452 = vmatprep.subr.mxu0 0.0
        %6453 = vmatpush1.msra.mxu0 0.0
        %6454 = vmatprep.subr.mxu0 0.0
        %6455 = vmatpush1.msra.mxu0 0.0
        %6456 = vmatprep.subr.mxu0 0.0
        %6457 = vmatpush1.msra.mxu0 0.0
        %6458 = vmatprep.subr.mxu0 0.0
        %6459 = vmatpush1.msra.mxu0 0.0
        %6460 = vmatprep.subr.mxu0 0.0
        %6461 = vmatpush1.msra.mxu0 0.0
        %6462 = vmatprep.subr.mxu0 0.0
        %6463 = vmatpush1.msra.mxu0 0.0
        %6464 = vmatprep.subr.mxu0 0.0
        %6465 = vmatpush1.msra.mxu0 %v6429
        %6466 = vmatprep.subr.mxu0 0.0
        %6467 = vmatpush2.msra.mxu0 0.0
        %6468 = vmatprep.subr.mxu0 0.0
        %6469 = vmatpush2.msra.mxu0 0.0
        %6470 = vmatprep.subr.mxu0 0.0
        %6471 = vmatpush2.msra.mxu0 0.0
        %6472 = vmatprep.subr.mxu0 0.0
        %6473 = vmatpush2.msra.mxu0 0.0
        %6474 = vmatprep.subr.mxu0 0.0
        %6475 = vmatpush2.msra.mxu0 0.0
        %6476 = vmatprep.subr.mxu0 0.0
        %6477 = vmatpush2.msra.mxu0 0.0
        %6478 = vmatprep.subr.mxu0 0.0
        %6479 = vmatpush2.msra.mxu0 0.0
        %6480 = vmatprep.subr.mxu0 0.0
        %6481 = vmatpush2.msra.mxu0 0.0
        %6482 = vmatprep.subr.mxu0 0.0
        %6483 = vmatpush2.msra.mxu0 0.0
        %6484 = vmatprep.subr.mxu0 0.0
        %6485 = vmatpush2.msra.mxu0 0.0
        %6486 = vmatprep.subr.mxu0 0.0
        %6487 = vmatpush2.msra.mxu0 0.0
        %6488 = vmatprep.subr.mxu0 0.0
        %6489 = vmatpush2.msra.mxu0 0.0
        %6490 = vmatprep.subr.mxu0 0.0
        %6491 = vmatpush2.msra.mxu0 0.0
        %6492 = vmatprep.subr.mxu0 0.0
        %6493 = vmatpush2.msra.mxu0 0.0
        %6494 = vmatprep.subr.mxu0 0.0
        %6495 = vmatpush2.msra.mxu0 0.0
        %6496 = vmatprep.subr.mxu0 0.0
        %6497 = vmatpush2.msra.mxu0 0.0
        %6498 = vmatprep.mubr.f32.mxu0 0.0
        %6499 = vmatmul.mubr.f32.gmra.mxu0 %v6432
        %v6500 = vpop.f32.mrf.mxu0
        %v6501 = vadd.f32 0.0, %v6500
        %v6502 = vpop.f32.mrf.mxu0
        %6503 = vdwg.mxu0
        %6504 = vrot.lane.b32.xlu0 %v5846, 104
        %v6505 = vpop.permute.xlu0 %6504
        %6506 = vrot.lane.b32.xlu0 %v6009, 104
        %v6507 = vpop.permute.xlu0 %6506
        %v6508 = vsel %vm554, %v6505, 0
        %v6510 = vsel %vm554, %v6507, 0
        %6512 = vmatprep.subr.mxu0 0.0
        %6513 = vmatpush1.xpose.msra.mxu0 0.0
        %6514 = vmatprep.subr.mxu0 0.0
        %6515 = vmatpush1.xpose.msra.mxu0 0.0
        %6516 = vmatprep.subr.mxu0 0.0
        %6517 = vmatpush1.xpose.msra.mxu0 0.0
        %6518 = vmatprep.subr.mxu0 0.0
        %6519 = vmatpush1.xpose.msra.mxu0 0.0
        %6520 = vmatprep.subr.mxu0 0.0
        %6521 = vmatpush1.xpose.msra.mxu0 0.0
        %6522 = vmatprep.subr.mxu0 0.0
        %6523 = vmatpush1.xpose.msra.mxu0 0.0
        %6524 = vmatprep.subr.mxu0 0.0
        %6525 = vmatpush1.xpose.msra.mxu0 0.0
        %6526 = vmatprep.subr.mxu0 0.0
        %6527 = vmatpush1.xpose.msra.mxu0 0.0
        %6528 = vmatprep.subr.mxu0 0.0
        %6529 = vmatpush1.xpose.msra.mxu0 0.0
        %6530 = vmatprep.subr.mxu0 0.0
        %6531 = vmatpush1.xpose.msra.mxu0 0.0
        %6532 = vmatprep.subr.mxu0 0.0
        %6533 = vmatpush1.xpose.msra.mxu0 0.0
        %6534 = vmatprep.subr.mxu0 0.0
        %6535 = vmatpush1.xpose.msra.mxu0 0.0
        %6536 = vmatprep.subr.mxu0 0.0
        %6537 = vmatpush1.xpose.msra.mxu0 0.0
        %6538 = vmatprep.subr.mxu0 0.0
        %6539 = vmatpush1.xpose.msra.mxu0 0.0
        %6540 = vmatprep.subr.mxu0 0.0
        %6541 = vmatpush1.xpose.msra.mxu0 0.0
        %6542 = vmatprep.subr.mxu0 0.0
        %6543 = vmatpush1.xpose.msra.mxu0 %v6510
        %6544 = vmatprep.subr.mxu0 0.0
        %6545 = vmatpush2.xpose.msra.mxu0 0.0
        %6546 = vmatprep.subr.mxu0 0.0
        %6547 = vmatpush2.xpose.msra.mxu0 0.0
        %6548 = vmatprep.subr.mxu0 0.0
        %6549 = vmatpush2.xpose.msra.mxu0 0.0
        %6550 = vmatprep.subr.mxu0 0.0
        %6551 = vmatpush2.xpose.msra.mxu0 0.0
        %6552 = vmatprep.subr.mxu0 0.0
        %6553 = vmatpush2.xpose.msra.mxu0 0.0
        %6554 = vmatprep.subr.mxu0 0.0
        %6555 = vmatpush2.xpose.msra.mxu0 0.0
        %6556 = vmatprep.subr.mxu0 0.0
        %6557 = vmatpush2.xpose.msra.mxu0 0.0
        %6558 = vmatprep.subr.mxu0 0.0
        %6559 = vmatpush2.xpose.msra.mxu0 0.0
        %6560 = vmatprep.subr.mxu0 0.0
        %6561 = vmatpush2.xpose.msra.mxu0 0.0
        %6562 = vmatprep.subr.mxu0 0.0
        %6563 = vmatpush2.xpose.msra.mxu0 0.0
        %6564 = vmatprep.subr.mxu0 0.0
        %6565 = vmatpush2.xpose.msra.mxu0 0.0
        %6566 = vmatprep.subr.mxu0 0.0
        %6567 = vmatpush2.xpose.msra.mxu0 0.0
        %6568 = vmatprep.subr.mxu0 0.0
        %6569 = vmatpush2.xpose.msra.mxu0 0.0
        %6570 = vmatprep.subr.mxu0 0.0
        %6571 = vmatpush2.xpose.msra.mxu0 0.0
        %6572 = vmatprep.subr.mxu0 0.0
        %6573 = vmatpush2.xpose.msra.mxu0 0.0
        %6574 = vmatprep.subr.mxu0 0.0
        %6575 = vmatpush2.xpose.msra.mxu0 0.0
        %6576 = vmatprep.mubr.f32.mxu0 0.0
        %6577 = vmatmul.mubr.f32.gmra.mxu0 %v6508
        %v6578 = vpop.f32.mrf.mxu0
        %v6579 = vadd.f32 %v549, %v6578
        %v6580 = vpop.f32.mrf.mxu0
        %6581 = vdwg.mxu0
        %v6582 = vsel %vm554, %v6579, -inf
        %6583 = vmax.xlane.f32.xlu0 %v6582
        %v6584 = vpop.xlane.xlu0 %6583
        %v6585 = vsub.f32 %v6579, %v6584
        %v6586 = vmul.f32 %v6585, 1.442695
        %v6587 = vpow.pop %v6586
        %v6588 = vsel %vm554, %v6587, 0.0
        %6589 = vadd.xlane.f32.xlu0 %v6588
        %v6590 = vpop.xlane.xlu0 %6589
        %v6591 = vrcp.pop %v6590
        %v6592 = vmul.f32 %v6587, %v6591
        %6593 = vrot.lane.b32.xlu0 %v5936, 72
        %v6594 = vpop.permute.xlu0 %6593
        %v6597 = vsel %vm554, %v6592, 0
        %6599 = vmatprep.subr.mxu0 0.0
        %6600 = vmatpush1.msra.mxu0 0.0
        %6601 = vmatprep.subr.mxu0 0.0
        %6602 = vmatpush1.msra.mxu0 0.0
        %6603 = vmatprep.subr.mxu0 0.0
        %6604 = vmatpush1.msra.mxu0 0.0
        %6605 = vmatprep.subr.mxu0 0.0
        %6606 = vmatpush1.msra.mxu0 0.0
        %6607 = vmatprep.subr.mxu0 0.0
        %6608 = vmatpush1.msra.mxu0 0.0
        %6609 = vmatprep.subr.mxu0 0.0
        %6610 = vmatpush1.msra.mxu0 0.0
        %6611 = vmatprep.subr.mxu0 0.0
        %6612 = vmatpush1.msra.mxu0 0.0
        %6613 = vmatprep.subr.mxu0 0.0
        %6614 = vmatpush1.msra.mxu0 0.0
        %6615 = vmatprep.subr.mxu0 0.0
        %6616 = vmatpush1.msra.mxu0 0.0
        %6617 = vmatprep.subr.mxu0 0.0
        %6618 = vmatpush1.msra.mxu0 0.0
        %6619 = vmatprep.subr.mxu0 0.0
        %6620 = vmatpush1.msra.mxu0 0.0
        %6621 = vmatprep.subr.mxu0 0.0
        %6622 = vmatpush1.msra.mxu0 0.0
        %6623 = vmatprep.subr.mxu0 0.0
        %6624 = vmatpush1.msra.mxu0 0.0
        %6625 = vmatprep.subr.mxu0 0.0
        %6626 = vmatpush1.msra.mxu0 0.0
        %6627 = vmatprep.subr.mxu0 0.0
        %6628 = vmatpush1.msra.mxu0 0.0
        %6629 = vmatprep.subr.mxu0 0.0
        %6630 = vmatpush1.msra.mxu0 %v6594
        %6631 = vmatprep.subr.mxu0 0.0
        %6632 = vmatpush2.msra.mxu0 0.0
        %6633 = vmatprep.subr.mxu0 0.0
        %6634 = vmatpush2.msra.mxu0 0.0
        %6635 = vmatprep.subr.mxu0 0.0
        %6636 = vmatpush2.msra.mxu0 0.0
        %6637 = vmatprep.subr.mxu0 0.0
        %6638 = vmatpush2.msra.mxu0 0.0
        %6639 = vmatprep.subr.mxu0 0.0
        %6640 = vmatpush2.msra.mxu0 0.0
        %6641 = vmatprep.subr.mxu0 0.0
        %6642 = vmatpush2.msra.mxu0 0.0
        %6643 = vmatprep.subr.mxu0 0.0
        %6644 = vmatpush2.msra.mxu0 0.0
        %6645 = vmatprep.subr.mxu0 0.0
        %6646 = vmatpush2.msra.mxu0 0.0
        %6647 = vmatprep.subr.mxu0 0.0
        %6648 = vmatpush2.msra.mxu0 0.0
        %6649 = vmatprep.subr.mxu0 0.0
        %6650 = vmatpush2.msra.mxu0 0.0
        %6651 = vmatprep.subr.mxu0 0.0
        %6652 = vmatpush2.msra.mxu0 0.0
        %6653 = vmatprep.subr.mxu0 0.0
        %6654 = vmatpush2.msra.mxu0 0.0
        %6655 = vmatprep.subr.mxu0 0.0
        %6656 = vmatpush2.msra.mxu0 0.0
        %6657 = vmatprep.subr.mxu0 0.0
        %6658 = vmatpush2.msra.mxu0 0.0
        %6659 = vmatprep.subr.mxu0 0.0
        %6660 = vmatpush2.msra.mxu0 0.0
        %6661 = vmatprep.subr.mxu0 0.0
        %6662 = vmatpush2.msra.mxu0 0.0
        %6663 = vmatprep.mubr.f32.mxu0 0.0
        %6664 = vmatmul.mubr.f32.gmra.mxu0 %v6597
        %v6665 = vpop.f32.mrf.mxu0
        %v6666 = vadd.f32 0.0, %v6665
        %v6667 = vpop.f32.mrf.mxu0
        %6668 = vdwg.mxu0
        %6670 = vrot.lane.b32.xlu0 %v6336, 8
        %v6671 = vpop.permute.xlu0 %6670
        %6674 = vrot.lane.b32.xlu0 %v6501, 16
        %v6675 = vpop.permute.xlu0 %6674
        %6678 = vrot.lane.b32.xlu0 %v6666, 24
        %v6679 = vpop.permute.xlu0 %6678
        %v6681 = vsel %vm554, %v6171, %v6671
        %v6682 = vsel %vm1225, %v6681, %v6675
        %v6683 = vsel %vm1227, %v6682, %v6679
        %v6684 = vld [vmem:[#allocation8 + $0x150] sm:$0xff]
        %v6685 = vld [vmem:[#allocation8 + $0x158] sm:$0xff]
        %v6686 = vld [vmem:[#allocation8 + $0x160] sm:$0xff]
        %v6687 = vld [vmem:[#allocation8 + $0x168] sm:$0xff]
        %v6688 = vld [vmem:[#allocation8 + $0x1d3] sm:$0x1]
        %v6689 = vlaneseq
        %v6690 = vshrl.u32 %v6689, 7
        %v6691 = vsub.s32 0, %v6690
        %v6692 = vrot.slane %v6688, %v6691
        %v6694 = vsel %vm397, %v6683, 0
        %6696 = vmatprep.subr.mxu0 0.0
        %6697 = vmatpush1.msra.mxu0 0.0
        %6698 = vmatprep.subr.mxu0 0.0
        %6699 = vmatpush1.msra.mxu0 0.0
        %6700 = vmatprep.subr.mxu0 0.0
        %6701 = vmatpush1.msra.mxu0 0.0
        %6702 = vmatprep.subr.mxu0 0.0
        %6703 = vmatpush1.msra.mxu0 0.0
        %6704 = vmatprep.subr.mxu0 0.0
        %6705 = vmatpush1.msra.mxu0 0.0
        %6706 = vmatprep.subr.mxu0 0.0
        %6707 = vmatpush1.msra.mxu0 0.0
        %6708 = vmatprep.subr.mxu0 0.0
        %6709 = vmatpush1.msra.mxu0 0.0
        %6710 = vmatprep.subr.mxu0 0.0
        %6711 = vmatpush1.msra.mxu0 0.0
        %6712 = vmatprep.subr.mxu0 0.0
        %6713 = vmatpush1.msra.mxu0 0.0
        %6714 = vmatprep.subr.mxu0 0.0
        %6715 = vmatpush1.msra.mxu0 0.0
        %6716 = vmatprep.subr.mxu0 0.0
        %6717 = vmatpush1.msra.mxu0 0.0
        %6718 = vmatprep.subr.mxu0 0.0
        %6719 = vmatpush1.msra.mxu0 0.0
        %6720 = vmatprep.subr.mxu0 0.0
        %6721 = vmatpush1.msra.mxu0 %v6687
        %6722 = vmatprep.subr.mxu0 0.0
        %6723 = vmatpush1.msra.mxu0 %v6686
        %6724 = vmatprep.subr.mxu0 0.0
        %6725 = vmatpush1.msra.mxu0 %v6685
        %6726 = vmatprep.subr.mxu0 0.0
        %6727 = vmatpush1.msra.mxu0 %v6684
        %6728 = vmatprep.subr.mxu0 0.0
        %6729 = vmatpush2.msra.mxu0 0.0
        %6730 = vmatprep.subr.mxu0 0.0
        %6731 = vmatpush2.msra.mxu0 0.0
        %6732 = vmatprep.subr.mxu0 0.0
        %6733 = vmatpush2.msra.mxu0 0.0
        %6734 = vmatprep.subr.mxu0 0.0
        %6735 = vmatpush2.msra.mxu0 0.0
        %6736 = vmatprep.subr.mxu0 0.0
        %6737 = vmatpush2.msra.mxu0 0.0
        %6738 = vmatprep.subr.mxu0 0.0
        %6739 = vmatpush2.msra.mxu0 0.0
        %6740 = vmatprep.subr.mxu0 0.0
        %6741 = vmatpush2.msra.mxu0 0.0
        %6742 = vmatprep.subr.mxu0 0.0
        %6743 = vmatpush2.msra.mxu0 0.0
        %6744 = vmatprep.subr.mxu0 0.0
        %6745 = vmatpush2.msra.mxu0 0.0
        %6746 = vmatprep.subr.mxu0 0.0
        %6747 = vmatpush2.msra.mxu0 0.0
        %6748 = vmatprep.subr.mxu0 0.0
        %6749 = vmatpush2.msra.mxu0 0.0
        %6750 = vmatprep.subr.mxu0 0.0
        %6751 = vmatpush2.msra.mxu0 0.0
        %6752 = vmatprep.subr.mxu0 0.0
        %6753 = vmatpush2.msra.mxu0 0.0
        %6754 = vmatprep.subr.mxu0 0.0
        %6755 = vmatpush2.msra.mxu0 0.0
        %6756 = vmatprep.subr.mxu0 0.0
        %6757 = vmatpush2.msra.mxu0 0.0
        %6758 = vmatprep.subr.mxu0 0.0
        %6759 = vmatpush2.msra.mxu0 0.0
        %6760 = vmatprep.mubr.f32.mxu0 0.0
        %6761 = vmatmul.mubr.f32.gmra.mxu0 %v6694
        %v6762 = vpop.f32.mrf.mxu0
        %v6763 = vadd.f32 %v6692, %v6762
        %v6764 = vpop.f32.mrf.mxu0
        %6765 = vdwg.mxu0
        %v6766 = vadd.f32 %v5765, %v6763
        %v6767 = vld [vmem:[#allocation8 + $0x1d8] sm:$0x1]
        %v6768 = vld [vmem:[#allocation8 + $0x1d9] sm:$0x1]
        %v6769 = vsel %vm397, %v6766, 0.0
        %6770 = vadd.xlane.f32.xlu0 %v6769
        %v6771 = vpop.xlane.xlu0 %6770
        %v6772 = vmul.f32 %v6771, %v1317
        %v6773 = vsub.f32 %v6766, %v6772
        %v6774 = vmul.f32 %v6773, %v6773
        %v6775 = vsel %vm397, %v6774, 0.0
        %6776 = vadd.xlane.f32.xlu0 %v6775
        %v6777 = vpop.xlane.xlu0 %6776
        %v6778 = vmul.f32 %v6777, %v1317
        %v6779 = vadd.f32 %v6778, 1e-05
        %v6780 = vrsqrt.pop %v6779
        %v6781 = vmul.f32 %v6773, %v6780
        %v6782 = vlaneseq
        %v6783 = vshrl.u32 %v6782, 7
        %v6784 = vsub.s32 0, %v6783
        %v6785 = vrot.slane %v6767, %v6784
        %v6786 = vmul.f32 %v6781, %v6785
        %v6787 = vlaneseq
        %v6788 = vshrl.u32 %v6787, 7
        %v6789 = vsub.s32 0, %v6788
        %v6790 = vrot.slane %v6768, %v6789
        %v6791 = vadd.f32 %v6786, %v6790
        %v6792 = vld [vmem:[#allocation8 + $0x170] sm:$0xff]
        %v6793 = vld [vmem:[#allocation8 + $0x178] sm:$0xff]
        %v6794 = vld [vmem:[#allocation8 + $0x180] sm:$0xff]
        %v6795 = vld [vmem:[#allocation8 + $0x188] sm:$0xff]
        %v6796 = vld [vmem:[#allocation8 + $0x1d4] sm:$0x1]
        %v6797 = vld [vmem:[#allocation8 + $0x190] sm:$0xff]
        %v6798 = vld [vmem:[#allocation8 + $0x198] sm:$0xff]
        %v6799 = vld [vmem:[#allocation8 + $0x1a0] sm:$0xff]
        %v6800 = vld [vmem:[#allocation8 + $0x1a8] sm:$0xff]
        %v6801 = vld [vmem:[#allocation8 + $0x1b0] sm:$0xff]
        %v6802 = vld [vmem:[#allocation8 + $0x1b8] sm:$0xff]
        %v6803 = vld [vmem:[#allocation8 + $0x1c0] sm:$0xff]
        %v6804 = vld [vmem:[#allocation8 + $0x1c8] sm:$0xff]
        %v6805 = vld [vmem:[#allocation8 + $0x1d5] sm:$0x1]
        %v6806 = vlaneseq
        %v6807 = vshrl.u32 %v6806, 7
        %v6808 = vsub.s32 0, %v6807
        %v6809 = vrot.slane %v6796, %v6808
        %v6811 = vsel %vm397, %v6791, 0
        %6813 = vmatprep.subr.mxu0 0.0
        %6814 = vmatpush1.msra.mxu0 0.0
        %6815 = vmatprep.subr.mxu0 0.0
        %6816 = vmatpush1.msra.mxu0 0.0
        %6817 = vmatprep.subr.mxu0 0.0
        %6818 = vmatpush1.msra.mxu0 0.0
        %6819 = vmatprep.subr.mxu0 0.0
        %6820 = vmatpush1.msra.mxu0 0.0
        %6821 = vmatprep.subr.mxu0 0.0
        %6822 = vmatpush1.msra.mxu0 0.0
        %6823 = vmatprep.subr.mxu0 0.0
        %6824 = vmatpush1.msra.mxu0 0.0
        %6825 = vmatprep.subr.mxu0 0.0
        %6826 = vmatpush1.msra.mxu0 0.0
        %6827 = vmatprep.subr.mxu0 0.0
        %6828 = vmatpush1.msra.mxu0 0.0
        %6829 = vmatprep.subr.mxu0 0.0
        %6830 = vmatpush1.msra.mxu0 0.0
        %6831 = vmatprep.subr.mxu0 0.0
        %6832 = vmatpush1.msra.mxu0 0.0
        %6833 = vmatprep.subr.mxu0 0.0
        %6834 = vmatpush1.msra.mxu0 0.0
        %6835 = vmatprep.subr.mxu0 0.0
        %6836 = vmatpush1.msra.mxu0 0.0
        %6837 = vmatprep.subr.mxu0 0.0
        %6838 = vmatpush1.msra.mxu0 %v6795
        %6839 = vmatprep.subr.mxu0 0.0
        %6840 = vmatpush1.msra.mxu0 %v6794
        %6841 = vmatprep.subr.mxu0 0.0
        %6842 = vmatpush1.msra.mxu0 %v6793
        %6843 = vmatprep.subr.mxu0 0.0
        %6844 = vmatpush1.msra.mxu0 %v6792
        %6845 = vmatprep.subr.mxu0 0.0
        %6846 = vmatpush2.msra.mxu0 0.0
        %6847 = vmatprep.subr.mxu0 0.0
        %6848 = vmatpush2.msra.mxu0 0.0
        %6849 = vmatprep.subr.mxu0 0.0
        %6850 = vmatpush2.msra.mxu0 0.0
        %6851 = vmatprep.subr.mxu0 0.0
        %6852 = vmatpush2.msra.mxu0 0.0
        %6853 = vmatprep.subr.mxu0 0.0
        %6854 = vmatpush2.msra.mxu0 0.0
        %6855 = vmatprep.subr.mxu0 0.0
        %6856 = vmatpush2.msra.mxu0 0.0
        %6857 = vmatprep.subr.mxu0 0.0
        %6858 = vmatpush2.msra.mxu0 0.0
        %6859 = vmatprep.subr.mxu0 0.0
        %6860 = vmatpush2.msra.mxu0 0.0
        %6861 = vmatprep.subr.mxu0 0.0
        %6862 = vmatpush2.msra.mxu0 0.0
        %6863 = vmatprep.subr.mxu0 0.0
        %6864 = vmatpush2.msra.mxu0 0.0
        %6865 = vmatprep.subr.mxu0 0.0
        %6866 = vmatpush2.msra.mxu0 0.0
        %6867 = vmatprep.subr.mxu0 0.0
        %6868 = vmatpush2.msra.mxu0 0.0
        %6869 = vmatprep.subr.mxu0 0.0
        %6870 = vmatpush2.msra.mxu0 0.0
        %6871 = vmatprep.subr.mxu0 0.0
        %6872 = vmatpush2.msra.mxu0 0.0
        %6873 = vmatprep.subr.mxu0 0.0
        %6874 = vmatpush2.msra.mxu0 0.0
        %6875 = vmatprep.subr.mxu0 0.0
        %6876 = vmatpush2.msra.mxu0 0.0
        %6877 = vmatprep.mubr.f32.mxu0 0.0
        %6878 = vmatmul.mubr.f32.gmra.mxu0 %v6811
        %v6879 = vpop.f32.mrf.mxu0
        %v6880 = vadd.f32 %v6809, %v6879
        %v6881 = vpop.f32.mrf.mxu0
        %6882 = vdwg.mxu0
        %v6883 = vmax.f32 %v6880, 0.0
        %v6884 = vlaneseq
        %v6885 = vshrl.u32 %v6884, 7
        %v6886 = vsub.s32 0, %v6885
        %v6887 = vrot.slane %v6805, %v6886
        %v6889 = vsel %vm1434, %v6883, 0
        %6891 = vmatprep.subr.mxu0 0.0
        %6892 = vmatpush1.msra.mxu0 0.0
        %6893 = vmatprep.subr.mxu0 0.0
        %6894 = vmatpush1.msra.mxu0 0.0
        %6895 = vmatprep.subr.mxu0 0.0
        %6896 = vmatpush1.msra.mxu0 0.0
        %6897 = vmatprep.subr.mxu0 0.0
        %6898 = vmatpush1.msra.mxu0 0.0
        %6899 = vmatprep.subr.mxu0 0.0
        %6900 = vmatpush1.msra.mxu0 0.0
        %6901 = vmatprep.subr.mxu0 0.0
        %6902 = vmatpush1.msra.mxu0 0.0
        %6903 = vmatprep.subr.mxu0 0.0
        %6904 = vmatpush1.msra.mxu0 0.0
        %6905 = vmatprep.subr.mxu0 0.0
        %6906 = vmatpush1.msra.mxu0 0.0
        %6907 = vmatprep.subr.mxu0 0.0
        %6908 = vmatpush1.msra.mxu0 %v6804
        %6909 = vmatprep.subr.mxu0 0.0
        %6910 = vmatpush1.msra.mxu0 %v6803
        %6911 = vmatprep.subr.mxu0 0.0
        %6912 = vmatpush1.msra.mxu0 %v6802
        %6913 = vmatprep.subr.mxu0 0.0
        %6914 = vmatpush1.msra.mxu0 %v6801
        %6915 = vmatprep.subr.mxu0 0.0
        %6916 = vmatpush1.msra.mxu0 %v6800
        %6917 = vmatprep.subr.mxu0 0.0
        %6918 = vmatpush1.msra.mxu0 %v6799
        %6919 = vmatprep.subr.mxu0 0.0
        %6920 = vmatpush1.msra.mxu0 %v6798
        %6921 = vmatprep.subr.mxu0 0.0
        %6922 = vmatpush1.msra.mxu0 %v6797
        %6923 = vmatprep.subr.mxu0 0.0
        %6924 = vmatpush2.msra.mxu0 0.0
        %6925 = vmatprep.subr.mxu0 0.0
        %6926 = vmatpush2.msra.mxu0 0.0
        %6927 = vmatprep.subr.mxu0 0.0
        %6928 = vmatpush2.msra.mxu0 0.0
        %6929 = vmatprep.subr.mxu0 0.0
        %6930 = vmatpush2.msra.mxu0 0.0
        %6931 = vmatprep.subr.mxu0 0.0
        %6932 = vmatpush2.msra.mxu0 0.0
        %6933 = vmatprep.subr.mxu0 0.0
        %6934 = vmatpush2.msra.mxu0 0.0
        %6935 = vmatprep.subr.mxu0 0.0
        %6936 = vmatpush2.msra.mxu0 0.0
        %6937 = vmatprep.subr.mxu0 0.0
        %6938 = vmatpush2.msra.mxu0 0.0
        %6939 = vmatprep.subr.mxu0 0.0
        %6940 = vmatpush2.msra.mxu0 0.0
        %6941 = vmatprep.subr.mxu0 0.0
        %6942 = vmatpush2.msra.mxu0 0.0
        %6943 = vmatprep.subr.mxu0 0.0
        %6944 = vmatpush2.msra.mxu0 0.0
        %6945 = vmatprep.subr.mxu0 0.0
        %6946 = vmatpush2.msra.mxu0 0.0
        %6947 = vmatprep.subr.mxu0 0.0
        %6948 = vmatpush2.msra.mxu0 0.0
        %6949 = vmatprep.subr.mxu0 0.0
        %6950 = vmatpush2.msra.mxu0 0.0
        %6951 = vmatprep.subr.mxu0 0.0
        %6952 = vmatpush2.msra.mxu0 0.0
        %6953 = vmatprep.subr.mxu0 0.0
        %6954 = vmatpush2.msra.mxu0 0.0
        %6955 = vmatprep.mubr.f32.mxu0 0.0
        %6956 = vmatmul.mubr.f32.gmra.mxu0 %v6889
        %v6957 = vpop.f32.mrf.mxu0
        %v6958 = vadd.f32 %v6887, %v6957
        %v6959 = vpop.f32.mrf.mxu0
        %6960 = vdwg.mxu0
        %v6961 = vadd.f32 %v6791, %v6958
        %v6962 = vld [vmem:[#allocation8 + $0x1da] sm:$0x1]
        %v6963 = vld [vmem:[#allocation8 + $0x1db] sm:$0x1]
        %v6964 = vsel %vm397, %v6961, 0.0
        %6965 = vadd.xlane.f32.xlu0 %v6964
        %v6966 = vpop.xlane.xlu0 %6965
        %v6967 = vmul.f32 %v6966, %v1317
        %v6968 = vsub.f32 %v6961, %v6967
        %v6969 = vmul.f32 %v6968, %v6968
        %v6970 = vsel %vm397, %v6969, 0.0
        %6971 = vadd.xlane.f32.xlu0 %v6970
        %v6972 = vpop.xlane.xlu0 %6971
        %v6973 = vmul.f32 %v6972, %v1317
        %v6974 = vadd.f32 %v6973, 1e-05
        %v6975 = vrsqrt.pop %v6974
        %v6976 = vmul.f32 %v6968, %v6975
        %v6977 = vlaneseq
        %v6978 = vshrl.u32 %v6977, 7
        %v6979 = vsub.s32 0, %v6978
        %v6980 = vrot.slane %v6962, %v6979
        %v6981 = vmul.f32 %v6976, %v6980
        %v6982 = vlaneseq
        %v6983 = vshrl.u32 %v6982, 7
        %v6984 = vsub.s32 0, %v6983
        %v6985 = vrot.slane %v6963, %v6984
        %v6986 = vadd.f32 %v6981, %v6985
        %v6987 = vld [vmem:[#allocation8 + $0x1dc] sm:$0x1]
        %v6988 = vld [vmem:[#allocation8 + $0x1dd] sm:$0x1]
        %v6989 = vsel %vm397, %v6986, 0.0
        %6990 = vadd.xlane.f32.xlu0 %v6989
        %v6991 = vpop.xlane.xlu0 %6990
        %v6992 = vmul.f32 %v6991, %v1317
        %v6993 = vsub.f32 %v6986, %v6992
        %v6994 = vmul.f32 %v6993, %v6993
        %v6995 = vsel %vm397, %v6994, 0.0
        %6996 = vadd.xlane.f32.xlu0 %v6995
        %v6997 = vpop.xlane.xlu0 %6996
        %v6998 = vmul.f32 %v6997, %v1317
        %v6999 = vadd.f32 %v6998, 1e-05
        %v7000 = vrsqrt.pop %v6999
        %v7001 = vmul.f32 %v6993, %v7000
        %v7002 = vlaneseq
        %v7003 = vshrl.u32 %v7002, 7
        %v7004 = vsub.s32 0, %v7003
        %v7005 = vrot.slane %v6987, %v7004
        %v7006 = vmul.f32 %v7001, %v7005
        %v7007 = vlaneseq
        %v7008 = vshrl.u32 %v7007, 7
        %v7009 = vsub.s32 0, %v7008
        %v7010 = vrot.slane %v6988, %v7009
        %v7011 = vadd.f32 %v7006, %v7010
        %7012 = vst.msk [vmem:[%s381] sm:$0xff] %vm397, %v7011
        %s7013 = sand.u32 %s181, 1
        %s7014 = scalar_lea.sflag [#allocation4], %s7013
        %s7015 = sand.u32 %s181, 1
        %s7016 = smul.addr %s7015, 8
        %s7017 = scalar_lea.vmem [#allocation10], %s7016
        %s7018 = sand.u32 %s207, 1
        %s7019 = scalar_lea.sflag [#allocation12], %s7018
        %s7020 = sand.u32 %s207, 1
        %s7021 = smul.addr %s7020, 8
        %s7022 = scalar_lea.vmem [#allocation11], %s7021
        // Predicated region
        $region61: #{transformer_forward.1} parent=43 // pred_check
          %p7023 = pneg %p191
        $region62: #{transformer_forward.1} parent=43 // pred_check_branch
          %7025 = sbr.rel (%p7023) target = $region64
        $region63: #{transformer_forward.1} parent=43 // pred_region
          %s7027 = ssub.s32 128, 128
          %7028 = vsyncadd %s7014, %s7027
          %s7029 = smul.addr %s32, 128
          %s7030 = scalar_lea.hbm %s6, %s7029
          %s7032 = sshll.u32 %s7017, 4
          %s7033 = int_to_ptr.vmem [resolvable:$true] %s7032
          %7035 = dma.vmem_to_hbm [thread:$0]  %s7033, 128, %s7030, %s7014
        $region64: #{transformer_forward.1} parent=43 // pred_fallthru
          _
        // Predicated region
        $region65: #{transformer_forward.1} parent=43 // pred_check
          %p7036 = pneg %p217
        $region66: #{transformer_forward.1} parent=43 // pred_check_branch
          %7038 = sbr.rel (%p7036) target = $region68
        $region67: #{transformer_forward.1} parent=43 // pred_region
          %s7040 = ssub.s32 128, 128
          %7041 = vsyncadd %s7019, %s7040
          %s7042 = smul.addr %s32, 128
          %s7043 = scalar_lea.hbm %s7, %s7042
          %s7045 = sshll.u32 %s7022, 4
          %s7046 = int_to_ptr.vmem [resolvable:$true] %s7045
          %7048 = dma.vmem_to_hbm [thread:$0]  %s7046, 128, %s7043, %s7019
        $region68: #{transformer_forward.1} parent=43 // pred_fallthru
          _
      $region44: #{transformer_forward.1} parent=5 // pred_fallthru
        _
      %p7049 = scmp.le.s32.totalorder 2, %s27
      // Predicated region
      $region69: #{transformer_forward.1} parent=5 // pred_check
        %p7050 = pneg %p7049
      $region70: #{transformer_forward.1} parent=5 // pred_check_branch
        %7052 = sbr.rel (%p7050) target = $region72
      $region71: #{transformer_forward.1} parent=5 // pred_region
        %s7053 = ssub.s32 %s27, 2
        // Predicated region
        $region73: #{transformer_forward.1} parent=71 // pred_check
          %p7054 = pneg %p197
        $region74: #{transformer_forward.1} parent=71 // pred_check_branch
          %7056 = sbr.rel (%p7054) target = $region76
        $region75: #{transformer_forward.1} parent=71 // pred_region
          %s7057 = sand.u32 %s182, 1
          %s7058 = scalar_lea.sflag [#allocation4], %s7057
          %s7059 = sand.u32 %s182, 1
          %s7060 = smul.addr %s7059, 8
          %s7061 = scalar_lea.vmem [#allocation10], %s7060
          %7062 = dma.done %s7058, 128
        $region76: #{transformer_forward.1} parent=71 // pred_fallthru
          _
        // Predicated region
        $region77: #{transformer_forward.1} parent=71 // pred_check
          %p7063 = pneg %p223
        $region78: #{transformer_forward.1} parent=71 // pred_check_branch
          %7065 = sbr.rel (%p7063) target = $region80
        $region79: #{transformer_forward.1} parent=71 // pred_region
          %s7066 = sand.u32 %s208, 1
          %s7067 = scalar_lea.sflag [#allocation12], %s7066
          %s7068 = sand.u32 %s208, 1
          %s7069 = smul.addr %s7068, 8
          %s7070 = scalar_lea.vmem [#allocation11], %s7069
          %7071 = dma.done %s7067, 128
        $region80: #{transformer_forward.1} parent=71 // pred_fallthru
          _
      $region72: #{transformer_forward.1} parent=5 // pred_fallthru
        _
    $region6: #{transformer_forward.1} parent=1 // loop_footer
      %s31 = sadd.s32 1, %s27
    $region7: #{transformer_forward.1} parent=1 // loop_footer_branch
      %26 = sbr.rel target = $region3
    $region8: #{transformer_forward.1} parent=1 // loop_exit
      _
    %7072 = vsyncpa [#allocation3], 1
    %s7073 = scalar_lea.sflag [#allocation3], 1
    %7074 = vsyncpa %s7073, 1
    %7075 = vsyncpa [#allocation6], 1
    %s7076 = scalar_lea.sflag [#allocation6], 1
    %7077 = vsyncpa %s7076, 1
    %7078 = vsyncpa [#allocation9], 1
    %7079 = vsyncpa [#allocation4], 1
    %s7080 = scalar_lea.sflag [#allocation4], 1
    %7081 = vsyncpa %s7080, 1
    %7082 = vsyncpa [#allocation12], 1
    %s7083 = scalar_lea.sflag [#allocation12], 1
    %7084 = vsyncpa %s7083, 1

</llo_original>
